<compile_context>
chip_gen: v7x
topology: tpu7x:2x2x1
jax: 0.10.0
libtpu: 0.0.40
codegen_flags: <defaults>
</compile_context>

<pallas_src>
import functools

import jax
import jax.numpy as jnp
from jax.experimental import pallas as pl
from jax.experimental.pallas import tpu as pltpu

EPS = 1e-5


# ------------------------------- kernel body --------------------------------

def _tcm_kernel(x_ref, w_in_ref, w_d_ref, w_out_ref, p_ref, o_ref,
                *, dilas, is_causal, matmul_dtype):
    Bb, T, _ = x_ref.shape
    Cm = w_in_ref.shape[-1]                     # bottleneck channels (64)

    x = x_ref[...].astype(jnp.float32)          # (Bb, T, 256), residual stream

    # (1, T, 1) cumulative entry count for the cumulative layer norm.
    t_iota = jax.lax.broadcasted_iota(jnp.int32, (1, T, 1), 1)
    entry_cnt = (t_iota.astype(jnp.float32) + 1.0) * float(Cm)

    use_f32_mxu = (matmul_dtype == jnp.float32)
    precision = jax.lax.Precision.HIGHEST if use_f32_mxu else None

    def mm(a, w):
        """(Bb, T, K) x (K, N) -> (Bb, T, N); flattened so M = Bb*T fills the MXU."""
        Bb_, T_, K = a.shape
        a_flat = a.reshape(Bb_ * T_, K).astype(matmul_dtype)
        out = jnp.dot(a_flat, w.astype(matmul_dtype),
                      preferred_element_type=jnp.float32,
                      precision=precision)
        return out.reshape(Bb_, T_, out.shape[-1])

    def tshift(u, d):
        """result[:, t, :] = u[:, t - d, :], zeros where t - d is outside [0, T)."""
        if d == 0:
            return u
        if d >= T or d <= -T:
            return jnp.zeros_like(u)
        if d > 0:
            z = jnp.zeros((u.shape[0], d, u.shape[2]), u.dtype)
            return jnp.concatenate([z, u[:, :T - d, :]], axis=1)
        k = -d
        z = jnp.zeros((u.shape[0], k, u.shape[2]), u.dtype)
        return jnp.concatenate([u[:, k:, :], z], axis=1)

    def cumsum_time(v):
        """Inclusive prefix sum along axis=1 (time) via O(log T) doubling."""
        off = 1
        while off < T:
            z = jnp.zeros((v.shape[0], off, v.shape[2]), v.dtype)
            v = v + jnp.concatenate([z, v[:, :T - off, :]], axis=1)
            off *= 2
        return v

    def cln(h, gain, bias):
        """Cumulative (channel x causal-time) layer norm on (Bb, T, Cm), f32."""
        cum_s = cumsum_time(jnp.sum(h, axis=-1, keepdims=True))        # (Bb,T,1)
        cum_ps = cumsum_time(jnp.sum(h * h, axis=-1, keepdims=True))   # (Bb,T,1)
        mean = cum_s / entry_cnt
        var = (cum_ps - 2.0 * mean * cum_s) / entry_cnt + mean * mean
        std = jnp.sqrt(var + EPS)
        return (h - mean) / std * gain + bias

    for l, d in enumerate(dilas):
        w_in = w_in_ref[l]            # (256, 64)
        w_d = w_d_ref[l]              # (192, 64)  = [tap0; tap1; tap2]
        w_out = w_out_ref[l]          # (64, 256)
        pv = p_ref[l]                 # (8, 64)    = [a1,g1,b1,a2,g2,b2,0,0]
        a1, g1, b1 = pv[0:1, :], pv[1:2, :], pv[2:3, :]
        a2, g2, b2 = pv[3:4, :], pv[4:5, :], pv[5:6, :]

        # in_conv (1x1 conv == channel matmul)
        h = mm(x, w_in)                                               # (Bb,T,64)

        # left_conv: PReLU -> cLN -> causal/centered pad -> dilated k=3 conv
        h = jnp.where(h >= 0.0, h, a1 * h)
        h = cln(h, g1, b1)
        shifts = (2 * d, d, 0) if is_causal else (d, 0, -d)
        h_cat = jnp.concatenate(
            [tshift(h, shifts[0]), tshift(h, shifts[1]), tshift(h, shifts[2])],
            axis=-1)                                                  # (Bb,T,192)
        h = mm(h_cat, w_d)                                            # (Bb,T,64)

        # out_conv: PReLU -> cLN -> 1x1 conv back to 256, plus residual
        h = jnp.where(h >= 0.0, h, a2 * h)
        h = cln(h, g2, b2)
        x = x + mm(h, w_out)                                          # (Bb,T,256)

    o_ref[...] = x.astype(o_ref.dtype)


# ------------------------------ host wrappers --------------------------------

def _pick_block_b(B, T, target_rows=512):
    """Largest divisor of B s.t. block_b*T stays around `target_rows` MXU rows."""
    bb = max(1, min(B, max(1, target_rows // max(T, 1))))
    while B % bb:
        bb -= 1
    return bb


def tcm_list_forward(x, params_list, dilas, is_causal=True,
                     matmul_dtype=jnp.bfloat16, block_b=None):
    """Fused forward of the whole Tcm_list (all Glu layers in one pallas_call)."""
    B, T, C = x.shape
    assert len(params_list) == len(dilas) and len(dilas) >= 1
    if block_b is None:
        block_b = _pick_block_b(B, T)
    assert B % block_b == 0

    w_dt = matmul_dtype
    w_in = jnp.stack([p['w_in'] for p in params_list]).astype(w_dt)     # (L,256,64)
    w_d = jnp.stack([jnp.concatenate([p['wd0'], p['wd1'], p['wd2']], axis=0)
                     for p in params_list]).astype(w_dt)                # (L,192,64)
    w_out = jnp.stack([p['w_out'] for p in params_list]).astype(w_dt)   # (L,64,256)
    pvec = jnp.stack([jnp.concatenate(
        [p['a1'], p['g1'], p['b1'], p['a2'], p['g2'], p['b2'],
         jnp.zeros((2, p['a1'].shape[-1]), jnp.float32)], axis=0)
        for p in params_list])                                          # (L,8,64)

    kernel = functools.partial(
        _tcm_kernel, dilas=tuple(int(d) for d in dilas),
        is_causal=bool(is_causal), matmul_dtype=matmul_dtype)

    def full_spec(arr):
        n = arr.ndim
        return pl.BlockSpec(arr.shape, lambda b, n=n: (0,) * n)

    # TODO(synk): for very long T, tile the time axis and carry streaming cLN
    # running sums across T-tiles instead of keeping the full (block_b, T, 256)
    # slab resident (needed to stay within v7x's 64 MiB VMEM at large T).
    return pl.pallas_call(
        kernel,
        out_shape=jax.ShapeDtypeStruct((B, T, C), jnp.float32),
        grid=(B // block_b,),
        in_specs=[pl.BlockSpec((block_b, T, C), lambda b: (b, 0, 0)),
                  full_spec(w_in), full_spec(w_d), full_spec(w_out),
                  full_spec(pvec)],
        out_specs=pl.BlockSpec((block_b, T, C), lambda b: (b, 0, 0)),
        compiler_params=pltpu.CompilerParams(
            dimension_semantics=("parallel",)),
    )(x, w_in, w_d, w_out, pvec)


def init_glu_params(key):
    k0, k1, k2 = jax.random.split(key, 3)
    p = {
        'w_in': jax.random.normal(k0, (256, 64), jnp.float32) * 0.06,
        'a1': jnp.full((1, 64), 0.25, jnp.float32),       # PReLU default init
        'g1': jnp.ones((1, 64), jnp.float32),
        'b1': jnp.zeros((1, 64), jnp.float32),
        'a2': jnp.full((1, 64), 0.25, jnp.float32),
        'g2': jnp.ones((1, 64), jnp.float32),
        'b2': jnp.zeros((1, 64), jnp.float32),
        'w_out': jax.random.normal(k2, (64, 256), jnp.float32) * 0.1,
    }
    wd = jax.random.normal(k1, (3, 64, 64), jnp.float32) * 0.07
    p['wd0'], p['wd1'], p['wd2'] = wd[0], wd[1], wd[2]
    return p


# --------------------------- pure-JAX reference ------------------------------

_HI = jax.lax.Precision.HIGHEST


def _cln_ref(h, gain, bias):  # h: (B, T, C)
    C = h.shape[-1]
    s = jnp.cumsum(jnp.sum(h, axis=-1), axis=-1)
    ps = jnp.cumsum(jnp.sum(h * h, axis=-1), axis=-1)
    cnt = jnp.arange(1, h.shape[1] + 1, dtype=jnp.float32) * C
    mean = s / cnt
    var = (ps - 2.0 * mean * s) / cnt + mean ** 2
    std = jnp.sqrt(var + EPS)
    return (h - mean[..., None]) / std[..., None] * gain + bias


def glu_ref(x, p, dilation, is_causal=True):
    T = x.shape[1]
    h = jnp.einsum('btc,cd->btd', x, p['w_in'], precision=_HI)
    h = jnp.where(h >= 0, h, p['a1'] * h)
    h = _cln_ref(h, p['g1'], p['b1'])

    def shift(u, d):
        if d == 0:
            return u
        if d > 0:
            pad = jnp.zeros((u.shape[0], d, u.shape[2]), u.dtype)
            return jnp.concatenate([pad, u], axis=1)[:, :T]
        d = -d
        pad = jnp.zeros((u.shape[0], d, u.shape[2]), u.dtype)
        return jnp.concatenate([u, pad], axis=1)[:, d:]

    u0 = jnp.einsum('btc,cd->btd', h, p['wd0'], precision=_HI)
    u1 = jnp.einsum('btc,cd->btd', h, p['wd1'], precision=_HI)
    u2 = jnp.einsum('btc,cd->btd', h, p['wd2'], precision=_HI)
    sh = (2 * dilation, dilation, 0) if is_causal else (dilation, 0, -dilation)
    h = shift(u0, sh[0]) + shift(u1, sh[1]) + shift(u2, sh[2])

    h = jnp.where(h >= 0, h, p['a2'] * h)
    h = _cln_ref(h, p['g2'], p['b2'])
    y = jnp.einsum('btd,dc->btc', h, p['w_out'], precision=_HI)
    return y + x


def tcm_list_ref(x, params_list, dilas, is_causal=True):
    for p, d in zip(params_list, dilas):
        x = glu_ref(x, p, d, is_causal)
    return x


# ----------------------------------- main ------------------------------------

if __name__ == "__main__":
    B, T = 2, 16            # batch, sequence length (channels 256/64 fixed by Glu)
    dilas = [1, 2]          # Tcm_list dilations

    key = jax.random.PRNGKey(0)
    kx, *kps = jax.random.split(key, 1 + len(dilas))
    x = jax.random.normal(kx, (B, T, 256), jnp.float32)   # PyTorch equiv: (B, 256, T)
    params_list = [init_glu_params(k) for k in kps]

    ref_c = tcm_list_ref(x, params_list, dilas, is_causal=True)
    ref_nc = tcm_list_ref(x, params_list, dilas, is_causal=False)

    # f32 matmul path (works on every TPU generation), causal
    out_f32 = jax.block_until_ready(
        tcm_list_forward(x, params_list, dilas, is_causal=True,
                         matmul_dtype=jnp.float32))
    assert out_f32.shape == (B, T, 256)
    err = float(jnp.max(jnp.abs(out_f32 - ref_c)))
    assert err < 5e-2, f"f32 causal mismatch vs reference: {err}"

    # non-causal variant
    out_nc = jax.block_until_ready(
        tcm_list_forward(x, params_list, dilas, is_causal=False,
                         matmul_dtype=jnp.float32))
    err_nc = float(jnp.max(jnp.abs(out_nc - ref_nc)))
    assert err_nc < 5e-2, f"f32 non-causal mismatch vs reference: {err_nc}"

    # bf16 MXU operands + f32 accumulation (v6e/v7x fast path), looser tolerance
    out_bf16 = jax.block_until_ready(
        tcm_list_forward(x, params_list, dilas, is_causal=True,
                         matmul_dtype=jnp.bfloat16))
    err_bf = float(jnp.max(jnp.abs(out_bf16 - ref_c)))
    assert err_bf < 0.25, f"bf16 causal mismatch vs reference: {err_bf}"

    print("KERNEL_OK")
</pallas_src>

<mosaic_0001>
module attributes {stable_mosaic.version = 11 : i64} {
  func.func @_tcm_kernel(%arg0: i32, %arg1: memref<2x16x256xf32, #tpu.memory_space<vmem>>, %arg2: memref<2x256x64xf32, #tpu.memory_space<vmem>>, %arg3: memref<2x192x64xf32, #tpu.memory_space<vmem>>, %arg4: memref<2x64x256xf32, #tpu.memory_space<vmem>>, %arg5: memref<2x8x64xf32, #tpu.memory_space<vmem>>, %arg6: memref<2x16x256xf32, #tpu.memory_space<vmem>>) attributes {dimension_semantics = [#tpu.dimension_semantics<parallel>], iteration_bounds = array<i64: 1>, scalar_prefetch = 0 : i64, scratch_operands = 0 : i64, tpu.core_type = #tpu.core_type<tc>, window_params = [{transform_indices = @transform_0, window_bounds = array<i64: 2, 16, 256>}, {pipeline_mode = #tpu.pipeline_mode<synchronous>, transform_indices = @transform_1, window_bounds = array<i64: 2, 256, 64>}, {pipeline_mode = #tpu.pipeline_mode<synchronous>, transform_indices = @transform_2, window_bounds = array<i64: 2, 192, 64>}, {pipeline_mode = #tpu.pipeline_mode<synchronous>, transform_indices = @transform_3, window_bounds = array<i64: 2, 64, 256>}, {pipeline_mode = #tpu.pipeline_mode<synchronous>, transform_indices = @transform_4, window_bounds = array<i64: 2, 8, 64>}, {transform_indices = @transform_5, window_bounds = array<i64: 2, 16, 256>}]} {
    %c0 = arith.constant 0 : index
    %c0_0 = arith.constant 0 : index
    %c0_1 = arith.constant 0 : index
    %0 = vector.load %arg1[%c0, %c0_0, %c0_1] : memref<2x16x256xf32, #tpu.memory_space<vmem>>, vector<2x16x256xf32>
    %1 = tpu.iota {dimensions = array<i32: 1>} : vector<1x16x1xi32>
    %2 = arith.sitofp %1 : vector<1x16x1xi32> to vector<1x16x1xf32>
    %cst = arith.constant 1.000000e+00 : f32
    %3 = vector.broadcast %cst : f32 to vector<1x16x1xf32>
    %4 = arith.addf %2, %3 : vector<1x16x1xf32>
    %cst_2 = arith.constant 6.400000e+01 : f32
    %5 = vector.broadcast %cst_2 : f32 to vector<1x16x1xf32>
    %6 = arith.mulf %4, %5 : vector<1x16x1xf32>
    %c0_3 = arith.constant 0 : index
    %c0_4 = arith.constant 0 : index
    %c0_5 = arith.constant 0 : index
    %7 = vector.load %arg2[%c0_3, %c0_4, %c0_5] : memref<2x256x64xf32, #tpu.memory_space<vmem>>, vector<1x256x64xf32>
    %8 = vector.shape_cast %7 : vector<1x256x64xf32> to vector<256x64xf32>
    %c0_6 = arith.constant 0 : index
    %c0_7 = arith.constant 0 : index
    %c0_8 = arith.constant 0 : index
    %9 = vector.load %arg3[%c0_6, %c0_7, %c0_8] : memref<2x192x64xf32, #tpu.memory_space<vmem>>, vector<1x192x64xf32>
    %10 = vector.shape_cast %9 : vector<1x192x64xf32> to vector<192x64xf32>
    %c0_9 = arith.constant 0 : index
    %c0_10 = arith.constant 0 : index
    %c0_11 = arith.constant 0 : index
    %11 = vector.load %arg4[%c0_9, %c0_10, %c0_11] : memref<2x64x256xf32, #tpu.memory_space<vmem>>, vector<1x64x256xf32>
    %12 = vector.shape_cast %11 : vector<1x64x256xf32> to vector<64x256xf32>
    %c0_12 = arith.constant 0 : index
    %c0_13 = arith.constant 0 : index
    %c0_14 = arith.constant 0 : index
    %13 = vector.load %arg5[%c0_12, %c0_13, %c0_14] : memref<2x8x64xf32, #tpu.memory_space<vmem>>, vector<1x8x64xf32>
    %14 = vector.shape_cast %13 : vector<1x8x64xf32> to vector<8x64xf32>
    %15 = vector.extract_strided_slice %14 {offsets = [0, 0], sizes = [1, 64], strides = [1, 1]} : vector<8x64xf32> to vector<1x64xf32>
    %16 = vector.extract_strided_slice %14 {offsets = [1, 0], sizes = [1, 64], strides = [1, 1]} : vector<8x64xf32> to vector<1x64xf32>
    %17 = vector.extract_strided_slice %14 {offsets = [2, 0], sizes = [1, 64], strides = [1, 1]} : vector<8x64xf32> to vector<1x64xf32>
    %18 = vector.extract_strided_slice %14 {offsets = [3, 0], sizes = [1, 64], strides = [1, 1]} : vector<8x64xf32> to vector<1x64xf32>
    %19 = vector.extract_strided_slice %14 {offsets = [4, 0], sizes = [1, 64], strides = [1, 1]} : vector<8x64xf32> to vector<1x64xf32>
    %20 = vector.extract_strided_slice %14 {offsets = [5, 0], sizes = [1, 64], strides = [1, 1]} : vector<8x64xf32> to vector<1x64xf32>
    %21 = vector.shape_cast %0 : vector<2x16x256xf32> to vector<32x256xf32>
    %cst_15 = arith.constant dense<0.000000e+00> : vector<32x64xf32>
    %22 = tpu.matmul %21, %8, %cst_15 {dimension_numbers = #tpu.dot_dimension_numbers<[1], [0], [0], [1], [0, 0, 1, 1], [], []>, precision = #tpu.contract_precision<fp32>} : vector<32x256xf32>, vector<256x64xf32>, vector<32x64xf32> -> vector<32x64xf32>
    %23 = vector.shape_cast %22 : vector<32x64xf32> to vector<2x16x64xf32>
    %cst_16 = arith.constant 0.000000e+00 : f32
    %24 = vector.broadcast %cst_16 : f32 to vector<2x16x64xf32>
    %25 = arith.cmpf oge, %23, %24 : vector<2x16x64xf32>
    %26 = vector.shape_cast %15 : vector<1x64xf32> to vector<1x1x64xf32>
    %27 = vector.broadcast %26 : vector<1x1x64xf32> to vector<2x16x64xf32>
    %28 = arith.mulf %27, %23 : vector<2x16x64xf32>
    %29 = arith.select %25, %23, %28 : vector<2x16x64xi1>, vector<2x16x64xf32>
    %cst_17 = arith.constant dense<0.000000e+00> : vector<2x16xf32>
    %30 = vector.multi_reduction <add>, %29, %cst_17 [2] : vector<2x16x64xf32> to vector<2x16xf32>
    %31 = vector.shape_cast %30 : vector<2x16xf32> to vector<2x16x1xf32>
    %cst_18 = arith.constant 0.000000e+00 : f32
    %32 = vector.broadcast %cst_18 : f32 to vector<2x1x1xf32>
    %33 = vector.extract_strided_slice %31 {offsets = [0, 0, 0], sizes = [2, 15, 1], strides = [1, 1, 1]} : vector<2x16x1xf32> to vector<2x15x1xf32>
    %34 = tpu.concatenate %32, %33 in 1 : vector<2x1x1xf32>, vector<2x15x1xf32> -> vector<2x16x1xf32>
    %35 = arith.addf %31, %34 : vector<2x16x1xf32>
    %cst_19 = arith.constant 0.000000e+00 : f32
    %36 = vector.broadcast %cst_19 : f32 to vector<2x2x1xf32>
    %37 = vector.extract_strided_slice %35 {offsets = [0, 0, 0], sizes = [2, 14, 1], strides = [1, 1, 1]} : vector<2x16x1xf32> to vector<2x14x1xf32>
    %38 = tpu.concatenate %36, %37 in 1 : vector<2x2x1xf32>, vector<2x14x1xf32> -> vector<2x16x1xf32>
    %39 = arith.addf %35, %38 : vector<2x16x1xf32>
    %cst_20 = arith.constant 0.000000e+00 : f32
    %40 = vector.broadcast %cst_20 : f32 to vector<2x4x1xf32>
    %41 = vector.extract_strided_slice %39 {offsets = [0, 0, 0], sizes = [2, 12, 1], strides = [1, 1, 1]} : vector<2x16x1xf32> to vector<2x12x1xf32>
    %42 = tpu.concatenate %40, %41 in 1 : vector<2x4x1xf32>, vector<2x12x1xf32> -> vector<2x16x1xf32>
    %43 = arith.addf %39, %42 : vector<2x16x1xf32>
    %cst_21 = arith.constant 0.000000e+00 : f32
    %44 = vector.broadcast %cst_21 : f32 to vector<2x8x1xf32>
    %45 = vector.extract_strided_slice %43 {offsets = [0, 0, 0], sizes = [2, 8, 1], strides = [1, 1, 1]} : vector<2x16x1xf32> to vector<2x8x1xf32>
    %46 = tpu.concatenate %44, %45 in 1 : vector<2x8x1xf32>, vector<2x8x1xf32> -> vector<2x16x1xf32>
    %47 = arith.addf %43, %46 : vector<2x16x1xf32>
    %48 = arith.mulf %29, %29 : vector<2x16x64xf32>
    %cst_22 = arith.constant dense<0.000000e+00> : vector<2x16xf32>
    %49 = vector.multi_reduction <add>, %48, %cst_22 [2] : vector<2x16x64xf32> to vector<2x16xf32>
    %50 = vector.shape_cast %49 : vector<2x16xf32> to vector<2x16x1xf32>
    %cst_23 = arith.constant 0.000000e+00 : f32
    %51 = vector.broadcast %cst_23 : f32 to vector<2x1x1xf32>
    %52 = vector.extract_strided_slice %50 {offsets = [0, 0, 0], sizes = [2, 15, 1], strides = [1, 1, 1]} : vector<2x16x1xf32> to vector<2x15x1xf32>
    %53 = tpu.concatenate %51, %52 in 1 : vector<2x1x1xf32>, vector<2x15x1xf32> -> vector<2x16x1xf32>
    %54 = arith.addf %50, %53 : vector<2x16x1xf32>
    %cst_24 = arith.constant 0.000000e+00 : f32
    %55 = vector.broadcast %cst_24 : f32 to vector<2x2x1xf32>
    %56 = vector.extract_strided_slice %54 {offsets = [0, 0, 0], sizes = [2, 14, 1], strides = [1, 1, 1]} : vector<2x16x1xf32> to vector<2x14x1xf32>
    %57 = tpu.concatenate %55, %56 in 1 : vector<2x2x1xf32>, vector<2x14x1xf32> -> vector<2x16x1xf32>
    %58 = arith.addf %54, %57 : vector<2x16x1xf32>
    %cst_25 = arith.constant 0.000000e+00 : f32
    %59 = vector.broadcast %cst_25 : f32 to vector<2x4x1xf32>
    %60 = vector.extract_strided_slice %58 {offsets = [0, 0, 0], sizes = [2, 12, 1], strides = [1, 1, 1]} : vector<2x16x1xf32> to vector<2x12x1xf32>
    %61 = tpu.concatenate %59, %60 in 1 : vector<2x4x1xf32>, vector<2x12x1xf32> -> vector<2x16x1xf32>
    %62 = arith.addf %58, %61 : vector<2x16x1xf32>
    %cst_26 = arith.constant 0.000000e+00 : f32
    %63 = vector.broadcast %cst_26 : f32 to vector<2x8x1xf32>
    %64 = vector.extract_strided_slice %62 {offsets = [0, 0, 0], sizes = [2, 8, 1], strides = [1, 1, 1]} : vector<2x16x1xf32> to vector<2x8x1xf32>
    %65 = tpu.concatenate %63, %64 in 1 : vector<2x8x1xf32>, vector<2x8x1xf32> -> vector<2x16x1xf32>
    %66 = arith.addf %62, %65 : vector<2x16x1xf32>
    %67 = vector.broadcast %6 : vector<1x16x1xf32> to vector<2x16x1xf32>
    %68 = arith.divf %47, %67 : vector<2x16x1xf32>
    %cst_27 = arith.constant 2.000000e+00 : f32
    %69 = vector.broadcast %cst_27 : f32 to vector<2x16x1xf32>
    %70 = arith.mulf %69, %68 : vector<2x16x1xf32>
    %71 = arith.mulf %70, %47 : vector<2x16x1xf32>
    %72 = arith.subf %66, %71 : vector<2x16x1xf32>
    %73 = vector.broadcast %6 : vector<1x16x1xf32> to vector<2x16x1xf32>
    %74 = arith.divf %72, %73 : vector<2x16x1xf32>
    %75 = arith.mulf %68, %68 : vector<2x16x1xf32>
    %76 = arith.addf %74, %75 : vector<2x16x1xf32>
    %cst_28 = arith.constant 9.99999974E-6 : f32
    %77 = vector.broadcast %cst_28 : f32 to vector<2x16x1xf32>
    %78 = arith.addf %76, %77 : vector<2x16x1xf32>
    %79 = math.sqrt %78 : vector<2x16x1xf32>
    %80 = vector.broadcast %68 : vector<2x16x1xf32> to vector<2x16x64xf32>
    %81 = arith.subf %29, %80 : vector<2x16x64xf32>
    %82 = vector.broadcast %79 : vector<2x16x1xf32> to vector<2x16x64xf32>
    %83 = arith.divf %81, %82 : vector<2x16x64xf32>
    %84 = vector.shape_cast %16 : vector<1x64xf32> to vector<1x1x64xf32>
    %85 = vector.broadcast %84 : vector<1x1x64xf32> to vector<2x16x64xf32>
    %86 = arith.mulf %83, %85 : vector<2x16x64xf32>
    %87 = vector.shape_cast %17 : vector<1x64xf32> to vector<1x1x64xf32>
    %88 = vector.broadcast %87 : vector<1x1x64xf32> to vector<2x16x64xf32>
    %89 = arith.addf %86, %88 : vector<2x16x64xf32>
    %cst_29 = arith.constant 0.000000e+00 : f32
    %90 = vector.broadcast %cst_29 : f32 to vector<2x2x64xf32>
    %91 = vector.extract_strided_slice %89 {offsets = [0, 0, 0], sizes = [2, 14, 64], strides = [1, 1, 1]} : vector<2x16x64xf32> to vector<2x14x64xf32>
    %92 = tpu.concatenate %90, %91 in 1 : vector<2x2x64xf32>, vector<2x14x64xf32> -> vector<2x16x64xf32>
    %cst_30 = arith.constant 0.000000e+00 : f32
    %93 = vector.broadcast %cst_30 : f32 to vector<2x1x64xf32>
    %94 = vector.extract_strided_slice %89 {offsets = [0, 0, 0], sizes = [2, 15, 64], strides = [1, 1, 1]} : vector<2x16x64xf32> to vector<2x15x64xf32>
    %95 = tpu.concatenate %93, %94 in 1 : vector<2x1x64xf32>, vector<2x15x64xf32> -> vector<2x16x64xf32>
    %96 = tpu.concatenate %92, %95, %89 in 2 : vector<2x16x64xf32>, vector<2x16x64xf32>, vector<2x16x64xf32> -> vector<2x16x192xf32>
    %97 = vector.shape_cast %96 : vector<2x16x192xf32> to vector<32x192xf32>
    %cst_31 = arith.constant dense<0.000000e+00> : vector<32x64xf32>
    %98 = tpu.matmul %97, %10, %cst_31 {dimension_numbers = #tpu.dot_dimension_numbers<[1], [0], [0], [1], [0, 0, 1, 1], [], []>, precision = #tpu.contract_precision<fp32>} : vector<32x192xf32>, vector<192x64xf32>, vector<32x64xf32> -> vector<32x64xf32>
    %99 = vector.shape_cast %98 : vector<32x64xf32> to vector<2x16x64xf32>
    %cst_32 = arith.constant 0.000000e+00 : f32
    %100 = vector.broadcast %cst_32 : f32 to vector<2x16x64xf32>
    %101 = arith.cmpf oge, %99, %100 : vector<2x16x64xf32>
    %102 = vector.shape_cast %18 : vector<1x64xf32> to vector<1x1x64xf32>
    %103 = vector.broadcast %102 : vector<1x1x64xf32> to vector<2x16x64xf32>
    %104 = arith.mulf %103, %99 : vector<2x16x64xf32>
    %105 = arith.select %101, %99, %104 : vector<2x16x64xi1>, vector<2x16x64xf32>
    %cst_33 = arith.constant dense<0.000000e+00> : vector<2x16xf32>
    %106 = vector.multi_reduction <add>, %105, %cst_33 [2] : vector<2x16x64xf32> to vector<2x16xf32>
    %107 = vector.shape_cast %106 : vector<2x16xf32> to vector<2x16x1xf32>
    %cst_34 = arith.constant 0.000000e+00 : f32
    %108 = vector.broadcast %cst_34 : f32 to vector<2x1x1xf32>
    %109 = vector.extract_strided_slice %107 {offsets = [0, 0, 0], sizes = [2, 15, 1], strides = [1, 1, 1]} : vector<2x16x1xf32> to vector<2x15x1xf32>
    %110 = tpu.concatenate %108, %109 in 1 : vector<2x1x1xf32>, vector<2x15x1xf32> -> vector<2x16x1xf32>
    %111 = arith.addf %107, %110 : vector<2x16x1xf32>
    %cst_35 = arith.constant 0.000000e+00 : f32
    %112 = vector.broadcast %cst_35 : f32 to vector<2x2x1xf32>
    %113 = vector.extract_strided_slice %111 {offsets = [0, 0, 0], sizes = [2, 14, 1], strides = [1, 1, 1]} : vector<2x16x1xf32> to vector<2x14x1xf32>
    %114 = tpu.concatenate %112, %113 in 1 : vector<2x2x1xf32>, vector<2x14x1xf32> -> vector<2x16x1xf32>
    %115 = arith.addf %111, %114 : vector<2x16x1xf32>
    %cst_36 = arith.constant 0.000000e+00 : f32
    %116 = vector.broadcast %cst_36 : f32 to vector<2x4x1xf32>
    %117 = vector.extract_strided_slice %115 {offsets = [0, 0, 0], sizes = [2, 12, 1], strides = [1, 1, 1]} : vector<2x16x1xf32> to vector<2x12x1xf32>
    %118 = tpu.concatenate %116, %117 in 1 : vector<2x4x1xf32>, vector<2x12x1xf32> -> vector<2x16x1xf32>
    %119 = arith.addf %115, %118 : vector<2x16x1xf32>
    %cst_37 = arith.constant 0.000000e+00 : f32
    %120 = vector.broadcast %cst_37 : f32 to vector<2x8x1xf32>
    %121 = vector.extract_strided_slice %119 {offsets = [0, 0, 0], sizes = [2, 8, 1], strides = [1, 1, 1]} : vector<2x16x1xf32> to vector<2x8x1xf32>
    %122 = tpu.concatenate %120, %121 in 1 : vector<2x8x1xf32>, vector<2x8x1xf32> -> vector<2x16x1xf32>
    %123 = arith.addf %119, %122 : vector<2x16x1xf32>
    %124 = arith.mulf %105, %105 : vector<2x16x64xf32>
    %cst_38 = arith.constant dense<0.000000e+00> : vector<2x16xf32>
    %125 = vector.multi_reduction <add>, %124, %cst_38 [2] : vector<2x16x64xf32> to vector<2x16xf32>
    %126 = vector.shape_cast %125 : vector<2x16xf32> to vector<2x16x1xf32>
    %cst_39 = arith.constant 0.000000e+00 : f32
    %127 = vector.broadcast %cst_39 : f32 to vector<2x1x1xf32>
    %128 = vector.extract_strided_slice %126 {offsets = [0, 0, 0], sizes = [2, 15, 1], strides = [1, 1, 1]} : vector<2x16x1xf32> to vector<2x15x1xf32>
    %129 = tpu.concatenate %127, %128 in 1 : vector<2x1x1xf32>, vector<2x15x1xf32> -> vector<2x16x1xf32>
    %130 = arith.addf %126, %129 : vector<2x16x1xf32>
    %cst_40 = arith.constant 0.000000e+00 : f32
    %131 = vector.broadcast %cst_40 : f32 to vector<2x2x1xf32>
    %132 = vector.extract_strided_slice %130 {offsets = [0, 0, 0], sizes = [2, 14, 1], strides = [1, 1, 1]} : vector<2x16x1xf32> to vector<2x14x1xf32>
    %133 = tpu.concatenate %131, %132 in 1 : vector<2x2x1xf32>, vector<2x14x1xf32> -> vector<2x16x1xf32>
    %134 = arith.addf %130, %133 : vector<2x16x1xf32>
    %cst_41 = arith.constant 0.000000e+00 : f32
    %135 = vector.broadcast %cst_41 : f32 to vector<2x4x1xf32>
    %136 = vector.extract_strided_slice %134 {offsets = [0, 0, 0], sizes = [2, 12, 1], strides = [1, 1, 1]} : vector<2x16x1xf32> to vector<2x12x1xf32>
    %137 = tpu.concatenate %135, %136 in 1 : vector<2x4x1xf32>, vector<2x12x1xf32> -> vector<2x16x1xf32>
    %138 = arith.addf %134, %137 : vector<2x16x1xf32>
    %cst_42 = arith.constant 0.000000e+00 : f32
    %139 = vector.broadcast %cst_42 : f32 to vector<2x8x1xf32>
    %140 = vector.extract_strided_slice %138 {offsets = [0, 0, 0], sizes = [2, 8, 1], strides = [1, 1, 1]} : vector<2x16x1xf32> to vector<2x8x1xf32>
    %141 = tpu.concatenate %139, %140 in 1 : vector<2x8x1xf32>, vector<2x8x1xf32> -> vector<2x16x1xf32>
    %142 = arith.addf %138, %141 : vector<2x16x1xf32>
    %143 = vector.broadcast %6 : vector<1x16x1xf32> to vector<2x16x1xf32>
    %144 = arith.divf %123, %143 : vector<2x16x1xf32>
    %cst_43 = arith.constant 2.000000e+00 : f32
    %145 = vector.broadcast %cst_43 : f32 to vector<2x16x1xf32>
    %146 = arith.mulf %145, %144 : vector<2x16x1xf32>
    %147 = arith.mulf %146, %123 : vector<2x16x1xf32>
    %148 = arith.subf %142, %147 : vector<2x16x1xf32>
    %149 = vector.broadcast %6 : vector<1x16x1xf32> to vector<2x16x1xf32>
    %150 = arith.divf %148, %149 : vector<2x16x1xf32>
    %151 = arith.mulf %144, %144 : vector<2x16x1xf32>
    %152 = arith.addf %150, %151 : vector<2x16x1xf32>
    %cst_44 = arith.constant 9.99999974E-6 : f32
    %153 = vector.broadcast %cst_44 : f32 to vector<2x16x1xf32>
    %154 = arith.addf %152, %153 : vector<2x16x1xf32>
    %155 = math.sqrt %154 : vector<2x16x1xf32>
    %156 = vector.broadcast %144 : vector<2x16x1xf32> to vector<2x16x64xf32>
    %157 = arith.subf %105, %156 : vector<2x16x64xf32>
    %158 = vector.broadcast %155 : vector<2x16x1xf32> to vector<2x16x64xf32>
    %159 = arith.divf %157, %158 : vector<2x16x64xf32>
    %160 = vector.shape_cast %19 : vector<1x64xf32> to vector<1x1x64xf32>
    %161 = vector.broadcast %160 : vector<1x1x64xf32> to vector<2x16x64xf32>
    %162 = arith.mulf %159, %161 : vector<2x16x64xf32>
    %163 = vector.shape_cast %20 : vector<1x64xf32> to vector<1x1x64xf32>
    %164 = vector.broadcast %163 : vector<1x1x64xf32> to vector<2x16x64xf32>
    %165 = arith.addf %162, %164 : vector<2x16x64xf32>
    %166 = vector.shape_cast %165 : vector<2x16x64xf32> to vector<32x64xf32>
    %cst_45 = arith.constant dense<0.000000e+00> : vector<32x256xf32>
    %167 = tpu.matmul %166, %12, %cst_45 {dimension_numbers = #tpu.dot_dimension_numbers<[1], [0], [0], [1], [0, 0, 1, 1], [], []>, precision = #tpu.contract_precision<fp32>} : vector<32x64xf32>, vector<64x256xf32>, vector<32x256xf32> -> vector<32x256xf32>
    %168 = vector.shape_cast %167 : vector<32x256xf32> to vector<2x16x256xf32>
    %169 = arith.addf %0, %168 : vector<2x16x256xf32>
    %c1 = arith.constant 1 : index
    %c0_46 = arith.constant 0 : index
    %c0_47 = arith.constant 0 : index
    %170 = vector.load %arg2[%c1, %c0_46, %c0_47] : memref<2x256x64xf32, #tpu.memory_space<vmem>>, vector<1x256x64xf32>
    %171 = vector.shape_cast %170 : vector<1x256x64xf32> to vector<256x64xf32>
    %c1_48 = arith.constant 1 : index
    %c0_49 = arith.constant 0 : index
    %c0_50 = arith.constant 0 : index
    %172 = vector.load %arg3[%c1_48, %c0_49, %c0_50] : memref<2x192x64xf32, #tpu.memory_space<vmem>>, vector<1x192x64xf32>
    %173 = vector.shape_cast %172 : vector<1x192x64xf32> to vector<192x64xf32>
    %c1_51 = arith.constant 1 : index
    %c0_52 = arith.constant 0 : index
    %c0_53 = arith.constant 0 : index
    %174 = vector.load %arg4[%c1_51, %c0_52, %c0_53] : memref<2x64x256xf32, #tpu.memory_space<vmem>>, vector<1x64x256xf32>
    %175 = vector.shape_cast %174 : vector<1x64x256xf32> to vector<64x256xf32>
    %c1_54 = arith.constant 1 : index
    %c0_55 = arith.constant 0 : index
    %c0_56 = arith.constant 0 : index
    %176 = vector.load %arg5[%c1_54, %c0_55, %c0_56] : memref<2x8x64xf32, #tpu.memory_space<vmem>>, vector<1x8x64xf32>
    %177 = vector.shape_cast %176 : vector<1x8x64xf32> to vector<8x64xf32>
    %178 = vector.extract_strided_slice %177 {offsets = [0, 0], sizes = [1, 64], strides = [1, 1]} : vector<8x64xf32> to vector<1x64xf32>
    %179 = vector.extract_strided_slice %177 {offsets = [1, 0], sizes = [1, 64], strides = [1, 1]} : vector<8x64xf32> to vector<1x64xf32>
    %180 = vector.extract_strided_slice %177 {offsets = [2, 0], sizes = [1, 64], strides = [1, 1]} : vector<8x64xf32> to vector<1x64xf32>
    %181 = vector.extract_strided_slice %177 {offsets = [3, 0], sizes = [1, 64], strides = [1, 1]} : vector<8x64xf32> to vector<1x64xf32>
    %182 = vector.extract_strided_slice %177 {offsets = [4, 0], sizes = [1, 64], strides = [1, 1]} : vector<8x64xf32> to vector<1x64xf32>
    %183 = vector.extract_strided_slice %177 {offsets = [5, 0], sizes = [1, 64], strides = [1, 1]} : vector<8x64xf32> to vector<1x64xf32>
    %184 = vector.shape_cast %169 : vector<2x16x256xf32> to vector<32x256xf32>
    %cst_57 = arith.constant dense<0.000000e+00> : vector<32x64xf32>
    %185 = tpu.matmul %184, %171, %cst_57 {dimension_numbers = #tpu.dot_dimension_numbers<[1], [0], [0], [1], [0, 0, 1, 1], [], []>, precision = #tpu.contract_precision<fp32>} : vector<32x256xf32>, vector<256x64xf32>, vector<32x64xf32> -> vector<32x64xf32>
    %186 = vector.shape_cast %185 : vector<32x64xf32> to vector<2x16x64xf32>
    %cst_58 = arith.constant 0.000000e+00 : f32
    %187 = vector.broadcast %cst_58 : f32 to vector<2x16x64xf32>
    %188 = arith.cmpf oge, %186, %187 : vector<2x16x64xf32>
    %189 = vector.shape_cast %178 : vector<1x64xf32> to vector<1x1x64xf32>
    %190 = vector.broadcast %189 : vector<1x1x64xf32> to vector<2x16x64xf32>
    %191 = arith.mulf %190, %186 : vector<2x16x64xf32>
    %192 = arith.select %188, %186, %191 : vector<2x16x64xi1>, vector<2x16x64xf32>
    %cst_59 = arith.constant dense<0.000000e+00> : vector<2x16xf32>
    %193 = vector.multi_reduction <add>, %192, %cst_59 [2] : vector<2x16x64xf32> to vector<2x16xf32>
    %194 = vector.shape_cast %193 : vector<2x16xf32> to vector<2x16x1xf32>
    %cst_60 = arith.constant 0.000000e+00 : f32
    %195 = vector.broadcast %cst_60 : f32 to vector<2x1x1xf32>
    %196 = vector.extract_strided_slice %194 {offsets = [0, 0, 0], sizes = [2, 15, 1], strides = [1, 1, 1]} : vector<2x16x1xf32> to vector<2x15x1xf32>
    %197 = tpu.concatenate %195, %196 in 1 : vector<2x1x1xf32>, vector<2x15x1xf32> -> vector<2x16x1xf32>
    %198 = arith.addf %194, %197 : vector<2x16x1xf32>
    %cst_61 = arith.constant 0.000000e+00 : f32
    %199 = vector.broadcast %cst_61 : f32 to vector<2x2x1xf32>
    %200 = vector.extract_strided_slice %198 {offsets = [0, 0, 0], sizes = [2, 14, 1], strides = [1, 1, 1]} : vector<2x16x1xf32> to vector<2x14x1xf32>
    %201 = tpu.concatenate %199, %200 in 1 : vector<2x2x1xf32>, vector<2x14x1xf32> -> vector<2x16x1xf32>
    %202 = arith.addf %198, %201 : vector<2x16x1xf32>
    %cst_62 = arith.constant 0.000000e+00 : f32
    %203 = vector.broadcast %cst_62 : f32 to vector<2x4x1xf32>
    %204 = vector.extract_strided_slice %202 {offsets = [0, 0, 0], sizes = [2, 12, 1], strides = [1, 1, 1]} : vector<2x16x1xf32> to vector<2x12x1xf32>
    %205 = tpu.concatenate %203, %204 in 1 : vector<2x4x1xf32>, vector<2x12x1xf32> -> vector<2x16x1xf32>
    %206 = arith.addf %202, %205 : vector<2x16x1xf32>
    %cst_63 = arith.constant 0.000000e+00 : f32
    %207 = vector.broadcast %cst_63 : f32 to vector<2x8x1xf32>
    %208 = vector.extract_strided_slice %206 {offsets = [0, 0, 0], sizes = [2, 8, 1], strides = [1, 1, 1]} : vector<2x16x1xf32> to vector<2x8x1xf32>
    %209 = tpu.concatenate %207, %208 in 1 : vector<2x8x1xf32>, vector<2x8x1xf32> -> vector<2x16x1xf32>
    %210 = arith.addf %206, %209 : vector<2x16x1xf32>
    %211 = arith.mulf %192, %192 : vector<2x16x64xf32>
    %cst_64 = arith.constant dense<0.000000e+00> : vector<2x16xf32>
    %212 = vector.multi_reduction <add>, %211, %cst_64 [2] : vector<2x16x64xf32> to vector<2x16xf32>
    %213 = vector.shape_cast %212 : vector<2x16xf32> to vector<2x16x1xf32>
    %cst_65 = arith.constant 0.000000e+00 : f32
    %214 = vector.broadcast %cst_65 : f32 to vector<2x1x1xf32>
    %215 = vector.extract_strided_slice %213 {offsets = [0, 0, 0], sizes = [2, 15, 1], strides = [1, 1, 1]} : vector<2x16x1xf32> to vector<2x15x1xf32>
    %216 = tpu.concatenate %214, %215 in 1 : vector<2x1x1xf32>, vector<2x15x1xf32> -> vector<2x16x1xf32>
    %217 = arith.addf %213, %216 : vector<2x16x1xf32>
    %cst_66 = arith.constant 0.000000e+00 : f32
    %218 = vector.broadcast %cst_66 : f32 to vector<2x2x1xf32>
    %219 = vector.extract_strided_slice %217 {offsets = [0, 0, 0], sizes = [2, 14, 1], strides = [1, 1, 1]} : vector<2x16x1xf32> to vector<2x14x1xf32>
    %220 = tpu.concatenate %218, %219 in 1 : vector<2x2x1xf32>, vector<2x14x1xf32> -> vector<2x16x1xf32>
    %221 = arith.addf %217, %220 : vector<2x16x1xf32>
    %cst_67 = arith.constant 0.000000e+00 : f32
    %222 = vector.broadcast %cst_67 : f32 to vector<2x4x1xf32>
    %223 = vector.extract_strided_slice %221 {offsets = [0, 0, 0], sizes = [2, 12, 1], strides = [1, 1, 1]} : vector<2x16x1xf32> to vector<2x12x1xf32>
    %224 = tpu.concatenate %222, %223 in 1 : vector<2x4x1xf32>, vector<2x12x1xf32> -> vector<2x16x1xf32>
    %225 = arith.addf %221, %224 : vector<2x16x1xf32>
    %cst_68 = arith.constant 0.000000e+00 : f32
    %226 = vector.broadcast %cst_68 : f32 to vector<2x8x1xf32>
    %227 = vector.extract_strided_slice %225 {offsets = [0, 0, 0], sizes = [2, 8, 1], strides = [1, 1, 1]} : vector<2x16x1xf32> to vector<2x8x1xf32>
    %228 = tpu.concatenate %226, %227 in 1 : vector<2x8x1xf32>, vector<2x8x1xf32> -> vector<2x16x1xf32>
    %229 = arith.addf %225, %228 : vector<2x16x1xf32>
    %230 = vector.broadcast %6 : vector<1x16x1xf32> to vector<2x16x1xf32>
    %231 = arith.divf %210, %230 : vector<2x16x1xf32>
    %cst_69 = arith.constant 2.000000e+00 : f32
    %232 = vector.broadcast %cst_69 : f32 to vector<2x16x1xf32>
    %233 = arith.mulf %232, %231 : vector<2x16x1xf32>
    %234 = arith.mulf %233, %210 : vector<2x16x1xf32>
    %235 = arith.subf %229, %234 : vector<2x16x1xf32>
    %236 = vector.broadcast %6 : vector<1x16x1xf32> to vector<2x16x1xf32>
    %237 = arith.divf %235, %236 : vector<2x16x1xf32>
    %238 = arith.mulf %231, %231 : vector<2x16x1xf32>
    %239 = arith.addf %237, %238 : vector<2x16x1xf32>
    %cst_70 = arith.constant 9.99999974E-6 : f32
    %240 = vector.broadcast %cst_70 : f32 to vector<2x16x1xf32>
    %241 = arith.addf %239, %240 : vector<2x16x1xf32>
    %242 = math.sqrt %241 : vector<2x16x1xf32>
    %243 = vector.broadcast %231 : vector<2x16x1xf32> to vector<2x16x64xf32>
    %244 = arith.subf %192, %243 : vector<2x16x64xf32>
    %245 = vector.broadcast %242 : vector<2x16x1xf32> to vector<2x16x64xf32>
    %246 = arith.divf %244, %245 : vector<2x16x64xf32>
    %247 = vector.shape_cast %179 : vector<1x64xf32> to vector<1x1x64xf32>
    %248 = vector.broadcast %247 : vector<1x1x64xf32> to vector<2x16x64xf32>
    %249 = arith.mulf %246, %248 : vector<2x16x64xf32>
    %250 = vector.shape_cast %180 : vector<1x64xf32> to vector<1x1x64xf32>
    %251 = vector.broadcast %250 : vector<1x1x64xf32> to vector<2x16x64xf32>
    %252 = arith.addf %249, %251 : vector<2x16x64xf32>
    %cst_71 = arith.constant 0.000000e+00 : f32
    %253 = vector.broadcast %cst_71 : f32 to vector<2x4x64xf32>
    %254 = vector.extract_strided_slice %252 {offsets = [0, 0, 0], sizes = [2, 12, 64], strides = [1, 1, 1]} : vector<2x16x64xf32> to vector<2x12x64xf32>
    %255 = tpu.concatenate %253, %254 in 1 : vector<2x4x64xf32>, vector<2x12x64xf32> -> vector<2x16x64xf32>
    %cst_72 = arith.constant 0.000000e+00 : f32
    %256 = vector.broadcast %cst_72 : f32 to vector<2x2x64xf32>
    %257 = vector.extract_strided_slice %252 {offsets = [0, 0, 0], sizes = [2, 14, 64], strides = [1, 1, 1]} : vector<2x16x64xf32> to vector<2x14x64xf32>
    %258 = tpu.concatenate %256, %257 in 1 : vector<2x2x64xf32>, vector<2x14x64xf32> -> vector<2x16x64xf32>
    %259 = tpu.concatenate %255, %258, %252 in 2 : vector<2x16x64xf32>, vector<2x16x64xf32>, vector<2x16x64xf32> -> vector<2x16x192xf32>
    %260 = vector.shape_cast %259 : vector<2x16x192xf32> to vector<32x192xf32>
    %cst_73 = arith.constant dense<0.000000e+00> : vector<32x64xf32>
    %261 = tpu.matmul %260, %173, %cst_73 {dimension_numbers = #tpu.dot_dimension_numbers<[1], [0], [0], [1], [0, 0, 1, 1], [], []>, precision = #tpu.contract_precision<fp32>} : vector<32x192xf32>, vector<192x64xf32>, vector<32x64xf32> -> vector<32x64xf32>
    %262 = vector.shape_cast %261 : vector<32x64xf32> to vector<2x16x64xf32>
    %cst_74 = arith.constant 0.000000e+00 : f32
    %263 = vector.broadcast %cst_74 : f32 to vector<2x16x64xf32>
    %264 = arith.cmpf oge, %262, %263 : vector<2x16x64xf32>
    %265 = vector.shape_cast %181 : vector<1x64xf32> to vector<1x1x64xf32>
    %266 = vector.broadcast %265 : vector<1x1x64xf32> to vector<2x16x64xf32>
    %267 = arith.mulf %266, %262 : vector<2x16x64xf32>
    %268 = arith.select %264, %262, %267 : vector<2x16x64xi1>, vector<2x16x64xf32>
    %cst_75 = arith.constant dense<0.000000e+00> : vector<2x16xf32>
    %269 = vector.multi_reduction <add>, %268, %cst_75 [2] : vector<2x16x64xf32> to vector<2x16xf32>
    %270 = vector.shape_cast %269 : vector<2x16xf32> to vector<2x16x1xf32>
    %cst_76 = arith.constant 0.000000e+00 : f32
    %271 = vector.broadcast %cst_76 : f32 to vector<2x1x1xf32>
    %272 = vector.extract_strided_slice %270 {offsets = [0, 0, 0], sizes = [2, 15, 1], strides = [1, 1, 1]} : vector<2x16x1xf32> to vector<2x15x1xf32>
    %273 = tpu.concatenate %271, %272 in 1 : vector<2x1x1xf32>, vector<2x15x1xf32> -> vector<2x16x1xf32>
    %274 = arith.addf %270, %273 : vector<2x16x1xf32>
    %cst_77 = arith.constant 0.000000e+00 : f32
    %275 = vector.broadcast %cst_77 : f32 to vector<2x2x1xf32>
    %276 = vector.extract_strided_slice %274 {offsets = [0, 0, 0], sizes = [2, 14, 1], strides = [1, 1, 1]} : vector<2x16x1xf32> to vector<2x14x1xf32>
    %277 = tpu.concatenate %275, %276 in 1 : vector<2x2x1xf32>, vector<2x14x1xf32> -> vector<2x16x1xf32>
    %278 = arith.addf %274, %277 : vector<2x16x1xf32>
    %cst_78 = arith.constant 0.000000e+00 : f32
    %279 = vector.broadcast %cst_78 : f32 to vector<2x4x1xf32>
    %280 = vector.extract_strided_slice %278 {offsets = [0, 0, 0], sizes = [2, 12, 1], strides = [1, 1, 1]} : vector<2x16x1xf32> to vector<2x12x1xf32>
    %281 = tpu.concatenate %279, %280 in 1 : vector<2x4x1xf32>, vector<2x12x1xf32> -> vector<2x16x1xf32>
    %282 = arith.addf %278, %281 : vector<2x16x1xf32>
    %cst_79 = arith.constant 0.000000e+00 : f32
    %283 = vector.broadcast %cst_79 : f32 to vector<2x8x1xf32>
    %284 = vector.extract_strided_slice %282 {offsets = [0, 0, 0], sizes = [2, 8, 1], strides = [1, 1, 1]} : vector<2x16x1xf32> to vector<2x8x1xf32>
    %285 = tpu.concatenate %283, %284 in 1 : vector<2x8x1xf32>, vector<2x8x1xf32> -> vector<2x16x1xf32>
    %286 = arith.addf %282, %285 : vector<2x16x1xf32>
    %287 = arith.mulf %268, %268 : vector<2x16x64xf32>
    %cst_80 = arith.constant dense<0.000000e+00> : vector<2x16xf32>
    %288 = vector.multi_reduction <add>, %287, %cst_80 [2] : vector<2x16x64xf32> to vector<2x16xf32>
    %289 = vector.shape_cast %288 : vector<2x16xf32> to vector<2x16x1xf32>
    %cst_81 = arith.constant 0.000000e+00 : f32
    %290 = vector.broadcast %cst_81 : f32 to vector<2x1x1xf32>
    %291 = vector.extract_strided_slice %289 {offsets = [0, 0, 0], sizes = [2, 15, 1], strides = [1, 1, 1]} : vector<2x16x1xf32> to vector<2x15x1xf32>
    %292 = tpu.concatenate %290, %291 in 1 : vector<2x1x1xf32>, vector<2x15x1xf32> -> vector<2x16x1xf32>
    %293 = arith.addf %289, %292 : vector<2x16x1xf32>
    %cst_82 = arith.constant 0.000000e+00 : f32
    %294 = vector.broadcast %cst_82 : f32 to vector<2x2x1xf32>
    %295 = vector.extract_strided_slice %293 {offsets = [0, 0, 0], sizes = [2, 14, 1], strides = [1, 1, 1]} : vector<2x16x1xf32> to vector<2x14x1xf32>
    %296 = tpu.concatenate %294, %295 in 1 : vector<2x2x1xf32>, vector<2x14x1xf32> -> vector<2x16x1xf32>
    %297 = arith.addf %293, %296 : vector<2x16x1xf32>
    %cst_83 = arith.constant 0.000000e+00 : f32
    %298 = vector.broadcast %cst_83 : f32 to vector<2x4x1xf32>
    %299 = vector.extract_strided_slice %297 {offsets = [0, 0, 0], sizes = [2, 12, 1], strides = [1, 1, 1]} : vector<2x16x1xf32> to vector<2x12x1xf32>
    %300 = tpu.concatenate %298, %299 in 1 : vector<2x4x1xf32>, vector<2x12x1xf32> -> vector<2x16x1xf32>
    %301 = arith.addf %297, %300 : vector<2x16x1xf32>
    %cst_84 = arith.constant 0.000000e+00 : f32
    %302 = vector.broadcast %cst_84 : f32 to vector<2x8x1xf32>
    %303 = vector.extract_strided_slice %301 {offsets = [0, 0, 0], sizes = [2, 8, 1], strides = [1, 1, 1]} : vector<2x16x1xf32> to vector<2x8x1xf32>
    %304 = tpu.concatenate %302, %303 in 1 : vector<2x8x1xf32>, vector<2x8x1xf32> -> vector<2x16x1xf32>
    %305 = arith.addf %301, %304 : vector<2x16x1xf32>
    %306 = vector.broadcast %6 : vector<1x16x1xf32> to vector<2x16x1xf32>
    %307 = arith.divf %286, %306 : vector<2x16x1xf32>
    %cst_85 = arith.constant 2.000000e+00 : f32
    %308 = vector.broadcast %cst_85 : f32 to vector<2x16x1xf32>
    %309 = arith.mulf %308, %307 : vector<2x16x1xf32>
    %310 = arith.mulf %309, %286 : vector<2x16x1xf32>
    %311 = arith.subf %305, %310 : vector<2x16x1xf32>
    %312 = vector.broadcast %6 : vector<1x16x1xf32> to vector<2x16x1xf32>
    %313 = arith.divf %311, %312 : vector<2x16x1xf32>
    %314 = arith.mulf %307, %307 : vector<2x16x1xf32>
    %315 = arith.addf %313, %314 : vector<2x16x1xf32>
    %cst_86 = arith.constant 9.99999974E-6 : f32
    %316 = vector.broadcast %cst_86 : f32 to vector<2x16x1xf32>
    %317 = arith.addf %315, %316 : vector<2x16x1xf32>
    %318 = math.sqrt %317 : vector<2x16x1xf32>
    %319 = vector.broadcast %307 : vector<2x16x1xf32> to vector<2x16x64xf32>
    %320 = arith.subf %268, %319 : vector<2x16x64xf32>
    %321 = vector.broadcast %318 : vector<2x16x1xf32> to vector<2x16x64xf32>
    %322 = arith.divf %320, %321 : vector<2x16x64xf32>
    %323 = vector.shape_cast %182 : vector<1x64xf32> to vector<1x1x64xf32>
    %324 = vector.broadcast %323 : vector<1x1x64xf32> to vector<2x16x64xf32>
    %325 = arith.mulf %322, %324 : vector<2x16x64xf32>
    %326 = vector.shape_cast %183 : vector<1x64xf32> to vector<1x1x64xf32>
    %327 = vector.broadcast %326 : vector<1x1x64xf32> to vector<2x16x64xf32>
    %328 = arith.addf %325, %327 : vector<2x16x64xf32>
    %329 = vector.shape_cast %328 : vector<2x16x64xf32> to vector<32x64xf32>
    %cst_87 = arith.constant dense<0.000000e+00> : vector<32x256xf32>
    %330 = tpu.matmul %329, %175, %cst_87 {dimension_numbers = #tpu.dot_dimension_numbers<[1], [0], [0], [1], [0, 0, 1, 1], [], []>, precision = #tpu.contract_precision<fp32>} : vector<32x64xf32>, vector<64x256xf32>, vector<32x256xf32> -> vector<32x256xf32>
    %331 = vector.shape_cast %330 : vector<32x256xf32> to vector<2x16x256xf32>
    %332 = arith.addf %169, %331 : vector<2x16x256xf32>
    %c0_88 = arith.constant 0 : index
    %c0_89 = arith.constant 0 : index
    %c0_90 = arith.constant 0 : index
    %333 = vector.load %arg6[%c0_88, %c0_89, %c0_90] : memref<2x16x256xf32, #tpu.memory_space<vmem>>, vector<2x16x256xf32>
    tpu.vector_store %arg6[%c0_88, %c0_89, %c0_90], %332 {strides = array<i32>} : memref<2x16x256xf32, #tpu.memory_space<vmem>>, vector<2x16x256xf32>,
    return
  }
  func.func @transform_0(%arg0: i32) -> (i32, i32, i32) {
    %c0_i32 = arith.constant 0 : i32
    %c0_i32_0 = arith.constant 0 : i32
    %c0_i32_1 = arith.constant 0 : i32
    return %arg0, %c0_i32, %c0_i32_0 : i32, i32, i32
  }
  func.func @transform_1(%arg0: i32) -> (i32, i32, i32) {
    %c0_i32 = arith.constant 0 : i32
    %c0_i32_0 = arith.constant 0 : i32
    %c0_i32_1 = arith.constant 0 : i32
    %c0_i32_2 = arith.constant 0 : i32
    return %c0_i32, %c0_i32_0, %c0_i32_1 : i32, i32, i32
  }
  func.func @transform_2(%arg0: i32) -> (i32, i32, i32) {
    %c0_i32 = arith.constant 0 : i32
    %c0_i32_0 = arith.constant 0 : i32
    %c0_i32_1 = arith.constant 0 : i32
    %c0_i32_2 = arith.constant 0 : i32
    return %c0_i32, %c0_i32_0, %c0_i32_1 : i32, i32, i32
  }
  func.func @transform_3(%arg0: i32) -> (i32, i32, i32) {
    %c0_i32 = arith.constant 0 : i32
    %c0_i32_0 = arith.constant 0 : i32
    %c0_i32_1 = arith.constant 0 : i32
    %c0_i32_2 = arith.constant 0 : i32
    return %c0_i32, %c0_i32_0, %c0_i32_1 : i32, i32, i32
  }
  func.func @transform_4(%arg0: i32) -> (i32, i32, i32) {
    %c0_i32 = arith.constant 0 : i32
    %c0_i32_0 = arith.constant 0 : i32
    %c0_i32_1 = arith.constant 0 : i32
    %c0_i32_2 = arith.constant 0 : i32
    return %c0_i32, %c0_i32_0, %c0_i32_1 : i32, i32, i32
  }
  func.func @transform_5(%arg0: i32) -> (i32, i32, i32) {
    %c0_i32 = arith.constant 0 : i32
    %c0_i32_0 = arith.constant 0 : i32
    %c0_i32_1 = arith.constant 0 : i32
    return %arg0, %c0_i32, %c0_i32_0 : i32, i32, i32
  }
}

</mosaic_0001>

<llo_original>
// kernel: tpu_custom_call.1
$region0: #{tpu_custom_call.1}
  #allocation0 [shape = 'u32[]', space=smem, size = 0x4, offset = 0x4, fixed_abs, tag = 'smem constant byte address 0x4 - core index']
  #allocation1 [shape = 'u32[144,128]{1,0:T(1,128)}', space=vmem, size = 0x12000, scoped, tag = 'internal scratch']
  %s0 = inlined_call_operand.vmem [shape: f32[2,16,256], index: 0, kind: input, shape index: {}]
  %s1 = inlined_call_operand.vmem [shape: f32[2,256,64], index: 1, kind: input, shape index: {}]
  %s2 = inlined_call_operand.vmem [shape: f32[2,192,64], index: 2, kind: input, shape index: {}]
  %s3 = inlined_call_operand.vmem [shape: f32[2,64,256], index: 3, kind: input, shape index: {}]
  %s4 = inlined_call_operand.vmem [shape: f32[2,8,64], index: 4, kind: input, shape index: {}]
  %s5 = inlined_call_operand.hbm [shape: f32[2,16,256], index: 5, kind: output, shape index: {}]
  %s6 = sld [smem:[#allocation0]]
  $region30: #{tpu_custom_call.1} parent=0
    _
  %s8 = ssub.s32 1, %s6
  %s9 = scalar_select 0, %s8, %s6
  $region1: #{tpu_custom_call.1} parent=0
    #allocation2 [shape = 'u8[32768]{0}', space=vmem, size = 0x8000, scoped, tag = 'output window, operand 0, single buffered']
    #allocation3 [shape = 's32[1]{0}', space=sflag, size = 0x4, scoped, tag = 'scoped memory for tpu_custom_call.1']
    %10 = vsyncpa [#allocation3], 0
    // Predicated region
    $region2: #{tpu_custom_call.1} parent=1 // pred_check
      _
    $region3: #{tpu_custom_call.1} parent=1 // pred_check_branch
      %12 = sbr.rel (0) target = $region5
    $region4: #{tpu_custom_call.1} parent=1 // pred_region
      _
    $region5: #{tpu_custom_call.1} parent=1 // pred_fallthru
      _
    // Predicated region
    $region6: #{tpu_custom_call.1} parent=1 // pred_check
      _
    $region7: #{tpu_custom_call.1} parent=1 // pred_check_branch
      %14 = sbr.rel (0) target = $region9
    $region8: #{tpu_custom_call.1} parent=1 // pred_region
      _
    $region9: #{tpu_custom_call.1} parent=1 // pred_fallthru
      _
    // Predicated region
    $region10: #{tpu_custom_call.1} parent=1 // pred_check
      _
    $region11: #{tpu_custom_call.1} parent=1 // pred_check_branch
      %16 = sbr.rel (0) target = $region13
    $region12: #{tpu_custom_call.1} parent=1 // pred_region
      _
    $region13: #{tpu_custom_call.1} parent=1 // pred_fallthru
      _
    // Predicated region
    $region14: #{tpu_custom_call.1} parent=1 // pred_check
      _
    $region15: #{tpu_custom_call.1} parent=1 // pred_check_branch
      %18 = sbr.rel (0) target = $region17
    $region16: #{tpu_custom_call.1} parent=1 // pred_region
      _
    $region17: #{tpu_custom_call.1} parent=1 // pred_fallthru
      _
    // Predicated region
    $region18: #{tpu_custom_call.1} parent=1 // pred_check
      _
    $region19: #{tpu_custom_call.1} parent=1 // pred_check_branch
      %20 = sbr.rel (0) target = $region21
    $region20: #{tpu_custom_call.1} parent=1 // pred_region
      _
    $region21: #{tpu_custom_call.1} parent=1 // pred_fallthru
      _
    %v21 = vld [vmem:[%s0] sm:$0xff]
    %v22 = vld [vmem:[%s0 + $0x8] sm:$0xff]
    %v23 = vld [vmem:[%s0 + $0x10] sm:$0xff]
    %v24 = vld [vmem:[%s0 + $0x18] sm:$0xff]
    %v25 = vld [vmem:[%s0 + $0x20] sm:$0xff]
    %v26 = vld [vmem:[%s0 + $0x28] sm:$0xff]
    %v27 = vld [vmem:[%s0 + $0x30] sm:$0xff]
    %v28 = vld [vmem:[%s0 + $0x38] sm:$0xff]
    %v29 = vlaneseq
    %v30 = vshrl.u32 %v29, 7
    %v31 = vadd.s32 %v30, 8
    %v32 = vcvt.s32.f32 %v30
    %v33 = vcvt.s32.f32 %v31
    %v34 = vadd.f32 %v32, 1.0
    %v35 = vadd.f32 %v33, 1.0
    %v36 = vmul.f32 %v34, 64.0
    %v37 = vmul.f32 %v35, 64.0
    %v38 = vld [vmem:[%s1] sm:$0xff]
    %v39 = vld [vmem:[%s1 + $0x8] sm:$0xff]
    %v40 = vld [vmem:[%s1 + $0x10] sm:$0xff]
    %v41 = vld [vmem:[%s1 + $0x18] sm:$0xff]
    %v42 = vld [vmem:[%s1 + $0x20] sm:$0xff]
    %v43 = vld [vmem:[%s1 + $0x28] sm:$0xff]
    %v44 = vld [vmem:[%s1 + $0x30] sm:$0xff]
    %v45 = vld [vmem:[%s1 + $0x38] sm:$0xff]
    %v46 = vld [vmem:[%s1 + $0x40] sm:$0xff]
    %v47 = vld [vmem:[%s1 + $0x48] sm:$0xff]
    %v48 = vld [vmem:[%s1 + $0x50] sm:$0xff]
    %v49 = vld [vmem:[%s1 + $0x58] sm:$0xff]
    %v50 = vld [vmem:[%s1 + $0x60] sm:$0xff]
    %v51 = vld [vmem:[%s1 + $0x68] sm:$0xff]
    %v52 = vld [vmem:[%s1 + $0x70] sm:$0xff]
    %v53 = vld [vmem:[%s1 + $0x78] sm:$0xff]
    %v54 = vld [vmem:[%s1 + $0x80] sm:$0xff]
    %v55 = vld [vmem:[%s1 + $0x88] sm:$0xff]
    %v56 = vld [vmem:[%s1 + $0x90] sm:$0xff]
    %v57 = vld [vmem:[%s1 + $0x98] sm:$0xff]
    %v58 = vld [vmem:[%s1 + $0xa0] sm:$0xff]
    %v59 = vld [vmem:[%s1 + $0xa8] sm:$0xff]
    %v60 = vld [vmem:[%s1 + $0xb0] sm:$0xff]
    %v61 = vld [vmem:[%s1 + $0xb8] sm:$0xff]
    %v62 = vld [vmem:[%s1 + $0xc0] sm:$0xff]
    %v63 = vld [vmem:[%s1 + $0xc8] sm:$0xff]
    %v64 = vld [vmem:[%s1 + $0xd0] sm:$0xff]
    %v65 = vld [vmem:[%s1 + $0xd8] sm:$0xff]
    %v66 = vld [vmem:[%s1 + $0xe0] sm:$0xff]
    %v67 = vld [vmem:[%s1 + $0xe8] sm:$0xff]
    %v68 = vld [vmem:[%s1 + $0xf0] sm:$0xff]
    %v69 = vld [vmem:[%s1 + $0xf8] sm:$0xff]
    %v70 = vld [vmem:[%s2] sm:$0xff]
    %v71 = vld [vmem:[%s2 + $0x8] sm:$0xff]
    %v72 = vld [vmem:[%s2 + $0x10] sm:$0xff]
    %v73 = vld [vmem:[%s2 + $0x18] sm:$0xff]
    %v74 = vld [vmem:[%s2 + $0x20] sm:$0xff]
    %v75 = vld [vmem:[%s2 + $0x28] sm:$0xff]
    %v76 = vld [vmem:[%s2 + $0x30] sm:$0xff]
    %v77 = vld [vmem:[%s2 + $0x38] sm:$0xff]
    %v78 = vld [vmem:[%s2 + $0x40] sm:$0xff]
    %v79 = vld [vmem:[%s2 + $0x48] sm:$0xff]
    %v80 = vld [vmem:[%s2 + $0x50] sm:$0xff]
    %v81 = vld [vmem:[%s2 + $0x58] sm:$0xff]
    %v82 = vld [vmem:[%s2 + $0x60] sm:$0xff]
    %v83 = vld [vmem:[%s2 + $0x68] sm:$0xff]
    %v84 = vld [vmem:[%s2 + $0x70] sm:$0xff]
    %v85 = vld [vmem:[%s2 + $0x78] sm:$0xff]
    %v86 = vld [vmem:[%s2 + $0x80] sm:$0xff]
    %v87 = vld [vmem:[%s2 + $0x88] sm:$0xff]
    %v88 = vld [vmem:[%s2 + $0x90] sm:$0xff]
    %v89 = vld [vmem:[%s2 + $0x98] sm:$0xff]
    %v90 = vld [vmem:[%s2 + $0xa0] sm:$0xff]
    %v91 = vld [vmem:[%s2 + $0xa8] sm:$0xff]
    %v92 = vld [vmem:[%s2 + $0xb0] sm:$0xff]
    %v93 = vld [vmem:[%s2 + $0xb8] sm:$0xff]
    %v94 = vld [vmem:[%s3] sm:$0xff]
    %v95 = vld [vmem:[%s3 + $0x8] sm:$0xff]
    %v96 = vld [vmem:[%s3 + $0x10] sm:$0xff]
    %v97 = vld [vmem:[%s3 + $0x18] sm:$0xff]
    %v98 = vld [vmem:[%s3 + $0x20] sm:$0xff]
    %v99 = vld [vmem:[%s3 + $0x28] sm:$0xff]
    %v100 = vld [vmem:[%s3 + $0x30] sm:$0xff]
    %v101 = vld [vmem:[%s3 + $0x38] sm:$0xff]
    %v102 = vld [vmem:[%s3 + $0x40] sm:$0xff]
    %v103 = vld [vmem:[%s3 + $0x48] sm:$0xff]
    %v104 = vld [vmem:[%s3 + $0x50] sm:$0xff]
    %v105 = vld [vmem:[%s3 + $0x58] sm:$0xff]
    %v106 = vld [vmem:[%s3 + $0x60] sm:$0xff]
    %v107 = vld [vmem:[%s3 + $0x68] sm:$0xff]
    %v108 = vld [vmem:[%s3 + $0x70] sm:$0xff]
    %v109 = vld [vmem:[%s3 + $0x78] sm:$0xff]
    %v110 = vld [vmem:[%s4] sm:$0xff]
    %111 = vmatprep.subr.mxu0 0.0
    %v112 = vand.u32 %v38, 4294901760
    %113 = vmatpush1.msra.mxu0 %v112
    %114 = vmatprep.subr.mxu0 0.0
    %v115 = vand.u32 %v39, 4294901760
    %116 = vmatpush1.msra.mxu0 %v115
    %117 = vmatprep.subr.mxu0 0.0
    %v118 = vand.u32 %v40, 4294901760
    %119 = vmatpush1.msra.mxu0 %v118
    %120 = vmatprep.subr.mxu0 0.0
    %v121 = vand.u32 %v41, 4294901760
    %122 = vmatpush1.msra.mxu0 %v121
    %123 = vmatprep.subr.mxu0 0.0
    %v124 = vand.u32 %v42, 4294901760
    %125 = vmatpush1.msra.mxu0 %v124
    %126 = vmatprep.subr.mxu0 0.0
    %v127 = vand.u32 %v43, 4294901760
    %128 = vmatpush1.msra.mxu0 %v127
    %129 = vmatprep.subr.mxu0 0.0
    %v130 = vand.u32 %v44, 4294901760
    %131 = vmatpush1.msra.mxu0 %v130
    %132 = vmatprep.subr.mxu0 0.0
    %v133 = vand.u32 %v45, 4294901760
    %134 = vmatpush1.msra.mxu0 %v133
    %135 = vmatprep.subr.mxu0 0.0
    %v136 = vand.u32 %v46, 4294901760
    %137 = vmatpush1.msra.mxu0 %v136
    %138 = vmatprep.subr.mxu0 0.0
    %v139 = vand.u32 %v47, 4294901760
    %140 = vmatpush1.msra.mxu0 %v139
    %141 = vmatprep.subr.mxu0 0.0
    %v142 = vand.u32 %v48, 4294901760
    %143 = vmatpush1.msra.mxu0 %v142
    %144 = vmatprep.subr.mxu0 0.0
    %v145 = vand.u32 %v49, 4294901760
    %146 = vmatpush1.msra.mxu0 %v145
    %147 = vmatprep.subr.mxu0 0.0
    %v148 = vand.u32 %v50, 4294901760
    %149 = vmatpush1.msra.mxu0 %v148
    %150 = vmatprep.subr.mxu0 0.0
    %v151 = vand.u32 %v51, 4294901760
    %152 = vmatpush1.msra.mxu0 %v151
    %153 = vmatprep.subr.mxu0 0.0
    %v154 = vand.u32 %v52, 4294901760
    %155 = vmatpush1.msra.mxu0 %v154
    %156 = vmatprep.subr.mxu0 0.0
    %v157 = vand.u32 %v53, 4294901760
    %158 = vmatpush1.msra.mxu0 %v157
    %159 = vmatprep.subr.mxu0 0.0
    %v160 = vand.u32 %v54, 4294901760
    %161 = vmatpush1.msra.mxu0 %v160
    %162 = vmatprep.subr.mxu0 0.0
    %v163 = vand.u32 %v55, 4294901760
    %164 = vmatpush1.msra.mxu0 %v163
    %165 = vmatprep.subr.mxu0 0.0
    %v166 = vand.u32 %v56, 4294901760
    %167 = vmatpush1.msra.mxu0 %v166
    %168 = vmatprep.subr.mxu0 0.0
    %v169 = vand.u32 %v57, 4294901760
    %170 = vmatpush1.msra.mxu0 %v169
    %171 = vmatprep.subr.mxu0 0.0
    %v172 = vand.u32 %v58, 4294901760
    %173 = vmatpush1.msra.mxu0 %v172
    %174 = vmatprep.subr.mxu0 0.0
    %v175 = vand.u32 %v59, 4294901760
    %176 = vmatpush1.msra.mxu0 %v175
    %177 = vmatprep.subr.mxu0 0.0
    %v178 = vand.u32 %v60, 4294901760
    %179 = vmatpush1.msra.mxu0 %v178
    %180 = vmatprep.subr.mxu0 0.0
    %v181 = vand.u32 %v61, 4294901760
    %182 = vmatpush1.msra.mxu0 %v181
    %183 = vmatprep.subr.mxu0 0.0
    %v184 = vand.u32 %v62, 4294901760
    %185 = vmatpush1.msra.mxu0 %v184
    %186 = vmatprep.subr.mxu0 0.0
    %v187 = vand.u32 %v63, 4294901760
    %188 = vmatpush1.msra.mxu0 %v187
    %189 = vmatprep.subr.mxu0 0.0
    %v190 = vand.u32 %v64, 4294901760
    %191 = vmatpush1.msra.mxu0 %v190
    %192 = vmatprep.subr.mxu0 0.0
    %v193 = vand.u32 %v65, 4294901760
    %194 = vmatpush1.msra.mxu0 %v193
    %195 = vmatprep.subr.mxu0 0.0
    %v196 = vand.u32 %v66, 4294901760
    %197 = vmatpush1.msra.mxu0 %v196
    %198 = vmatprep.subr.mxu0 0.0
    %v199 = vand.u32 %v67, 4294901760
    %200 = vmatpush1.msra.mxu0 %v199
    %201 = vmatprep.subr.mxu0 0.0
    %v202 = vand.u32 %v68, 4294901760
    %203 = vmatpush1.msra.mxu0 %v202
    %204 = vmatprep.subr.mxu0 0.0
    %v205 = vand.u32 %v69, 4294901760
    %206 = vmatpush1.msra.mxu0 %v205
    %v207 = vand.u32 %v22, 4294901760
    %v208 = vsub.f32 %v22, %v207
    %v209 = vand.u32 %v208, 4294901760
    %v210 = vsub.f32 %v208, %v209
    %v211 = vand.u32 %v210, 4294901760
    %212 = vmatprep.mubr.f32.mxu0 %v211
    %v213 = vand.u32 %v21, 4294901760
    %v214 = vsub.f32 %v21, %v213
    %v215 = vand.u32 %v214, 4294901760
    %v216 = vsub.f32 %v214, %v215
    %v217 = vand.u32 %v216, 4294901760
    %218 = vmatmul.mubr.f32.gmra.mrb[0].mxu0 %v217
    %v219 = vpop.f32.mrb[0].mxu0
    %v220 = vadd.f32 0.0, %v219
    %v221 = vpop.f32.mrb[0].mxu0
    %v222 = vand.u32 %v24, 4294901760
    %v223 = vsub.f32 %v24, %v222
    %v224 = vand.u32 %v223, 4294901760
    %v225 = vsub.f32 %v223, %v224
    %v226 = vand.u32 %v225, 4294901760
    %227 = vmatprep.mubr.f32.mxu0 %v226
    %v228 = vand.u32 %v23, 4294901760
    %v229 = vsub.f32 %v23, %v228
    %v230 = vand.u32 %v229, 4294901760
    %v231 = vsub.f32 %v229, %v230
    %v232 = vand.u32 %v231, 4294901760
    %233 = vmatmul.mubr.f32.gmra.mrb[0].mxu0 %v232
    %v234 = vpop.f32.mrb[0].mxu0
    %v235 = vadd.f32 0.0, %v234
    %v236 = vpop.f32.mrb[0].mxu0
    %v237 = vand.u32 %v26, 4294901760
    %v238 = vsub.f32 %v26, %v237
    %v239 = vand.u32 %v238, 4294901760
    %v240 = vsub.f32 %v238, %v239
    %v241 = vand.u32 %v240, 4294901760
    %242 = vmatprep.mubr.f32.mxu0 %v241
    %v243 = vand.u32 %v25, 4294901760
    %v244 = vsub.f32 %v25, %v243
    %v245 = vand.u32 %v244, 4294901760
    %v246 = vsub.f32 %v244, %v245
    %v247 = vand.u32 %v246, 4294901760
    %248 = vmatmul.mubr.f32.gmra.mrb[0].mxu0 %v247
    %v249 = vpop.f32.mrb[0].mxu0
    %v250 = vadd.f32 0.0, %v249
    %v251 = vpop.f32.mrb[0].mxu0
    %v252 = vand.u32 %v28, 4294901760
    %v253 = vsub.f32 %v28, %v252
    %v254 = vand.u32 %v253, 4294901760
    %v255 = vsub.f32 %v253, %v254
    %v256 = vand.u32 %v255, 4294901760
    %257 = vmatprep.mubr.f32.mxu0 %v256
    %v258 = vand.u32 %v27, 4294901760
    %v259 = vsub.f32 %v27, %v258
    %v260 = vand.u32 %v259, 4294901760
    %v261 = vsub.f32 %v259, %v260
    %v262 = vand.u32 %v261, 4294901760
    %263 = vmatmul.mubr.f32.gmra.mrb[0].mxu0 %v262
    %v264 = vpop.f32.mrb[0].mxu0
    %v265 = vadd.f32 0.0, %v264
    %v266 = vpop.f32.mrb[0].mxu0
    %267 = vdwg.mxu0
    %268 = vmatprep.subr.mxu0 0.0
    %v269 = vand.u32 %v38, 4294901760
    %v270 = vsub.f32 %v38, %v269
    %v271 = vand.u32 %v270, 4294901760
    %v272 = vsub.f32 %v270, %v271
    %v273 = vand.u32 %v272, 4294901760
    %274 = vmatpush1.msra.mxu0 %v273
    %275 = vmatprep.subr.mxu0 0.0
    %v276 = vand.u32 %v39, 4294901760
    %v277 = vsub.f32 %v39, %v276
    %v278 = vand.u32 %v277, 4294901760
    %v279 = vsub.f32 %v277, %v278
    %v280 = vand.u32 %v279, 4294901760
    %281 = vmatpush1.msra.mxu0 %v280
    %282 = vmatprep.subr.mxu0 0.0
    %v283 = vand.u32 %v40, 4294901760
    %v284 = vsub.f32 %v40, %v283
    %v285 = vand.u32 %v284, 4294901760
    %v286 = vsub.f32 %v284, %v285
    %v287 = vand.u32 %v286, 4294901760
    %288 = vmatpush1.msra.mxu0 %v287
    %289 = vmatprep.subr.mxu0 0.0
    %v290 = vand.u32 %v41, 4294901760
    %v291 = vsub.f32 %v41, %v290
    %v292 = vand.u32 %v291, 4294901760
    %v293 = vsub.f32 %v291, %v292
    %v294 = vand.u32 %v293, 4294901760
    %295 = vmatpush1.msra.mxu0 %v294
    %296 = vmatprep.subr.mxu0 0.0
    %v297 = vand.u32 %v42, 4294901760
    %v298 = vsub.f32 %v42, %v297
    %v299 = vand.u32 %v298, 4294901760
    %v300 = vsub.f32 %v298, %v299
    %v301 = vand.u32 %v300, 4294901760
    %302 = vmatpush1.msra.mxu0 %v301
    %303 = vmatprep.subr.mxu0 0.0
    %v304 = vand.u32 %v43, 4294901760
    %v305 = vsub.f32 %v43, %v304
    %v306 = vand.u32 %v305, 4294901760
    %v307 = vsub.f32 %v305, %v306
    %v308 = vand.u32 %v307, 4294901760
    %309 = vmatpush1.msra.mxu0 %v308
    %310 = vmatprep.subr.mxu0 0.0
    %v311 = vand.u32 %v44, 4294901760
    %v312 = vsub.f32 %v44, %v311
    %v313 = vand.u32 %v312, 4294901760
    %v314 = vsub.f32 %v312, %v313
    %v315 = vand.u32 %v314, 4294901760
    %316 = vmatpush1.msra.mxu0 %v315
    %317 = vmatprep.subr.mxu0 0.0
    %v318 = vand.u32 %v45, 4294901760
    %v319 = vsub.f32 %v45, %v318
    %v320 = vand.u32 %v319, 4294901760
    %v321 = vsub.f32 %v319, %v320
    %v322 = vand.u32 %v321, 4294901760
    %323 = vmatpush1.msra.mxu0 %v322
    %324 = vmatprep.subr.mxu0 0.0
    %v325 = vand.u32 %v46, 4294901760
    %v326 = vsub.f32 %v46, %v325
    %v327 = vand.u32 %v326, 4294901760
    %v328 = vsub.f32 %v326, %v327
    %v329 = vand.u32 %v328, 4294901760
    %330 = vmatpush1.msra.mxu0 %v329
    %331 = vmatprep.subr.mxu0 0.0
    %v332 = vand.u32 %v47, 4294901760
    %v333 = vsub.f32 %v47, %v332
    %v334 = vand.u32 %v333, 4294901760
    %v335 = vsub.f32 %v333, %v334
    %v336 = vand.u32 %v335, 4294901760
    %337 = vmatpush1.msra.mxu0 %v336
    %338 = vmatprep.subr.mxu0 0.0
    %v339 = vand.u32 %v48, 4294901760
    %v340 = vsub.f32 %v48, %v339
    %v341 = vand.u32 %v340, 4294901760
    %v342 = vsub.f32 %v340, %v341
    %v343 = vand.u32 %v342, 4294901760
    %344 = vmatpush1.msra.mxu0 %v343
    %345 = vmatprep.subr.mxu0 0.0
    %v346 = vand.u32 %v49, 4294901760
    %v347 = vsub.f32 %v49, %v346
    %v348 = vand.u32 %v347, 4294901760
    %v349 = vsub.f32 %v347, %v348
    %v350 = vand.u32 %v349, 4294901760
    %351 = vmatpush1.msra.mxu0 %v350
    %352 = vmatprep.subr.mxu0 0.0
    %v353 = vand.u32 %v50, 4294901760
    %v354 = vsub.f32 %v50, %v353
    %v355 = vand.u32 %v354, 4294901760
    %v356 = vsub.f32 %v354, %v355
    %v357 = vand.u32 %v356, 4294901760
    %358 = vmatpush1.msra.mxu0 %v357
    %359 = vmatprep.subr.mxu0 0.0
    %v360 = vand.u32 %v51, 4294901760
    %v361 = vsub.f32 %v51, %v360
    %v362 = vand.u32 %v361, 4294901760
    %v363 = vsub.f32 %v361, %v362
    %v364 = vand.u32 %v363, 4294901760
    %365 = vmatpush1.msra.mxu0 %v364
    %366 = vmatprep.subr.mxu0 0.0
    %v367 = vand.u32 %v52, 4294901760
    %v368 = vsub.f32 %v52, %v367
    %v369 = vand.u32 %v368, 4294901760
    %v370 = vsub.f32 %v368, %v369
    %v371 = vand.u32 %v370, 4294901760
    %372 = vmatpush1.msra.mxu0 %v371
    %373 = vmatprep.subr.mxu0 0.0
    %v374 = vand.u32 %v53, 4294901760
    %v375 = vsub.f32 %v53, %v374
    %v376 = vand.u32 %v375, 4294901760
    %v377 = vsub.f32 %v375, %v376
    %v378 = vand.u32 %v377, 4294901760
    %379 = vmatpush1.msra.mxu0 %v378
    %380 = vmatprep.subr.mxu0 0.0
    %v381 = vand.u32 %v54, 4294901760
    %v382 = vsub.f32 %v54, %v381
    %v383 = vand.u32 %v382, 4294901760
    %v384 = vsub.f32 %v382, %v383
    %v385 = vand.u32 %v384, 4294901760
    %386 = vmatpush1.msra.mxu0 %v385
    %387 = vmatprep.subr.mxu0 0.0
    %v388 = vand.u32 %v55, 4294901760
    %v389 = vsub.f32 %v55, %v388
    %v390 = vand.u32 %v389, 4294901760
    %v391 = vsub.f32 %v389, %v390
    %v392 = vand.u32 %v391, 4294901760
    %393 = vmatpush1.msra.mxu0 %v392
    %394 = vmatprep.subr.mxu0 0.0
    %v395 = vand.u32 %v56, 4294901760
    %v396 = vsub.f32 %v56, %v395
    %v397 = vand.u32 %v396, 4294901760
    %v398 = vsub.f32 %v396, %v397
    %v399 = vand.u32 %v398, 4294901760
    %400 = vmatpush1.msra.mxu0 %v399
    %401 = vmatprep.subr.mxu0 0.0
    %v402 = vand.u32 %v57, 4294901760
    %v403 = vsub.f32 %v57, %v402
    %v404 = vand.u32 %v403, 4294901760
    %v405 = vsub.f32 %v403, %v404
    %v406 = vand.u32 %v405, 4294901760
    %407 = vmatpush1.msra.mxu0 %v406
    %408 = vmatprep.subr.mxu0 0.0
    %v409 = vand.u32 %v58, 4294901760
    %v410 = vsub.f32 %v58, %v409
    %v411 = vand.u32 %v410, 4294901760
    %v412 = vsub.f32 %v410, %v411
    %v413 = vand.u32 %v412, 4294901760
    %414 = vmatpush1.msra.mxu0 %v413
    %415 = vmatprep.subr.mxu0 0.0
    %v416 = vand.u32 %v59, 4294901760
    %v417 = vsub.f32 %v59, %v416
    %v418 = vand.u32 %v417, 4294901760
    %v419 = vsub.f32 %v417, %v418
    %v420 = vand.u32 %v419, 4294901760
    %421 = vmatpush1.msra.mxu0 %v420
    %422 = vmatprep.subr.mxu0 0.0
    %v423 = vand.u32 %v60, 4294901760
    %v424 = vsub.f32 %v60, %v423
    %v425 = vand.u32 %v424, 4294901760
    %v426 = vsub.f32 %v424, %v425
    %v427 = vand.u32 %v426, 4294901760
    %428 = vmatpush1.msra.mxu0 %v427
    %429 = vmatprep.subr.mxu0 0.0
    %v430 = vand.u32 %v61, 4294901760
    %v431 = vsub.f32 %v61, %v430
    %v432 = vand.u32 %v431, 4294901760
    %v433 = vsub.f32 %v431, %v432
    %v434 = vand.u32 %v433, 4294901760
    %435 = vmatpush1.msra.mxu0 %v434
    %436 = vmatprep.subr.mxu0 0.0
    %v437 = vand.u32 %v62, 4294901760
    %v438 = vsub.f32 %v62, %v437
    %v439 = vand.u32 %v438, 4294901760
    %v440 = vsub.f32 %v438, %v439
    %v441 = vand.u32 %v440, 4294901760
    %442 = vmatpush1.msra.mxu0 %v441
    %443 = vmatprep.subr.mxu0 0.0
    %v444 = vand.u32 %v63, 4294901760
    %v445 = vsub.f32 %v63, %v444
    %v446 = vand.u32 %v445, 4294901760
    %v447 = vsub.f32 %v445, %v446
    %v448 = vand.u32 %v447, 4294901760
    %449 = vmatpush1.msra.mxu0 %v448
    %450 = vmatprep.subr.mxu0 0.0
    %v451 = vand.u32 %v64, 4294901760
    %v452 = vsub.f32 %v64, %v451
    %v453 = vand.u32 %v452, 4294901760
    %v454 = vsub.f32 %v452, %v453
    %v455 = vand.u32 %v454, 4294901760
    %456 = vmatpush1.msra.mxu0 %v455
    %457 = vmatprep.subr.mxu0 0.0
    %v458 = vand.u32 %v65, 4294901760
    %v459 = vsub.f32 %v65, %v458
    %v460 = vand.u32 %v459, 4294901760
    %v461 = vsub.f32 %v459, %v460
    %v462 = vand.u32 %v461, 4294901760
    %463 = vmatpush1.msra.mxu0 %v462
    %464 = vmatprep.subr.mxu0 0.0
    %v465 = vand.u32 %v66, 4294901760
    %v466 = vsub.f32 %v66, %v465
    %v467 = vand.u32 %v466, 4294901760
    %v468 = vsub.f32 %v466, %v467
    %v469 = vand.u32 %v468, 4294901760
    %470 = vmatpush1.msra.mxu0 %v469
    %471 = vmatprep.subr.mxu0 0.0
    %v472 = vand.u32 %v67, 4294901760
    %v473 = vsub.f32 %v67, %v472
    %v474 = vand.u32 %v473, 4294901760
    %v475 = vsub.f32 %v473, %v474
    %v476 = vand.u32 %v475, 4294901760
    %477 = vmatpush1.msra.mxu0 %v476
    %478 = vmatprep.subr.mxu0 0.0
    %v479 = vand.u32 %v68, 4294901760
    %v480 = vsub.f32 %v68, %v479
    %v481 = vand.u32 %v480, 4294901760
    %v482 = vsub.f32 %v480, %v481
    %v483 = vand.u32 %v482, 4294901760
    %484 = vmatpush1.msra.mxu0 %v483
    %485 = vmatprep.subr.mxu0 0.0
    %v486 = vand.u32 %v69, 4294901760
    %v487 = vsub.f32 %v69, %v486
    %v488 = vand.u32 %v487, 4294901760
    %v489 = vsub.f32 %v487, %v488
    %v490 = vand.u32 %v489, 4294901760
    %491 = vmatpush1.msra.mxu0 %v490
    %v492 = vand.u32 %v22, 4294901760
    %493 = vmatprep.mubr.f32.mxu0 %v492
    %v494 = vand.u32 %v21, 4294901760
    %495 = vmatmul.mubr.f32.gmra.mrb[0].mxu0 %v494
    %v496 = vpop.f32.mrb[0].mxu0
    %v497 = vadd.f32 %v220, %v496
    %v498 = vpop.f32.mrb[0].mxu0
    %v499 = vand.u32 %v24, 4294901760
    %500 = vmatprep.mubr.f32.mxu0 %v499
    %v501 = vand.u32 %v23, 4294901760
    %502 = vmatmul.mubr.f32.gmra.mrb[0].mxu0 %v501
    %v503 = vpop.f32.mrb[0].mxu0
    %v504 = vadd.f32 %v235, %v503
    %v505 = vpop.f32.mrb[0].mxu0
    %v506 = vand.u32 %v26, 4294901760
    %507 = vmatprep.mubr.f32.mxu0 %v506
    %v508 = vand.u32 %v25, 4294901760
    %509 = vmatmul.mubr.f32.gmra.mrb[0].mxu0 %v508
    %v510 = vpop.f32.mrb[0].mxu0
    %v511 = vadd.f32 %v250, %v510
    %v512 = vpop.f32.mrb[0].mxu0
    %v513 = vand.u32 %v28, 4294901760
    %514 = vmatprep.mubr.f32.mxu0 %v513
    %v515 = vand.u32 %v27, 4294901760
    %516 = vmatmul.mubr.f32.gmra.mrb[0].mxu0 %v515
    %v517 = vpop.f32.mrb[0].mxu0
    %v518 = vadd.f32 %v265, %v517
    %v519 = vpop.f32.mrb[0].mxu0
    %520 = vdwg.mxu0
    %521 = vmatprep.subr.mxu0 0.0
    %v522 = vand.u32 %v38, 4294901760
    %v523 = vsub.f32 %v38, %v522
    %524 = vmatpush1.msra.mxu0 %v523
    %525 = vmatprep.subr.mxu0 0.0
    %v526 = vand.u32 %v39, 4294901760
    %v527 = vsub.f32 %v39, %v526
    %528 = vmatpush1.msra.mxu0 %v527
    %529 = vmatprep.subr.mxu0 0.0
    %v530 = vand.u32 %v40, 4294901760
    %v531 = vsub.f32 %v40, %v530
    %532 = vmatpush1.msra.mxu0 %v531
    %533 = vmatprep.subr.mxu0 0.0
    %v534 = vand.u32 %v41, 4294901760
    %v535 = vsub.f32 %v41, %v534
    %536 = vmatpush1.msra.mxu0 %v535
    %537 = vmatprep.subr.mxu0 0.0
    %v538 = vand.u32 %v42, 4294901760
    %v539 = vsub.f32 %v42, %v538
    %540 = vmatpush1.msra.mxu0 %v539
    %541 = vmatprep.subr.mxu0 0.0
    %v542 = vand.u32 %v43, 4294901760
    %v543 = vsub.f32 %v43, %v542
    %544 = vmatpush1.msra.mxu0 %v543
    %545 = vmatprep.subr.mxu0 0.0
    %v546 = vand.u32 %v44, 4294901760
    %v547 = vsub.f32 %v44, %v546
    %548 = vmatpush1.msra.mxu0 %v547
    %549 = vmatprep.subr.mxu0 0.0
    %v550 = vand.u32 %v45, 4294901760
    %v551 = vsub.f32 %v45, %v550
    %552 = vmatpush1.msra.mxu0 %v551
    %553 = vmatprep.subr.mxu0 0.0
    %v554 = vand.u32 %v46, 4294901760
    %v555 = vsub.f32 %v46, %v554
    %556 = vmatpush1.msra.mxu0 %v555
    %557 = vmatprep.subr.mxu0 0.0
    %v558 = vand.u32 %v47, 4294901760
    %v559 = vsub.f32 %v47, %v558
    %560 = vmatpush1.msra.mxu0 %v559
    %561 = vmatprep.subr.mxu0 0.0
    %v562 = vand.u32 %v48, 4294901760
    %v563 = vsub.f32 %v48, %v562
    %564 = vmatpush1.msra.mxu0 %v563
    %565 = vmatprep.subr.mxu0 0.0
    %v566 = vand.u32 %v49, 4294901760
    %v567 = vsub.f32 %v49, %v566
    %568 = vmatpush1.msra.mxu0 %v567
    %569 = vmatprep.subr.mxu0 0.0
    %v570 = vand.u32 %v50, 4294901760
    %v571 = vsub.f32 %v50, %v570
    %572 = vmatpush1.msra.mxu0 %v571
    %573 = vmatprep.subr.mxu0 0.0
    %v574 = vand.u32 %v51, 4294901760
    %v575 = vsub.f32 %v51, %v574
    %576 = vmatpush1.msra.mxu0 %v575
    %577 = vmatprep.subr.mxu0 0.0
    %v578 = vand.u32 %v52, 4294901760
    %v579 = vsub.f32 %v52, %v578
    %580 = vmatpush1.msra.mxu0 %v579
    %581 = vmatprep.subr.mxu0 0.0
    %v582 = vand.u32 %v53, 4294901760
    %v583 = vsub.f32 %v53, %v582
    %584 = vmatpush1.msra.mxu0 %v583
    %585 = vmatprep.subr.mxu0 0.0
    %v586 = vand.u32 %v54, 4294901760
    %v587 = vsub.f32 %v54, %v586
    %588 = vmatpush1.msra.mxu0 %v587
    %589 = vmatprep.subr.mxu0 0.0
    %v590 = vand.u32 %v55, 4294901760
    %v591 = vsub.f32 %v55, %v590
    %592 = vmatpush1.msra.mxu0 %v591
    %593 = vmatprep.subr.mxu0 0.0
    %v594 = vand.u32 %v56, 4294901760
    %v595 = vsub.f32 %v56, %v594
    %596 = vmatpush1.msra.mxu0 %v595
    %597 = vmatprep.subr.mxu0 0.0
    %v598 = vand.u32 %v57, 4294901760
    %v599 = vsub.f32 %v57, %v598
    %600 = vmatpush1.msra.mxu0 %v599
    %601 = vmatprep.subr.mxu0 0.0
    %v602 = vand.u32 %v58, 4294901760
    %v603 = vsub.f32 %v58, %v602
    %604 = vmatpush1.msra.mxu0 %v603
    %605 = vmatprep.subr.mxu0 0.0
    %v606 = vand.u32 %v59, 4294901760
    %v607 = vsub.f32 %v59, %v606
    %608 = vmatpush1.msra.mxu0 %v607
    %609 = vmatprep.subr.mxu0 0.0
    %v610 = vand.u32 %v60, 4294901760
    %v611 = vsub.f32 %v60, %v610
    %612 = vmatpush1.msra.mxu0 %v611
    %613 = vmatprep.subr.mxu0 0.0
    %v614 = vand.u32 %v61, 4294901760
    %v615 = vsub.f32 %v61, %v614
    %616 = vmatpush1.msra.mxu0 %v615
    %617 = vmatprep.subr.mxu0 0.0
    %v618 = vand.u32 %v62, 4294901760
    %v619 = vsub.f32 %v62, %v618
    %620 = vmatpush1.msra.mxu0 %v619
    %621 = vmatprep.subr.mxu0 0.0
    %v622 = vand.u32 %v63, 4294901760
    %v623 = vsub.f32 %v63, %v622
    %624 = vmatpush1.msra.mxu0 %v623
    %625 = vmatprep.subr.mxu0 0.0
    %v626 = vand.u32 %v64, 4294901760
    %v627 = vsub.f32 %v64, %v626
    %628 = vmatpush1.msra.mxu0 %v627
    %629 = vmatprep.subr.mxu0 0.0
    %v630 = vand.u32 %v65, 4294901760
    %v631 = vsub.f32 %v65, %v630
    %632 = vmatpush1.msra.mxu0 %v631
    %633 = vmatprep.subr.mxu0 0.0
    %v634 = vand.u32 %v66, 4294901760
    %v635 = vsub.f32 %v66, %v634
    %636 = vmatpush1.msra.mxu0 %v635
    %637 = vmatprep.subr.mxu0 0.0
    %v638 = vand.u32 %v67, 4294901760
    %v639 = vsub.f32 %v67, %v638
    %640 = vmatpush1.msra.mxu0 %v639
    %641 = vmatprep.subr.mxu0 0.0
    %v642 = vand.u32 %v68, 4294901760
    %v643 = vsub.f32 %v68, %v642
    %644 = vmatpush1.msra.mxu0 %v643
    %645 = vmatprep.subr.mxu0 0.0
    %v646 = vand.u32 %v69, 4294901760
    %v647 = vsub.f32 %v69, %v646
    %648 = vmatpush1.msra.mxu0 %v647
    %v649 = vand.u32 %v22, 4294901760
    %v650 = vsub.f32 %v22, %v649
    %651 = vmatprep.mubr.f32.mxu0 %v650
    %v652 = vand.u32 %v21, 4294901760
    %v653 = vsub.f32 %v21, %v652
    %654 = vmatmul.mubr.f32.gmra.mrb[0].mxu0 %v653
    %v655 = vpop.f32.mrb[0].mxu0
    %v656 = vadd.f32 %v497, %v655
    %v657 = vpop.f32.mrb[0].mxu0
    %v658 = vand.u32 %v24, 4294901760
    %v659 = vsub.f32 %v24, %v658
    %660 = vmatprep.mubr.f32.mxu0 %v659
    %v661 = vand.u32 %v23, 4294901760
    %v662 = vsub.f32 %v23, %v661
    %663 = vmatmul.mubr.f32.gmra.mrb[0].mxu0 %v662
    %v664 = vpop.f32.mrb[0].mxu0
    %v665 = vadd.f32 %v504, %v664
    %v666 = vpop.f32.mrb[0].mxu0
    %v667 = vand.u32 %v26, 4294901760
    %v668 = vsub.f32 %v26, %v667
    %669 = vmatprep.mubr.f32.mxu0 %v668
    %v670 = vand.u32 %v25, 4294901760
    %v671 = vsub.f32 %v25, %v670
    %672 = vmatmul.mubr.f32.gmra.mrb[0].mxu0 %v671
    %v673 = vpop.f32.mrb[0].mxu0
    %v674 = vadd.f32 %v511, %v673
    %v675 = vpop.f32.mrb[0].mxu0
    %v676 = vand.u32 %v28, 4294901760
    %v677 = vsub.f32 %v28, %v676
    %678 = vmatprep.mubr.f32.mxu0 %v677
    %v679 = vand.u32 %v27, 4294901760
    %v680 = vsub.f32 %v27, %v679
    %681 = vmatmul.mubr.f32.gmra.mrb[0].mxu0 %v680
    %v682 = vpop.f32.mrb[0].mxu0
    %v683 = vadd.f32 %v518, %v682
    %v684 = vpop.f32.mrb[0].mxu0
    %685 = vdwg.mxu0
    %686 = vmatprep.subr.mxu0 0.0
    %v687 = vand.u32 %v38, 4294901760
    %688 = vmatpush1.msra.mxu0 %v687
    %689 = vmatprep.subr.mxu0 0.0
    %v690 = vand.u32 %v39, 4294901760
    %691 = vmatpush1.msra.mxu0 %v690
    %692 = vmatprep.subr.mxu0 0.0
    %v693 = vand.u32 %v40, 4294901760
    %694 = vmatpush1.msra.mxu0 %v693
    %695 = vmatprep.subr.mxu0 0.0
    %v696 = vand.u32 %v41, 4294901760
    %697 = vmatpush1.msra.mxu0 %v696
    %698 = vmatprep.subr.mxu0 0.0
    %v699 = vand.u32 %v42, 4294901760
    %700 = vmatpush1.msra.mxu0 %v699
    %701 = vmatprep.subr.mxu0 0.0
    %v702 = vand.u32 %v43, 4294901760
    %703 = vmatpush1.msra.mxu0 %v702
    %704 = vmatprep.subr.mxu0 0.0
    %v705 = vand.u32 %v44, 4294901760
    %706 = vmatpush1.msra.mxu0 %v705
    %707 = vmatprep.subr.mxu0 0.0
    %v708 = vand.u32 %v45, 4294901760
    %709 = vmatpush1.msra.mxu0 %v708
    %710 = vmatprep.subr.mxu0 0.0
    %v711 = vand.u32 %v46, 4294901760
    %712 = vmatpush1.msra.mxu0 %v711
    %713 = vmatprep.subr.mxu0 0.0
    %v714 = vand.u32 %v47, 4294901760
    %715 = vmatpush1.msra.mxu0 %v714
    %716 = vmatprep.subr.mxu0 0.0
    %v717 = vand.u32 %v48, 4294901760
    %718 = vmatpush1.msra.mxu0 %v717
    %719 = vmatprep.subr.mxu0 0.0
    %v720 = vand.u32 %v49, 4294901760
    %721 = vmatpush1.msra.mxu0 %v720
    %722 = vmatprep.subr.mxu0 0.0
    %v723 = vand.u32 %v50, 4294901760
    %724 = vmatpush1.msra.mxu0 %v723
    %725 = vmatprep.subr.mxu0 0.0
    %v726 = vand.u32 %v51, 4294901760
    %727 = vmatpush1.msra.mxu0 %v726
    %728 = vmatprep.subr.mxu0 0.0
    %v729 = vand.u32 %v52, 4294901760
    %730 = vmatpush1.msra.mxu0 %v729
    %731 = vmatprep.subr.mxu0 0.0
    %v732 = vand.u32 %v53, 4294901760
    %733 = vmatpush1.msra.mxu0 %v732
    %734 = vmatprep.subr.mxu0 0.0
    %v735 = vand.u32 %v54, 4294901760
    %736 = vmatpush1.msra.mxu0 %v735
    %737 = vmatprep.subr.mxu0 0.0
    %v738 = vand.u32 %v55, 4294901760
    %739 = vmatpush1.msra.mxu0 %v738
    %740 = vmatprep.subr.mxu0 0.0
    %v741 = vand.u32 %v56, 4294901760
    %742 = vmatpush1.msra.mxu0 %v741
    %743 = vmatprep.subr.mxu0 0.0
    %v744 = vand.u32 %v57, 4294901760
    %745 = vmatpush1.msra.mxu0 %v744
    %746 = vmatprep.subr.mxu0 0.0
    %v747 = vand.u32 %v58, 4294901760
    %748 = vmatpush1.msra.mxu0 %v747
    %749 = vmatprep.subr.mxu0 0.0
    %v750 = vand.u32 %v59, 4294901760
    %751 = vmatpush1.msra.mxu0 %v750
    %752 = vmatprep.subr.mxu0 0.0
    %v753 = vand.u32 %v60, 4294901760
    %754 = vmatpush1.msra.mxu0 %v753
    %755 = vmatprep.subr.mxu0 0.0
    %v756 = vand.u32 %v61, 4294901760
    %757 = vmatpush1.msra.mxu0 %v756
    %758 = vmatprep.subr.mxu0 0.0
    %v759 = vand.u32 %v62, 4294901760
    %760 = vmatpush1.msra.mxu0 %v759
    %761 = vmatprep.subr.mxu0 0.0
    %v762 = vand.u32 %v63, 4294901760
    %763 = vmatpush1.msra.mxu0 %v762
    %764 = vmatprep.subr.mxu0 0.0
    %v765 = vand.u32 %v64, 4294901760
    %766 = vmatpush1.msra.mxu0 %v765
    %767 = vmatprep.subr.mxu0 0.0
    %v768 = vand.u32 %v65, 4294901760
    %769 = vmatpush1.msra.mxu0 %v768
    %770 = vmatprep.subr.mxu0 0.0
    %v771 = vand.u32 %v66, 4294901760
    %772 = vmatpush1.msra.mxu0 %v771
    %773 = vmatprep.subr.mxu0 0.0
    %v774 = vand.u32 %v67, 4294901760
    %775 = vmatpush1.msra.mxu0 %v774
    %776 = vmatprep.subr.mxu0 0.0
    %v777 = vand.u32 %v68, 4294901760
    %778 = vmatpush1.msra.mxu0 %v777
    %779 = vmatprep.subr.mxu0 0.0
    %v780 = vand.u32 %v69, 4294901760
    %781 = vmatpush1.msra.mxu0 %v780
    %v782 = vand.u32 %v22, 4294901760
    %v783 = vsub.f32 %v22, %v782
    %v784 = vand.u32 %v783, 4294901760
    %785 = vmatprep.mubr.f32.mxu0 %v784
    %v786 = vand.u32 %v21, 4294901760
    %v787 = vsub.f32 %v21, %v786
    %v788 = vand.u32 %v787, 4294901760
    %789 = vmatmul.mubr.f32.gmra.mrb[0].mxu0 %v788
    %v790 = vpop.f32.mrb[0].mxu0
    %v791 = vadd.f32 %v656, %v790
    %v792 = vpop.f32.mrb[0].mxu0
    %v793 = vand.u32 %v24, 4294901760
    %v794 = vsub.f32 %v24, %v793
    %v795 = vand.u32 %v794, 4294901760
    %796 = vmatprep.mubr.f32.mxu0 %v795
    %v797 = vand.u32 %v23, 4294901760
    %v798 = vsub.f32 %v23, %v797
    %v799 = vand.u32 %v798, 4294901760
    %800 = vmatmul.mubr.f32.gmra.mrb[0].mxu0 %v799
    %v801 = vpop.f32.mrb[0].mxu0
    %v802 = vadd.f32 %v665, %v801
    %v803 = vpop.f32.mrb[0].mxu0
    %v804 = vand.u32 %v26, 4294901760
    %v805 = vsub.f32 %v26, %v804
    %v806 = vand.u32 %v805, 4294901760
    %807 = vmatprep.mubr.f32.mxu0 %v806
    %v808 = vand.u32 %v25, 4294901760
    %v809 = vsub.f32 %v25, %v808
    %v810 = vand.u32 %v809, 4294901760
    %811 = vmatmul.mubr.f32.gmra.mrb[0].mxu0 %v810
    %v812 = vpop.f32.mrb[0].mxu0
    %v813 = vadd.f32 %v674, %v812
    %v814 = vpop.f32.mrb[0].mxu0
    %v815 = vand.u32 %v28, 4294901760
    %v816 = vsub.f32 %v28, %v815
    %v817 = vand.u32 %v816, 4294901760
    %818 = vmatprep.mubr.f32.mxu0 %v817
    %v819 = vand.u32 %v27, 4294901760
    %v820 = vsub.f32 %v27, %v819
    %v821 = vand.u32 %v820, 4294901760
    %822 = vmatmul.mubr.f32.gmra.mrb[0].mxu0 %v821
    %v823 = vpop.f32.mrb[0].mxu0
    %v824 = vadd.f32 %v683, %v823
    %v825 = vpop.f32.mrb[0].mxu0
    %826 = vdwg.mxu0
    %827 = vmatprep.subr.mxu0 0.0
    %v828 = vand.u32 %v38, 4294901760
    %v829 = vsub.f32 %v38, %v828
    %v830 = vand.u32 %v829, 4294901760
    %831 = vmatpush1.msra.mxu0 %v830
    %832 = vmatprep.subr.mxu0 0.0
    %v833 = vand.u32 %v39, 4294901760
    %v834 = vsub.f32 %v39, %v833
    %v835 = vand.u32 %v834, 4294901760
    %836 = vmatpush1.msra.mxu0 %v835
    %837 = vmatprep.subr.mxu0 0.0
    %v838 = vand.u32 %v40, 4294901760
    %v839 = vsub.f32 %v40, %v838
    %v840 = vand.u32 %v839, 4294901760
    %841 = vmatpush1.msra.mxu0 %v840
    %842 = vmatprep.subr.mxu0 0.0
    %v843 = vand.u32 %v41, 4294901760
    %v844 = vsub.f32 %v41, %v843
    %v845 = vand.u32 %v844, 4294901760
    %846 = vmatpush1.msra.mxu0 %v845
    %847 = vmatprep.subr.mxu0 0.0
    %v848 = vand.u32 %v42, 4294901760
    %v849 = vsub.f32 %v42, %v848
    %v850 = vand.u32 %v849, 4294901760
    %851 = vmatpush1.msra.mxu0 %v850
    %852 = vmatprep.subr.mxu0 0.0
    %v853 = vand.u32 %v43, 4294901760
    %v854 = vsub.f32 %v43, %v853
    %v855 = vand.u32 %v854, 4294901760
    %856 = vmatpush1.msra.mxu0 %v855
    %857 = vmatprep.subr.mxu0 0.0
    %v858 = vand.u32 %v44, 4294901760
    %v859 = vsub.f32 %v44, %v858
    %v860 = vand.u32 %v859, 4294901760
    %861 = vmatpush1.msra.mxu0 %v860
    %862 = vmatprep.subr.mxu0 0.0
    %v863 = vand.u32 %v45, 4294901760
    %v864 = vsub.f32 %v45, %v863
    %v865 = vand.u32 %v864, 4294901760
    %866 = vmatpush1.msra.mxu0 %v865
    %867 = vmatprep.subr.mxu0 0.0
    %v868 = vand.u32 %v46, 4294901760
    %v869 = vsub.f32 %v46, %v868
    %v870 = vand.u32 %v869, 4294901760
    %871 = vmatpush1.msra.mxu0 %v870
    %872 = vmatprep.subr.mxu0 0.0
    %v873 = vand.u32 %v47, 4294901760
    %v874 = vsub.f32 %v47, %v873
    %v875 = vand.u32 %v874, 4294901760
    %876 = vmatpush1.msra.mxu0 %v875
    %877 = vmatprep.subr.mxu0 0.0
    %v878 = vand.u32 %v48, 4294901760
    %v879 = vsub.f32 %v48, %v878
    %v880 = vand.u32 %v879, 4294901760
    %881 = vmatpush1.msra.mxu0 %v880
    %882 = vmatprep.subr.mxu0 0.0
    %v883 = vand.u32 %v49, 4294901760
    %v884 = vsub.f32 %v49, %v883
    %v885 = vand.u32 %v884, 4294901760
    %886 = vmatpush1.msra.mxu0 %v885
    %887 = vmatprep.subr.mxu0 0.0
    %v888 = vand.u32 %v50, 4294901760
    %v889 = vsub.f32 %v50, %v888
    %v890 = vand.u32 %v889, 4294901760
    %891 = vmatpush1.msra.mxu0 %v890
    %892 = vmatprep.subr.mxu0 0.0
    %v893 = vand.u32 %v51, 4294901760
    %v894 = vsub.f32 %v51, %v893
    %v895 = vand.u32 %v894, 4294901760
    %896 = vmatpush1.msra.mxu0 %v895
    %897 = vmatprep.subr.mxu0 0.0
    %v898 = vand.u32 %v52, 4294901760
    %v899 = vsub.f32 %v52, %v898
    %v900 = vand.u32 %v899, 4294901760
    %901 = vmatpush1.msra.mxu0 %v900
    %902 = vmatprep.subr.mxu0 0.0
    %v903 = vand.u32 %v53, 4294901760
    %v904 = vsub.f32 %v53, %v903
    %v905 = vand.u32 %v904, 4294901760
    %906 = vmatpush1.msra.mxu0 %v905
    %907 = vmatprep.subr.mxu0 0.0
    %v908 = vand.u32 %v54, 4294901760
    %v909 = vsub.f32 %v54, %v908
    %v910 = vand.u32 %v909, 4294901760
    %911 = vmatpush1.msra.mxu0 %v910
    %912 = vmatprep.subr.mxu0 0.0
    %v913 = vand.u32 %v55, 4294901760
    %v914 = vsub.f32 %v55, %v913
    %v915 = vand.u32 %v914, 4294901760
    %916 = vmatpush1.msra.mxu0 %v915
    %917 = vmatprep.subr.mxu0 0.0
    %v918 = vand.u32 %v56, 4294901760
    %v919 = vsub.f32 %v56, %v918
    %v920 = vand.u32 %v919, 4294901760
    %921 = vmatpush1.msra.mxu0 %v920
    %922 = vmatprep.subr.mxu0 0.0
    %v923 = vand.u32 %v57, 4294901760
    %v924 = vsub.f32 %v57, %v923
    %v925 = vand.u32 %v924, 4294901760
    %926 = vmatpush1.msra.mxu0 %v925
    %927 = vmatprep.subr.mxu0 0.0
    %v928 = vand.u32 %v58, 4294901760
    %v929 = vsub.f32 %v58, %v928
    %v930 = vand.u32 %v929, 4294901760
    %931 = vmatpush1.msra.mxu0 %v930
    %932 = vmatprep.subr.mxu0 0.0
    %v933 = vand.u32 %v59, 4294901760
    %v934 = vsub.f32 %v59, %v933
    %v935 = vand.u32 %v934, 4294901760
    %936 = vmatpush1.msra.mxu0 %v935
    %937 = vmatprep.subr.mxu0 0.0
    %v938 = vand.u32 %v60, 4294901760
    %v939 = vsub.f32 %v60, %v938
    %v940 = vand.u32 %v939, 4294901760
    %941 = vmatpush1.msra.mxu0 %v940
    %942 = vmatprep.subr.mxu0 0.0
    %v943 = vand.u32 %v61, 4294901760
    %v944 = vsub.f32 %v61, %v943
    %v945 = vand.u32 %v944, 4294901760
    %946 = vmatpush1.msra.mxu0 %v945
    %947 = vmatprep.subr.mxu0 0.0
    %v948 = vand.u32 %v62, 4294901760
    %v949 = vsub.f32 %v62, %v948
    %v950 = vand.u32 %v949, 4294901760
    %951 = vmatpush1.msra.mxu0 %v950
    %952 = vmatprep.subr.mxu0 0.0
    %v953 = vand.u32 %v63, 4294901760
    %v954 = vsub.f32 %v63, %v953
    %v955 = vand.u32 %v954, 4294901760
    %956 = vmatpush1.msra.mxu0 %v955
    %957 = vmatprep.subr.mxu0 0.0
    %v958 = vand.u32 %v64, 4294901760
    %v959 = vsub.f32 %v64, %v958
    %v960 = vand.u32 %v959, 4294901760
    %961 = vmatpush1.msra.mxu0 %v960
    %962 = vmatprep.subr.mxu0 0.0
    %v963 = vand.u32 %v65, 4294901760
    %v964 = vsub.f32 %v65, %v963
    %v965 = vand.u32 %v964, 4294901760
    %966 = vmatpush1.msra.mxu0 %v965
    %967 = vmatprep.subr.mxu0 0.0
    %v968 = vand.u32 %v66, 4294901760
    %v969 = vsub.f32 %v66, %v968
    %v970 = vand.u32 %v969, 4294901760
    %971 = vmatpush1.msra.mxu0 %v970
    %972 = vmatprep.subr.mxu0 0.0
    %v973 = vand.u32 %v67, 4294901760
    %v974 = vsub.f32 %v67, %v973
    %v975 = vand.u32 %v974, 4294901760
    %976 = vmatpush1.msra.mxu0 %v975
    %977 = vmatprep.subr.mxu0 0.0
    %v978 = vand.u32 %v68, 4294901760
    %v979 = vsub.f32 %v68, %v978
    %v980 = vand.u32 %v979, 4294901760
    %981 = vmatpush1.msra.mxu0 %v980
    %982 = vmatprep.subr.mxu0 0.0
    %v983 = vand.u32 %v69, 4294901760
    %v984 = vsub.f32 %v69, %v983
    %v985 = vand.u32 %v984, 4294901760
    %986 = vmatpush1.msra.mxu0 %v985
    %v987 = vand.u32 %v22, 4294901760
    %988 = vmatprep.mubr.f32.mxu0 %v987
    %v989 = vand.u32 %v21, 4294901760
    %990 = vmatmul.mubr.f32.gmra.mrb[0].mxu0 %v989
    %v991 = vpop.f32.mrb[0].mxu0
    %v992 = vadd.f32 %v791, %v991
    %v993 = vpop.f32.mrb[0].mxu0
    %v994 = vand.u32 %v24, 4294901760
    %995 = vmatprep.mubr.f32.mxu0 %v994
    %v996 = vand.u32 %v23, 4294901760
    %997 = vmatmul.mubr.f32.gmra.mrb[0].mxu0 %v996
    %v998 = vpop.f32.mrb[0].mxu0
    %v999 = vadd.f32 %v802, %v998
    %v1000 = vpop.f32.mrb[0].mxu0
    %v1001 = vand.u32 %v26, 4294901760
    %1002 = vmatprep.mubr.f32.mxu0 %v1001
    %v1003 = vand.u32 %v25, 4294901760
    %1004 = vmatmul.mubr.f32.gmra.mrb[0].mxu0 %v1003
    %v1005 = vpop.f32.mrb[0].mxu0
    %v1006 = vadd.f32 %v813, %v1005
    %v1007 = vpop.f32.mrb[0].mxu0
    %v1008 = vand.u32 %v28, 4294901760
    %1009 = vmatprep.mubr.f32.mxu0 %v1008
    %v1010 = vand.u32 %v27, 4294901760
    %1011 = vmatmul.mubr.f32.gmra.mrb[0].mxu0 %v1010
    %v1012 = vpop.f32.mrb[0].mxu0
    %v1013 = vadd.f32 %v824, %v1012
    %v1014 = vpop.f32.mrb[0].mxu0
    %1015 = vdwg.mxu0
    %1016 = vmatprep.subr.mxu0 0.0
    %v1017 = vand.u32 %v38, 4294901760
    %1018 = vmatpush1.msra.mxu0 %v1017
    %1019 = vmatprep.subr.mxu0 0.0
    %v1020 = vand.u32 %v39, 4294901760
    %1021 = vmatpush1.msra.mxu0 %v1020
    %1022 = vmatprep.subr.mxu0 0.0
    %v1023 = vand.u32 %v40, 4294901760
    %1024 = vmatpush1.msra.mxu0 %v1023
    %1025 = vmatprep.subr.mxu0 0.0
    %v1026 = vand.u32 %v41, 4294901760
    %1027 = vmatpush1.msra.mxu0 %v1026
    %1028 = vmatprep.subr.mxu0 0.0
    %v1029 = vand.u32 %v42, 4294901760
    %1030 = vmatpush1.msra.mxu0 %v1029
    %1031 = vmatprep.subr.mxu0 0.0
    %v1032 = vand.u32 %v43, 4294901760
    %1033 = vmatpush1.msra.mxu0 %v1032
    %1034 = vmatprep.subr.mxu0 0.0
    %v1035 = vand.u32 %v44, 4294901760
    %1036 = vmatpush1.msra.mxu0 %v1035
    %1037 = vmatprep.subr.mxu0 0.0
    %v1038 = vand.u32 %v45, 4294901760
    %1039 = vmatpush1.msra.mxu0 %v1038
    %1040 = vmatprep.subr.mxu0 0.0
    %v1041 = vand.u32 %v46, 4294901760
    %1042 = vmatpush1.msra.mxu0 %v1041
    %1043 = vmatprep.subr.mxu0 0.0
    %v1044 = vand.u32 %v47, 4294901760
    %1045 = vmatpush1.msra.mxu0 %v1044
    %1046 = vmatprep.subr.mxu0 0.0
    %v1047 = vand.u32 %v48, 4294901760
    %1048 = vmatpush1.msra.mxu0 %v1047
    %1049 = vmatprep.subr.mxu0 0.0
    %v1050 = vand.u32 %v49, 4294901760
    %1051 = vmatpush1.msra.mxu0 %v1050
    %1052 = vmatprep.subr.mxu0 0.0
    %v1053 = vand.u32 %v50, 4294901760
    %1054 = vmatpush1.msra.mxu0 %v1053
    %1055 = vmatprep.subr.mxu0 0.0
    %v1056 = vand.u32 %v51, 4294901760
    %1057 = vmatpush1.msra.mxu0 %v1056
    %1058 = vmatprep.subr.mxu0 0.0
    %v1059 = vand.u32 %v52, 4294901760
    %1060 = vmatpush1.msra.mxu0 %v1059
    %1061 = vmatprep.subr.mxu0 0.0
    %v1062 = vand.u32 %v53, 4294901760
    %1063 = vmatpush1.msra.mxu0 %v1062
    %1064 = vmatprep.subr.mxu0 0.0
    %v1065 = vand.u32 %v54, 4294901760
    %1066 = vmatpush1.msra.mxu0 %v1065
    %1067 = vmatprep.subr.mxu0 0.0
    %v1068 = vand.u32 %v55, 4294901760
    %1069 = vmatpush1.msra.mxu0 %v1068
    %1070 = vmatprep.subr.mxu0 0.0
    %v1071 = vand.u32 %v56, 4294901760
    %1072 = vmatpush1.msra.mxu0 %v1071
    %1073 = vmatprep.subr.mxu0 0.0
    %v1074 = vand.u32 %v57, 4294901760
    %1075 = vmatpush1.msra.mxu0 %v1074
    %1076 = vmatprep.subr.mxu0 0.0
    %v1077 = vand.u32 %v58, 4294901760
    %1078 = vmatpush1.msra.mxu0 %v1077
    %1079 = vmatprep.subr.mxu0 0.0
    %v1080 = vand.u32 %v59, 4294901760
    %1081 = vmatpush1.msra.mxu0 %v1080
    %1082 = vmatprep.subr.mxu0 0.0
    %v1083 = vand.u32 %v60, 4294901760
    %1084 = vmatpush1.msra.mxu0 %v1083
    %1085 = vmatprep.subr.mxu0 0.0
    %v1086 = vand.u32 %v61, 4294901760
    %1087 = vmatpush1.msra.mxu0 %v1086
    %1088 = vmatprep.subr.mxu0 0.0
    %v1089 = vand.u32 %v62, 4294901760
    %1090 = vmatpush1.msra.mxu0 %v1089
    %1091 = vmatprep.subr.mxu0 0.0
    %v1092 = vand.u32 %v63, 4294901760
    %1093 = vmatpush1.msra.mxu0 %v1092
    %1094 = vmatprep.subr.mxu0 0.0
    %v1095 = vand.u32 %v64, 4294901760
    %1096 = vmatpush1.msra.mxu0 %v1095
    %1097 = vmatprep.subr.mxu0 0.0
    %v1098 = vand.u32 %v65, 4294901760
    %1099 = vmatpush1.msra.mxu0 %v1098
    %1100 = vmatprep.subr.mxu0 0.0
    %v1101 = vand.u32 %v66, 4294901760
    %1102 = vmatpush1.msra.mxu0 %v1101
    %1103 = vmatprep.subr.mxu0 0.0
    %v1104 = vand.u32 %v67, 4294901760
    %1105 = vmatpush1.msra.mxu0 %v1104
    %1106 = vmatprep.subr.mxu0 0.0
    %v1107 = vand.u32 %v68, 4294901760
    %1108 = vmatpush1.msra.mxu0 %v1107
    %1109 = vmatprep.subr.mxu0 0.0
    %v1110 = vand.u32 %v69, 4294901760
    %1111 = vmatpush1.msra.mxu0 %v1110
    %v1112 = vand.u32 %v22, 4294901760
    %1113 = vmatprep.mubr.f32.mxu0 %v1112
    %v1114 = vand.u32 %v21, 4294901760
    %1115 = vmatmul.mubr.f32.gmra.mrb[0].mxu0 %v1114
    %v1116 = vpop.f32.mrb[0].mxu0
    %v1117 = vadd.f32 %v992, %v1116
    %v1118 = vpop.f32.mrb[0].mxu0
    %v1119 = vand.u32 %v24, 4294901760
    %1120 = vmatprep.mubr.f32.mxu0 %v1119
    %v1121 = vand.u32 %v23, 4294901760
    %1122 = vmatmul.mubr.f32.gmra.mrb[0].mxu0 %v1121
    %v1123 = vpop.f32.mrb[0].mxu0
    %v1124 = vadd.f32 %v999, %v1123
    %v1125 = vpop.f32.mrb[0].mxu0
    %v1126 = vand.u32 %v26, 4294901760
    %1127 = vmatprep.mubr.f32.mxu0 %v1126
    %v1128 = vand.u32 %v25, 4294901760
    %1129 = vmatmul.mubr.f32.gmra.mrb[0].mxu0 %v1128
    %v1130 = vpop.f32.mrb[0].mxu0
    %v1131 = vadd.f32 %v1006, %v1130
    %v1132 = vpop.f32.mrb[0].mxu0
    %v1133 = vand.u32 %v28, 4294901760
    %1134 = vmatprep.mubr.f32.mxu0 %v1133
    %v1135 = vand.u32 %v27, 4294901760
    %1136 = vmatmul.mubr.f32.gmra.mrb[0].mxu0 %v1135
    %v1137 = vpop.f32.mrb[0].mxu0
    %v1138 = vadd.f32 %v1013, %v1137
    %v1139 = vpop.f32.mrb[0].mxu0
    %1140 = vdwg.mxu0
    %vm1141 = vcmp.ge.f32.partialorder %v1117, 0.0
    %vm1142 = vcmp.ge.f32.partialorder %v1124, 0.0
    %vm1143 = vcmp.ge.f32.partialorder %v1131, 0.0
    %vm1144 = vcmp.ge.f32.partialorder %v1138, 0.0
    %v1145 = vlaneseq
    %v1146 = vshrl.u32 %v1145, 7
    %v1147 = vsub.s32 0, %v1146
    %v1148 = vrot.slane %v110, %v1147
    %v1149 = vmul.f32 %v1148, %v1117
    %v1150 = vmul.f32 %v1148, %v1124
    %v1151 = vmul.f32 %v1148, %v1131
    %v1152 = vmul.f32 %v1148, %v1138
    %v1153 = vsel %vm1141, %v1117, %v1149
    %v1154 = vsel %vm1142, %v1124, %v1150
    %v1155 = vsel %vm1143, %v1131, %v1151
    %v1156 = vsel %vm1144, %v1138, %v1152
    %vm1157 = vcmask 523264
    %v1158 = vsel %vm1157, %v1153, 0.0
    %1159 = vadd.xlane.f32.xlu0 %v1158
    %v1160 = vpop.xlane.xlu0 %1159
    %v1161 = vsel %vm1157, %v1154, 0.0
    %1162 = vadd.xlane.f32.xlu0 %v1161
    %v1163 = vpop.xlane.xlu0 %1162
    %v1164 = vsel %vm1157, %v1155, 0.0
    %1165 = vadd.xlane.f32.xlu0 %v1164
    %v1166 = vpop.xlane.xlu0 %1165
    %v1167 = vsel %vm1157, %v1156, 0.0
    %1168 = vadd.xlane.f32.xlu0 %v1167
    %v1169 = vpop.xlane.xlu0 %1168
    %vm1174 = vcmask 1040384
    %v1175 = vrot.slane %v1160, 7
    %v1176 = vrot.slane %v1163, 7
    %v1177 = vsel %vm1174, %v1175, %v1176
    %v1178 = vrot.slane %v1166, 7
    %v1179 = vrot.slane %v1169, 7
    %v1180 = vsel %vm1174, %v1178, %v1179
    %v1185 = vsel %vm1174, 0.0, %v1175
    %v1186 = vsel %vm1174, 0.0, %v1178
    %v1187 = vadd.f32 %v1160, %v1185
    %v1188 = vadd.f32 %v1163, %v1177
    %v1189 = vadd.f32 %v1166, %v1186
    %v1190 = vadd.f32 %v1169, %v1180
    %vm1195 = vcmask 1041408
    %v1196 = vrot.slane %v1187, 6
    %v1197 = vrot.slane %v1188, 6
    %v1198 = vsel %vm1195, %v1196, %v1197
    %v1199 = vrot.slane %v1189, 6
    %v1200 = vrot.slane %v1190, 6
    %v1201 = vsel %vm1195, %v1199, %v1200
    %v1206 = vsel %vm1195, 0.0, %v1196
    %v1207 = vsel %vm1195, 0.0, %v1199
    %v1208 = vadd.f32 %v1187, %v1206
    %v1209 = vadd.f32 %v1188, %v1198
    %v1210 = vadd.f32 %v1189, %v1207
    %v1211 = vadd.f32 %v1190, %v1201
    %vm1216 = vcmask 1043456
    %v1217 = vrot.slane %v1208, 4
    %v1218 = vrot.slane %v1209, 4
    %v1219 = vsel %vm1216, %v1217, %v1218
    %v1220 = vrot.slane %v1210, 4
    %v1221 = vrot.slane %v1211, 4
    %v1222 = vsel %vm1216, %v1220, %v1221
    %v1227 = vsel %vm1216, 0.0, %v1217
    %v1228 = vsel %vm1216, 0.0, %v1220
    %v1229 = vadd.f32 %v1208, %v1227
    %v1230 = vadd.f32 %v1209, %v1219
    %v1231 = vadd.f32 %v1210, %v1228
    %v1232 = vadd.f32 %v1211, %v1222
    %v1233 = vadd.f32 %v1229, 0.0
    %v1234 = vadd.f32 %v1230, %v1229
    %v1235 = vadd.f32 %v1231, 0.0
    %v1236 = vadd.f32 %v1232, %v1231
    %v1237 = vmul.f32 %v1153, %v1153
    %v1238 = vmul.f32 %v1154, %v1154
    %v1239 = vmul.f32 %v1155, %v1155
    %v1240 = vmul.f32 %v1156, %v1156
    %v1241 = vsel %vm1157, %v1237, 0.0
    %1242 = vadd.xlane.f32.xlu0 %v1241
    %v1243 = vpop.xlane.xlu0 %1242
    %v1244 = vsel %vm1157, %v1238, 0.0
    %1245 = vadd.xlane.f32.xlu0 %v1244
    %v1246 = vpop.xlane.xlu0 %1245
    %v1247 = vsel %vm1157, %v1239, 0.0
    %1248 = vadd.xlane.f32.xlu0 %v1247
    %v1249 = vpop.xlane.xlu0 %1248
    %v1250 = vsel %vm1157, %v1240, 0.0
    %1251 = vadd.xlane.f32.xlu0 %v1250
    %v1252 = vpop.xlane.xlu0 %1251
    %v1257 = vrot.slane %v1243, 7
    %v1258 = vrot.slane %v1246, 7
    %v1259 = vsel %vm1174, %v1257, %v1258
    %v1260 = vrot.slane %v1249, 7
    %v1261 = vrot.slane %v1252, 7
    %v1262 = vsel %vm1174, %v1260, %v1261
    %v1267 = vsel %vm1174, 0.0, %v1257
    %v1268 = vsel %vm1174, 0.0, %v1260
    %v1269 = vadd.f32 %v1243, %v1267
    %v1270 = vadd.f32 %v1246, %v1259
    %v1271 = vadd.f32 %v1249, %v1268
    %v1272 = vadd.f32 %v1252, %v1262
    %v1277 = vrot.slane %v1269, 6
    %v1278 = vrot.slane %v1270, 6
    %v1279 = vsel %vm1195, %v1277, %v1278
    %v1280 = vrot.slane %v1271, 6
    %v1281 = vrot.slane %v1272, 6
    %v1282 = vsel %vm1195, %v1280, %v1281
    %v1287 = vsel %vm1195, 0.0, %v1277
    %v1288 = vsel %vm1195, 0.0, %v1280
    %v1289 = vadd.f32 %v1269, %v1287
    %v1290 = vadd.f32 %v1270, %v1279
    %v1291 = vadd.f32 %v1271, %v1288
    %v1292 = vadd.f32 %v1272, %v1282
    %v1297 = vrot.slane %v1289, 4
    %v1298 = vrot.slane %v1290, 4
    %v1299 = vsel %vm1216, %v1297, %v1298
    %v1300 = vrot.slane %v1291, 4
    %v1301 = vrot.slane %v1292, 4
    %v1302 = vsel %vm1216, %v1300, %v1301
    %v1307 = vsel %vm1216, 0.0, %v1297
    %v1308 = vsel %vm1216, 0.0, %v1300
    %v1309 = vadd.f32 %v1289, %v1307
    %v1310 = vadd.f32 %v1290, %v1299
    %v1311 = vadd.f32 %v1291, %v1308
    %v1312 = vadd.f32 %v1292, %v1302
    %v1313 = vadd.f32 %v1309, 0.0
    %v1314 = vadd.f32 %v1310, %v1309
    %v1315 = vadd.f32 %v1311, 0.0
    %v1316 = vadd.f32 %v1312, %v1311
    %v1317 = vrcp.pop %v36
    %v1318 = vmul.f32 %v1233, %v1317
    %v1319 = vrcp.pop %v37
    %v1320 = vmul.f32 %v1234, %v1319
    %v1321 = vmul.f32 %v1235, %v1317
    %v1322 = vmul.f32 %v1236, %v1319
    %v1323 = vmul.f32 %v1318, 2.0
    %v1324 = vmul.f32 %v1320, 2.0
    %v1325 = vmul.f32 %v1321, 2.0
    %v1326 = vmul.f32 %v1322, 2.0
    %v1327 = vmul.f32 %v1323, %v1233
    %v1328 = vmul.f32 %v1324, %v1234
    %v1329 = vmul.f32 %v1325, %v1235
    %v1330 = vmul.f32 %v1326, %v1236
    %v1331 = vsub.f32 %v1313, %v1327
    %v1332 = vsub.f32 %v1314, %v1328
    %v1333 = vsub.f32 %v1315, %v1329
    %v1334 = vsub.f32 %v1316, %v1330
    %v1335 = vmul.f32 %v1331, %v1317
    %v1336 = vmul.f32 %v1332, %v1319
    %v1337 = vmul.f32 %v1333, %v1317
    %v1338 = vmul.f32 %v1334, %v1319
    %v1339 = vmul.f32 %v1318, %v1318
    %v1340 = vmul.f32 %v1320, %v1320
    %v1341 = vmul.f32 %v1321, %v1321
    %v1342 = vmul.f32 %v1322, %v1322
    %v1343 = vadd.f32 %v1335, %v1339
    %v1344 = vadd.f32 %v1336, %v1340
    %v1345 = vadd.f32 %v1337, %v1341
    %v1346 = vadd.f32 %v1338, %v1342
    %v1347 = vadd.f32 %v1343, 1e-05
    %v1348 = vadd.f32 %v1344, 1e-05
    %v1349 = vadd.f32 %v1345, 1e-05
    %v1350 = vadd.f32 %v1346, 1e-05
    %v1351 = vrsqrt.pop %v1347
    %v1352 = vmul.f32 %v1347, %v1351
    %vm1353 = vcmp.eq.f32.partialorder %v1347, inf
    %v1354 = vsel %vm1353, %v1347, %v1352
    %vm1355 = vcmp.eq.f32.partialorder %v1347, 0.0
    %v1356 = vand.u32 %v1347, 2147483648
    %v1357 = vsel %vm1355, %v1356, %v1354
    %v1358 = vrsqrt.pop %v1348
    %v1359 = vmul.f32 %v1348, %v1358
    %vm1360 = vcmp.eq.f32.partialorder %v1348, inf
    %v1361 = vsel %vm1360, %v1348, %v1359
    %vm1362 = vcmp.eq.f32.partialorder %v1348, 0.0
    %v1363 = vand.u32 %v1348, 2147483648
    %v1364 = vsel %vm1362, %v1363, %v1361
    %v1365 = vrsqrt.pop %v1349
    %v1366 = vmul.f32 %v1349, %v1365
    %vm1367 = vcmp.eq.f32.partialorder %v1349, inf
    %v1368 = vsel %vm1367, %v1349, %v1366
    %vm1369 = vcmp.eq.f32.partialorder %v1349, 0.0
    %v1370 = vand.u32 %v1349, 2147483648
    %v1371 = vsel %vm1369, %v1370, %v1368
    %v1372 = vrsqrt.pop %v1350
    %v1373 = vmul.f32 %v1350, %v1372
    %vm1374 = vcmp.eq.f32.partialorder %v1350, inf
    %v1375 = vsel %vm1374, %v1350, %v1373
    %vm1376 = vcmp.eq.f32.partialorder %v1350, 0.0
    %v1377 = vand.u32 %v1350, 2147483648
    %v1378 = vsel %vm1376, %v1377, %v1375
    %1380 = vset.pattern.permute.xlu0 0
    %1381 = vperm.xlu0 %1380, %v1318
    %v1382 = vpop.permute.xlu0 %1381
    %1385 = vset.pattern.permute.xlu0 0
    %1386 = vperm.xlu0 %1385, %v1320
    %v1387 = vpop.permute.xlu0 %1386
    %1390 = vset.pattern.permute.xlu0 0
    %1391 = vperm.xlu0 %1390, %v1321
    %v1392 = vpop.permute.xlu0 %1391
    %1395 = vset.pattern.permute.xlu0 0
    %1396 = vperm.xlu0 %1395, %v1322
    %v1397 = vpop.permute.xlu0 %1396
    %v1399 = vsub.f32 %v1153, %v1382
    %v1400 = vsub.f32 %v1154, %v1387
    %v1401 = vsub.f32 %v1155, %v1392
    %v1402 = vsub.f32 %v1156, %v1397
    %1404 = vset.pattern.permute.xlu0 0
    %1405 = vperm.xlu0 %1404, %v1357
    %v1406 = vpop.permute.xlu0 %1405
    %1409 = vset.pattern.permute.xlu0 0
    %1410 = vperm.xlu0 %1409, %v1364
    %v1411 = vpop.permute.xlu0 %1410
    %1414 = vset.pattern.permute.xlu0 0
    %1415 = vperm.xlu0 %1414, %v1371
    %v1416 = vpop.permute.xlu0 %1415
    %1419 = vset.pattern.permute.xlu0 0
    %1420 = vperm.xlu0 %1419, %v1378
    %v1421 = vpop.permute.xlu0 %1420
    %v1423 = vrcp.pop %v1406
    %v1424 = vmul.f32 %v1399, %v1423
    %v1425 = vrcp.pop %v1411
    %v1426 = vmul.f32 %v1400, %v1425
    %v1427 = vrcp.pop %v1416
    %v1428 = vmul.f32 %v1401, %v1427
    %v1429 = vrcp.pop %v1421
    %v1430 = vmul.f32 %v1402, %v1429
    %v1431 = vlaneseq
    %v1432 = vshrl.u32 %v1431, 7
    %v1433 = vsub.s32 1, %v1432
    %v1434 = vrot.slane %v110, %v1433
    %v1435 = vmul.f32 %v1424, %v1434
    %v1436 = vmul.f32 %v1426, %v1434
    %v1437 = vmul.f32 %v1428, %v1434
    %v1438 = vmul.f32 %v1430, %v1434
    %v1439 = vlaneseq
    %v1440 = vshrl.u32 %v1439, 7
    %v1441 = vsub.s32 2, %v1440
    %v1442 = vrot.slane %v110, %v1441
    %v1443 = vadd.f32 %v1435, %v1442
    %v1444 = vadd.f32 %v1436, %v1442
    %v1445 = vadd.f32 %v1437, %v1442
    %v1446 = vadd.f32 %v1438, %v1442
    %v1451 = vrot.slane %v1443, 6
    %v1452 = vrot.slane %v1444, 6
    %v1453 = vsel %vm1195, %v1451, %v1452
    %v1454 = vrot.slane %v1445, 6
    %v1455 = vrot.slane %v1446, 6
    %v1456 = vsel %vm1195, %v1454, %v1455
    %v1461 = vsel %vm1195, 0.0, %v1451
    %v1462 = vsel %vm1195, 0.0, %v1454
    %v1463 = vrot.slane %v1443, 7
    %v1464 = vrot.slane %v1444, 7
    %v1465 = vsel %vm1174, %v1463, %v1464
    %v1466 = vrot.slane %v1445, 7
    %v1467 = vrot.slane %v1446, 7
    %v1468 = vsel %vm1174, %v1466, %v1467
    %v1471 = vsel %vm1174, 0.0, %v1463
    %v1472 = vsel %vm1174, 0.0, %v1466
    %1475 = vrot.lane.b32.xlu0 %v1471, 64
    %v1476 = vpop.permute.xlu0 %1475
    %1477 = vrot.lane.b32.xlu0 %v1465, 64
    %v1478 = vpop.permute.xlu0 %1477
    %1479 = vrot.lane.b32.xlu0 %v1472, 64
    %v1480 = vpop.permute.xlu0 %1479
    %1481 = vrot.lane.b32.xlu0 %v1468, 64
    %v1482 = vpop.permute.xlu0 %1481
    %v1487 = vsel %vm1157, %v1461, %v1476
    %v1488 = vsel %vm1157, %v1453, %v1478
    %v1489 = vsel %vm1157, %v1462, %v1480
    %v1490 = vsel %vm1157, %v1456, %v1482
    %v1491 = vsel %vm1157, %v1443, 0
    %v1493 = vsel %vm1157, %v1444, 0
    %v1495 = vsel %vm1157, %v1445, 0
    %v1497 = vsel %vm1157, %v1446, 0
    %1499 = vmatprep.subr.mxu0 0.0
    %v1500 = vand.u32 %v70, 4294901760
    %1501 = vmatpush1.msra.mxu0 %v1500
    %1502 = vmatprep.subr.mxu0 0.0
    %v1503 = vand.u32 %v71, 4294901760
    %1504 = vmatpush1.msra.mxu0 %v1503
    %1505 = vmatprep.subr.mxu0 0.0
    %v1506 = vand.u32 %v72, 4294901760
    %1507 = vmatpush1.msra.mxu0 %v1506
    %1508 = vmatprep.subr.mxu0 0.0
    %v1509 = vand.u32 %v73, 4294901760
    %1510 = vmatpush1.msra.mxu0 %v1509
    %1511 = vmatprep.subr.mxu0 0.0
    %v1512 = vand.u32 %v74, 4294901760
    %1513 = vmatpush1.msra.mxu0 %v1512
    %1514 = vmatprep.subr.mxu0 0.0
    %v1515 = vand.u32 %v75, 4294901760
    %1516 = vmatpush1.msra.mxu0 %v1515
    %1517 = vmatprep.subr.mxu0 0.0
    %v1518 = vand.u32 %v76, 4294901760
    %1519 = vmatpush1.msra.mxu0 %v1518
    %1520 = vmatprep.subr.mxu0 0.0
    %v1521 = vand.u32 %v77, 4294901760
    %1522 = vmatpush1.msra.mxu0 %v1521
    %1523 = vmatprep.subr.mxu0 0.0
    %v1524 = vand.u32 %v78, 4294901760
    %1525 = vmatpush1.msra.mxu0 %v1524
    %1526 = vmatprep.subr.mxu0 0.0
    %v1527 = vand.u32 %v79, 4294901760
    %1528 = vmatpush1.msra.mxu0 %v1527
    %1529 = vmatprep.subr.mxu0 0.0
    %v1530 = vand.u32 %v80, 4294901760
    %1531 = vmatpush1.msra.mxu0 %v1530
    %1532 = vmatprep.subr.mxu0 0.0
    %v1533 = vand.u32 %v81, 4294901760
    %1534 = vmatpush1.msra.mxu0 %v1533
    %1535 = vmatprep.subr.mxu0 0.0
    %v1536 = vand.u32 %v82, 4294901760
    %1537 = vmatpush1.msra.mxu0 %v1536
    %1538 = vmatprep.subr.mxu0 0.0
    %v1539 = vand.u32 %v83, 4294901760
    %1540 = vmatpush1.msra.mxu0 %v1539
    %1541 = vmatprep.subr.mxu0 0.0
    %v1542 = vand.u32 %v84, 4294901760
    %1543 = vmatpush1.msra.mxu0 %v1542
    %1544 = vmatprep.subr.mxu0 0.0
    %v1545 = vand.u32 %v85, 4294901760
    %1546 = vmatpush1.msra.mxu0 %v1545
    %1547 = vmatprep.subr.mxu0 0.0
    %v1548 = vand.u32 %v86, 4294901760
    %1549 = vmatpush1.msra.mxu0 %v1548
    %1550 = vmatprep.subr.mxu0 0.0
    %v1551 = vand.u32 %v87, 4294901760
    %1552 = vmatpush1.msra.mxu0 %v1551
    %1553 = vmatprep.subr.mxu0 0.0
    %v1554 = vand.u32 %v88, 4294901760
    %1555 = vmatpush1.msra.mxu0 %v1554
    %1556 = vmatprep.subr.mxu0 0.0
    %v1557 = vand.u32 %v89, 4294901760
    %1558 = vmatpush1.msra.mxu0 %v1557
    %1559 = vmatprep.subr.mxu0 0.0
    %v1560 = vand.u32 %v90, 4294901760
    %1561 = vmatpush1.msra.mxu0 %v1560
    %1562 = vmatprep.subr.mxu0 0.0
    %v1563 = vand.u32 %v91, 4294901760
    %1564 = vmatpush1.msra.mxu0 %v1563
    %1565 = vmatprep.subr.mxu0 0.0
    %v1566 = vand.u32 %v92, 4294901760
    %1567 = vmatpush1.msra.mxu0 %v1566
    %1568 = vmatprep.subr.mxu0 0.0
    %v1569 = vand.u32 %v93, 4294901760
    %1570 = vmatpush1.msra.mxu0 %v1569
    %1571 = vmatprep.subr.mxu0 0.0
    %1572 = vmatpush1.msra.mxu0 0.0
    %1573 = vmatprep.subr.mxu0 0.0
    %1574 = vmatpush1.msra.mxu0 0.0
    %1575 = vmatprep.subr.mxu0 0.0
    %1576 = vmatpush1.msra.mxu0 0.0
    %1577 = vmatprep.subr.mxu0 0.0
    %1578 = vmatpush1.msra.mxu0 0.0
    %1579 = vmatprep.subr.mxu0 0.0
    %1580 = vmatpush1.msra.mxu0 0.0
    %1581 = vmatprep.subr.mxu0 0.0
    %1582 = vmatpush1.msra.mxu0 0.0
    %1583 = vmatprep.subr.mxu0 0.0
    %1584 = vmatpush1.msra.mxu0 0.0
    %1585 = vmatprep.subr.mxu0 0.0
    %1586 = vmatpush1.msra.mxu0 0.0
    %v1587 = vand.u32 %v1491, 4294901760
    %v1588 = vsub.f32 %v1491, %v1587
    %v1589 = vand.u32 %v1588, 4294901760
    %v1590 = vsub.f32 %v1588, %v1589
    %v1591 = vand.u32 %v1590, 4294901760
    %1592 = vmatprep.mubr.f32.mxu0 %v1591
    %v1593 = vand.u32 %v1487, 4294901760
    %v1594 = vsub.f32 %v1487, %v1593
    %v1595 = vand.u32 %v1594, 4294901760
    %v1596 = vsub.f32 %v1594, %v1595
    %v1597 = vand.u32 %v1596, 4294901760
    %1598 = vmatmul.mubr.f32.gmra.mrb[0].mxu0 %v1597
    %v1599 = vpop.f32.mrb[0].mxu0
    %v1600 = vadd.f32 0.0, %v1599
    %v1601 = vpop.f32.mrb[0].mxu0
    %v1602 = vand.u32 %v1493, 4294901760
    %v1603 = vsub.f32 %v1493, %v1602
    %v1604 = vand.u32 %v1603, 4294901760
    %v1605 = vsub.f32 %v1603, %v1604
    %v1606 = vand.u32 %v1605, 4294901760
    %1607 = vmatprep.mubr.f32.mxu0 %v1606
    %v1608 = vand.u32 %v1488, 4294901760
    %v1609 = vsub.f32 %v1488, %v1608
    %v1610 = vand.u32 %v1609, 4294901760
    %v1611 = vsub.f32 %v1609, %v1610
    %v1612 = vand.u32 %v1611, 4294901760
    %1613 = vmatmul.mubr.f32.gmra.mrb[0].mxu0 %v1612
    %v1614 = vpop.f32.mrb[0].mxu0
    %v1615 = vadd.f32 0.0, %v1614
    %v1616 = vpop.f32.mrb[0].mxu0
    %v1617 = vand.u32 %v1495, 4294901760
    %v1618 = vsub.f32 %v1495, %v1617
    %v1619 = vand.u32 %v1618, 4294901760
    %v1620 = vsub.f32 %v1618, %v1619
    %v1621 = vand.u32 %v1620, 4294901760
    %1622 = vmatprep.mubr.f32.mxu0 %v1621
    %v1623 = vand.u32 %v1489, 4294901760
    %v1624 = vsub.f32 %v1489, %v1623
    %v1625 = vand.u32 %v1624, 4294901760
    %v1626 = vsub.f32 %v1624, %v1625
    %v1627 = vand.u32 %v1626, 4294901760
    %1628 = vmatmul.mubr.f32.gmra.mrb[0].mxu0 %v1627
    %v1629 = vpop.f32.mrb[0].mxu0
    %v1630 = vadd.f32 0.0, %v1629
    %v1631 = vpop.f32.mrb[0].mxu0
    %v1632 = vand.u32 %v1497, 4294901760
    %v1633 = vsub.f32 %v1497, %v1632
    %v1634 = vand.u32 %v1633, 4294901760
    %v1635 = vsub.f32 %v1633, %v1634
    %v1636 = vand.u32 %v1635, 4294901760
    %1637 = vmatprep.mubr.f32.mxu0 %v1636
    %v1638 = vand.u32 %v1490, 4294901760
    %v1639 = vsub.f32 %v1490, %v1638
    %v1640 = vand.u32 %v1639, 4294901760
    %v1641 = vsub.f32 %v1639, %v1640
    %v1642 = vand.u32 %v1641, 4294901760
    %1643 = vmatmul.mubr.f32.gmra.mrb[0].mxu0 %v1642
    %v1644 = vpop.f32.mrb[0].mxu0
    %v1645 = vadd.f32 0.0, %v1644
    %v1646 = vpop.f32.mrb[0].mxu0
    %1647 = vdwg.mxu0
    %1648 = vmatprep.subr.mxu0 0.0
    %v1649 = vand.u32 %v70, 4294901760
    %v1650 = vsub.f32 %v70, %v1649
    %v1651 = vand.u32 %v1650, 4294901760
    %v1652 = vsub.f32 %v1650, %v1651
    %v1653 = vand.u32 %v1652, 4294901760
    %1654 = vmatpush1.msra.mxu0 %v1653
    %1655 = vmatprep.subr.mxu0 0.0
    %v1656 = vand.u32 %v71, 4294901760
    %v1657 = vsub.f32 %v71, %v1656
    %v1658 = vand.u32 %v1657, 4294901760
    %v1659 = vsub.f32 %v1657, %v1658
    %v1660 = vand.u32 %v1659, 4294901760
    %1661 = vmatpush1.msra.mxu0 %v1660
    %1662 = vmatprep.subr.mxu0 0.0
    %v1663 = vand.u32 %v72, 4294901760
    %v1664 = vsub.f32 %v72, %v1663
    %v1665 = vand.u32 %v1664, 4294901760
    %v1666 = vsub.f32 %v1664, %v1665
    %v1667 = vand.u32 %v1666, 4294901760
    %1668 = vmatpush1.msra.mxu0 %v1667
    %1669 = vmatprep.subr.mxu0 0.0
    %v1670 = vand.u32 %v73, 4294901760
    %v1671 = vsub.f32 %v73, %v1670
    %v1672 = vand.u32 %v1671, 4294901760
    %v1673 = vsub.f32 %v1671, %v1672
    %v1674 = vand.u32 %v1673, 4294901760
    %1675 = vmatpush1.msra.mxu0 %v1674
    %1676 = vmatprep.subr.mxu0 0.0
    %v1677 = vand.u32 %v74, 4294901760
    %v1678 = vsub.f32 %v74, %v1677
    %v1679 = vand.u32 %v1678, 4294901760
    %v1680 = vsub.f32 %v1678, %v1679
    %v1681 = vand.u32 %v1680, 4294901760
    %1682 = vmatpush1.msra.mxu0 %v1681
    %1683 = vmatprep.subr.mxu0 0.0
    %v1684 = vand.u32 %v75, 4294901760
    %v1685 = vsub.f32 %v75, %v1684
    %v1686 = vand.u32 %v1685, 4294901760
    %v1687 = vsub.f32 %v1685, %v1686
    %v1688 = vand.u32 %v1687, 4294901760
    %1689 = vmatpush1.msra.mxu0 %v1688
    %1690 = vmatprep.subr.mxu0 0.0
    %v1691 = vand.u32 %v76, 4294901760
    %v1692 = vsub.f32 %v76, %v1691
    %v1693 = vand.u32 %v1692, 4294901760
    %v1694 = vsub.f32 %v1692, %v1693
    %v1695 = vand.u32 %v1694, 4294901760
    %1696 = vmatpush1.msra.mxu0 %v1695
    %1697 = vmatprep.subr.mxu0 0.0
    %v1698 = vand.u32 %v77, 4294901760
    %v1699 = vsub.f32 %v77, %v1698
    %v1700 = vand.u32 %v1699, 4294901760
    %v1701 = vsub.f32 %v1699, %v1700
    %v1702 = vand.u32 %v1701, 4294901760
    %1703 = vmatpush1.msra.mxu0 %v1702
    %1704 = vmatprep.subr.mxu0 0.0
    %v1705 = vand.u32 %v78, 4294901760
    %v1706 = vsub.f32 %v78, %v1705
    %v1707 = vand.u32 %v1706, 4294901760
    %v1708 = vsub.f32 %v1706, %v1707
    %v1709 = vand.u32 %v1708, 4294901760
    %1710 = vmatpush1.msra.mxu0 %v1709
    %1711 = vmatprep.subr.mxu0 0.0
    %v1712 = vand.u32 %v79, 4294901760
    %v1713 = vsub.f32 %v79, %v1712
    %v1714 = vand.u32 %v1713, 4294901760
    %v1715 = vsub.f32 %v1713, %v1714
    %v1716 = vand.u32 %v1715, 4294901760
    %1717 = vmatpush1.msra.mxu0 %v1716
    %1718 = vmatprep.subr.mxu0 0.0
    %v1719 = vand.u32 %v80, 4294901760
    %v1720 = vsub.f32 %v80, %v1719
    %v1721 = vand.u32 %v1720, 4294901760
    %v1722 = vsub.f32 %v1720, %v1721
    %v1723 = vand.u32 %v1722, 4294901760
    %1724 = vmatpush1.msra.mxu0 %v1723
    %1725 = vmatprep.subr.mxu0 0.0
    %v1726 = vand.u32 %v81, 4294901760
    %v1727 = vsub.f32 %v81, %v1726
    %v1728 = vand.u32 %v1727, 4294901760
    %v1729 = vsub.f32 %v1727, %v1728
    %v1730 = vand.u32 %v1729, 4294901760
    %1731 = vmatpush1.msra.mxu0 %v1730
    %1732 = vmatprep.subr.mxu0 0.0
    %v1733 = vand.u32 %v82, 4294901760
    %v1734 = vsub.f32 %v82, %v1733
    %v1735 = vand.u32 %v1734, 4294901760
    %v1736 = vsub.f32 %v1734, %v1735
    %v1737 = vand.u32 %v1736, 4294901760
    %1738 = vmatpush1.msra.mxu0 %v1737
    %1739 = vmatprep.subr.mxu0 0.0
    %v1740 = vand.u32 %v83, 4294901760
    %v1741 = vsub.f32 %v83, %v1740
    %v1742 = vand.u32 %v1741, 4294901760
    %v1743 = vsub.f32 %v1741, %v1742
    %v1744 = vand.u32 %v1743, 4294901760
    %1745 = vmatpush1.msra.mxu0 %v1744
    %1746 = vmatprep.subr.mxu0 0.0
    %v1747 = vand.u32 %v84, 4294901760
    %v1748 = vsub.f32 %v84, %v1747
    %v1749 = vand.u32 %v1748, 4294901760
    %v1750 = vsub.f32 %v1748, %v1749
    %v1751 = vand.u32 %v1750, 4294901760
    %1752 = vmatpush1.msra.mxu0 %v1751
    %1753 = vmatprep.subr.mxu0 0.0
    %v1754 = vand.u32 %v85, 4294901760
    %v1755 = vsub.f32 %v85, %v1754
    %v1756 = vand.u32 %v1755, 4294901760
    %v1757 = vsub.f32 %v1755, %v1756
    %v1758 = vand.u32 %v1757, 4294901760
    %1759 = vmatpush1.msra.mxu0 %v1758
    %1760 = vmatprep.subr.mxu0 0.0
    %v1761 = vand.u32 %v86, 4294901760
    %v1762 = vsub.f32 %v86, %v1761
    %v1763 = vand.u32 %v1762, 4294901760
    %v1764 = vsub.f32 %v1762, %v1763
    %v1765 = vand.u32 %v1764, 4294901760
    %1766 = vmatpush1.msra.mxu0 %v1765
    %1767 = vmatprep.subr.mxu0 0.0
    %v1768 = vand.u32 %v87, 4294901760
    %v1769 = vsub.f32 %v87, %v1768
    %v1770 = vand.u32 %v1769, 4294901760
    %v1771 = vsub.f32 %v1769, %v1770
    %v1772 = vand.u32 %v1771, 4294901760
    %1773 = vmatpush1.msra.mxu0 %v1772
    %1774 = vmatprep.subr.mxu0 0.0
    %v1775 = vand.u32 %v88, 4294901760
    %v1776 = vsub.f32 %v88, %v1775
    %v1777 = vand.u32 %v1776, 4294901760
    %v1778 = vsub.f32 %v1776, %v1777
    %v1779 = vand.u32 %v1778, 4294901760
    %1780 = vmatpush1.msra.mxu0 %v1779
    %1781 = vmatprep.subr.mxu0 0.0
    %v1782 = vand.u32 %v89, 4294901760
    %v1783 = vsub.f32 %v89, %v1782
    %v1784 = vand.u32 %v1783, 4294901760
    %v1785 = vsub.f32 %v1783, %v1784
    %v1786 = vand.u32 %v1785, 4294901760
    %1787 = vmatpush1.msra.mxu0 %v1786
    %1788 = vmatprep.subr.mxu0 0.0
    %v1789 = vand.u32 %v90, 4294901760
    %v1790 = vsub.f32 %v90, %v1789
    %v1791 = vand.u32 %v1790, 4294901760
    %v1792 = vsub.f32 %v1790, %v1791
    %v1793 = vand.u32 %v1792, 4294901760
    %1794 = vmatpush1.msra.mxu0 %v1793
    %1795 = vmatprep.subr.mxu0 0.0
    %v1796 = vand.u32 %v91, 4294901760
    %v1797 = vsub.f32 %v91, %v1796
    %v1798 = vand.u32 %v1797, 4294901760
    %v1799 = vsub.f32 %v1797, %v1798
    %v1800 = vand.u32 %v1799, 4294901760
    %1801 = vmatpush1.msra.mxu0 %v1800
    %1802 = vmatprep.subr.mxu0 0.0
    %v1803 = vand.u32 %v92, 4294901760
    %v1804 = vsub.f32 %v92, %v1803
    %v1805 = vand.u32 %v1804, 4294901760
    %v1806 = vsub.f32 %v1804, %v1805
    %v1807 = vand.u32 %v1806, 4294901760
    %1808 = vmatpush1.msra.mxu0 %v1807
    %1809 = vmatprep.subr.mxu0 0.0
    %v1810 = vand.u32 %v93, 4294901760
    %v1811 = vsub.f32 %v93, %v1810
    %v1812 = vand.u32 %v1811, 4294901760
    %v1813 = vsub.f32 %v1811, %v1812
    %v1814 = vand.u32 %v1813, 4294901760
    %1815 = vmatpush1.msra.mxu0 %v1814
    %1816 = vmatprep.subr.mxu0 0.0
    %1817 = vmatpush1.msra.mxu0 0.0
    %1818 = vmatprep.subr.mxu0 0.0
    %1819 = vmatpush1.msra.mxu0 0.0
    %1820 = vmatprep.subr.mxu0 0.0
    %1821 = vmatpush1.msra.mxu0 0.0
    %1822 = vmatprep.subr.mxu0 0.0
    %1823 = vmatpush1.msra.mxu0 0.0
    %1824 = vmatprep.subr.mxu0 0.0
    %1825 = vmatpush1.msra.mxu0 0.0
    %1826 = vmatprep.subr.mxu0 0.0
    %1827 = vmatpush1.msra.mxu0 0.0
    %1828 = vmatprep.subr.mxu0 0.0
    %1829 = vmatpush1.msra.mxu0 0.0
    %1830 = vmatprep.subr.mxu0 0.0
    %1831 = vmatpush1.msra.mxu0 0.0
    %v1832 = vand.u32 %v1491, 4294901760
    %1833 = vmatprep.mubr.f32.mxu0 %v1832
    %v1834 = vand.u32 %v1487, 4294901760
    %1835 = vmatmul.mubr.f32.gmra.mrb[0].mxu0 %v1834
    %v1836 = vpop.f32.mrb[0].mxu0
    %v1837 = vadd.f32 %v1600, %v1836
    %v1838 = vpop.f32.mrb[0].mxu0
    %v1839 = vand.u32 %v1493, 4294901760
    %1840 = vmatprep.mubr.f32.mxu0 %v1839
    %v1841 = vand.u32 %v1488, 4294901760
    %1842 = vmatmul.mubr.f32.gmra.mrb[0].mxu0 %v1841
    %v1843 = vpop.f32.mrb[0].mxu0
    %v1844 = vadd.f32 %v1615, %v1843
    %v1845 = vpop.f32.mrb[0].mxu0
    %v1846 = vand.u32 %v1495, 4294901760
    %1847 = vmatprep.mubr.f32.mxu0 %v1846
    %v1848 = vand.u32 %v1489, 4294901760
    %1849 = vmatmul.mubr.f32.gmra.mrb[0].mxu0 %v1848
    %v1850 = vpop.f32.mrb[0].mxu0
    %v1851 = vadd.f32 %v1630, %v1850
    %v1852 = vpop.f32.mrb[0].mxu0
    %v1853 = vand.u32 %v1497, 4294901760
    %1854 = vmatprep.mubr.f32.mxu0 %v1853
    %v1855 = vand.u32 %v1490, 4294901760
    %1856 = vmatmul.mubr.f32.gmra.mrb[0].mxu0 %v1855
    %v1857 = vpop.f32.mrb[0].mxu0
    %v1858 = vadd.f32 %v1645, %v1857
    %v1859 = vpop.f32.mrb[0].mxu0
    %1860 = vdwg.mxu0
    %1861 = vmatprep.subr.mxu0 0.0
    %v1862 = vand.u32 %v70, 4294901760
    %v1863 = vsub.f32 %v70, %v1862
    %1864 = vmatpush1.msra.mxu0 %v1863
    %1865 = vmatprep.subr.mxu0 0.0
    %v1866 = vand.u32 %v71, 4294901760
    %v1867 = vsub.f32 %v71, %v1866
    %1868 = vmatpush1.msra.mxu0 %v1867
    %1869 = vmatprep.subr.mxu0 0.0
    %v1870 = vand.u32 %v72, 4294901760
    %v1871 = vsub.f32 %v72, %v1870
    %1872 = vmatpush1.msra.mxu0 %v1871
    %1873 = vmatprep.subr.mxu0 0.0
    %v1874 = vand.u32 %v73, 4294901760
    %v1875 = vsub.f32 %v73, %v1874
    %1876 = vmatpush1.msra.mxu0 %v1875
    %1877 = vmatprep.subr.mxu0 0.0
    %v1878 = vand.u32 %v74, 4294901760
    %v1879 = vsub.f32 %v74, %v1878
    %1880 = vmatpush1.msra.mxu0 %v1879
    %1881 = vmatprep.subr.mxu0 0.0
    %v1882 = vand.u32 %v75, 4294901760
    %v1883 = vsub.f32 %v75, %v1882
    %1884 = vmatpush1.msra.mxu0 %v1883
    %1885 = vmatprep.subr.mxu0 0.0
    %v1886 = vand.u32 %v76, 4294901760
    %v1887 = vsub.f32 %v76, %v1886
    %1888 = vmatpush1.msra.mxu0 %v1887
    %1889 = vmatprep.subr.mxu0 0.0
    %v1890 = vand.u32 %v77, 4294901760
    %v1891 = vsub.f32 %v77, %v1890
    %1892 = vmatpush1.msra.mxu0 %v1891
    %1893 = vmatprep.subr.mxu0 0.0
    %v1894 = vand.u32 %v78, 4294901760
    %v1895 = vsub.f32 %v78, %v1894
    %1896 = vmatpush1.msra.mxu0 %v1895
    %1897 = vmatprep.subr.mxu0 0.0
    %v1898 = vand.u32 %v79, 4294901760
    %v1899 = vsub.f32 %v79, %v1898
    %1900 = vmatpush1.msra.mxu0 %v1899
    %1901 = vmatprep.subr.mxu0 0.0
    %v1902 = vand.u32 %v80, 4294901760
    %v1903 = vsub.f32 %v80, %v1902
    %1904 = vmatpush1.msra.mxu0 %v1903
    %1905 = vmatprep.subr.mxu0 0.0
    %v1906 = vand.u32 %v81, 4294901760
    %v1907 = vsub.f32 %v81, %v1906
    %1908 = vmatpush1.msra.mxu0 %v1907
    %1909 = vmatprep.subr.mxu0 0.0
    %v1910 = vand.u32 %v82, 4294901760
    %v1911 = vsub.f32 %v82, %v1910
    %1912 = vmatpush1.msra.mxu0 %v1911
    %1913 = vmatprep.subr.mxu0 0.0
    %v1914 = vand.u32 %v83, 4294901760
    %v1915 = vsub.f32 %v83, %v1914
    %1916 = vmatpush1.msra.mxu0 %v1915
    %1917 = vmatprep.subr.mxu0 0.0
    %v1918 = vand.u32 %v84, 4294901760
    %v1919 = vsub.f32 %v84, %v1918
    %1920 = vmatpush1.msra.mxu0 %v1919
    %1921 = vmatprep.subr.mxu0 0.0
    %v1922 = vand.u32 %v85, 4294901760
    %v1923 = vsub.f32 %v85, %v1922
    %1924 = vmatpush1.msra.mxu0 %v1923
    %1925 = vmatprep.subr.mxu0 0.0
    %v1926 = vand.u32 %v86, 4294901760
    %v1927 = vsub.f32 %v86, %v1926
    %1928 = vmatpush1.msra.mxu0 %v1927
    %1929 = vmatprep.subr.mxu0 0.0
    %v1930 = vand.u32 %v87, 4294901760
    %v1931 = vsub.f32 %v87, %v1930
    %1932 = vmatpush1.msra.mxu0 %v1931
    %1933 = vmatprep.subr.mxu0 0.0
    %v1934 = vand.u32 %v88, 4294901760
    %v1935 = vsub.f32 %v88, %v1934
    %1936 = vmatpush1.msra.mxu0 %v1935
    %1937 = vmatprep.subr.mxu0 0.0
    %v1938 = vand.u32 %v89, 4294901760
    %v1939 = vsub.f32 %v89, %v1938
    %1940 = vmatpush1.msra.mxu0 %v1939
    %1941 = vmatprep.subr.mxu0 0.0
    %v1942 = vand.u32 %v90, 4294901760
    %v1943 = vsub.f32 %v90, %v1942
    %1944 = vmatpush1.msra.mxu0 %v1943
    %1945 = vmatprep.subr.mxu0 0.0
    %v1946 = vand.u32 %v91, 4294901760
    %v1947 = vsub.f32 %v91, %v1946
    %1948 = vmatpush1.msra.mxu0 %v1947
    %1949 = vmatprep.subr.mxu0 0.0
    %v1950 = vand.u32 %v92, 4294901760
    %v1951 = vsub.f32 %v92, %v1950
    %1952 = vmatpush1.msra.mxu0 %v1951
    %1953 = vmatprep.subr.mxu0 0.0
    %v1954 = vand.u32 %v93, 4294901760
    %v1955 = vsub.f32 %v93, %v1954
    %1956 = vmatpush1.msra.mxu0 %v1955
    %1957 = vmatprep.subr.mxu0 0.0
    %1958 = vmatpush1.msra.mxu0 0.0
    %1959 = vmatprep.subr.mxu0 0.0
    %1960 = vmatpush1.msra.mxu0 0.0
    %1961 = vmatprep.subr.mxu0 0.0
    %1962 = vmatpush1.msra.mxu0 0.0
    %1963 = vmatprep.subr.mxu0 0.0
    %1964 = vmatpush1.msra.mxu0 0.0
    %1965 = vmatprep.subr.mxu0 0.0
    %1966 = vmatpush1.msra.mxu0 0.0
    %1967 = vmatprep.subr.mxu0 0.0
    %1968 = vmatpush1.msra.mxu0 0.0
    %1969 = vmatprep.subr.mxu0 0.0
    %1970 = vmatpush1.msra.mxu0 0.0
    %1971 = vmatprep.subr.mxu0 0.0
    %1972 = vmatpush1.msra.mxu0 0.0
    %v1973 = vand.u32 %v1491, 4294901760
    %v1974 = vsub.f32 %v1491, %v1973
    %1975 = vmatprep.mubr.f32.mxu0 %v1974
    %v1976 = vand.u32 %v1487, 4294901760
    %v1977 = vsub.f32 %v1487, %v1976
    %1978 = vmatmul.mubr.f32.gmra.mrb[0].mxu0 %v1977
    %v1979 = vpop.f32.mrb[0].mxu0
    %v1980 = vadd.f32 %v1837, %v1979
    %v1981 = vpop.f32.mrb[0].mxu0
    %v1982 = vand.u32 %v1493, 4294901760
    %v1983 = vsub.f32 %v1493, %v1982
    %1984 = vmatprep.mubr.f32.mxu0 %v1983
    %v1985 = vand.u32 %v1488, 4294901760
    %v1986 = vsub.f32 %v1488, %v1985
    %1987 = vmatmul.mubr.f32.gmra.mrb[0].mxu0 %v1986
    %v1988 = vpop.f32.mrb[0].mxu0
    %v1989 = vadd.f32 %v1844, %v1988
    %v1990 = vpop.f32.mrb[0].mxu0
    %v1991 = vand.u32 %v1495, 4294901760
    %v1992 = vsub.f32 %v1495, %v1991
    %1993 = vmatprep.mubr.f32.mxu0 %v1992
    %v1994 = vand.u32 %v1489, 4294901760
    %v1995 = vsub.f32 %v1489, %v1994
    %1996 = vmatmul.mubr.f32.gmra.mrb[0].mxu0 %v1995
    %v1997 = vpop.f32.mrb[0].mxu0
    %v1998 = vadd.f32 %v1851, %v1997
    %v1999 = vpop.f32.mrb[0].mxu0
    %v2000 = vand.u32 %v1497, 4294901760
    %v2001 = vsub.f32 %v1497, %v2000
    %2002 = vmatprep.mubr.f32.mxu0 %v2001
    %v2003 = vand.u32 %v1490, 4294901760
    %v2004 = vsub.f32 %v1490, %v2003
    %2005 = vmatmul.mubr.f32.gmra.mrb[0].mxu0 %v2004
    %v2006 = vpop.f32.mrb[0].mxu0
    %v2007 = vadd.f32 %v1858, %v2006
    %v2008 = vpop.f32.mrb[0].mxu0
    %2009 = vdwg.mxu0
    %2010 = vmatprep.subr.mxu0 0.0
    %v2011 = vand.u32 %v70, 4294901760
    %2012 = vmatpush1.msra.mxu0 %v2011
    %2013 = vmatprep.subr.mxu0 0.0
    %v2014 = vand.u32 %v71, 4294901760
    %2015 = vmatpush1.msra.mxu0 %v2014
    %2016 = vmatprep.subr.mxu0 0.0
    %v2017 = vand.u32 %v72, 4294901760
    %2018 = vmatpush1.msra.mxu0 %v2017
    %2019 = vmatprep.subr.mxu0 0.0
    %v2020 = vand.u32 %v73, 4294901760
    %2021 = vmatpush1.msra.mxu0 %v2020
    %2022 = vmatprep.subr.mxu0 0.0
    %v2023 = vand.u32 %v74, 4294901760
    %2024 = vmatpush1.msra.mxu0 %v2023
    %2025 = vmatprep.subr.mxu0 0.0
    %v2026 = vand.u32 %v75, 4294901760
    %2027 = vmatpush1.msra.mxu0 %v2026
    %2028 = vmatprep.subr.mxu0 0.0
    %v2029 = vand.u32 %v76, 4294901760
    %2030 = vmatpush1.msra.mxu0 %v2029
    %2031 = vmatprep.subr.mxu0 0.0
    %v2032 = vand.u32 %v77, 4294901760
    %2033 = vmatpush1.msra.mxu0 %v2032
    %2034 = vmatprep.subr.mxu0 0.0
    %v2035 = vand.u32 %v78, 4294901760
    %2036 = vmatpush1.msra.mxu0 %v2035
    %2037 = vmatprep.subr.mxu0 0.0
    %v2038 = vand.u32 %v79, 4294901760
    %2039 = vmatpush1.msra.mxu0 %v2038
    %2040 = vmatprep.subr.mxu0 0.0
    %v2041 = vand.u32 %v80, 4294901760
    %2042 = vmatpush1.msra.mxu0 %v2041
    %2043 = vmatprep.subr.mxu0 0.0
    %v2044 = vand.u32 %v81, 4294901760
    %2045 = vmatpush1.msra.mxu0 %v2044
    %2046 = vmatprep.subr.mxu0 0.0
    %v2047 = vand.u32 %v82, 4294901760
    %2048 = vmatpush1.msra.mxu0 %v2047
    %2049 = vmatprep.subr.mxu0 0.0
    %v2050 = vand.u32 %v83, 4294901760
    %2051 = vmatpush1.msra.mxu0 %v2050
    %2052 = vmatprep.subr.mxu0 0.0
    %v2053 = vand.u32 %v84, 4294901760
    %2054 = vmatpush1.msra.mxu0 %v2053
    %2055 = vmatprep.subr.mxu0 0.0
    %v2056 = vand.u32 %v85, 4294901760
    %2057 = vmatpush1.msra.mxu0 %v2056
    %2058 = vmatprep.subr.mxu0 0.0
    %v2059 = vand.u32 %v86, 4294901760
    %2060 = vmatpush1.msra.mxu0 %v2059
    %2061 = vmatprep.subr.mxu0 0.0
    %v2062 = vand.u32 %v87, 4294901760
    %2063 = vmatpush1.msra.mxu0 %v2062
    %2064 = vmatprep.subr.mxu0 0.0
    %v2065 = vand.u32 %v88, 4294901760
    %2066 = vmatpush1.msra.mxu0 %v2065
    %2067 = vmatprep.subr.mxu0 0.0
    %v2068 = vand.u32 %v89, 4294901760
    %2069 = vmatpush1.msra.mxu0 %v2068
    %2070 = vmatprep.subr.mxu0 0.0
    %v2071 = vand.u32 %v90, 4294901760
    %2072 = vmatpush1.msra.mxu0 %v2071
    %2073 = vmatprep.subr.mxu0 0.0
    %v2074 = vand.u32 %v91, 4294901760
    %2075 = vmatpush1.msra.mxu0 %v2074
    %2076 = vmatprep.subr.mxu0 0.0
    %v2077 = vand.u32 %v92, 4294901760
    %2078 = vmatpush1.msra.mxu0 %v2077
    %2079 = vmatprep.subr.mxu0 0.0
    %v2080 = vand.u32 %v93, 4294901760
    %2081 = vmatpush1.msra.mxu0 %v2080
    %2082 = vmatprep.subr.mxu0 0.0
    %2083 = vmatpush1.msra.mxu0 0.0
    %2084 = vmatprep.subr.mxu0 0.0
    %2085 = vmatpush1.msra.mxu0 0.0
    %2086 = vmatprep.subr.mxu0 0.0
    %2087 = vmatpush1.msra.mxu0 0.0
    %2088 = vmatprep.subr.mxu0 0.0
    %2089 = vmatpush1.msra.mxu0 0.0
    %2090 = vmatprep.subr.mxu0 0.0
    %2091 = vmatpush1.msra.mxu0 0.0
    %2092 = vmatprep.subr.mxu0 0.0
    %2093 = vmatpush1.msra.mxu0 0.0
    %2094 = vmatprep.subr.mxu0 0.0
    %2095 = vmatpush1.msra.mxu0 0.0
    %2096 = vmatprep.subr.mxu0 0.0
    %2097 = vmatpush1.msra.mxu0 0.0
    %v2098 = vand.u32 %v1491, 4294901760
    %v2099 = vsub.f32 %v1491, %v2098
    %v2100 = vand.u32 %v2099, 4294901760
    %2101 = vmatprep.mubr.f32.mxu0 %v2100
    %v2102 = vand.u32 %v1487, 4294901760
    %v2103 = vsub.f32 %v1487, %v2102
    %v2104 = vand.u32 %v2103, 4294901760
    %2105 = vmatmul.mubr.f32.gmra.mrb[0].mxu0 %v2104
    %v2106 = vpop.f32.mrb[0].mxu0
    %v2107 = vadd.f32 %v1980, %v2106
    %v2108 = vpop.f32.mrb[0].mxu0
    %v2109 = vand.u32 %v1493, 4294901760
    %v2110 = vsub.f32 %v1493, %v2109
    %v2111 = vand.u32 %v2110, 4294901760
    %2112 = vmatprep.mubr.f32.mxu0 %v2111
    %v2113 = vand.u32 %v1488, 4294901760
    %v2114 = vsub.f32 %v1488, %v2113
    %v2115 = vand.u32 %v2114, 4294901760
    %2116 = vmatmul.mubr.f32.gmra.mrb[0].mxu0 %v2115
    %v2117 = vpop.f32.mrb[0].mxu0
    %v2118 = vadd.f32 %v1989, %v2117
    %v2119 = vpop.f32.mrb[0].mxu0
    %v2120 = vand.u32 %v1495, 4294901760
    %v2121 = vsub.f32 %v1495, %v2120
    %v2122 = vand.u32 %v2121, 4294901760
    %2123 = vmatprep.mubr.f32.mxu0 %v2122
    %v2124 = vand.u32 %v1489, 4294901760
    %v2125 = vsub.f32 %v1489, %v2124
    %v2126 = vand.u32 %v2125, 4294901760
    %2127 = vmatmul.mubr.f32.gmra.mrb[0].mxu0 %v2126
    %v2128 = vpop.f32.mrb[0].mxu0
    %v2129 = vadd.f32 %v1998, %v2128
    %v2130 = vpop.f32.mrb[0].mxu0
    %v2131 = vand.u32 %v1497, 4294901760
    %v2132 = vsub.f32 %v1497, %v2131
    %v2133 = vand.u32 %v2132, 4294901760
    %2134 = vmatprep.mubr.f32.mxu0 %v2133
    %v2135 = vand.u32 %v1490, 4294901760
    %v2136 = vsub.f32 %v1490, %v2135
    %v2137 = vand.u32 %v2136, 4294901760
    %2138 = vmatmul.mubr.f32.gmra.mrb[0].mxu0 %v2137
    %v2139 = vpop.f32.mrb[0].mxu0
    %v2140 = vadd.f32 %v2007, %v2139
    %v2141 = vpop.f32.mrb[0].mxu0
    %2142 = vdwg.mxu0
    %2143 = vmatprep.subr.mxu0 0.0
    %v2144 = vand.u32 %v70, 4294901760
    %v2145 = vsub.f32 %v70, %v2144
    %v2146 = vand.u32 %v2145, 4294901760
    %2147 = vmatpush1.msra.mxu0 %v2146
    %2148 = vmatprep.subr.mxu0 0.0
    %v2149 = vand.u32 %v71, 4294901760
    %v2150 = vsub.f32 %v71, %v2149
    %v2151 = vand.u32 %v2150, 4294901760
    %2152 = vmatpush1.msra.mxu0 %v2151
    %2153 = vmatprep.subr.mxu0 0.0
    %v2154 = vand.u32 %v72, 4294901760
    %v2155 = vsub.f32 %v72, %v2154
    %v2156 = vand.u32 %v2155, 4294901760
    %2157 = vmatpush1.msra.mxu0 %v2156
    %2158 = vmatprep.subr.mxu0 0.0
    %v2159 = vand.u32 %v73, 4294901760
    %v2160 = vsub.f32 %v73, %v2159
    %v2161 = vand.u32 %v2160, 4294901760
    %2162 = vmatpush1.msra.mxu0 %v2161
    %2163 = vmatprep.subr.mxu0 0.0
    %v2164 = vand.u32 %v74, 4294901760
    %v2165 = vsub.f32 %v74, %v2164
    %v2166 = vand.u32 %v2165, 4294901760
    %2167 = vmatpush1.msra.mxu0 %v2166
    %2168 = vmatprep.subr.mxu0 0.0
    %v2169 = vand.u32 %v75, 4294901760
    %v2170 = vsub.f32 %v75, %v2169
    %v2171 = vand.u32 %v2170, 4294901760
    %2172 = vmatpush1.msra.mxu0 %v2171
    %2173 = vmatprep.subr.mxu0 0.0
    %v2174 = vand.u32 %v76, 4294901760
    %v2175 = vsub.f32 %v76, %v2174
    %v2176 = vand.u32 %v2175, 4294901760
    %2177 = vmatpush1.msra.mxu0 %v2176
    %2178 = vmatprep.subr.mxu0 0.0
    %v2179 = vand.u32 %v77, 4294901760
    %v2180 = vsub.f32 %v77, %v2179
    %v2181 = vand.u32 %v2180, 4294901760
    %2182 = vmatpush1.msra.mxu0 %v2181
    %2183 = vmatprep.subr.mxu0 0.0
    %v2184 = vand.u32 %v78, 4294901760
    %v2185 = vsub.f32 %v78, %v2184
    %v2186 = vand.u32 %v2185, 4294901760
    %2187 = vmatpush1.msra.mxu0 %v2186
    %2188 = vmatprep.subr.mxu0 0.0
    %v2189 = vand.u32 %v79, 4294901760
    %v2190 = vsub.f32 %v79, %v2189
    %v2191 = vand.u32 %v2190, 4294901760
    %2192 = vmatpush1.msra.mxu0 %v2191
    %2193 = vmatprep.subr.mxu0 0.0
    %v2194 = vand.u32 %v80, 4294901760
    %v2195 = vsub.f32 %v80, %v2194
    %v2196 = vand.u32 %v2195, 4294901760
    %2197 = vmatpush1.msra.mxu0 %v2196
    %2198 = vmatprep.subr.mxu0 0.0
    %v2199 = vand.u32 %v81, 4294901760
    %v2200 = vsub.f32 %v81, %v2199
    %v2201 = vand.u32 %v2200, 4294901760
    %2202 = vmatpush1.msra.mxu0 %v2201
    %2203 = vmatprep.subr.mxu0 0.0
    %v2204 = vand.u32 %v82, 4294901760
    %v2205 = vsub.f32 %v82, %v2204
    %v2206 = vand.u32 %v2205, 4294901760
    %2207 = vmatpush1.msra.mxu0 %v2206
    %2208 = vmatprep.subr.mxu0 0.0
    %v2209 = vand.u32 %v83, 4294901760
    %v2210 = vsub.f32 %v83, %v2209
    %v2211 = vand.u32 %v2210, 4294901760
    %2212 = vmatpush1.msra.mxu0 %v2211
    %2213 = vmatprep.subr.mxu0 0.0
    %v2214 = vand.u32 %v84, 4294901760
    %v2215 = vsub.f32 %v84, %v2214
    %v2216 = vand.u32 %v2215, 4294901760
    %2217 = vmatpush1.msra.mxu0 %v2216
    %2218 = vmatprep.subr.mxu0 0.0
    %v2219 = vand.u32 %v85, 4294901760
    %v2220 = vsub.f32 %v85, %v2219
    %v2221 = vand.u32 %v2220, 4294901760
    %2222 = vmatpush1.msra.mxu0 %v2221
    %2223 = vmatprep.subr.mxu0 0.0
    %v2224 = vand.u32 %v86, 4294901760
    %v2225 = vsub.f32 %v86, %v2224
    %v2226 = vand.u32 %v2225, 4294901760
    %2227 = vmatpush1.msra.mxu0 %v2226
    %2228 = vmatprep.subr.mxu0 0.0
    %v2229 = vand.u32 %v87, 4294901760
    %v2230 = vsub.f32 %v87, %v2229
    %v2231 = vand.u32 %v2230, 4294901760
    %2232 = vmatpush1.msra.mxu0 %v2231
    %2233 = vmatprep.subr.mxu0 0.0
    %v2234 = vand.u32 %v88, 4294901760
    %v2235 = vsub.f32 %v88, %v2234
    %v2236 = vand.u32 %v2235, 4294901760
    %2237 = vmatpush1.msra.mxu0 %v2236
    %2238 = vmatprep.subr.mxu0 0.0
    %v2239 = vand.u32 %v89, 4294901760
    %v2240 = vsub.f32 %v89, %v2239
    %v2241 = vand.u32 %v2240, 4294901760
    %2242 = vmatpush1.msra.mxu0 %v2241
    %2243 = vmatprep.subr.mxu0 0.0
    %v2244 = vand.u32 %v90, 4294901760
    %v2245 = vsub.f32 %v90, %v2244
    %v2246 = vand.u32 %v2245, 4294901760
    %2247 = vmatpush1.msra.mxu0 %v2246
    %2248 = vmatprep.subr.mxu0 0.0
    %v2249 = vand.u32 %v91, 4294901760
    %v2250 = vsub.f32 %v91, %v2249
    %v2251 = vand.u32 %v2250, 4294901760
    %2252 = vmatpush1.msra.mxu0 %v2251
    %2253 = vmatprep.subr.mxu0 0.0
    %v2254 = vand.u32 %v92, 4294901760
    %v2255 = vsub.f32 %v92, %v2254
    %v2256 = vand.u32 %v2255, 4294901760
    %2257 = vmatpush1.msra.mxu0 %v2256
    %2258 = vmatprep.subr.mxu0 0.0
    %v2259 = vand.u32 %v93, 4294901760
    %v2260 = vsub.f32 %v93, %v2259
    %v2261 = vand.u32 %v2260, 4294901760
    %2262 = vmatpush1.msra.mxu0 %v2261
    %2263 = vmatprep.subr.mxu0 0.0
    %2264 = vmatpush1.msra.mxu0 0.0
    %2265 = vmatprep.subr.mxu0 0.0
    %2266 = vmatpush1.msra.mxu0 0.0
    %2267 = vmatprep.subr.mxu0 0.0
    %2268 = vmatpush1.msra.mxu0 0.0
    %2269 = vmatprep.subr.mxu0 0.0
    %2270 = vmatpush1.msra.mxu0 0.0
    %2271 = vmatprep.subr.mxu0 0.0
    %2272 = vmatpush1.msra.mxu0 0.0
    %2273 = vmatprep.subr.mxu0 0.0
    %2274 = vmatpush1.msra.mxu0 0.0
    %2275 = vmatprep.subr.mxu0 0.0
    %2276 = vmatpush1.msra.mxu0 0.0
    %2277 = vmatprep.subr.mxu0 0.0
    %2278 = vmatpush1.msra.mxu0 0.0
    %v2279 = vand.u32 %v1491, 4294901760
    %2280 = vmatprep.mubr.f32.mxu0 %v2279
    %v2281 = vand.u32 %v1487, 4294901760
    %2282 = vmatmul.mubr.f32.gmra.mrb[0].mxu0 %v2281
    %v2283 = vpop.f32.mrb[0].mxu0
    %v2284 = vadd.f32 %v2107, %v2283
    %v2285 = vpop.f32.mrb[0].mxu0
    %v2286 = vand.u32 %v1493, 4294901760
    %2287 = vmatprep.mubr.f32.mxu0 %v2286
    %v2288 = vand.u32 %v1488, 4294901760
    %2289 = vmatmul.mubr.f32.gmra.mrb[0].mxu0 %v2288
    %v2290 = vpop.f32.mrb[0].mxu0
    %v2291 = vadd.f32 %v2118, %v2290
    %v2292 = vpop.f32.mrb[0].mxu0
    %v2293 = vand.u32 %v1495, 4294901760
    %2294 = vmatprep.mubr.f32.mxu0 %v2293
    %v2295 = vand.u32 %v1489, 4294901760
    %2296 = vmatmul.mubr.f32.gmra.mrb[0].mxu0 %v2295
    %v2297 = vpop.f32.mrb[0].mxu0
    %v2298 = vadd.f32 %v2129, %v2297
    %v2299 = vpop.f32.mrb[0].mxu0
    %v2300 = vand.u32 %v1497, 4294901760
    %2301 = vmatprep.mubr.f32.mxu0 %v2300
    %v2302 = vand.u32 %v1490, 4294901760
    %2303 = vmatmul.mubr.f32.gmra.mrb[0].mxu0 %v2302
    %v2304 = vpop.f32.mrb[0].mxu0
    %v2305 = vadd.f32 %v2140, %v2304
    %v2306 = vpop.f32.mrb[0].mxu0
    %2307 = vdwg.mxu0
    %2308 = vmatprep.subr.mxu0 0.0
    %v2309 = vand.u32 %v70, 4294901760
    %2310 = vmatpush1.msra.mxu0 %v2309
    %2311 = vmatprep.subr.mxu0 0.0
    %v2312 = vand.u32 %v71, 4294901760
    %2313 = vmatpush1.msra.mxu0 %v2312
    %2314 = vmatprep.subr.mxu0 0.0
    %v2315 = vand.u32 %v72, 4294901760
    %2316 = vmatpush1.msra.mxu0 %v2315
    %2317 = vmatprep.subr.mxu0 0.0
    %v2318 = vand.u32 %v73, 4294901760
    %2319 = vmatpush1.msra.mxu0 %v2318
    %2320 = vmatprep.subr.mxu0 0.0
    %v2321 = vand.u32 %v74, 4294901760
    %2322 = vmatpush1.msra.mxu0 %v2321
    %2323 = vmatprep.subr.mxu0 0.0
    %v2324 = vand.u32 %v75, 4294901760
    %2325 = vmatpush1.msra.mxu0 %v2324
    %2326 = vmatprep.subr.mxu0 0.0
    %v2327 = vand.u32 %v76, 4294901760
    %2328 = vmatpush1.msra.mxu0 %v2327
    %2329 = vmatprep.subr.mxu0 0.0
    %v2330 = vand.u32 %v77, 4294901760
    %2331 = vmatpush1.msra.mxu0 %v2330
    %2332 = vmatprep.subr.mxu0 0.0
    %v2333 = vand.u32 %v78, 4294901760
    %2334 = vmatpush1.msra.mxu0 %v2333
    %2335 = vmatprep.subr.mxu0 0.0
    %v2336 = vand.u32 %v79, 4294901760
    %2337 = vmatpush1.msra.mxu0 %v2336
    %2338 = vmatprep.subr.mxu0 0.0
    %v2339 = vand.u32 %v80, 4294901760
    %2340 = vmatpush1.msra.mxu0 %v2339
    %2341 = vmatprep.subr.mxu0 0.0
    %v2342 = vand.u32 %v81, 4294901760
    %2343 = vmatpush1.msra.mxu0 %v2342
    %2344 = vmatprep.subr.mxu0 0.0
    %v2345 = vand.u32 %v82, 4294901760
    %2346 = vmatpush1.msra.mxu0 %v2345
    %2347 = vmatprep.subr.mxu0 0.0
    %v2348 = vand.u32 %v83, 4294901760
    %2349 = vmatpush1.msra.mxu0 %v2348
    %2350 = vmatprep.subr.mxu0 0.0
    %v2351 = vand.u32 %v84, 4294901760
    %2352 = vmatpush1.msra.mxu0 %v2351
    %2353 = vmatprep.subr.mxu0 0.0
    %v2354 = vand.u32 %v85, 4294901760
    %2355 = vmatpush1.msra.mxu0 %v2354
    %2356 = vmatprep.subr.mxu0 0.0
    %v2357 = vand.u32 %v86, 4294901760
    %2358 = vmatpush1.msra.mxu0 %v2357
    %2359 = vmatprep.subr.mxu0 0.0
    %v2360 = vand.u32 %v87, 4294901760
    %2361 = vmatpush1.msra.mxu0 %v2360
    %2362 = vmatprep.subr.mxu0 0.0
    %v2363 = vand.u32 %v88, 4294901760
    %2364 = vmatpush1.msra.mxu0 %v2363
    %2365 = vmatprep.subr.mxu0 0.0
    %v2366 = vand.u32 %v89, 4294901760
    %2367 = vmatpush1.msra.mxu0 %v2366
    %2368 = vmatprep.subr.mxu0 0.0
    %v2369 = vand.u32 %v90, 4294901760
    %2370 = vmatpush1.msra.mxu0 %v2369
    %2371 = vmatprep.subr.mxu0 0.0
    %v2372 = vand.u32 %v91, 4294901760
    %2373 = vmatpush1.msra.mxu0 %v2372
    %2374 = vmatprep.subr.mxu0 0.0
    %v2375 = vand.u32 %v92, 4294901760
    %2376 = vmatpush1.msra.mxu0 %v2375
    %2377 = vmatprep.subr.mxu0 0.0
    %v2378 = vand.u32 %v93, 4294901760
    %2379 = vmatpush1.msra.mxu0 %v2378
    %2380 = vmatprep.subr.mxu0 0.0
    %2381 = vmatpush1.msra.mxu0 0.0
    %2382 = vmatprep.subr.mxu0 0.0
    %2383 = vmatpush1.msra.mxu0 0.0
    %2384 = vmatprep.subr.mxu0 0.0
    %2385 = vmatpush1.msra.mxu0 0.0
    %2386 = vmatprep.subr.mxu0 0.0
    %2387 = vmatpush1.msra.mxu0 0.0
    %2388 = vmatprep.subr.mxu0 0.0
    %2389 = vmatpush1.msra.mxu0 0.0
    %2390 = vmatprep.subr.mxu0 0.0
    %2391 = vmatpush1.msra.mxu0 0.0
    %2392 = vmatprep.subr.mxu0 0.0
    %2393 = vmatpush1.msra.mxu0 0.0
    %2394 = vmatprep.subr.mxu0 0.0
    %2395 = vmatpush1.msra.mxu0 0.0
    %v2396 = vand.u32 %v1491, 4294901760
    %2397 = vmatprep.mubr.f32.mxu0 %v2396
    %v2398 = vand.u32 %v1487, 4294901760
    %2399 = vmatmul.mubr.f32.gmra.mrb[0].mxu0 %v2398
    %v2400 = vpop.f32.mrb[0].mxu0
    %v2401 = vadd.f32 %v2284, %v2400
    %v2402 = vpop.f32.mrb[0].mxu0
    %v2403 = vand.u32 %v1493, 4294901760
    %2404 = vmatprep.mubr.f32.mxu0 %v2403
    %v2405 = vand.u32 %v1488, 4294901760
    %2406 = vmatmul.mubr.f32.gmra.mrb[0].mxu0 %v2405
    %v2407 = vpop.f32.mrb[0].mxu0
    %v2408 = vadd.f32 %v2291, %v2407
    %v2409 = vpop.f32.mrb[0].mxu0
    %v2410 = vand.u32 %v1495, 4294901760
    %2411 = vmatprep.mubr.f32.mxu0 %v2410
    %v2412 = vand.u32 %v1489, 4294901760
    %2413 = vmatmul.mubr.f32.gmra.mrb[0].mxu0 %v2412
    %v2414 = vpop.f32.mrb[0].mxu0
    %v2415 = vadd.f32 %v2298, %v2414
    %v2416 = vpop.f32.mrb[0].mxu0
    %v2417 = vand.u32 %v1497, 4294901760
    %2418 = vmatprep.mubr.f32.mxu0 %v2417
    %v2419 = vand.u32 %v1490, 4294901760
    %2420 = vmatmul.mubr.f32.gmra.mrb[0].mxu0 %v2419
    %v2421 = vpop.f32.mrb[0].mxu0
    %v2422 = vadd.f32 %v2305, %v2421
    %v2423 = vpop.f32.mrb[0].mxu0
    %2424 = vdwg.mxu0
    %vm2425 = vcmp.ge.f32.partialorder %v2401, 0.0
    %vm2426 = vcmp.ge.f32.partialorder %v2408, 0.0
    %vm2427 = vcmp.ge.f32.partialorder %v2415, 0.0
    %vm2428 = vcmp.ge.f32.partialorder %v2422, 0.0
    %v2429 = vlaneseq
    %v2430 = vshrl.u32 %v2429, 7
    %v2431 = vsub.s32 3, %v2430
    %v2432 = vrot.slane %v110, %v2431
    %v2433 = vmul.f32 %v2432, %v2401
    %v2434 = vmul.f32 %v2432, %v2408
    %v2435 = vmul.f32 %v2432, %v2415
    %v2436 = vmul.f32 %v2432, %v2422
    %v2437 = vsel %vm2425, %v2401, %v2433
    %v2438 = vsel %vm2426, %v2408, %v2434
    %v2439 = vsel %vm2427, %v2415, %v2435
    %v2440 = vsel %vm2428, %v2422, %v2436
    %v2441 = vsel %vm1157, %v2437, 0.0
    %2442 = vadd.xlane.f32.xlu0 %v2441
    %v2443 = vpop.xlane.xlu0 %2442
    %v2444 = vsel %vm1157, %v2438, 0.0
    %2445 = vadd.xlane.f32.xlu0 %v2444
    %v2446 = vpop.xlane.xlu0 %2445
    %v2447 = vsel %vm1157, %v2439, 0.0
    %2448 = vadd.xlane.f32.xlu0 %v2447
    %v2449 = vpop.xlane.xlu0 %2448
    %v2450 = vsel %vm1157, %v2440, 0.0
    %2451 = vadd.xlane.f32.xlu0 %v2450
    %v2452 = vpop.xlane.xlu0 %2451
    %v2457 = vrot.slane %v2443, 7
    %v2458 = vrot.slane %v2446, 7
    %v2459 = vsel %vm1174, %v2457, %v2458
    %v2460 = vrot.slane %v2449, 7
    %v2461 = vrot.slane %v2452, 7
    %v2462 = vsel %vm1174, %v2460, %v2461
    %v2467 = vsel %vm1174, 0.0, %v2457
    %v2468 = vsel %vm1174, 0.0, %v2460
    %v2469 = vadd.f32 %v2443, %v2467
    %v2470 = vadd.f32 %v2446, %v2459
    %v2471 = vadd.f32 %v2449, %v2468
    %v2472 = vadd.f32 %v2452, %v2462
    %v2477 = vrot.slane %v2469, 6
    %v2478 = vrot.slane %v2470, 6
    %v2479 = vsel %vm1195, %v2477, %v2478
    %v2480 = vrot.slane %v2471, 6
    %v2481 = vrot.slane %v2472, 6
    %v2482 = vsel %vm1195, %v2480, %v2481
    %v2487 = vsel %vm1195, 0.0, %v2477
    %v2488 = vsel %vm1195, 0.0, %v2480
    %v2489 = vadd.f32 %v2469, %v2487
    %v2490 = vadd.f32 %v2470, %v2479
    %v2491 = vadd.f32 %v2471, %v2488
    %v2492 = vadd.f32 %v2472, %v2482
    %v2497 = vrot.slane %v2489, 4
    %v2498 = vrot.slane %v2490, 4
    %v2499 = vsel %vm1216, %v2497, %v2498
    %v2500 = vrot.slane %v2491, 4
    %v2501 = vrot.slane %v2492, 4
    %v2502 = vsel %vm1216, %v2500, %v2501
    %v2507 = vsel %vm1216, 0.0, %v2497
    %v2508 = vsel %vm1216, 0.0, %v2500
    %v2509 = vadd.f32 %v2489, %v2507
    %v2510 = vadd.f32 %v2490, %v2499
    %v2511 = vadd.f32 %v2491, %v2508
    %v2512 = vadd.f32 %v2492, %v2502
    %v2513 = vadd.f32 %v2509, 0.0
    %v2514 = vadd.f32 %v2510, %v2509
    %v2515 = vadd.f32 %v2511, 0.0
    %v2516 = vadd.f32 %v2512, %v2511
    %v2517 = vmul.f32 %v2437, %v2437
    %v2518 = vmul.f32 %v2438, %v2438
    %v2519 = vmul.f32 %v2439, %v2439
    %v2520 = vmul.f32 %v2440, %v2440
    %v2521 = vsel %vm1157, %v2517, 0.0
    %2522 = vadd.xlane.f32.xlu0 %v2521
    %v2523 = vpop.xlane.xlu0 %2522
    %v2524 = vsel %vm1157, %v2518, 0.0
    %2525 = vadd.xlane.f32.xlu0 %v2524
    %v2526 = vpop.xlane.xlu0 %2525
    %v2527 = vsel %vm1157, %v2519, 0.0
    %2528 = vadd.xlane.f32.xlu0 %v2527
    %v2529 = vpop.xlane.xlu0 %2528
    %v2530 = vsel %vm1157, %v2520, 0.0
    %2531 = vadd.xlane.f32.xlu0 %v2530
    %v2532 = vpop.xlane.xlu0 %2531
    %v2537 = vrot.slane %v2523, 7
    %v2538 = vrot.slane %v2526, 7
    %v2539 = vsel %vm1174, %v2537, %v2538
    %v2540 = vrot.slane %v2529, 7
    %v2541 = vrot.slane %v2532, 7
    %v2542 = vsel %vm1174, %v2540, %v2541
    %v2547 = vsel %vm1174, 0.0, %v2537
    %v2548 = vsel %vm1174, 0.0, %v2540
    %v2549 = vadd.f32 %v2523, %v2547
    %v2550 = vadd.f32 %v2526, %v2539
    %v2551 = vadd.f32 %v2529, %v2548
    %v2552 = vadd.f32 %v2532, %v2542
    %v2557 = vrot.slane %v2549, 6
    %v2558 = vrot.slane %v2550, 6
    %v2559 = vsel %vm1195, %v2557, %v2558
    %v2560 = vrot.slane %v2551, 6
    %v2561 = vrot.slane %v2552, 6
    %v2562 = vsel %vm1195, %v2560, %v2561
    %v2567 = vsel %vm1195, 0.0, %v2557
    %v2568 = vsel %vm1195, 0.0, %v2560
    %v2569 = vadd.f32 %v2549, %v2567
    %v2570 = vadd.f32 %v2550, %v2559
    %v2571 = vadd.f32 %v2551, %v2568
    %v2572 = vadd.f32 %v2552, %v2562
    %v2577 = vrot.slane %v2569, 4
    %v2578 = vrot.slane %v2570, 4
    %v2579 = vsel %vm1216, %v2577, %v2578
    %v2580 = vrot.slane %v2571, 4
    %v2581 = vrot.slane %v2572, 4
    %v2582 = vsel %vm1216, %v2580, %v2581
    %v2587 = vsel %vm1216, 0.0, %v2577
    %v2588 = vsel %vm1216, 0.0, %v2580
    %v2589 = vadd.f32 %v2569, %v2587
    %v2590 = vadd.f32 %v2570, %v2579
    %v2591 = vadd.f32 %v2571, %v2588
    %v2592 = vadd.f32 %v2572, %v2582
    %v2593 = vadd.f32 %v2589, 0.0
    %v2594 = vadd.f32 %v2590, %v2589
    %v2595 = vadd.f32 %v2591, 0.0
    %v2596 = vadd.f32 %v2592, %v2591
    %v2597 = vmul.f32 %v2513, %v1317
    %v2598 = vmul.f32 %v2514, %v1319
    %v2599 = vmul.f32 %v2515, %v1317
    %v2600 = vmul.f32 %v2516, %v1319
    %v2601 = vmul.f32 %v2597, 2.0
    %v2602 = vmul.f32 %v2598, 2.0
    %v2603 = vmul.f32 %v2599, 2.0
    %v2604 = vmul.f32 %v2600, 2.0
    %v2605 = vmul.f32 %v2601, %v2513
    %v2606 = vmul.f32 %v2602, %v2514
    %v2607 = vmul.f32 %v2603, %v2515
    %v2608 = vmul.f32 %v2604, %v2516
    %v2609 = vsub.f32 %v2593, %v2605
    %v2610 = vsub.f32 %v2594, %v2606
    %v2611 = vsub.f32 %v2595, %v2607
    %v2612 = vsub.f32 %v2596, %v2608
    %v2613 = vmul.f32 %v2609, %v1317
    %v2614 = vmul.f32 %v2610, %v1319
    %v2615 = vmul.f32 %v2611, %v1317
    %v2616 = vmul.f32 %v2612, %v1319
    %v2617 = vmul.f32 %v2597, %v2597
    %v2618 = vmul.f32 %v2598, %v2598
    %v2619 = vmul.f32 %v2599, %v2599
    %v2620 = vmul.f32 %v2600, %v2600
    %v2621 = vadd.f32 %v2613, %v2617
    %v2622 = vadd.f32 %v2614, %v2618
    %v2623 = vadd.f32 %v2615, %v2619
    %v2624 = vadd.f32 %v2616, %v2620
    %v2625 = vadd.f32 %v2621, 1e-05
    %v2626 = vadd.f32 %v2622, 1e-05
    %v2627 = vadd.f32 %v2623, 1e-05
    %v2628 = vadd.f32 %v2624, 1e-05
    %v2629 = vrsqrt.pop %v2625
    %v2630 = vmul.f32 %v2625, %v2629
    %vm2631 = vcmp.eq.f32.partialorder %v2625, inf
    %v2632 = vsel %vm2631, %v2625, %v2630
    %vm2633 = vcmp.eq.f32.partialorder %v2625, 0.0
    %v2634 = vand.u32 %v2625, 2147483648
    %v2635 = vsel %vm2633, %v2634, %v2632
    %v2636 = vrsqrt.pop %v2626
    %v2637 = vmul.f32 %v2626, %v2636
    %vm2638 = vcmp.eq.f32.partialorder %v2626, inf
    %v2639 = vsel %vm2638, %v2626, %v2637
    %vm2640 = vcmp.eq.f32.partialorder %v2626, 0.0
    %v2641 = vand.u32 %v2626, 2147483648
    %v2642 = vsel %vm2640, %v2641, %v2639
    %v2643 = vrsqrt.pop %v2627
    %v2644 = vmul.f32 %v2627, %v2643
    %vm2645 = vcmp.eq.f32.partialorder %v2627, inf
    %v2646 = vsel %vm2645, %v2627, %v2644
    %vm2647 = vcmp.eq.f32.partialorder %v2627, 0.0
    %v2648 = vand.u32 %v2627, 2147483648
    %v2649 = vsel %vm2647, %v2648, %v2646
    %v2650 = vrsqrt.pop %v2628
    %v2651 = vmul.f32 %v2628, %v2650
    %vm2652 = vcmp.eq.f32.partialorder %v2628, inf
    %v2653 = vsel %vm2652, %v2628, %v2651
    %vm2654 = vcmp.eq.f32.partialorder %v2628, 0.0
    %v2655 = vand.u32 %v2628, 2147483648
    %v2656 = vsel %vm2654, %v2655, %v2653
    %2658 = vset.pattern.permute.xlu0 0
    %2659 = vperm.xlu0 %2658, %v2597
    %v2660 = vpop.permute.xlu0 %2659
    %2663 = vset.pattern.permute.xlu0 0
    %2664 = vperm.xlu0 %2663, %v2598
    %v2665 = vpop.permute.xlu0 %2664
    %2668 = vset.pattern.permute.xlu0 0
    %2669 = vperm.xlu0 %2668, %v2599
    %v2670 = vpop.permute.xlu0 %2669
    %2673 = vset.pattern.permute.xlu0 0
    %2674 = vperm.xlu0 %2673, %v2600
    %v2675 = vpop.permute.xlu0 %2674
    %v2677 = vsub.f32 %v2437, %v2660
    %v2678 = vsub.f32 %v2438, %v2665
    %v2679 = vsub.f32 %v2439, %v2670
    %v2680 = vsub.f32 %v2440, %v2675
    %2682 = vset.pattern.permute.xlu0 0
    %2683 = vperm.xlu0 %2682, %v2635
    %v2684 = vpop.permute.xlu0 %2683
    %2687 = vset.pattern.permute.xlu0 0
    %2688 = vperm.xlu0 %2687, %v2642
    %v2689 = vpop.permute.xlu0 %2688
    %2692 = vset.pattern.permute.xlu0 0
    %2693 = vperm.xlu0 %2692, %v2649
    %v2694 = vpop.permute.xlu0 %2693
    %2697 = vset.pattern.permute.xlu0 0
    %2698 = vperm.xlu0 %2697, %v2656
    %v2699 = vpop.permute.xlu0 %2698
    %v2701 = vrcp.pop %v2684
    %v2702 = vmul.f32 %v2677, %v2701
    %v2703 = vrcp.pop %v2689
    %v2704 = vmul.f32 %v2678, %v2703
    %v2705 = vrcp.pop %v2694
    %v2706 = vmul.f32 %v2679, %v2705
    %v2707 = vrcp.pop %v2699
    %v2708 = vmul.f32 %v2680, %v2707
    %v2709 = vlaneseq
    %v2710 = vshrl.u32 %v2709, 7
    %v2711 = vsub.s32 4, %v2710
    %v2712 = vrot.slane %v110, %v2711
    %v2713 = vmul.f32 %v2702, %v2712
    %v2714 = vmul.f32 %v2704, %v2712
    %v2715 = vmul.f32 %v2706, %v2712
    %v2716 = vmul.f32 %v2708, %v2712
    %v2717 = vlaneseq
    %v2718 = vshrl.u32 %v2717, 7
    %v2719 = vsub.s32 5, %v2718
    %v2720 = vrot.slane %v110, %v2719
    %v2721 = vadd.f32 %v2713, %v2720
    %v2722 = vadd.f32 %v2714, %v2720
    %v2723 = vadd.f32 %v2715, %v2720
    %v2724 = vadd.f32 %v2716, %v2720
    %v2726 = vsel %vm1157, %v2721, 0
    %v2729 = vsel %vm1157, %v2722, 0
    %v2732 = vsel %vm1157, %v2723, 0
    %v2735 = vsel %vm1157, %v2724, 0
    %v2737 = vand.u32 %v95, 4294901760
    %2738 = vmatprep.subr.mxu0 %v2737
    %v2739 = vand.u32 %v94, 4294901760
    %2740 = vmatpush1.msra.mxu0 %v2739
    %v2741 = vand.u32 %v97, 4294901760
    %2742 = vmatprep.subr.mxu0 %v2741
    %v2743 = vand.u32 %v96, 4294901760
    %2744 = vmatpush1.msra.mxu0 %v2743
    %v2745 = vand.u32 %v99, 4294901760
    %2746 = vmatprep.subr.mxu0 %v2745
    %v2747 = vand.u32 %v98, 4294901760
    %2748 = vmatpush1.msra.mxu0 %v2747
    %v2749 = vand.u32 %v101, 4294901760
    %2750 = vmatprep.subr.mxu0 %v2749
    %v2751 = vand.u32 %v100, 4294901760
    %2752 = vmatpush1.msra.mxu0 %v2751
    %v2753 = vand.u32 %v103, 4294901760
    %2754 = vmatprep.subr.mxu0 %v2753
    %v2755 = vand.u32 %v102, 4294901760
    %2756 = vmatpush1.msra.mxu0 %v2755
    %v2757 = vand.u32 %v105, 4294901760
    %2758 = vmatprep.subr.mxu0 %v2757
    %v2759 = vand.u32 %v104, 4294901760
    %2760 = vmatpush1.msra.mxu0 %v2759
    %v2761 = vand.u32 %v107, 4294901760
    %2762 = vmatprep.subr.mxu0 %v2761
    %v2763 = vand.u32 %v106, 4294901760
    %2764 = vmatpush1.msra.mxu0 %v2763
    %v2765 = vand.u32 %v109, 4294901760
    %2766 = vmatprep.subr.mxu0 %v2765
    %v2767 = vand.u32 %v108, 4294901760
    %2768 = vmatpush1.msra.mxu0 %v2767
    %2769 = vmatprep.subr.mxu0 0.0
    %2770 = vmatpush1.msra.mxu0 0.0
    %2771 = vmatprep.subr.mxu0 0.0
    %2772 = vmatpush1.msra.mxu0 0.0
    %2773 = vmatprep.subr.mxu0 0.0
    %2774 = vmatpush1.msra.mxu0 0.0
    %2775 = vmatprep.subr.mxu0 0.0
    %2776 = vmatpush1.msra.mxu0 0.0
    %2777 = vmatprep.subr.mxu0 0.0
    %2778 = vmatpush1.msra.mxu0 0.0
    %2779 = vmatprep.subr.mxu0 0.0
    %2780 = vmatpush1.msra.mxu0 0.0
    %2781 = vmatprep.subr.mxu0 0.0
    %2782 = vmatpush1.msra.mxu0 0.0
    %2783 = vmatprep.subr.mxu0 0.0
    %2784 = vmatpush1.msra.mxu0 0.0
    %2785 = vmatprep.subr.mxu0 0.0
    %2786 = vmatpush1.msra.mxu0 0.0
    %2787 = vmatprep.subr.mxu0 0.0
    %2788 = vmatpush1.msra.mxu0 0.0
    %2789 = vmatprep.subr.mxu0 0.0
    %2790 = vmatpush1.msra.mxu0 0.0
    %2791 = vmatprep.subr.mxu0 0.0
    %2792 = vmatpush1.msra.mxu0 0.0
    %2793 = vmatprep.subr.mxu0 0.0
    %2794 = vmatpush1.msra.mxu0 0.0
    %2795 = vmatprep.subr.mxu0 0.0
    %2796 = vmatpush1.msra.mxu0 0.0
    %2797 = vmatprep.subr.mxu0 0.0
    %2798 = vmatpush1.msra.mxu0 0.0
    %2799 = vmatprep.subr.mxu0 0.0
    %2800 = vmatpush1.msra.mxu0 0.0
    %2801 = vmatprep.subr.mxu0 0.0
    %2802 = vmatpush1.msra.mxu0 0.0
    %2803 = vmatprep.subr.mxu0 0.0
    %2804 = vmatpush1.msra.mxu0 0.0
    %2805 = vmatprep.subr.mxu0 0.0
    %2806 = vmatpush1.msra.mxu0 0.0
    %2807 = vmatprep.subr.mxu0 0.0
    %2808 = vmatpush1.msra.mxu0 0.0
    %2809 = vmatprep.subr.mxu0 0.0
    %2810 = vmatpush1.msra.mxu0 0.0
    %2811 = vmatprep.subr.mxu0 0.0
    %2812 = vmatpush1.msra.mxu0 0.0
    %2813 = vmatprep.subr.mxu0 0.0
    %2814 = vmatpush1.msra.mxu0 0.0
    %2815 = vmatprep.subr.mxu0 0.0
    %2816 = vmatpush1.msra.mxu0 0.0
    %2817 = vmatprep.mubr.f32.mxu0 0.0
    %v2818 = vand.u32 %v2726, 4294901760
    %v2819 = vsub.f32 %v2726, %v2818
    %v2820 = vand.u32 %v2819, 4294901760
    %v2821 = vsub.f32 %v2819, %v2820
    %v2822 = vand.u32 %v2821, 4294901760
    %2823 = vmatmul.mubr.f32.gmra.mrb[0].mxu0 %v2822
    %v2824 = vpop.f32.mrb[0].mxu0
    %v2825 = vadd.f32 0.0, %v2824
    %v2826 = vpop.f32.mrb[0].mxu0
    %v2827 = vadd.f32 0.0, %v2826
    %2828 = vmatprep.mubr.f32.mxu0 0.0
    %v2829 = vand.u32 %v2729, 4294901760
    %v2830 = vsub.f32 %v2729, %v2829
    %v2831 = vand.u32 %v2830, 4294901760
    %v2832 = vsub.f32 %v2830, %v2831
    %v2833 = vand.u32 %v2832, 4294901760
    %2834 = vmatmul.mubr.f32.gmra.mrb[0].mxu0 %v2833
    %v2835 = vpop.f32.mrb[0].mxu0
    %v2836 = vadd.f32 0.0, %v2835
    %v2837 = vpop.f32.mrb[0].mxu0
    %v2838 = vadd.f32 0.0, %v2837
    %2839 = vmatprep.mubr.f32.mxu0 0.0
    %v2840 = vand.u32 %v2732, 4294901760
    %v2841 = vsub.f32 %v2732, %v2840
    %v2842 = vand.u32 %v2841, 4294901760
    %v2843 = vsub.f32 %v2841, %v2842
    %v2844 = vand.u32 %v2843, 4294901760
    %2845 = vmatmul.mubr.f32.gmra.mrb[0].mxu0 %v2844
    %v2846 = vpop.f32.mrb[0].mxu0
    %v2847 = vadd.f32 0.0, %v2846
    %v2848 = vpop.f32.mrb[0].mxu0
    %v2849 = vadd.f32 0.0, %v2848
    %2850 = vmatprep.mubr.f32.mxu0 0.0
    %v2851 = vand.u32 %v2735, 4294901760
    %v2852 = vsub.f32 %v2735, %v2851
    %v2853 = vand.u32 %v2852, 4294901760
    %v2854 = vsub.f32 %v2852, %v2853
    %v2855 = vand.u32 %v2854, 4294901760
    %2856 = vmatmul.mubr.f32.gmra.mrb[0].mxu0 %v2855
    %v2857 = vpop.f32.mrb[0].mxu0
    %v2858 = vadd.f32 0.0, %v2857
    %v2859 = vpop.f32.mrb[0].mxu0
    %v2860 = vadd.f32 0.0, %v2859
    %2861 = vdwg.mxu0
    %v2862 = vand.u32 %v95, 4294901760
    %v2863 = vsub.f32 %v95, %v2862
    %v2864 = vand.u32 %v2863, 4294901760
    %v2865 = vsub.f32 %v2863, %v2864
    %v2866 = vand.u32 %v2865, 4294901760
    %2867 = vmatprep.subr.mxu0 %v2866
    %v2868 = vand.u32 %v94, 4294901760
    %v2869 = vsub.f32 %v94, %v2868
    %v2870 = vand.u32 %v2869, 4294901760
    %v2871 = vsub.f32 %v2869, %v2870
    %v2872 = vand.u32 %v2871, 4294901760
    %2873 = vmatpush1.msra.mxu0 %v2872
    %v2874 = vand.u32 %v97, 4294901760
    %v2875 = vsub.f32 %v97, %v2874
    %v2876 = vand.u32 %v2875, 4294901760
    %v2877 = vsub.f32 %v2875, %v2876
    %v2878 = vand.u32 %v2877, 4294901760
    %2879 = vmatprep.subr.mxu0 %v2878
    %v2880 = vand.u32 %v96, 4294901760
    %v2881 = vsub.f32 %v96, %v2880
    %v2882 = vand.u32 %v2881, 4294901760
    %v2883 = vsub.f32 %v2881, %v2882
    %v2884 = vand.u32 %v2883, 4294901760
    %2885 = vmatpush1.msra.mxu0 %v2884
    %v2886 = vand.u32 %v99, 4294901760
    %v2887 = vsub.f32 %v99, %v2886
    %v2888 = vand.u32 %v2887, 4294901760
    %v2889 = vsub.f32 %v2887, %v2888
    %v2890 = vand.u32 %v2889, 4294901760
    %2891 = vmatprep.subr.mxu0 %v2890
    %v2892 = vand.u32 %v98, 4294901760
    %v2893 = vsub.f32 %v98, %v2892
    %v2894 = vand.u32 %v2893, 4294901760
    %v2895 = vsub.f32 %v2893, %v2894
    %v2896 = vand.u32 %v2895, 4294901760
    %2897 = vmatpush1.msra.mxu0 %v2896
    %v2898 = vand.u32 %v101, 4294901760
    %v2899 = vsub.f32 %v101, %v2898
    %v2900 = vand.u32 %v2899, 4294901760
    %v2901 = vsub.f32 %v2899, %v2900
    %v2902 = vand.u32 %v2901, 4294901760
    %2903 = vmatprep.subr.mxu0 %v2902
    %v2904 = vand.u32 %v100, 4294901760
    %v2905 = vsub.f32 %v100, %v2904
    %v2906 = vand.u32 %v2905, 4294901760
    %v2907 = vsub.f32 %v2905, %v2906
    %v2908 = vand.u32 %v2907, 4294901760
    %2909 = vmatpush1.msra.mxu0 %v2908
    %v2910 = vand.u32 %v103, 4294901760
    %v2911 = vsub.f32 %v103, %v2910
    %v2912 = vand.u32 %v2911, 4294901760
    %v2913 = vsub.f32 %v2911, %v2912
    %v2914 = vand.u32 %v2913, 4294901760
    %2915 = vmatprep.subr.mxu0 %v2914
    %v2916 = vand.u32 %v102, 4294901760
    %v2917 = vsub.f32 %v102, %v2916
    %v2918 = vand.u32 %v2917, 4294901760
    %v2919 = vsub.f32 %v2917, %v2918
    %v2920 = vand.u32 %v2919, 4294901760
    %2921 = vmatpush1.msra.mxu0 %v2920
    %v2922 = vand.u32 %v105, 4294901760
    %v2923 = vsub.f32 %v105, %v2922
    %v2924 = vand.u32 %v2923, 4294901760
    %v2925 = vsub.f32 %v2923, %v2924
    %v2926 = vand.u32 %v2925, 4294901760
    %2927 = vmatprep.subr.mxu0 %v2926
    %v2928 = vand.u32 %v104, 4294901760
    %v2929 = vsub.f32 %v104, %v2928
    %v2930 = vand.u32 %v2929, 4294901760
    %v2931 = vsub.f32 %v2929, %v2930
    %v2932 = vand.u32 %v2931, 4294901760
    %2933 = vmatpush1.msra.mxu0 %v2932
    %v2934 = vand.u32 %v107, 4294901760
    %v2935 = vsub.f32 %v107, %v2934
    %v2936 = vand.u32 %v2935, 4294901760
    %v2937 = vsub.f32 %v2935, %v2936
    %v2938 = vand.u32 %v2937, 4294901760
    %2939 = vmatprep.subr.mxu0 %v2938
    %v2940 = vand.u32 %v106, 4294901760
    %v2941 = vsub.f32 %v106, %v2940
    %v2942 = vand.u32 %v2941, 4294901760
    %v2943 = vsub.f32 %v2941, %v2942
    %v2944 = vand.u32 %v2943, 4294901760
    %2945 = vmatpush1.msra.mxu0 %v2944
    %v2946 = vand.u32 %v109, 4294901760
    %v2947 = vsub.f32 %v109, %v2946
    %v2948 = vand.u32 %v2947, 4294901760
    %v2949 = vsub.f32 %v2947, %v2948
    %v2950 = vand.u32 %v2949, 4294901760
    %2951 = vmatprep.subr.mxu0 %v2950
    %v2952 = vand.u32 %v108, 4294901760
    %v2953 = vsub.f32 %v108, %v2952
    %v2954 = vand.u32 %v2953, 4294901760
    %v2955 = vsub.f32 %v2953, %v2954
    %v2956 = vand.u32 %v2955, 4294901760
    %2957 = vmatpush1.msra.mxu0 %v2956
    %2958 = vmatprep.subr.mxu0 0.0
    %2959 = vmatpush1.msra.mxu0 0.0
    %2960 = vmatprep.subr.mxu0 0.0
    %2961 = vmatpush1.msra.mxu0 0.0
    %2962 = vmatprep.subr.mxu0 0.0
    %2963 = vmatpush1.msra.mxu0 0.0
    %2964 = vmatprep.subr.mxu0 0.0
    %2965 = vmatpush1.msra.mxu0 0.0
    %2966 = vmatprep.subr.mxu0 0.0
    %2967 = vmatpush1.msra.mxu0 0.0
    %2968 = vmatprep.subr.mxu0 0.0
    %2969 = vmatpush1.msra.mxu0 0.0
    %2970 = vmatprep.subr.mxu0 0.0
    %2971 = vmatpush1.msra.mxu0 0.0
    %2972 = vmatprep.subr.mxu0 0.0
    %2973 = vmatpush1.msra.mxu0 0.0
    %2974 = vmatprep.subr.mxu0 0.0
    %2975 = vmatpush1.msra.mxu0 0.0
    %2976 = vmatprep.subr.mxu0 0.0
    %2977 = vmatpush1.msra.mxu0 0.0
    %2978 = vmatprep.subr.mxu0 0.0
    %2979 = vmatpush1.msra.mxu0 0.0
    %2980 = vmatprep.subr.mxu0 0.0
    %2981 = vmatpush1.msra.mxu0 0.0
    %2982 = vmatprep.subr.mxu0 0.0
    %2983 = vmatpush1.msra.mxu0 0.0
    %2984 = vmatprep.subr.mxu0 0.0
    %2985 = vmatpush1.msra.mxu0 0.0
    %2986 = vmatprep.subr.mxu0 0.0
    %2987 = vmatpush1.msra.mxu0 0.0
    %2988 = vmatprep.subr.mxu0 0.0
    %2989 = vmatpush1.msra.mxu0 0.0
    %2990 = vmatprep.subr.mxu0 0.0
    %2991 = vmatpush1.msra.mxu0 0.0
    %2992 = vmatprep.subr.mxu0 0.0
    %2993 = vmatpush1.msra.mxu0 0.0
    %2994 = vmatprep.subr.mxu0 0.0
    %2995 = vmatpush1.msra.mxu0 0.0
    %2996 = vmatprep.subr.mxu0 0.0
    %2997 = vmatpush1.msra.mxu0 0.0
    %2998 = vmatprep.subr.mxu0 0.0
    %2999 = vmatpush1.msra.mxu0 0.0
    %3000 = vmatprep.subr.mxu0 0.0
    %3001 = vmatpush1.msra.mxu0 0.0
    %3002 = vmatprep.subr.mxu0 0.0
    %3003 = vmatpush1.msra.mxu0 0.0
    %3004 = vmatprep.subr.mxu0 0.0
    %3005 = vmatpush1.msra.mxu0 0.0
    %3006 = vmatprep.mubr.f32.mxu0 0.0
    %v3007 = vand.u32 %v2726, 4294901760
    %3008 = vmatmul.mubr.f32.gmra.mrb[0].mxu0 %v3007
    %v3009 = vpop.f32.mrb[0].mxu0
    %v3010 = vadd.f32 %v2825, %v3009
    %v3011 = vpop.f32.mrb[0].mxu0
    %v3012 = vadd.f32 %v2827, %v3011
    %3013 = vmatprep.mubr.f32.mxu0 0.0
    %v3014 = vand.u32 %v2729, 4294901760
    %3015 = vmatmul.mubr.f32.gmra.mrb[0].mxu0 %v3014
    %v3016 = vpop.f32.mrb[0].mxu0
    %v3017 = vadd.f32 %v2836, %v3016
    %v3018 = vpop.f32.mrb[0].mxu0
    %v3019 = vadd.f32 %v2838, %v3018
    %3020 = vmatprep.mubr.f32.mxu0 0.0
    %v3021 = vand.u32 %v2732, 4294901760
    %3022 = vmatmul.mubr.f32.gmra.mrb[0].mxu0 %v3021
    %v3023 = vpop.f32.mrb[0].mxu0
    %v3024 = vadd.f32 %v2847, %v3023
    %v3025 = vpop.f32.mrb[0].mxu0
    %v3026 = vadd.f32 %v2849, %v3025
    %3027 = vmatprep.mubr.f32.mxu0 0.0
    %v3028 = vand.u32 %v2735, 4294901760
    %3029 = vmatmul.mubr.f32.gmra.mrb[0].mxu0 %v3028
    %v3030 = vpop.f32.mrb[0].mxu0
    %v3031 = vadd.f32 %v2858, %v3030
    %v3032 = vpop.f32.mrb[0].mxu0
    %v3033 = vadd.f32 %v2860, %v3032
    %3034 = vdwg.mxu0
    %v3035 = vand.u32 %v95, 4294901760
    %v3036 = vsub.f32 %v95, %v3035
    %3037 = vmatprep.subr.mxu0 %v3036
    %v3038 = vand.u32 %v94, 4294901760
    %v3039 = vsub.f32 %v94, %v3038
    %3040 = vmatpush1.msra.mxu0 %v3039
    %v3041 = vand.u32 %v97, 4294901760
    %v3042 = vsub.f32 %v97, %v3041
    %3043 = vmatprep.subr.mxu0 %v3042
    %v3044 = vand.u32 %v96, 4294901760
    %v3045 = vsub.f32 %v96, %v3044
    %3046 = vmatpush1.msra.mxu0 %v3045
    %v3047 = vand.u32 %v99, 4294901760
    %v3048 = vsub.f32 %v99, %v3047
    %3049 = vmatprep.subr.mxu0 %v3048
    %v3050 = vand.u32 %v98, 4294901760
    %v3051 = vsub.f32 %v98, %v3050
    %3052 = vmatpush1.msra.mxu0 %v3051
    %v3053 = vand.u32 %v101, 4294901760
    %v3054 = vsub.f32 %v101, %v3053
    %3055 = vmatprep.subr.mxu0 %v3054
    %v3056 = vand.u32 %v100, 4294901760
    %v3057 = vsub.f32 %v100, %v3056
    %3058 = vmatpush1.msra.mxu0 %v3057
    %v3059 = vand.u32 %v103, 4294901760
    %v3060 = vsub.f32 %v103, %v3059
    %3061 = vmatprep.subr.mxu0 %v3060
    %v3062 = vand.u32 %v102, 4294901760
    %v3063 = vsub.f32 %v102, %v3062
    %3064 = vmatpush1.msra.mxu0 %v3063
    %v3065 = vand.u32 %v105, 4294901760
    %v3066 = vsub.f32 %v105, %v3065
    %3067 = vmatprep.subr.mxu0 %v3066
    %v3068 = vand.u32 %v104, 4294901760
    %v3069 = vsub.f32 %v104, %v3068
    %3070 = vmatpush1.msra.mxu0 %v3069
    %v3071 = vand.u32 %v107, 4294901760
    %v3072 = vsub.f32 %v107, %v3071
    %3073 = vmatprep.subr.mxu0 %v3072
    %v3074 = vand.u32 %v106, 4294901760
    %v3075 = vsub.f32 %v106, %v3074
    %3076 = vmatpush1.msra.mxu0 %v3075
    %v3077 = vand.u32 %v109, 4294901760
    %v3078 = vsub.f32 %v109, %v3077
    %3079 = vmatprep.subr.mxu0 %v3078
    %v3080 = vand.u32 %v108, 4294901760
    %v3081 = vsub.f32 %v108, %v3080
    %3082 = vmatpush1.msra.mxu0 %v3081
    %3083 = vmatprep.subr.mxu0 0.0
    %3084 = vmatpush1.msra.mxu0 0.0
    %3085 = vmatprep.subr.mxu0 0.0
    %3086 = vmatpush1.msra.mxu0 0.0
    %3087 = vmatprep.subr.mxu0 0.0
    %3088 = vmatpush1.msra.mxu0 0.0
    %3089 = vmatprep.subr.mxu0 0.0
    %3090 = vmatpush1.msra.mxu0 0.0
    %3091 = vmatprep.subr.mxu0 0.0
    %3092 = vmatpush1.msra.mxu0 0.0
    %3093 = vmatprep.subr.mxu0 0.0
    %3094 = vmatpush1.msra.mxu0 0.0
    %3095 = vmatprep.subr.mxu0 0.0
    %3096 = vmatpush1.msra.mxu0 0.0
    %3097 = vmatprep.subr.mxu0 0.0
    %3098 = vmatpush1.msra.mxu0 0.0
    %3099 = vmatprep.subr.mxu0 0.0
    %3100 = vmatpush1.msra.mxu0 0.0
    %3101 = vmatprep.subr.mxu0 0.0
    %3102 = vmatpush1.msra.mxu0 0.0
    %3103 = vmatprep.subr.mxu0 0.0
    %3104 = vmatpush1.msra.mxu0 0.0
    %3105 = vmatprep.subr.mxu0 0.0
    %3106 = vmatpush1.msra.mxu0 0.0
    %3107 = vmatprep.subr.mxu0 0.0
    %3108 = vmatpush1.msra.mxu0 0.0
    %3109 = vmatprep.subr.mxu0 0.0
    %3110 = vmatpush1.msra.mxu0 0.0
    %3111 = vmatprep.subr.mxu0 0.0
    %3112 = vmatpush1.msra.mxu0 0.0
    %3113 = vmatprep.subr.mxu0 0.0
    %3114 = vmatpush1.msra.mxu0 0.0
    %3115 = vmatprep.subr.mxu0 0.0
    %3116 = vmatpush1.msra.mxu0 0.0
    %3117 = vmatprep.subr.mxu0 0.0
    %3118 = vmatpush1.msra.mxu0 0.0
    %3119 = vmatprep.subr.mxu0 0.0
    %3120 = vmatpush1.msra.mxu0 0.0
    %3121 = vmatprep.subr.mxu0 0.0
    %3122 = vmatpush1.msra.mxu0 0.0
    %3123 = vmatprep.subr.mxu0 0.0
    %3124 = vmatpush1.msra.mxu0 0.0
    %3125 = vmatprep.subr.mxu0 0.0
    %3126 = vmatpush1.msra.mxu0 0.0
    %3127 = vmatprep.subr.mxu0 0.0
    %3128 = vmatpush1.msra.mxu0 0.0
    %3129 = vmatprep.subr.mxu0 0.0
    %3130 = vmatpush1.msra.mxu0 0.0
    %3131 = vmatprep.mubr.f32.mxu0 0.0
    %v3132 = vand.u32 %v2726, 4294901760
    %v3133 = vsub.f32 %v2726, %v3132
    %3134 = vmatmul.mubr.f32.gmra.mrb[0].mxu0 %v3133
    %v3135 = vpop.f32.mrb[0].mxu0
    %v3136 = vadd.f32 %v3010, %v3135
    %v3137 = vpop.f32.mrb[0].mxu0
    %v3138 = vadd.f32 %v3012, %v3137
    %3139 = vmatprep.mubr.f32.mxu0 0.0
    %v3140 = vand.u32 %v2729, 4294901760
    %v3141 = vsub.f32 %v2729, %v3140
    %3142 = vmatmul.mubr.f32.gmra.mrb[0].mxu0 %v3141
    %v3143 = vpop.f32.mrb[0].mxu0
    %v3144 = vadd.f32 %v3017, %v3143
    %v3145 = vpop.f32.mrb[0].mxu0
    %v3146 = vadd.f32 %v3019, %v3145
    %3147 = vmatprep.mubr.f32.mxu0 0.0
    %v3148 = vand.u32 %v2732, 4294901760
    %v3149 = vsub.f32 %v2732, %v3148
    %3150 = vmatmul.mubr.f32.gmra.mrb[0].mxu0 %v3149
    %v3151 = vpop.f32.mrb[0].mxu0
    %v3152 = vadd.f32 %v3024, %v3151
    %v3153 = vpop.f32.mrb[0].mxu0
    %v3154 = vadd.f32 %v3026, %v3153
    %3155 = vmatprep.mubr.f32.mxu0 0.0
    %v3156 = vand.u32 %v2735, 4294901760
    %v3157 = vsub.f32 %v2735, %v3156
    %3158 = vmatmul.mubr.f32.gmra.mrb[0].mxu0 %v3157
    %v3159 = vpop.f32.mrb[0].mxu0
    %v3160 = vadd.f32 %v3031, %v3159
    %v3161 = vpop.f32.mrb[0].mxu0
    %v3162 = vadd.f32 %v3033, %v3161
    %3163 = vdwg.mxu0
    %v3164 = vand.u32 %v95, 4294901760
    %3165 = vmatprep.subr.mxu0 %v3164
    %v3166 = vand.u32 %v94, 4294901760
    %3167 = vmatpush1.msra.mxu0 %v3166
    %v3168 = vand.u32 %v97, 4294901760
    %3169 = vmatprep.subr.mxu0 %v3168
    %v3170 = vand.u32 %v96, 4294901760
    %3171 = vmatpush1.msra.mxu0 %v3170
    %v3172 = vand.u32 %v99, 4294901760
    %3173 = vmatprep.subr.mxu0 %v3172
    %v3174 = vand.u32 %v98, 4294901760
    %3175 = vmatpush1.msra.mxu0 %v3174
    %v3176 = vand.u32 %v101, 4294901760
    %3177 = vmatprep.subr.mxu0 %v3176
    %v3178 = vand.u32 %v100, 4294901760
    %3179 = vmatpush1.msra.mxu0 %v3178
    %v3180 = vand.u32 %v103, 4294901760
    %3181 = vmatprep.subr.mxu0 %v3180
    %v3182 = vand.u32 %v102, 4294901760
    %3183 = vmatpush1.msra.mxu0 %v3182
    %v3184 = vand.u32 %v105, 4294901760
    %3185 = vmatprep.subr.mxu0 %v3184
    %v3186 = vand.u32 %v104, 4294901760
    %3187 = vmatpush1.msra.mxu0 %v3186
    %v3188 = vand.u32 %v107, 4294901760
    %3189 = vmatprep.subr.mxu0 %v3188
    %v3190 = vand.u32 %v106, 4294901760
    %3191 = vmatpush1.msra.mxu0 %v3190
    %v3192 = vand.u32 %v109, 4294901760
    %3193 = vmatprep.subr.mxu0 %v3192
    %v3194 = vand.u32 %v108, 4294901760
    %3195 = vmatpush1.msra.mxu0 %v3194
    %3196 = vmatprep.subr.mxu0 0.0
    %3197 = vmatpush1.msra.mxu0 0.0
    %3198 = vmatprep.subr.mxu0 0.0
    %3199 = vmatpush1.msra.mxu0 0.0
    %3200 = vmatprep.subr.mxu0 0.0
    %3201 = vmatpush1.msra.mxu0 0.0
    %3202 = vmatprep.subr.mxu0 0.0
    %3203 = vmatpush1.msra.mxu0 0.0
    %3204 = vmatprep.subr.mxu0 0.0
    %3205 = vmatpush1.msra.mxu0 0.0
    %3206 = vmatprep.subr.mxu0 0.0
    %3207 = vmatpush1.msra.mxu0 0.0
    %3208 = vmatprep.subr.mxu0 0.0
    %3209 = vmatpush1.msra.mxu0 0.0
    %3210 = vmatprep.subr.mxu0 0.0
    %3211 = vmatpush1.msra.mxu0 0.0
    %3212 = vmatprep.subr.mxu0 0.0
    %3213 = vmatpush1.msra.mxu0 0.0
    %3214 = vmatprep.subr.mxu0 0.0
    %3215 = vmatpush1.msra.mxu0 0.0
    %3216 = vmatprep.subr.mxu0 0.0
    %3217 = vmatpush1.msra.mxu0 0.0
    %3218 = vmatprep.subr.mxu0 0.0
    %3219 = vmatpush1.msra.mxu0 0.0
    %3220 = vmatprep.subr.mxu0 0.0
    %3221 = vmatpush1.msra.mxu0 0.0
    %3222 = vmatprep.subr.mxu0 0.0
    %3223 = vmatpush1.msra.mxu0 0.0
    %3224 = vmatprep.subr.mxu0 0.0
    %3225 = vmatpush1.msra.mxu0 0.0
    %3226 = vmatprep.subr.mxu0 0.0
    %3227 = vmatpush1.msra.mxu0 0.0
    %3228 = vmatprep.subr.mxu0 0.0
    %3229 = vmatpush1.msra.mxu0 0.0
    %3230 = vmatprep.subr.mxu0 0.0
    %3231 = vmatpush1.msra.mxu0 0.0
    %3232 = vmatprep.subr.mxu0 0.0
    %3233 = vmatpush1.msra.mxu0 0.0
    %3234 = vmatprep.subr.mxu0 0.0
    %3235 = vmatpush1.msra.mxu0 0.0
    %3236 = vmatprep.subr.mxu0 0.0
    %3237 = vmatpush1.msra.mxu0 0.0
    %3238 = vmatprep.subr.mxu0 0.0
    %3239 = vmatpush1.msra.mxu0 0.0
    %3240 = vmatprep.subr.mxu0 0.0
    %3241 = vmatpush1.msra.mxu0 0.0
    %3242 = vmatprep.subr.mxu0 0.0
    %3243 = vmatpush1.msra.mxu0 0.0
    %3244 = vmatprep.mubr.f32.mxu0 0.0
    %v3245 = vand.u32 %v2726, 4294901760
    %v3246 = vsub.f32 %v2726, %v3245
    %v3247 = vand.u32 %v3246, 4294901760
    %3248 = vmatmul.mubr.f32.gmra.mrb[0].mxu0 %v3247
    %v3249 = vpop.f32.mrb[0].mxu0
    %v3250 = vadd.f32 %v3136, %v3249
    %v3251 = vpop.f32.mrb[0].mxu0
    %v3252 = vadd.f32 %v3138, %v3251
    %3253 = vmatprep.mubr.f32.mxu0 0.0
    %v3254 = vand.u32 %v2729, 4294901760
    %v3255 = vsub.f32 %v2729, %v3254
    %v3256 = vand.u32 %v3255, 4294901760
    %3257 = vmatmul.mubr.f32.gmra.mrb[0].mxu0 %v3256
    %v3258 = vpop.f32.mrb[0].mxu0
    %v3259 = vadd.f32 %v3144, %v3258
    %v3260 = vpop.f32.mrb[0].mxu0
    %v3261 = vadd.f32 %v3146, %v3260
    %3262 = vmatprep.mubr.f32.mxu0 0.0
    %v3263 = vand.u32 %v2732, 4294901760
    %v3264 = vsub.f32 %v2732, %v3263
    %v3265 = vand.u32 %v3264, 4294901760
    %3266 = vmatmul.mubr.f32.gmra.mrb[0].mxu0 %v3265
    %v3267 = vpop.f32.mrb[0].mxu0
    %v3268 = vadd.f32 %v3152, %v3267
    %v3269 = vpop.f32.mrb[0].mxu0
    %v3270 = vadd.f32 %v3154, %v3269
    %3271 = vmatprep.mubr.f32.mxu0 0.0
    %v3272 = vand.u32 %v2735, 4294901760
    %v3273 = vsub.f32 %v2735, %v3272
    %v3274 = vand.u32 %v3273, 4294901760
    %3275 = vmatmul.mubr.f32.gmra.mrb[0].mxu0 %v3274
    %v3276 = vpop.f32.mrb[0].mxu0
    %v3277 = vadd.f32 %v3160, %v3276
    %v3278 = vpop.f32.mrb[0].mxu0
    %v3279 = vadd.f32 %v3162, %v3278
    %3280 = vdwg.mxu0
    %v3281 = vand.u32 %v95, 4294901760
    %v3282 = vsub.f32 %v95, %v3281
    %v3283 = vand.u32 %v3282, 4294901760
    %3284 = vmatprep.subr.mxu0 %v3283
    %v3285 = vand.u32 %v94, 4294901760
    %v3286 = vsub.f32 %v94, %v3285
    %v3287 = vand.u32 %v3286, 4294901760
    %3288 = vmatpush1.msra.mxu0 %v3287
    %v3289 = vand.u32 %v97, 4294901760
    %v3290 = vsub.f32 %v97, %v3289
    %v3291 = vand.u32 %v3290, 4294901760
    %3292 = vmatprep.subr.mxu0 %v3291
    %v3293 = vand.u32 %v96, 4294901760
    %v3294 = vsub.f32 %v96, %v3293
    %v3295 = vand.u32 %v3294, 4294901760
    %3296 = vmatpush1.msra.mxu0 %v3295
    %v3297 = vand.u32 %v99, 4294901760
    %v3298 = vsub.f32 %v99, %v3297
    %v3299 = vand.u32 %v3298, 4294901760
    %3300 = vmatprep.subr.mxu0 %v3299
    %v3301 = vand.u32 %v98, 4294901760
    %v3302 = vsub.f32 %v98, %v3301
    %v3303 = vand.u32 %v3302, 4294901760
    %3304 = vmatpush1.msra.mxu0 %v3303
    %v3305 = vand.u32 %v101, 4294901760
    %v3306 = vsub.f32 %v101, %v3305
    %v3307 = vand.u32 %v3306, 4294901760
    %3308 = vmatprep.subr.mxu0 %v3307
    %v3309 = vand.u32 %v100, 4294901760
    %v3310 = vsub.f32 %v100, %v3309
    %v3311 = vand.u32 %v3310, 4294901760
    %3312 = vmatpush1.msra.mxu0 %v3311
    %v3313 = vand.u32 %v103, 4294901760
    %v3314 = vsub.f32 %v103, %v3313
    %v3315 = vand.u32 %v3314, 4294901760
    %3316 = vmatprep.subr.mxu0 %v3315
    %v3317 = vand.u32 %v102, 4294901760
    %v3318 = vsub.f32 %v102, %v3317
    %v3319 = vand.u32 %v3318, 4294901760
    %3320 = vmatpush1.msra.mxu0 %v3319
    %v3321 = vand.u32 %v105, 4294901760
    %v3322 = vsub.f32 %v105, %v3321
    %v3323 = vand.u32 %v3322, 4294901760
    %3324 = vmatprep.subr.mxu0 %v3323
    %v3325 = vand.u32 %v104, 4294901760
    %v3326 = vsub.f32 %v104, %v3325
    %v3327 = vand.u32 %v3326, 4294901760
    %3328 = vmatpush1.msra.mxu0 %v3327
    %v3329 = vand.u32 %v107, 4294901760
    %v3330 = vsub.f32 %v107, %v3329
    %v3331 = vand.u32 %v3330, 4294901760
    %3332 = vmatprep.subr.mxu0 %v3331
    %v3333 = vand.u32 %v106, 4294901760
    %v3334 = vsub.f32 %v106, %v3333
    %v3335 = vand.u32 %v3334, 4294901760
    %3336 = vmatpush1.msra.mxu0 %v3335
    %v3337 = vand.u32 %v109, 4294901760
    %v3338 = vsub.f32 %v109, %v3337
    %v3339 = vand.u32 %v3338, 4294901760
    %3340 = vmatprep.subr.mxu0 %v3339
    %v3341 = vand.u32 %v108, 4294901760
    %v3342 = vsub.f32 %v108, %v3341
    %v3343 = vand.u32 %v3342, 4294901760
    %3344 = vmatpush1.msra.mxu0 %v3343
    %3345 = vmatprep.subr.mxu0 0.0
    %3346 = vmatpush1.msra.mxu0 0.0
    %3347 = vmatprep.subr.mxu0 0.0
    %3348 = vmatpush1.msra.mxu0 0.0
    %3349 = vmatprep.subr.mxu0 0.0
    %3350 = vmatpush1.msra.mxu0 0.0
    %3351 = vmatprep.subr.mxu0 0.0
    %3352 = vmatpush1.msra.mxu0 0.0
    %3353 = vmatprep.subr.mxu0 0.0
    %3354 = vmatpush1.msra.mxu0 0.0
    %3355 = vmatprep.subr.mxu0 0.0
    %3356 = vmatpush1.msra.mxu0 0.0
    %3357 = vmatprep.subr.mxu0 0.0
    %3358 = vmatpush1.msra.mxu0 0.0
    %3359 = vmatprep.subr.mxu0 0.0
    %3360 = vmatpush1.msra.mxu0 0.0
    %3361 = vmatprep.subr.mxu0 0.0
    %3362 = vmatpush1.msra.mxu0 0.0
    %3363 = vmatprep.subr.mxu0 0.0
    %3364 = vmatpush1.msra.mxu0 0.0
    %3365 = vmatprep.subr.mxu0 0.0
    %3366 = vmatpush1.msra.mxu0 0.0
    %3367 = vmatprep.subr.mxu0 0.0
    %3368 = vmatpush1.msra.mxu0 0.0
    %3369 = vmatprep.subr.mxu0 0.0
    %3370 = vmatpush1.msra.mxu0 0.0
    %3371 = vmatprep.subr.mxu0 0.0
    %3372 = vmatpush1.msra.mxu0 0.0
    %3373 = vmatprep.subr.mxu0 0.0
    %3374 = vmatpush1.msra.mxu0 0.0
    %3375 = vmatprep.subr.mxu0 0.0
    %3376 = vmatpush1.msra.mxu0 0.0
    %3377 = vmatprep.subr.mxu0 0.0
    %3378 = vmatpush1.msra.mxu0 0.0
    %3379 = vmatprep.subr.mxu0 0.0
    %3380 = vmatpush1.msra.mxu0 0.0
    %3381 = vmatprep.subr.mxu0 0.0
    %3382 = vmatpush1.msra.mxu0 0.0
    %3383 = vmatprep.subr.mxu0 0.0
    %3384 = vmatpush1.msra.mxu0 0.0
    %3385 = vmatprep.subr.mxu0 0.0
    %3386 = vmatpush1.msra.mxu0 0.0
    %3387 = vmatprep.subr.mxu0 0.0
    %3388 = vmatpush1.msra.mxu0 0.0
    %3389 = vmatprep.subr.mxu0 0.0
    %3390 = vmatpush1.msra.mxu0 0.0
    %3391 = vmatprep.subr.mxu0 0.0
    %3392 = vmatpush1.msra.mxu0 0.0
    %3393 = vmatprep.mubr.f32.mxu0 0.0
    %v3394 = vand.u32 %v2726, 4294901760
    %3395 = vmatmul.mubr.f32.gmra.mrb[0].mxu0 %v3394
    %v3396 = vpop.f32.mrb[0].mxu0
    %v3397 = vadd.f32 %v3250, %v3396
    %v3398 = vpop.f32.mrb[0].mxu0
    %v3399 = vadd.f32 %v3252, %v3398
    %3400 = vmatprep.mubr.f32.mxu0 0.0
    %v3401 = vand.u32 %v2729, 4294901760
    %3402 = vmatmul.mubr.f32.gmra.mrb[0].mxu0 %v3401
    %v3403 = vpop.f32.mrb[0].mxu0
    %v3404 = vadd.f32 %v3259, %v3403
    %v3405 = vpop.f32.mrb[0].mxu0
    %v3406 = vadd.f32 %v3261, %v3405
    %3407 = vmatprep.mubr.f32.mxu0 0.0
    %v3408 = vand.u32 %v2732, 4294901760
    %3409 = vmatmul.mubr.f32.gmra.mrb[0].mxu0 %v3408
    %v3410 = vpop.f32.mrb[0].mxu0
    %v3411 = vadd.f32 %v3268, %v3410
    %v3412 = vpop.f32.mrb[0].mxu0
    %v3413 = vadd.f32 %v3270, %v3412
    %3414 = vmatprep.mubr.f32.mxu0 0.0
    %v3415 = vand.u32 %v2735, 4294901760
    %3416 = vmatmul.mubr.f32.gmra.mrb[0].mxu0 %v3415
    %v3417 = vpop.f32.mrb[0].mxu0
    %v3418 = vadd.f32 %v3277, %v3417
    %v3419 = vpop.f32.mrb[0].mxu0
    %v3420 = vadd.f32 %v3279, %v3419
    %3421 = vdwg.mxu0
    %v3422 = vand.u32 %v95, 4294901760
    %3423 = vmatprep.subr.mxu0 %v3422
    %v3424 = vand.u32 %v94, 4294901760
    %3425 = vmatpush1.msra.mxu0 %v3424
    %v3426 = vand.u32 %v97, 4294901760
    %3427 = vmatprep.subr.mxu0 %v3426
    %v3428 = vand.u32 %v96, 4294901760
    %3429 = vmatpush1.msra.mxu0 %v3428
    %v3430 = vand.u32 %v99, 4294901760
    %3431 = vmatprep.subr.mxu0 %v3430
    %v3432 = vand.u32 %v98, 4294901760
    %3433 = vmatpush1.msra.mxu0 %v3432
    %v3434 = vand.u32 %v101, 4294901760
    %3435 = vmatprep.subr.mxu0 %v3434
    %v3436 = vand.u32 %v100, 4294901760
    %3437 = vmatpush1.msra.mxu0 %v3436
    %v3438 = vand.u32 %v103, 4294901760
    %3439 = vmatprep.subr.mxu0 %v3438
    %v3440 = vand.u32 %v102, 4294901760
    %3441 = vmatpush1.msra.mxu0 %v3440
    %v3442 = vand.u32 %v105, 4294901760
    %3443 = vmatprep.subr.mxu0 %v3442
    %v3444 = vand.u32 %v104, 4294901760
    %3445 = vmatpush1.msra.mxu0 %v3444
    %v3446 = vand.u32 %v107, 4294901760
    %3447 = vmatprep.subr.mxu0 %v3446
    %v3448 = vand.u32 %v106, 4294901760
    %3449 = vmatpush1.msra.mxu0 %v3448
    %v3450 = vand.u32 %v109, 4294901760
    %3451 = vmatprep.subr.mxu0 %v3450
    %v3452 = vand.u32 %v108, 4294901760
    %3453 = vmatpush1.msra.mxu0 %v3452
    %3454 = vmatprep.subr.mxu0 0.0
    %3455 = vmatpush1.msra.mxu0 0.0
    %3456 = vmatprep.subr.mxu0 0.0
    %3457 = vmatpush1.msra.mxu0 0.0
    %3458 = vmatprep.subr.mxu0 0.0
    %3459 = vmatpush1.msra.mxu0 0.0
    %3460 = vmatprep.subr.mxu0 0.0
    %3461 = vmatpush1.msra.mxu0 0.0
    %3462 = vmatprep.subr.mxu0 0.0
    %3463 = vmatpush1.msra.mxu0 0.0
    %3464 = vmatprep.subr.mxu0 0.0
    %3465 = vmatpush1.msra.mxu0 0.0
    %3466 = vmatprep.subr.mxu0 0.0
    %3467 = vmatpush1.msra.mxu0 0.0
    %3468 = vmatprep.subr.mxu0 0.0
    %3469 = vmatpush1.msra.mxu0 0.0
    %3470 = vmatprep.subr.mxu0 0.0
    %3471 = vmatpush1.msra.mxu0 0.0
    %3472 = vmatprep.subr.mxu0 0.0
    %3473 = vmatpush1.msra.mxu0 0.0
    %3474 = vmatprep.subr.mxu0 0.0
    %3475 = vmatpush1.msra.mxu0 0.0
    %3476 = vmatprep.subr.mxu0 0.0
    %3477 = vmatpush1.msra.mxu0 0.0
    %3478 = vmatprep.subr.mxu0 0.0
    %3479 = vmatpush1.msra.mxu0 0.0
    %3480 = vmatprep.subr.mxu0 0.0
    %3481 = vmatpush1.msra.mxu0 0.0
    %3482 = vmatprep.subr.mxu0 0.0
    %3483 = vmatpush1.msra.mxu0 0.0
    %3484 = vmatprep.subr.mxu0 0.0
    %3485 = vmatpush1.msra.mxu0 0.0
    %3486 = vmatprep.subr.mxu0 0.0
    %3487 = vmatpush1.msra.mxu0 0.0
    %3488 = vmatprep.subr.mxu0 0.0
    %3489 = vmatpush1.msra.mxu0 0.0
    %3490 = vmatprep.subr.mxu0 0.0
    %3491 = vmatpush1.msra.mxu0 0.0
    %3492 = vmatprep.subr.mxu0 0.0
    %3493 = vmatpush1.msra.mxu0 0.0
    %3494 = vmatprep.subr.mxu0 0.0
    %3495 = vmatpush1.msra.mxu0 0.0
    %3496 = vmatprep.subr.mxu0 0.0
    %3497 = vmatpush1.msra.mxu0 0.0
    %3498 = vmatprep.subr.mxu0 0.0
    %3499 = vmatpush1.msra.mxu0 0.0
    %3500 = vmatprep.subr.mxu0 0.0
    %3501 = vmatpush1.msra.mxu0 0.0
    %3502 = vmatprep.mubr.f32.mxu0 0.0
    %v3503 = vand.u32 %v2726, 4294901760
    %3504 = vmatmul.mubr.f32.gmra.mrb[0].mxu0 %v3503
    %v3505 = vpop.f32.mrb[0].mxu0
    %v3506 = vadd.f32 %v3397, %v3505
    %v3507 = vpop.f32.mrb[0].mxu0
    %v3508 = vadd.f32 %v3399, %v3507
    %3509 = vmatprep.mubr.f32.mxu0 0.0
    %v3510 = vand.u32 %v2729, 4294901760
    %3511 = vmatmul.mubr.f32.gmra.mrb[0].mxu0 %v3510
    %v3512 = vpop.f32.mrb[0].mxu0
    %v3513 = vadd.f32 %v3404, %v3512
    %v3514 = vpop.f32.mrb[0].mxu0
    %v3515 = vadd.f32 %v3406, %v3514
    %3516 = vmatprep.mubr.f32.mxu0 0.0
    %v3517 = vand.u32 %v2732, 4294901760
    %3518 = vmatmul.mubr.f32.gmra.mrb[0].mxu0 %v3517
    %v3519 = vpop.f32.mrb[0].mxu0
    %v3520 = vadd.f32 %v3411, %v3519
    %v3521 = vpop.f32.mrb[0].mxu0
    %v3522 = vadd.f32 %v3413, %v3521
    %3523 = vmatprep.mubr.f32.mxu0 0.0
    %v3524 = vand.u32 %v2735, 4294901760
    %3525 = vmatmul.mubr.f32.gmra.mrb[0].mxu0 %v3524
    %v3526 = vpop.f32.mrb[0].mxu0
    %v3527 = vadd.f32 %v3418, %v3526
    %v3528 = vpop.f32.mrb[0].mxu0
    %v3529 = vadd.f32 %v3420, %v3528
    %3530 = vdwg.mxu0
    %v3531 = vadd.f32 %v21, %v3506
    %v3532 = vadd.f32 %v22, %v3508
    %v3533 = vadd.f32 %v23, %v3513
    %v3534 = vadd.f32 %v24, %v3515
    %v3535 = vadd.f32 %v25, %v3520
    %v3536 = vadd.f32 %v26, %v3522
    %v3537 = vadd.f32 %v27, %v3527
    %v3538 = vadd.f32 %v28, %v3529
    %s3539 = scalar_lea.vmem %s1, 256
    %v3540 = vld [vmem:[%s3539] sm:$0xff]
    %v3541 = vld [vmem:[%s3539 + $0x8] sm:$0xff]
    %v3542 = vld [vmem:[%s3539 + $0x10] sm:$0xff]
    %v3543 = vld [vmem:[%s3539 + $0x18] sm:$0xff]
    %v3544 = vld [vmem:[%s3539 + $0x20] sm:$0xff]
    %v3545 = vld [vmem:[%s3539 + $0x28] sm:$0xff]
    %v3546 = vld [vmem:[%s3539 + $0x30] sm:$0xff]
    %v3547 = vld [vmem:[%s3539 + $0x38] sm:$0xff]
    %v3548 = vld [vmem:[%s3539 + $0x40] sm:$0xff]
    %v3549 = vld [vmem:[%s3539 + $0x48] sm:$0xff]
    %v3550 = vld [vmem:[%s3539 + $0x50] sm:$0xff]
    %v3551 = vld [vmem:[%s3539 + $0x58] sm:$0xff]
    %v3552 = vld [vmem:[%s3539 + $0x60] sm:$0xff]
    %v3553 = vld [vmem:[%s3539 + $0x68] sm:$0xff]
    %v3554 = vld [vmem:[%s3539 + $0x70] sm:$0xff]
    %v3555 = vld [vmem:[%s3539 + $0x78] sm:$0xff]
    %v3556 = vld [vmem:[%s3539 + $0x80] sm:$0xff]
    %v3557 = vld [vmem:[%s3539 + $0x88] sm:$0xff]
    %v3558 = vld [vmem:[%s3539 + $0x90] sm:$0xff]
    %v3559 = vld [vmem:[%s3539 + $0x98] sm:$0xff]
    %v3560 = vld [vmem:[%s3539 + $0xa0] sm:$0xff]
    %v3561 = vld [vmem:[%s3539 + $0xa8] sm:$0xff]
    %v3562 = vld [vmem:[%s3539 + $0xb0] sm:$0xff]
    %v3563 = vld [vmem:[%s3539 + $0xb8] sm:$0xff]
    %v3564 = vld [vmem:[%s3539 + $0xc0] sm:$0xff]
    %v3565 = vld [vmem:[%s3539 + $0xc8] sm:$0xff]
    %v3566 = vld [vmem:[%s3539 + $0xd0] sm:$0xff]
    %v3567 = vld [vmem:[%s3539 + $0xd8] sm:$0xff]
    %v3568 = vld [vmem:[%s3539 + $0xe0] sm:$0xff]
    %v3569 = vld [vmem:[%s3539 + $0xe8] sm:$0xff]
    %v3570 = vld [vmem:[%s3539 + $0xf0] sm:$0xff]
    %v3571 = vld [vmem:[%s3539 + $0xf8] sm:$0xff]
    %s3572 = scalar_lea.vmem %s2, 192
    %v3573 = vld [vmem:[%s3572] sm:$0xff]
    %v3574 = vld [vmem:[%s3572 + $0x8] sm:$0xff]
    %v3575 = vld [vmem:[%s3572 + $0x10] sm:$0xff]
    %v3576 = vld [vmem:[%s3572 + $0x18] sm:$0xff]
    %v3577 = vld [vmem:[%s3572 + $0x20] sm:$0xff]
    %v3578 = vld [vmem:[%s3572 + $0x28] sm:$0xff]
    %v3579 = vld [vmem:[%s3572 + $0x30] sm:$0xff]
    %v3580 = vld [vmem:[%s3572 + $0x38] sm:$0xff]
    %v3581 = vld [vmem:[%s3572 + $0x40] sm:$0xff]
    %v3582 = vld [vmem:[%s3572 + $0x48] sm:$0xff]
    %v3583 = vld [vmem:[%s3572 + $0x50] sm:$0xff]
    %v3584 = vld [vmem:[%s3572 + $0x58] sm:$0xff]
    %v3585 = vld [vmem:[%s3572 + $0x60] sm:$0xff]
    %v3586 = vld [vmem:[%s3572 + $0x68] sm:$0xff]
    %v3587 = vld [vmem:[%s3572 + $0x70] sm:$0xff]
    %v3588 = vld [vmem:[%s3572 + $0x78] sm:$0xff]
    %v3589 = vld [vmem:[%s3572 + $0x80] sm:$0xff]
    %v3590 = vld [vmem:[%s3572 + $0x88] sm:$0xff]
    %v3591 = vld [vmem:[%s3572 + $0x90] sm:$0xff]
    %v3592 = vld [vmem:[%s3572 + $0x98] sm:$0xff]
    %v3593 = vld [vmem:[%s3572 + $0xa0] sm:$0xff]
    %v3594 = vld [vmem:[%s3572 + $0xa8] sm:$0xff]
    %v3595 = vld [vmem:[%s3572 + $0xb0] sm:$0xff]
    %v3596 = vld [vmem:[%s3572 + $0xb8] sm:$0xff]
    %s3597 = scalar_lea.vmem %s3, 128
    %v3598 = vld [vmem:[%s3597] sm:$0xff]
    %v3599 = vld [vmem:[%s3597 + $0x8] sm:$0xff]
    %v3600 = vld [vmem:[%s3597 + $0x10] sm:$0xff]
    %v3601 = vld [vmem:[%s3597 + $0x18] sm:$0xff]
    %v3602 = vld [vmem:[%s3597 + $0x20] sm:$0xff]
    %v3603 = vld [vmem:[%s3597 + $0x28] sm:$0xff]
    %v3604 = vld [vmem:[%s3597 + $0x30] sm:$0xff]
    %v3605 = vld [vmem:[%s3597 + $0x38] sm:$0xff]
    %v3606 = vld [vmem:[%s3597 + $0x40] sm:$0xff]
    %v3607 = vld [vmem:[%s3597 + $0x48] sm:$0xff]
    %v3608 = vld [vmem:[%s3597 + $0x50] sm:$0xff]
    %v3609 = vld [vmem:[%s3597 + $0x58] sm:$0xff]
    %v3610 = vld [vmem:[%s3597 + $0x60] sm:$0xff]
    %v3611 = vld [vmem:[%s3597 + $0x68] sm:$0xff]
    %v3612 = vld [vmem:[%s3597 + $0x70] sm:$0xff]
    %v3613 = vld [vmem:[%s3597 + $0x78] sm:$0xff]
    %s3614 = scalar_lea.vmem %s4, 8
    %v3615 = vld [vmem:[%s3614] sm:$0xff]
    %3616 = vmatprep.subr.mxu0 0.0
    %v3617 = vand.u32 %v3540, 4294901760
    %3618 = vmatpush1.msra.mxu0 %v3617
    %3619 = vmatprep.subr.mxu0 0.0
    %v3620 = vand.u32 %v3541, 4294901760
    %3621 = vmatpush1.msra.mxu0 %v3620
    %3622 = vmatprep.subr.mxu0 0.0
    %v3623 = vand.u32 %v3542, 4294901760
    %3624 = vmatpush1.msra.mxu0 %v3623
    %3625 = vmatprep.subr.mxu0 0.0
    %v3626 = vand.u32 %v3543, 4294901760
    %3627 = vmatpush1.msra.mxu0 %v3626
    %3628 = vmatprep.subr.mxu0 0.0
    %v3629 = vand.u32 %v3544, 4294901760
    %3630 = vmatpush1.msra.mxu0 %v3629
    %3631 = vmatprep.subr.mxu0 0.0
    %v3632 = vand.u32 %v3545, 4294901760
    %3633 = vmatpush1.msra.mxu0 %v3632
    %3634 = vmatprep.subr.mxu0 0.0
    %v3635 = vand.u32 %v3546, 4294901760
    %3636 = vmatpush1.msra.mxu0 %v3635
    %3637 = vmatprep.subr.mxu0 0.0
    %v3638 = vand.u32 %v3547, 4294901760
    %3639 = vmatpush1.msra.mxu0 %v3638
    %3640 = vmatprep.subr.mxu0 0.0
    %v3641 = vand.u32 %v3548, 4294901760
    %3642 = vmatpush1.msra.mxu0 %v3641
    %3643 = vmatprep.subr.mxu0 0.0
    %v3644 = vand.u32 %v3549, 4294901760
    %3645 = vmatpush1.msra.mxu0 %v3644
    %3646 = vmatprep.subr.mxu0 0.0
    %v3647 = vand.u32 %v3550, 4294901760
    %3648 = vmatpush1.msra.mxu0 %v3647
    %3649 = vmatprep.subr.mxu0 0.0
    %v3650 = vand.u32 %v3551, 4294901760
    %3651 = vmatpush1.msra.mxu0 %v3650
    %3652 = vmatprep.subr.mxu0 0.0
    %v3653 = vand.u32 %v3552, 4294901760
    %3654 = vmatpush1.msra.mxu0 %v3653
    %3655 = vmatprep.subr.mxu0 0.0
    %v3656 = vand.u32 %v3553, 4294901760
    %3657 = vmatpush1.msra.mxu0 %v3656
    %3658 = vmatprep.subr.mxu0 0.0
    %v3659 = vand.u32 %v3554, 4294901760
    %3660 = vmatpush1.msra.mxu0 %v3659
    %3661 = vmatprep.subr.mxu0 0.0
    %v3662 = vand.u32 %v3555, 4294901760
    %3663 = vmatpush1.msra.mxu0 %v3662
    %3664 = vmatprep.subr.mxu0 0.0
    %v3665 = vand.u32 %v3556, 4294901760
    %3666 = vmatpush1.msra.mxu0 %v3665
    %3667 = vmatprep.subr.mxu0 0.0
    %v3668 = vand.u32 %v3557, 4294901760
    %3669 = vmatpush1.msra.mxu0 %v3668
    %3670 = vmatprep.subr.mxu0 0.0
    %v3671 = vand.u32 %v3558, 4294901760
    %3672 = vmatpush1.msra.mxu0 %v3671
    %3673 = vmatprep.subr.mxu0 0.0
    %v3674 = vand.u32 %v3559, 4294901760
    %3675 = vmatpush1.msra.mxu0 %v3674
    %3676 = vmatprep.subr.mxu0 0.0
    %v3677 = vand.u32 %v3560, 4294901760
    %3678 = vmatpush1.msra.mxu0 %v3677
    %3679 = vmatprep.subr.mxu0 0.0
    %v3680 = vand.u32 %v3561, 4294901760
    %3681 = vmatpush1.msra.mxu0 %v3680
    %3682 = vmatprep.subr.mxu0 0.0
    %v3683 = vand.u32 %v3562, 4294901760
    %3684 = vmatpush1.msra.mxu0 %v3683
    %3685 = vmatprep.subr.mxu0 0.0
    %v3686 = vand.u32 %v3563, 4294901760
    %3687 = vmatpush1.msra.mxu0 %v3686
    %3688 = vmatprep.subr.mxu0 0.0
    %v3689 = vand.u32 %v3564, 4294901760
    %3690 = vmatpush1.msra.mxu0 %v3689
    %3691 = vmatprep.subr.mxu0 0.0
    %v3692 = vand.u32 %v3565, 4294901760
    %3693 = vmatpush1.msra.mxu0 %v3692
    %3694 = vmatprep.subr.mxu0 0.0
    %v3695 = vand.u32 %v3566, 4294901760
    %3696 = vmatpush1.msra.mxu0 %v3695
    %3697 = vmatprep.subr.mxu0 0.0
    %v3698 = vand.u32 %v3567, 4294901760
    %3699 = vmatpush1.msra.mxu0 %v3698
    %3700 = vmatprep.subr.mxu0 0.0
    %v3701 = vand.u32 %v3568, 4294901760
    %3702 = vmatpush1.msra.mxu0 %v3701
    %3703 = vmatprep.subr.mxu0 0.0
    %v3704 = vand.u32 %v3569, 4294901760
    %3705 = vmatpush1.msra.mxu0 %v3704
    %3706 = vmatprep.subr.mxu0 0.0
    %v3707 = vand.u32 %v3570, 4294901760
    %3708 = vmatpush1.msra.mxu0 %v3707
    %3709 = vmatprep.subr.mxu0 0.0
    %v3710 = vand.u32 %v3571, 4294901760
    %3711 = vmatpush1.msra.mxu0 %v3710
    %v3712 = vand.u32 %v3532, 4294901760
    %v3713 = vsub.f32 %v3532, %v3712
    %v3714 = vand.u32 %v3713, 4294901760
    %v3715 = vsub.f32 %v3713, %v3714
    %v3716 = vand.u32 %v3715, 4294901760
    %3717 = vmatprep.mubr.f32.mxu0 %v3716
    %v3718 = vand.u32 %v3531, 4294901760
    %v3719 = vsub.f32 %v3531, %v3718
    %v3720 = vand.u32 %v3719, 4294901760
    %v3721 = vsub.f32 %v3719, %v3720
    %v3722 = vand.u32 %v3721, 4294901760
    %3723 = vmatmul.mubr.f32.gmra.mrb[0].mxu0 %v3722
    %v3724 = vpop.f32.mrb[0].mxu0
    %v3725 = vadd.f32 0.0, %v3724
    %v3726 = vpop.f32.mrb[0].mxu0
    %v3727 = vand.u32 %v3534, 4294901760
    %v3728 = vsub.f32 %v3534, %v3727
    %v3729 = vand.u32 %v3728, 4294901760
    %v3730 = vsub.f32 %v3728, %v3729
    %v3731 = vand.u32 %v3730, 4294901760
    %3732 = vmatprep.mubr.f32.mxu0 %v3731
    %v3733 = vand.u32 %v3533, 4294901760
    %v3734 = vsub.f32 %v3533, %v3733
    %v3735 = vand.u32 %v3734, 4294901760
    %v3736 = vsub.f32 %v3734, %v3735
    %v3737 = vand.u32 %v3736, 4294901760
    %3738 = vmatmul.mubr.f32.gmra.mrb[0].mxu0 %v3737
    %v3739 = vpop.f32.mrb[0].mxu0
    %v3740 = vadd.f32 0.0, %v3739
    %v3741 = vpop.f32.mrb[0].mxu0
    %v3742 = vand.u32 %v3536, 4294901760
    %v3743 = vsub.f32 %v3536, %v3742
    %v3744 = vand.u32 %v3743, 4294901760
    %v3745 = vsub.f32 %v3743, %v3744
    %v3746 = vand.u32 %v3745, 4294901760
    %3747 = vmatprep.mubr.f32.mxu0 %v3746
    %v3748 = vand.u32 %v3535, 4294901760
    %v3749 = vsub.f32 %v3535, %v3748
    %v3750 = vand.u32 %v3749, 4294901760
    %v3751 = vsub.f32 %v3749, %v3750
    %v3752 = vand.u32 %v3751, 4294901760
    %3753 = vmatmul.mubr.f32.gmra.mrb[0].mxu0 %v3752
    %v3754 = vpop.f32.mrb[0].mxu0
    %v3755 = vadd.f32 0.0, %v3754
    %v3756 = vpop.f32.mrb[0].mxu0
    %v3757 = vand.u32 %v3538, 4294901760
    %v3758 = vsub.f32 %v3538, %v3757
    %v3759 = vand.u32 %v3758, 4294901760
    %v3760 = vsub.f32 %v3758, %v3759
    %v3761 = vand.u32 %v3760, 4294901760
    %3762 = vmatprep.mubr.f32.mxu0 %v3761
    %v3763 = vand.u32 %v3537, 4294901760
    %v3764 = vsub.f32 %v3537, %v3763
    %v3765 = vand.u32 %v3764, 4294901760
    %v3766 = vsub.f32 %v3764, %v3765
    %v3767 = vand.u32 %v3766, 4294901760
    %3768 = vmatmul.mubr.f32.gmra.mrb[0].mxu0 %v3767
    %v3769 = vpop.f32.mrb[0].mxu0
    %v3770 = vadd.f32 0.0, %v3769
    %v3771 = vpop.f32.mrb[0].mxu0
    %3772 = vdwg.mxu0
    %3773 = vmatprep.subr.mxu0 0.0
    %v3774 = vand.u32 %v3540, 4294901760
    %v3775 = vsub.f32 %v3540, %v3774
    %v3776 = vand.u32 %v3775, 4294901760
    %v3777 = vsub.f32 %v3775, %v3776
    %v3778 = vand.u32 %v3777, 4294901760
    %3779 = vmatpush1.msra.mxu0 %v3778
    %3780 = vmatprep.subr.mxu0 0.0
    %v3781 = vand.u32 %v3541, 4294901760
    %v3782 = vsub.f32 %v3541, %v3781
    %v3783 = vand.u32 %v3782, 4294901760
    %v3784 = vsub.f32 %v3782, %v3783
    %v3785 = vand.u32 %v3784, 4294901760
    %3786 = vmatpush1.msra.mxu0 %v3785
    %3787 = vmatprep.subr.mxu0 0.0
    %v3788 = vand.u32 %v3542, 4294901760
    %v3789 = vsub.f32 %v3542, %v3788
    %v3790 = vand.u32 %v3789, 4294901760
    %v3791 = vsub.f32 %v3789, %v3790
    %v3792 = vand.u32 %v3791, 4294901760
    %3793 = vmatpush1.msra.mxu0 %v3792
    %3794 = vmatprep.subr.mxu0 0.0
    %v3795 = vand.u32 %v3543, 4294901760
    %v3796 = vsub.f32 %v3543, %v3795
    %v3797 = vand.u32 %v3796, 4294901760
    %v3798 = vsub.f32 %v3796, %v3797
    %v3799 = vand.u32 %v3798, 4294901760
    %3800 = vmatpush1.msra.mxu0 %v3799
    %3801 = vmatprep.subr.mxu0 0.0
    %v3802 = vand.u32 %v3544, 4294901760
    %v3803 = vsub.f32 %v3544, %v3802
    %v3804 = vand.u32 %v3803, 4294901760
    %v3805 = vsub.f32 %v3803, %v3804
    %v3806 = vand.u32 %v3805, 4294901760
    %3807 = vmatpush1.msra.mxu0 %v3806
    %3808 = vmatprep.subr.mxu0 0.0
    %v3809 = vand.u32 %v3545, 4294901760
    %v3810 = vsub.f32 %v3545, %v3809
    %v3811 = vand.u32 %v3810, 4294901760
    %v3812 = vsub.f32 %v3810, %v3811
    %v3813 = vand.u32 %v3812, 4294901760
    %3814 = vmatpush1.msra.mxu0 %v3813
    %3815 = vmatprep.subr.mxu0 0.0
    %v3816 = vand.u32 %v3546, 4294901760
    %v3817 = vsub.f32 %v3546, %v3816
    %v3818 = vand.u32 %v3817, 4294901760
    %v3819 = vsub.f32 %v3817, %v3818
    %v3820 = vand.u32 %v3819, 4294901760
    %3821 = vmatpush1.msra.mxu0 %v3820
    %3822 = vmatprep.subr.mxu0 0.0
    %v3823 = vand.u32 %v3547, 4294901760
    %v3824 = vsub.f32 %v3547, %v3823
    %v3825 = vand.u32 %v3824, 4294901760
    %v3826 = vsub.f32 %v3824, %v3825
    %v3827 = vand.u32 %v3826, 4294901760
    %3828 = vmatpush1.msra.mxu0 %v3827
    %3829 = vmatprep.subr.mxu0 0.0
    %v3830 = vand.u32 %v3548, 4294901760
    %v3831 = vsub.f32 %v3548, %v3830
    %v3832 = vand.u32 %v3831, 4294901760
    %v3833 = vsub.f32 %v3831, %v3832
    %v3834 = vand.u32 %v3833, 4294901760
    %3835 = vmatpush1.msra.mxu0 %v3834
    %3836 = vmatprep.subr.mxu0 0.0
    %v3837 = vand.u32 %v3549, 4294901760
    %v3838 = vsub.f32 %v3549, %v3837
    %v3839 = vand.u32 %v3838, 4294901760
    %v3840 = vsub.f32 %v3838, %v3839
    %v3841 = vand.u32 %v3840, 4294901760
    %3842 = vmatpush1.msra.mxu0 %v3841
    %3843 = vmatprep.subr.mxu0 0.0
    %v3844 = vand.u32 %v3550, 4294901760
    %v3845 = vsub.f32 %v3550, %v3844
    %v3846 = vand.u32 %v3845, 4294901760
    %v3847 = vsub.f32 %v3845, %v3846
    %v3848 = vand.u32 %v3847, 4294901760
    %3849 = vmatpush1.msra.mxu0 %v3848
    %3850 = vmatprep.subr.mxu0 0.0
    %v3851 = vand.u32 %v3551, 4294901760
    %v3852 = vsub.f32 %v3551, %v3851
    %v3853 = vand.u32 %v3852, 4294901760
    %v3854 = vsub.f32 %v3852, %v3853
    %v3855 = vand.u32 %v3854, 4294901760
    %3856 = vmatpush1.msra.mxu0 %v3855
    %3857 = vmatprep.subr.mxu0 0.0
    %v3858 = vand.u32 %v3552, 4294901760
    %v3859 = vsub.f32 %v3552, %v3858
    %v3860 = vand.u32 %v3859, 4294901760
    %v3861 = vsub.f32 %v3859, %v3860
    %v3862 = vand.u32 %v3861, 4294901760
    %3863 = vmatpush1.msra.mxu0 %v3862
    %3864 = vmatprep.subr.mxu0 0.0
    %v3865 = vand.u32 %v3553, 4294901760
    %v3866 = vsub.f32 %v3553, %v3865
    %v3867 = vand.u32 %v3866, 4294901760
    %v3868 = vsub.f32 %v3866, %v3867
    %v3869 = vand.u32 %v3868, 4294901760
    %3870 = vmatpush1.msra.mxu0 %v3869
    %3871 = vmatprep.subr.mxu0 0.0
    %v3872 = vand.u32 %v3554, 4294901760
    %v3873 = vsub.f32 %v3554, %v3872
    %v3874 = vand.u32 %v3873, 4294901760
    %v3875 = vsub.f32 %v3873, %v3874
    %v3876 = vand.u32 %v3875, 4294901760
    %3877 = vmatpush1.msra.mxu0 %v3876
    %3878 = vmatprep.subr.mxu0 0.0
    %v3879 = vand.u32 %v3555, 4294901760
    %v3880 = vsub.f32 %v3555, %v3879
    %v3881 = vand.u32 %v3880, 4294901760
    %v3882 = vsub.f32 %v3880, %v3881
    %v3883 = vand.u32 %v3882, 4294901760
    %3884 = vmatpush1.msra.mxu0 %v3883
    %3885 = vmatprep.subr.mxu0 0.0
    %v3886 = vand.u32 %v3556, 4294901760
    %v3887 = vsub.f32 %v3556, %v3886
    %v3888 = vand.u32 %v3887, 4294901760
    %v3889 = vsub.f32 %v3887, %v3888
    %v3890 = vand.u32 %v3889, 4294901760
    %3891 = vmatpush1.msra.mxu0 %v3890
    %3892 = vmatprep.subr.mxu0 0.0
    %v3893 = vand.u32 %v3557, 4294901760
    %v3894 = vsub.f32 %v3557, %v3893
    %v3895 = vand.u32 %v3894, 4294901760
    %v3896 = vsub.f32 %v3894, %v3895
    %v3897 = vand.u32 %v3896, 4294901760
    %3898 = vmatpush1.msra.mxu0 %v3897
    %3899 = vmatprep.subr.mxu0 0.0
    %v3900 = vand.u32 %v3558, 4294901760
    %v3901 = vsub.f32 %v3558, %v3900
    %v3902 = vand.u32 %v3901, 4294901760
    %v3903 = vsub.f32 %v3901, %v3902
    %v3904 = vand.u32 %v3903, 4294901760
    %3905 = vmatpush1.msra.mxu0 %v3904
    %3906 = vmatprep.subr.mxu0 0.0
    %v3907 = vand.u32 %v3559, 4294901760
    %v3908 = vsub.f32 %v3559, %v3907
    %v3909 = vand.u32 %v3908, 4294901760
    %v3910 = vsub.f32 %v3908, %v3909
    %v3911 = vand.u32 %v3910, 4294901760
    %3912 = vmatpush1.msra.mxu0 %v3911
    %3913 = vmatprep.subr.mxu0 0.0
    %v3914 = vand.u32 %v3560, 4294901760
    %v3915 = vsub.f32 %v3560, %v3914
    %v3916 = vand.u32 %v3915, 4294901760
    %v3917 = vsub.f32 %v3915, %v3916
    %v3918 = vand.u32 %v3917, 4294901760
    %3919 = vmatpush1.msra.mxu0 %v3918
    %3920 = vmatprep.subr.mxu0 0.0
    %v3921 = vand.u32 %v3561, 4294901760
    %v3922 = vsub.f32 %v3561, %v3921
    %v3923 = vand.u32 %v3922, 4294901760
    %v3924 = vsub.f32 %v3922, %v3923
    %v3925 = vand.u32 %v3924, 4294901760
    %3926 = vmatpush1.msra.mxu0 %v3925
    %3927 = vmatprep.subr.mxu0 0.0
    %v3928 = vand.u32 %v3562, 4294901760
    %v3929 = vsub.f32 %v3562, %v3928
    %v3930 = vand.u32 %v3929, 4294901760
    %v3931 = vsub.f32 %v3929, %v3930
    %v3932 = vand.u32 %v3931, 4294901760
    %3933 = vmatpush1.msra.mxu0 %v3932
    %3934 = vmatprep.subr.mxu0 0.0
    %v3935 = vand.u32 %v3563, 4294901760
    %v3936 = vsub.f32 %v3563, %v3935
    %v3937 = vand.u32 %v3936, 4294901760
    %v3938 = vsub.f32 %v3936, %v3937
    %v3939 = vand.u32 %v3938, 4294901760
    %3940 = vmatpush1.msra.mxu0 %v3939
    %3941 = vmatprep.subr.mxu0 0.0
    %v3942 = vand.u32 %v3564, 4294901760
    %v3943 = vsub.f32 %v3564, %v3942
    %v3944 = vand.u32 %v3943, 4294901760
    %v3945 = vsub.f32 %v3943, %v3944
    %v3946 = vand.u32 %v3945, 4294901760
    %3947 = vmatpush1.msra.mxu0 %v3946
    %3948 = vmatprep.subr.mxu0 0.0
    %v3949 = vand.u32 %v3565, 4294901760
    %v3950 = vsub.f32 %v3565, %v3949
    %v3951 = vand.u32 %v3950, 4294901760
    %v3952 = vsub.f32 %v3950, %v3951
    %v3953 = vand.u32 %v3952, 4294901760
    %3954 = vmatpush1.msra.mxu0 %v3953
    %3955 = vmatprep.subr.mxu0 0.0
    %v3956 = vand.u32 %v3566, 4294901760
    %v3957 = vsub.f32 %v3566, %v3956
    %v3958 = vand.u32 %v3957, 4294901760
    %v3959 = vsub.f32 %v3957, %v3958
    %v3960 = vand.u32 %v3959, 4294901760
    %3961 = vmatpush1.msra.mxu0 %v3960
    %3962 = vmatprep.subr.mxu0 0.0
    %v3963 = vand.u32 %v3567, 4294901760
    %v3964 = vsub.f32 %v3567, %v3963
    %v3965 = vand.u32 %v3964, 4294901760
    %v3966 = vsub.f32 %v3964, %v3965
    %v3967 = vand.u32 %v3966, 4294901760
    %3968 = vmatpush1.msra.mxu0 %v3967
    %3969 = vmatprep.subr.mxu0 0.0
    %v3970 = vand.u32 %v3568, 4294901760
    %v3971 = vsub.f32 %v3568, %v3970
    %v3972 = vand.u32 %v3971, 4294901760
    %v3973 = vsub.f32 %v3971, %v3972
    %v3974 = vand.u32 %v3973, 4294901760
    %3975 = vmatpush1.msra.mxu0 %v3974
    %3976 = vmatprep.subr.mxu0 0.0
    %v3977 = vand.u32 %v3569, 4294901760
    %v3978 = vsub.f32 %v3569, %v3977
    %v3979 = vand.u32 %v3978, 4294901760
    %v3980 = vsub.f32 %v3978, %v3979
    %v3981 = vand.u32 %v3980, 4294901760
    %3982 = vmatpush1.msra.mxu0 %v3981
    %3983 = vmatprep.subr.mxu0 0.0
    %v3984 = vand.u32 %v3570, 4294901760
    %v3985 = vsub.f32 %v3570, %v3984
    %v3986 = vand.u32 %v3985, 4294901760
    %v3987 = vsub.f32 %v3985, %v3986
    %v3988 = vand.u32 %v3987, 4294901760
    %3989 = vmatpush1.msra.mxu0 %v3988
    %3990 = vmatprep.subr.mxu0 0.0
    %v3991 = vand.u32 %v3571, 4294901760
    %v3992 = vsub.f32 %v3571, %v3991
    %v3993 = vand.u32 %v3992, 4294901760
    %v3994 = vsub.f32 %v3992, %v3993
    %v3995 = vand.u32 %v3994, 4294901760
    %3996 = vmatpush1.msra.mxu0 %v3995
    %v3997 = vand.u32 %v3532, 4294901760
    %3998 = vmatprep.mubr.f32.mxu0 %v3997
    %v3999 = vand.u32 %v3531, 4294901760
    %4000 = vmatmul.mubr.f32.gmra.mrb[0].mxu0 %v3999
    %v4001 = vpop.f32.mrb[0].mxu0
    %v4002 = vadd.f32 %v3725, %v4001
    %v4003 = vpop.f32.mrb[0].mxu0
    %v4004 = vand.u32 %v3534, 4294901760
    %4005 = vmatprep.mubr.f32.mxu0 %v4004
    %v4006 = vand.u32 %v3533, 4294901760
    %4007 = vmatmul.mubr.f32.gmra.mrb[0].mxu0 %v4006
    %v4008 = vpop.f32.mrb[0].mxu0
    %v4009 = vadd.f32 %v3740, %v4008
    %v4010 = vpop.f32.mrb[0].mxu0
    %v4011 = vand.u32 %v3536, 4294901760
    %4012 = vmatprep.mubr.f32.mxu0 %v4011
    %v4013 = vand.u32 %v3535, 4294901760
    %4014 = vmatmul.mubr.f32.gmra.mrb[0].mxu0 %v4013
    %v4015 = vpop.f32.mrb[0].mxu0
    %v4016 = vadd.f32 %v3755, %v4015
    %v4017 = vpop.f32.mrb[0].mxu0
    %v4018 = vand.u32 %v3538, 4294901760
    %4019 = vmatprep.mubr.f32.mxu0 %v4018
    %v4020 = vand.u32 %v3537, 4294901760
    %4021 = vmatmul.mubr.f32.gmra.mrb[0].mxu0 %v4020
    %v4022 = vpop.f32.mrb[0].mxu0
    %v4023 = vadd.f32 %v3770, %v4022
    %v4024 = vpop.f32.mrb[0].mxu0
    %4025 = vdwg.mxu0
    %4026 = vmatprep.subr.mxu0 0.0
    %v4027 = vand.u32 %v3540, 4294901760
    %v4028 = vsub.f32 %v3540, %v4027
    %4029 = vmatpush1.msra.mxu0 %v4028
    %4030 = vmatprep.subr.mxu0 0.0
    %v4031 = vand.u32 %v3541, 4294901760
    %v4032 = vsub.f32 %v3541, %v4031
    %4033 = vmatpush1.msra.mxu0 %v4032
    %4034 = vmatprep.subr.mxu0 0.0
    %v4035 = vand.u32 %v3542, 4294901760
    %v4036 = vsub.f32 %v3542, %v4035
    %4037 = vmatpush1.msra.mxu0 %v4036
    %4038 = vmatprep.subr.mxu0 0.0
    %v4039 = vand.u32 %v3543, 4294901760
    %v4040 = vsub.f32 %v3543, %v4039
    %4041 = vmatpush1.msra.mxu0 %v4040
    %4042 = vmatprep.subr.mxu0 0.0
    %v4043 = vand.u32 %v3544, 4294901760
    %v4044 = vsub.f32 %v3544, %v4043
    %4045 = vmatpush1.msra.mxu0 %v4044
    %4046 = vmatprep.subr.mxu0 0.0
    %v4047 = vand.u32 %v3545, 4294901760
    %v4048 = vsub.f32 %v3545, %v4047
    %4049 = vmatpush1.msra.mxu0 %v4048
    %4050 = vmatprep.subr.mxu0 0.0
    %v4051 = vand.u32 %v3546, 4294901760
    %v4052 = vsub.f32 %v3546, %v4051
    %4053 = vmatpush1.msra.mxu0 %v4052
    %4054 = vmatprep.subr.mxu0 0.0
    %v4055 = vand.u32 %v3547, 4294901760
    %v4056 = vsub.f32 %v3547, %v4055
    %4057 = vmatpush1.msra.mxu0 %v4056
    %4058 = vmatprep.subr.mxu0 0.0
    %v4059 = vand.u32 %v3548, 4294901760
    %v4060 = vsub.f32 %v3548, %v4059
    %4061 = vmatpush1.msra.mxu0 %v4060
    %4062 = vmatprep.subr.mxu0 0.0
    %v4063 = vand.u32 %v3549, 4294901760
    %v4064 = vsub.f32 %v3549, %v4063
    %4065 = vmatpush1.msra.mxu0 %v4064
    %4066 = vmatprep.subr.mxu0 0.0
    %v4067 = vand.u32 %v3550, 4294901760
    %v4068 = vsub.f32 %v3550, %v4067
    %4069 = vmatpush1.msra.mxu0 %v4068
    %4070 = vmatprep.subr.mxu0 0.0
    %v4071 = vand.u32 %v3551, 4294901760
    %v4072 = vsub.f32 %v3551, %v4071
    %4073 = vmatpush1.msra.mxu0 %v4072
    %4074 = vmatprep.subr.mxu0 0.0
    %v4075 = vand.u32 %v3552, 4294901760
    %v4076 = vsub.f32 %v3552, %v4075
    %4077 = vmatpush1.msra.mxu0 %v4076
    %4078 = vmatprep.subr.mxu0 0.0
    %v4079 = vand.u32 %v3553, 4294901760
    %v4080 = vsub.f32 %v3553, %v4079
    %4081 = vmatpush1.msra.mxu0 %v4080
    %4082 = vmatprep.subr.mxu0 0.0
    %v4083 = vand.u32 %v3554, 4294901760
    %v4084 = vsub.f32 %v3554, %v4083
    %4085 = vmatpush1.msra.mxu0 %v4084
    %4086 = vmatprep.subr.mxu0 0.0
    %v4087 = vand.u32 %v3555, 4294901760
    %v4088 = vsub.f32 %v3555, %v4087
    %4089 = vmatpush1.msra.mxu0 %v4088
    %4090 = vmatprep.subr.mxu0 0.0
    %v4091 = vand.u32 %v3556, 4294901760
    %v4092 = vsub.f32 %v3556, %v4091
    %4093 = vmatpush1.msra.mxu0 %v4092
    %4094 = vmatprep.subr.mxu0 0.0
    %v4095 = vand.u32 %v3557, 4294901760
    %v4096 = vsub.f32 %v3557, %v4095
    %4097 = vmatpush1.msra.mxu0 %v4096
    %4098 = vmatprep.subr.mxu0 0.0
    %v4099 = vand.u32 %v3558, 4294901760
    %v4100 = vsub.f32 %v3558, %v4099
    %4101 = vmatpush1.msra.mxu0 %v4100
    %4102 = vmatprep.subr.mxu0 0.0
    %v4103 = vand.u32 %v3559, 4294901760
    %v4104 = vsub.f32 %v3559, %v4103
    %4105 = vmatpush1.msra.mxu0 %v4104
    %4106 = vmatprep.subr.mxu0 0.0
    %v4107 = vand.u32 %v3560, 4294901760
    %v4108 = vsub.f32 %v3560, %v4107
    %4109 = vmatpush1.msra.mxu0 %v4108
    %4110 = vmatprep.subr.mxu0 0.0
    %v4111 = vand.u32 %v3561, 4294901760
    %v4112 = vsub.f32 %v3561, %v4111
    %4113 = vmatpush1.msra.mxu0 %v4112
    %4114 = vmatprep.subr.mxu0 0.0
    %v4115 = vand.u32 %v3562, 4294901760
    %v4116 = vsub.f32 %v3562, %v4115
    %4117 = vmatpush1.msra.mxu0 %v4116
    %4118 = vmatprep.subr.mxu0 0.0
    %v4119 = vand.u32 %v3563, 4294901760
    %v4120 = vsub.f32 %v3563, %v4119
    %4121 = vmatpush1.msra.mxu0 %v4120
    %4122 = vmatprep.subr.mxu0 0.0
    %v4123 = vand.u32 %v3564, 4294901760
    %v4124 = vsub.f32 %v3564, %v4123
    %4125 = vmatpush1.msra.mxu0 %v4124
    %4126 = vmatprep.subr.mxu0 0.0
    %v4127 = vand.u32 %v3565, 4294901760
    %v4128 = vsub.f32 %v3565, %v4127
    %4129 = vmatpush1.msra.mxu0 %v4128
    %4130 = vmatprep.subr.mxu0 0.0
    %v4131 = vand.u32 %v3566, 4294901760
    %v4132 = vsub.f32 %v3566, %v4131
    %4133 = vmatpush1.msra.mxu0 %v4132
    %4134 = vmatprep.subr.mxu0 0.0
    %v4135 = vand.u32 %v3567, 4294901760
    %v4136 = vsub.f32 %v3567, %v4135
    %4137 = vmatpush1.msra.mxu0 %v4136
    %4138 = vmatprep.subr.mxu0 0.0
    %v4139 = vand.u32 %v3568, 4294901760
    %v4140 = vsub.f32 %v3568, %v4139
    %4141 = vmatpush1.msra.mxu0 %v4140
    %4142 = vmatprep.subr.mxu0 0.0
    %v4143 = vand.u32 %v3569, 4294901760
    %v4144 = vsub.f32 %v3569, %v4143
    %4145 = vmatpush1.msra.mxu0 %v4144
    %4146 = vmatprep.subr.mxu0 0.0
    %v4147 = vand.u32 %v3570, 4294901760
    %v4148 = vsub.f32 %v3570, %v4147
    %4149 = vmatpush1.msra.mxu0 %v4148
    %4150 = vmatprep.subr.mxu0 0.0
    %v4151 = vand.u32 %v3571, 4294901760
    %v4152 = vsub.f32 %v3571, %v4151
    %4153 = vmatpush1.msra.mxu0 %v4152
    %v4154 = vand.u32 %v3532, 4294901760
    %v4155 = vsub.f32 %v3532, %v4154
    %4156 = vmatprep.mubr.f32.mxu0 %v4155
    %v4157 = vand.u32 %v3531, 4294901760
    %v4158 = vsub.f32 %v3531, %v4157
    %4159 = vmatmul.mubr.f32.gmra.mrb[0].mxu0 %v4158
    %v4160 = vpop.f32.mrb[0].mxu0
    %v4161 = vadd.f32 %v4002, %v4160
    %v4162 = vpop.f32.mrb[0].mxu0
    %v4163 = vand.u32 %v3534, 4294901760
    %v4164 = vsub.f32 %v3534, %v4163
    %4165 = vmatprep.mubr.f32.mxu0 %v4164
    %v4166 = vand.u32 %v3533, 4294901760
    %v4167 = vsub.f32 %v3533, %v4166
    %4168 = vmatmul.mubr.f32.gmra.mrb[0].mxu0 %v4167
    %v4169 = vpop.f32.mrb[0].mxu0
    %v4170 = vadd.f32 %v4009, %v4169
    %v4171 = vpop.f32.mrb[0].mxu0
    %v4172 = vand.u32 %v3536, 4294901760
    %v4173 = vsub.f32 %v3536, %v4172
    %4174 = vmatprep.mubr.f32.mxu0 %v4173
    %v4175 = vand.u32 %v3535, 4294901760
    %v4176 = vsub.f32 %v3535, %v4175
    %4177 = vmatmul.mubr.f32.gmra.mrb[0].mxu0 %v4176
    %v4178 = vpop.f32.mrb[0].mxu0
    %v4179 = vadd.f32 %v4016, %v4178
    %v4180 = vpop.f32.mrb[0].mxu0
    %v4181 = vand.u32 %v3538, 4294901760
    %v4182 = vsub.f32 %v3538, %v4181
    %4183 = vmatprep.mubr.f32.mxu0 %v4182
    %v4184 = vand.u32 %v3537, 4294901760
    %v4185 = vsub.f32 %v3537, %v4184
    %4186 = vmatmul.mubr.f32.gmra.mrb[0].mxu0 %v4185
    %v4187 = vpop.f32.mrb[0].mxu0
    %v4188 = vadd.f32 %v4023, %v4187
    %v4189 = vpop.f32.mrb[0].mxu0
    %4190 = vdwg.mxu0
    %4191 = vmatprep.subr.mxu0 0.0
    %v4192 = vand.u32 %v3540, 4294901760
    %4193 = vmatpush1.msra.mxu0 %v4192
    %4194 = vmatprep.subr.mxu0 0.0
    %v4195 = vand.u32 %v3541, 4294901760
    %4196 = vmatpush1.msra.mxu0 %v4195
    %4197 = vmatprep.subr.mxu0 0.0
    %v4198 = vand.u32 %v3542, 4294901760
    %4199 = vmatpush1.msra.mxu0 %v4198
    %4200 = vmatprep.subr.mxu0 0.0
    %v4201 = vand.u32 %v3543, 4294901760
    %4202 = vmatpush1.msra.mxu0 %v4201
    %4203 = vmatprep.subr.mxu0 0.0
    %v4204 = vand.u32 %v3544, 4294901760
    %4205 = vmatpush1.msra.mxu0 %v4204
    %4206 = vmatprep.subr.mxu0 0.0
    %v4207 = vand.u32 %v3545, 4294901760
    %4208 = vmatpush1.msra.mxu0 %v4207
    %4209 = vmatprep.subr.mxu0 0.0
    %v4210 = vand.u32 %v3546, 4294901760
    %4211 = vmatpush1.msra.mxu0 %v4210
    %4212 = vmatprep.subr.mxu0 0.0
    %v4213 = vand.u32 %v3547, 4294901760
    %4214 = vmatpush1.msra.mxu0 %v4213
    %4215 = vmatprep.subr.mxu0 0.0
    %v4216 = vand.u32 %v3548, 4294901760
    %4217 = vmatpush1.msra.mxu0 %v4216
    %4218 = vmatprep.subr.mxu0 0.0
    %v4219 = vand.u32 %v3549, 4294901760
    %4220 = vmatpush1.msra.mxu0 %v4219
    %4221 = vmatprep.subr.mxu0 0.0
    %v4222 = vand.u32 %v3550, 4294901760
    %4223 = vmatpush1.msra.mxu0 %v4222
    %4224 = vmatprep.subr.mxu0 0.0
    %v4225 = vand.u32 %v3551, 4294901760
    %4226 = vmatpush1.msra.mxu0 %v4225
    %4227 = vmatprep.subr.mxu0 0.0
    %v4228 = vand.u32 %v3552, 4294901760
    %4229 = vmatpush1.msra.mxu0 %v4228
    %4230 = vmatprep.subr.mxu0 0.0
    %v4231 = vand.u32 %v3553, 4294901760
    %4232 = vmatpush1.msra.mxu0 %v4231
    %4233 = vmatprep.subr.mxu0 0.0
    %v4234 = vand.u32 %v3554, 4294901760
    %4235 = vmatpush1.msra.mxu0 %v4234
    %4236 = vmatprep.subr.mxu0 0.0
    %v4237 = vand.u32 %v3555, 4294901760
    %4238 = vmatpush1.msra.mxu0 %v4237
    %4239 = vmatprep.subr.mxu0 0.0
    %v4240 = vand.u32 %v3556, 4294901760
    %4241 = vmatpush1.msra.mxu0 %v4240
    %4242 = vmatprep.subr.mxu0 0.0
    %v4243 = vand.u32 %v3557, 4294901760
    %4244 = vmatpush1.msra.mxu0 %v4243
    %4245 = vmatprep.subr.mxu0 0.0
    %v4246 = vand.u32 %v3558, 4294901760
    %4247 = vmatpush1.msra.mxu0 %v4246
    %4248 = vmatprep.subr.mxu0 0.0
    %v4249 = vand.u32 %v3559, 4294901760
    %4250 = vmatpush1.msra.mxu0 %v4249
    %4251 = vmatprep.subr.mxu0 0.0
    %v4252 = vand.u32 %v3560, 4294901760
    %4253 = vmatpush1.msra.mxu0 %v4252
    %4254 = vmatprep.subr.mxu0 0.0
    %v4255 = vand.u32 %v3561, 4294901760
    %4256 = vmatpush1.msra.mxu0 %v4255
    %4257 = vmatprep.subr.mxu0 0.0
    %v4258 = vand.u32 %v3562, 4294901760
    %4259 = vmatpush1.msra.mxu0 %v4258
    %4260 = vmatprep.subr.mxu0 0.0
    %v4261 = vand.u32 %v3563, 4294901760
    %4262 = vmatpush1.msra.mxu0 %v4261
    %4263 = vmatprep.subr.mxu0 0.0
    %v4264 = vand.u32 %v3564, 4294901760
    %4265 = vmatpush1.msra.mxu0 %v4264
    %4266 = vmatprep.subr.mxu0 0.0
    %v4267 = vand.u32 %v3565, 4294901760
    %4268 = vmatpush1.msra.mxu0 %v4267
    %4269 = vmatprep.subr.mxu0 0.0
    %v4270 = vand.u32 %v3566, 4294901760
    %4271 = vmatpush1.msra.mxu0 %v4270
    %4272 = vmatprep.subr.mxu0 0.0
    %v4273 = vand.u32 %v3567, 4294901760
    %4274 = vmatpush1.msra.mxu0 %v4273
    %4275 = vmatprep.subr.mxu0 0.0
    %v4276 = vand.u32 %v3568, 4294901760
    %4277 = vmatpush1.msra.mxu0 %v4276
    %4278 = vmatprep.subr.mxu0 0.0
    %v4279 = vand.u32 %v3569, 4294901760
    %4280 = vmatpush1.msra.mxu0 %v4279
    %4281 = vmatprep.subr.mxu0 0.0
    %v4282 = vand.u32 %v3570, 4294901760
    %4283 = vmatpush1.msra.mxu0 %v4282
    %4284 = vmatprep.subr.mxu0 0.0
    %v4285 = vand.u32 %v3571, 4294901760
    %4286 = vmatpush1.msra.mxu0 %v4285
    %v4287 = vand.u32 %v3532, 4294901760
    %v4288 = vsub.f32 %v3532, %v4287
    %v4289 = vand.u32 %v4288, 4294901760
    %4290 = vmatprep.mubr.f32.mxu0 %v4289
    %v4291 = vand.u32 %v3531, 4294901760
    %v4292 = vsub.f32 %v3531, %v4291
    %v4293 = vand.u32 %v4292, 4294901760
    %4294 = vmatmul.mubr.f32.gmra.mrb[0].mxu0 %v4293
    %v4295 = vpop.f32.mrb[0].mxu0
    %v4296 = vadd.f32 %v4161, %v4295
    %v4297 = vpop.f32.mrb[0].mxu0
    %v4298 = vand.u32 %v3534, 4294901760
    %v4299 = vsub.f32 %v3534, %v4298
    %v4300 = vand.u32 %v4299, 4294901760
    %4301 = vmatprep.mubr.f32.mxu0 %v4300
    %v4302 = vand.u32 %v3533, 4294901760
    %v4303 = vsub.f32 %v3533, %v4302
    %v4304 = vand.u32 %v4303, 4294901760
    %4305 = vmatmul.mubr.f32.gmra.mrb[0].mxu0 %v4304
    %v4306 = vpop.f32.mrb[0].mxu0
    %v4307 = vadd.f32 %v4170, %v4306
    %v4308 = vpop.f32.mrb[0].mxu0
    %v4309 = vand.u32 %v3536, 4294901760
    %v4310 = vsub.f32 %v3536, %v4309
    %v4311 = vand.u32 %v4310, 4294901760
    %4312 = vmatprep.mubr.f32.mxu0 %v4311
    %v4313 = vand.u32 %v3535, 4294901760
    %v4314 = vsub.f32 %v3535, %v4313
    %v4315 = vand.u32 %v4314, 4294901760
    %4316 = vmatmul.mubr.f32.gmra.mrb[0].mxu0 %v4315
    %v4317 = vpop.f32.mrb[0].mxu0
    %v4318 = vadd.f32 %v4179, %v4317
    %v4319 = vpop.f32.mrb[0].mxu0
    %v4320 = vand.u32 %v3538, 4294901760
    %v4321 = vsub.f32 %v3538, %v4320
    %v4322 = vand.u32 %v4321, 4294901760
    %4323 = vmatprep.mubr.f32.mxu0 %v4322
    %v4324 = vand.u32 %v3537, 4294901760
    %v4325 = vsub.f32 %v3537, %v4324
    %v4326 = vand.u32 %v4325, 4294901760
    %4327 = vmatmul.mubr.f32.gmra.mrb[0].mxu0 %v4326
    %v4328 = vpop.f32.mrb[0].mxu0
    %v4329 = vadd.f32 %v4188, %v4328
    %v4330 = vpop.f32.mrb[0].mxu0
    %4331 = vdwg.mxu0
    %4332 = vmatprep.subr.mxu0 0.0
    %v4333 = vand.u32 %v3540, 4294901760
    %v4334 = vsub.f32 %v3540, %v4333
    %v4335 = vand.u32 %v4334, 4294901760
    %4336 = vmatpush1.msra.mxu0 %v4335
    %4337 = vmatprep.subr.mxu0 0.0
    %v4338 = vand.u32 %v3541, 4294901760
    %v4339 = vsub.f32 %v3541, %v4338
    %v4340 = vand.u32 %v4339, 4294901760
    %4341 = vmatpush1.msra.mxu0 %v4340
    %4342 = vmatprep.subr.mxu0 0.0
    %v4343 = vand.u32 %v3542, 4294901760
    %v4344 = vsub.f32 %v3542, %v4343
    %v4345 = vand.u32 %v4344, 4294901760
    %4346 = vmatpush1.msra.mxu0 %v4345
    %4347 = vmatprep.subr.mxu0 0.0
    %v4348 = vand.u32 %v3543, 4294901760
    %v4349 = vsub.f32 %v3543, %v4348
    %v4350 = vand.u32 %v4349, 4294901760
    %4351 = vmatpush1.msra.mxu0 %v4350
    %4352 = vmatprep.subr.mxu0 0.0
    %v4353 = vand.u32 %v3544, 4294901760
    %v4354 = vsub.f32 %v3544, %v4353
    %v4355 = vand.u32 %v4354, 4294901760
    %4356 = vmatpush1.msra.mxu0 %v4355
    %4357 = vmatprep.subr.mxu0 0.0
    %v4358 = vand.u32 %v3545, 4294901760
    %v4359 = vsub.f32 %v3545, %v4358
    %v4360 = vand.u32 %v4359, 4294901760
    %4361 = vmatpush1.msra.mxu0 %v4360
    %4362 = vmatprep.subr.mxu0 0.0
    %v4363 = vand.u32 %v3546, 4294901760
    %v4364 = vsub.f32 %v3546, %v4363
    %v4365 = vand.u32 %v4364, 4294901760
    %4366 = vmatpush1.msra.mxu0 %v4365
    %4367 = vmatprep.subr.mxu0 0.0
    %v4368 = vand.u32 %v3547, 4294901760
    %v4369 = vsub.f32 %v3547, %v4368
    %v4370 = vand.u32 %v4369, 4294901760
    %4371 = vmatpush1.msra.mxu0 %v4370
    %4372 = vmatprep.subr.mxu0 0.0
    %v4373 = vand.u32 %v3548, 4294901760
    %v4374 = vsub.f32 %v3548, %v4373
    %v4375 = vand.u32 %v4374, 4294901760
    %4376 = vmatpush1.msra.mxu0 %v4375
    %4377 = vmatprep.subr.mxu0 0.0
    %v4378 = vand.u32 %v3549, 4294901760
    %v4379 = vsub.f32 %v3549, %v4378
    %v4380 = vand.u32 %v4379, 4294901760
    %4381 = vmatpush1.msra.mxu0 %v4380
    %4382 = vmatprep.subr.mxu0 0.0
    %v4383 = vand.u32 %v3550, 4294901760
    %v4384 = vsub.f32 %v3550, %v4383
    %v4385 = vand.u32 %v4384, 4294901760
    %4386 = vmatpush1.msra.mxu0 %v4385
    %4387 = vmatprep.subr.mxu0 0.0
    %v4388 = vand.u32 %v3551, 4294901760
    %v4389 = vsub.f32 %v3551, %v4388
    %v4390 = vand.u32 %v4389, 4294901760
    %4391 = vmatpush1.msra.mxu0 %v4390
    %4392 = vmatprep.subr.mxu0 0.0
    %v4393 = vand.u32 %v3552, 4294901760
    %v4394 = vsub.f32 %v3552, %v4393
    %v4395 = vand.u32 %v4394, 4294901760
    %4396 = vmatpush1.msra.mxu0 %v4395
    %4397 = vmatprep.subr.mxu0 0.0
    %v4398 = vand.u32 %v3553, 4294901760
    %v4399 = vsub.f32 %v3553, %v4398
    %v4400 = vand.u32 %v4399, 4294901760
    %4401 = vmatpush1.msra.mxu0 %v4400
    %4402 = vmatprep.subr.mxu0 0.0
    %v4403 = vand.u32 %v3554, 4294901760
    %v4404 = vsub.f32 %v3554, %v4403
    %v4405 = vand.u32 %v4404, 4294901760
    %4406 = vmatpush1.msra.mxu0 %v4405
    %4407 = vmatprep.subr.mxu0 0.0
    %v4408 = vand.u32 %v3555, 4294901760
    %v4409 = vsub.f32 %v3555, %v4408
    %v4410 = vand.u32 %v4409, 4294901760
    %4411 = vmatpush1.msra.mxu0 %v4410
    %4412 = vmatprep.subr.mxu0 0.0
    %v4413 = vand.u32 %v3556, 4294901760
    %v4414 = vsub.f32 %v3556, %v4413
    %v4415 = vand.u32 %v4414, 4294901760
    %4416 = vmatpush1.msra.mxu0 %v4415
    %4417 = vmatprep.subr.mxu0 0.0
    %v4418 = vand.u32 %v3557, 4294901760
    %v4419 = vsub.f32 %v3557, %v4418
    %v4420 = vand.u32 %v4419, 4294901760
    %4421 = vmatpush1.msra.mxu0 %v4420
    %4422 = vmatprep.subr.mxu0 0.0
    %v4423 = vand.u32 %v3558, 4294901760
    %v4424 = vsub.f32 %v3558, %v4423
    %v4425 = vand.u32 %v4424, 4294901760
    %4426 = vmatpush1.msra.mxu0 %v4425
    %4427 = vmatprep.subr.mxu0 0.0
    %v4428 = vand.u32 %v3559, 4294901760
    %v4429 = vsub.f32 %v3559, %v4428
    %v4430 = vand.u32 %v4429, 4294901760
    %4431 = vmatpush1.msra.mxu0 %v4430
    %4432 = vmatprep.subr.mxu0 0.0
    %v4433 = vand.u32 %v3560, 4294901760
    %v4434 = vsub.f32 %v3560, %v4433
    %v4435 = vand.u32 %v4434, 4294901760
    %4436 = vmatpush1.msra.mxu0 %v4435
    %4437 = vmatprep.subr.mxu0 0.0
    %v4438 = vand.u32 %v3561, 4294901760
    %v4439 = vsub.f32 %v3561, %v4438
    %v4440 = vand.u32 %v4439, 4294901760
    %4441 = vmatpush1.msra.mxu0 %v4440
    %4442 = vmatprep.subr.mxu0 0.0
    %v4443 = vand.u32 %v3562, 4294901760
    %v4444 = vsub.f32 %v3562, %v4443
    %v4445 = vand.u32 %v4444, 4294901760
    %4446 = vmatpush1.msra.mxu0 %v4445
    %4447 = vmatprep.subr.mxu0 0.0
    %v4448 = vand.u32 %v3563, 4294901760
    %v4449 = vsub.f32 %v3563, %v4448
    %v4450 = vand.u32 %v4449, 4294901760
    %4451 = vmatpush1.msra.mxu0 %v4450
    %4452 = vmatprep.subr.mxu0 0.0
    %v4453 = vand.u32 %v3564, 4294901760
    %v4454 = vsub.f32 %v3564, %v4453
    %v4455 = vand.u32 %v4454, 4294901760
    %4456 = vmatpush1.msra.mxu0 %v4455
    %4457 = vmatprep.subr.mxu0 0.0
    %v4458 = vand.u32 %v3565, 4294901760
    %v4459 = vsub.f32 %v3565, %v4458
    %v4460 = vand.u32 %v4459, 4294901760
    %4461 = vmatpush1.msra.mxu0 %v4460
    %4462 = vmatprep.subr.mxu0 0.0
    %v4463 = vand.u32 %v3566, 4294901760
    %v4464 = vsub.f32 %v3566, %v4463
    %v4465 = vand.u32 %v4464, 4294901760
    %4466 = vmatpush1.msra.mxu0 %v4465
    %4467 = vmatprep.subr.mxu0 0.0
    %v4468 = vand.u32 %v3567, 4294901760
    %v4469 = vsub.f32 %v3567, %v4468
    %v4470 = vand.u32 %v4469, 4294901760
    %4471 = vmatpush1.msra.mxu0 %v4470
    %4472 = vmatprep.subr.mxu0 0.0
    %v4473 = vand.u32 %v3568, 4294901760
    %v4474 = vsub.f32 %v3568, %v4473
    %v4475 = vand.u32 %v4474, 4294901760
    %4476 = vmatpush1.msra.mxu0 %v4475
    %4477 = vmatprep.subr.mxu0 0.0
    %v4478 = vand.u32 %v3569, 4294901760
    %v4479 = vsub.f32 %v3569, %v4478
    %v4480 = vand.u32 %v4479, 4294901760
    %4481 = vmatpush1.msra.mxu0 %v4480
    %4482 = vmatprep.subr.mxu0 0.0
    %v4483 = vand.u32 %v3570, 4294901760
    %v4484 = vsub.f32 %v3570, %v4483
    %v4485 = vand.u32 %v4484, 4294901760
    %4486 = vmatpush1.msra.mxu0 %v4485
    %4487 = vmatprep.subr.mxu0 0.0
    %v4488 = vand.u32 %v3571, 4294901760
    %v4489 = vsub.f32 %v3571, %v4488
    %v4490 = vand.u32 %v4489, 4294901760
    %4491 = vmatpush1.msra.mxu0 %v4490
    %v4492 = vand.u32 %v3532, 4294901760
    %4493 = vmatprep.mubr.f32.mxu0 %v4492
    %v4494 = vand.u32 %v3531, 4294901760
    %4495 = vmatmul.mubr.f32.gmra.mrb[0].mxu0 %v4494
    %v4496 = vpop.f32.mrb[0].mxu0
    %v4497 = vadd.f32 %v4296, %v4496
    %v4498 = vpop.f32.mrb[0].mxu0
    %v4499 = vand.u32 %v3534, 4294901760
    %4500 = vmatprep.mubr.f32.mxu0 %v4499
    %v4501 = vand.u32 %v3533, 4294901760
    %4502 = vmatmul.mubr.f32.gmra.mrb[0].mxu0 %v4501
    %v4503 = vpop.f32.mrb[0].mxu0
    %v4504 = vadd.f32 %v4307, %v4503
    %v4505 = vpop.f32.mrb[0].mxu0
    %v4506 = vand.u32 %v3536, 4294901760
    %4507 = vmatprep.mubr.f32.mxu0 %v4506
    %v4508 = vand.u32 %v3535, 4294901760
    %4509 = vmatmul.mubr.f32.gmra.mrb[0].mxu0 %v4508
    %v4510 = vpop.f32.mrb[0].mxu0
    %v4511 = vadd.f32 %v4318, %v4510
    %v4512 = vpop.f32.mrb[0].mxu0
    %v4513 = vand.u32 %v3538, 4294901760
    %4514 = vmatprep.mubr.f32.mxu0 %v4513
    %v4515 = vand.u32 %v3537, 4294901760
    %4516 = vmatmul.mubr.f32.gmra.mrb[0].mxu0 %v4515
    %v4517 = vpop.f32.mrb[0].mxu0
    %v4518 = vadd.f32 %v4329, %v4517
    %v4519 = vpop.f32.mrb[0].mxu0
    %4520 = vdwg.mxu0
    %4521 = vmatprep.subr.mxu0 0.0
    %v4522 = vand.u32 %v3540, 4294901760
    %4523 = vmatpush1.msra.mxu0 %v4522
    %4524 = vmatprep.subr.mxu0 0.0
    %v4525 = vand.u32 %v3541, 4294901760
    %4526 = vmatpush1.msra.mxu0 %v4525
    %4527 = vmatprep.subr.mxu0 0.0
    %v4528 = vand.u32 %v3542, 4294901760
    %4529 = vmatpush1.msra.mxu0 %v4528
    %4530 = vmatprep.subr.mxu0 0.0
    %v4531 = vand.u32 %v3543, 4294901760
    %4532 = vmatpush1.msra.mxu0 %v4531
    %4533 = vmatprep.subr.mxu0 0.0
    %v4534 = vand.u32 %v3544, 4294901760
    %4535 = vmatpush1.msra.mxu0 %v4534
    %4536 = vmatprep.subr.mxu0 0.0
    %v4537 = vand.u32 %v3545, 4294901760
    %4538 = vmatpush1.msra.mxu0 %v4537
    %4539 = vmatprep.subr.mxu0 0.0
    %v4540 = vand.u32 %v3546, 4294901760
    %4541 = vmatpush1.msra.mxu0 %v4540
    %4542 = vmatprep.subr.mxu0 0.0
    %v4543 = vand.u32 %v3547, 4294901760
    %4544 = vmatpush1.msra.mxu0 %v4543
    %4545 = vmatprep.subr.mxu0 0.0
    %v4546 = vand.u32 %v3548, 4294901760
    %4547 = vmatpush1.msra.mxu0 %v4546
    %4548 = vmatprep.subr.mxu0 0.0
    %v4549 = vand.u32 %v3549, 4294901760
    %4550 = vmatpush1.msra.mxu0 %v4549
    %4551 = vmatprep.subr.mxu0 0.0
    %v4552 = vand.u32 %v3550, 4294901760
    %4553 = vmatpush1.msra.mxu0 %v4552
    %4554 = vmatprep.subr.mxu0 0.0
    %v4555 = vand.u32 %v3551, 4294901760
    %4556 = vmatpush1.msra.mxu0 %v4555
    %4557 = vmatprep.subr.mxu0 0.0
    %v4558 = vand.u32 %v3552, 4294901760
    %4559 = vmatpush1.msra.mxu0 %v4558
    %4560 = vmatprep.subr.mxu0 0.0
    %v4561 = vand.u32 %v3553, 4294901760
    %4562 = vmatpush1.msra.mxu0 %v4561
    %4563 = vmatprep.subr.mxu0 0.0
    %v4564 = vand.u32 %v3554, 4294901760
    %4565 = vmatpush1.msra.mxu0 %v4564
    %4566 = vmatprep.subr.mxu0 0.0
    %v4567 = vand.u32 %v3555, 4294901760
    %4568 = vmatpush1.msra.mxu0 %v4567
    %4569 = vmatprep.subr.mxu0 0.0
    %v4570 = vand.u32 %v3556, 4294901760
    %4571 = vmatpush1.msra.mxu0 %v4570
    %4572 = vmatprep.subr.mxu0 0.0
    %v4573 = vand.u32 %v3557, 4294901760
    %4574 = vmatpush1.msra.mxu0 %v4573
    %4575 = vmatprep.subr.mxu0 0.0
    %v4576 = vand.u32 %v3558, 4294901760
    %4577 = vmatpush1.msra.mxu0 %v4576
    %4578 = vmatprep.subr.mxu0 0.0
    %v4579 = vand.u32 %v3559, 4294901760
    %4580 = vmatpush1.msra.mxu0 %v4579
    %4581 = vmatprep.subr.mxu0 0.0
    %v4582 = vand.u32 %v3560, 4294901760
    %4583 = vmatpush1.msra.mxu0 %v4582
    %4584 = vmatprep.subr.mxu0 0.0
    %v4585 = vand.u32 %v3561, 4294901760
    %4586 = vmatpush1.msra.mxu0 %v4585
    %4587 = vmatprep.subr.mxu0 0.0
    %v4588 = vand.u32 %v3562, 4294901760
    %4589 = vmatpush1.msra.mxu0 %v4588
    %4590 = vmatprep.subr.mxu0 0.0
    %v4591 = vand.u32 %v3563, 4294901760
    %4592 = vmatpush1.msra.mxu0 %v4591
    %4593 = vmatprep.subr.mxu0 0.0
    %v4594 = vand.u32 %v3564, 4294901760
    %4595 = vmatpush1.msra.mxu0 %v4594
    %4596 = vmatprep.subr.mxu0 0.0
    %v4597 = vand.u32 %v3565, 4294901760
    %4598 = vmatpush1.msra.mxu0 %v4597
    %4599 = vmatprep.subr.mxu0 0.0
    %v4600 = vand.u32 %v3566, 4294901760
    %4601 = vmatpush1.msra.mxu0 %v4600
    %4602 = vmatprep.subr.mxu0 0.0
    %v4603 = vand.u32 %v3567, 4294901760
    %4604 = vmatpush1.msra.mxu0 %v4603
    %4605 = vmatprep.subr.mxu0 0.0
    %v4606 = vand.u32 %v3568, 4294901760
    %4607 = vmatpush1.msra.mxu0 %v4606
    %4608 = vmatprep.subr.mxu0 0.0
    %v4609 = vand.u32 %v3569, 4294901760
    %4610 = vmatpush1.msra.mxu0 %v4609
    %4611 = vmatprep.subr.mxu0 0.0
    %v4612 = vand.u32 %v3570, 4294901760
    %4613 = vmatpush1.msra.mxu0 %v4612
    %4614 = vmatprep.subr.mxu0 0.0
    %v4615 = vand.u32 %v3571, 4294901760
    %4616 = vmatpush1.msra.mxu0 %v4615
    %v4617 = vand.u32 %v3532, 4294901760
    %4618 = vmatprep.mubr.f32.mxu0 %v4617
    %v4619 = vand.u32 %v3531, 4294901760
    %4620 = vmatmul.mubr.f32.gmra.mrb[0].mxu0 %v4619
    %v4621 = vpop.f32.mrb[0].mxu0
    %v4622 = vadd.f32 %v4497, %v4621
    %v4623 = vpop.f32.mrb[0].mxu0
    %v4624 = vand.u32 %v3534, 4294901760
    %4625 = vmatprep.mubr.f32.mxu0 %v4624
    %v4626 = vand.u32 %v3533, 4294901760
    %4627 = vmatmul.mubr.f32.gmra.mrb[0].mxu0 %v4626
    %v4628 = vpop.f32.mrb[0].mxu0
    %v4629 = vadd.f32 %v4504, %v4628
    %v4630 = vpop.f32.mrb[0].mxu0
    %v4631 = vand.u32 %v3536, 4294901760
    %4632 = vmatprep.mubr.f32.mxu0 %v4631
    %v4633 = vand.u32 %v3535, 4294901760
    %4634 = vmatmul.mubr.f32.gmra.mrb[0].mxu0 %v4633
    %v4635 = vpop.f32.mrb[0].mxu0
    %v4636 = vadd.f32 %v4511, %v4635
    %v4637 = vpop.f32.mrb[0].mxu0
    %v4638 = vand.u32 %v3538, 4294901760
    %4639 = vmatprep.mubr.f32.mxu0 %v4638
    %v4640 = vand.u32 %v3537, 4294901760
    %4641 = vmatmul.mubr.f32.gmra.mrb[0].mxu0 %v4640
    %v4642 = vpop.f32.mrb[0].mxu0
    %v4643 = vadd.f32 %v4518, %v4642
    %v4644 = vpop.f32.mrb[0].mxu0
    %4645 = vdwg.mxu0
    %vm4646 = vcmp.ge.f32.partialorder %v4622, 0.0
    %vm4647 = vcmp.ge.f32.partialorder %v4629, 0.0
    %vm4648 = vcmp.ge.f32.partialorder %v4636, 0.0
    %vm4649 = vcmp.ge.f32.partialorder %v4643, 0.0
    %v4650 = vlaneseq
    %v4651 = vshrl.u32 %v4650, 7
    %v4652 = vsub.s32 0, %v4651
    %v4653 = vrot.slane %v3615, %v4652
    %v4654 = vmul.f32 %v4653, %v4622
    %v4655 = vmul.f32 %v4653, %v4629
    %v4656 = vmul.f32 %v4653, %v4636
    %v4657 = vmul.f32 %v4653, %v4643
    %v4658 = vsel %vm4646, %v4622, %v4654
    %v4659 = vsel %vm4647, %v4629, %v4655
    %v4660 = vsel %vm4648, %v4636, %v4656
    %v4661 = vsel %vm4649, %v4643, %v4657
    %v4662 = vsel %vm1157, %v4658, 0.0
    %4663 = vadd.xlane.f32.xlu0 %v4662
    %v4664 = vpop.xlane.xlu0 %4663
    %v4665 = vsel %vm1157, %v4659, 0.0
    %4666 = vadd.xlane.f32.xlu0 %v4665
    %v4667 = vpop.xlane.xlu0 %4666
    %v4668 = vsel %vm1157, %v4660, 0.0
    %4669 = vadd.xlane.f32.xlu0 %v4668
    %v4670 = vpop.xlane.xlu0 %4669
    %v4671 = vsel %vm1157, %v4661, 0.0
    %4672 = vadd.xlane.f32.xlu0 %v4671
    %v4673 = vpop.xlane.xlu0 %4672
    %v4678 = vrot.slane %v4664, 7
    %v4679 = vrot.slane %v4667, 7
    %v4680 = vsel %vm1174, %v4678, %v4679
    %v4681 = vrot.slane %v4670, 7
    %v4682 = vrot.slane %v4673, 7
    %v4683 = vsel %vm1174, %v4681, %v4682
    %v4688 = vsel %vm1174, 0.0, %v4678
    %v4689 = vsel %vm1174, 0.0, %v4681
    %v4690 = vadd.f32 %v4664, %v4688
    %v4691 = vadd.f32 %v4667, %v4680
    %v4692 = vadd.f32 %v4670, %v4689
    %v4693 = vadd.f32 %v4673, %v4683
    %v4698 = vrot.slane %v4690, 6
    %v4699 = vrot.slane %v4691, 6
    %v4700 = vsel %vm1195, %v4698, %v4699
    %v4701 = vrot.slane %v4692, 6
    %v4702 = vrot.slane %v4693, 6
    %v4703 = vsel %vm1195, %v4701, %v4702
    %v4708 = vsel %vm1195, 0.0, %v4698
    %v4709 = vsel %vm1195, 0.0, %v4701
    %v4710 = vadd.f32 %v4690, %v4708
    %v4711 = vadd.f32 %v4691, %v4700
    %v4712 = vadd.f32 %v4692, %v4709
    %v4713 = vadd.f32 %v4693, %v4703
    %v4718 = vrot.slane %v4710, 4
    %v4719 = vrot.slane %v4711, 4
    %v4720 = vsel %vm1216, %v4718, %v4719
    %v4721 = vrot.slane %v4712, 4
    %v4722 = vrot.slane %v4713, 4
    %v4723 = vsel %vm1216, %v4721, %v4722
    %v4728 = vsel %vm1216, 0.0, %v4718
    %v4729 = vsel %vm1216, 0.0, %v4721
    %v4730 = vadd.f32 %v4710, %v4728
    %v4731 = vadd.f32 %v4711, %v4720
    %v4732 = vadd.f32 %v4712, %v4729
    %v4733 = vadd.f32 %v4713, %v4723
    %v4734 = vadd.f32 %v4730, 0.0
    %v4735 = vadd.f32 %v4731, %v4730
    %v4736 = vadd.f32 %v4732, 0.0
    %v4737 = vadd.f32 %v4733, %v4732
    %v4738 = vmul.f32 %v4658, %v4658
    %v4739 = vmul.f32 %v4659, %v4659
    %v4740 = vmul.f32 %v4660, %v4660
    %v4741 = vmul.f32 %v4661, %v4661
    %v4742 = vsel %vm1157, %v4738, 0.0
    %4743 = vadd.xlane.f32.xlu0 %v4742
    %v4744 = vpop.xlane.xlu0 %4743
    %v4745 = vsel %vm1157, %v4739, 0.0
    %4746 = vadd.xlane.f32.xlu0 %v4745
    %v4747 = vpop.xlane.xlu0 %4746
    %v4748 = vsel %vm1157, %v4740, 0.0
    %4749 = vadd.xlane.f32.xlu0 %v4748
    %v4750 = vpop.xlane.xlu0 %4749
    %v4751 = vsel %vm1157, %v4741, 0.0
    %4752 = vadd.xlane.f32.xlu0 %v4751
    %v4753 = vpop.xlane.xlu0 %4752
    %v4758 = vrot.slane %v4744, 7
    %v4759 = vrot.slane %v4747, 7
    %v4760 = vsel %vm1174, %v4758, %v4759
    %v4761 = vrot.slane %v4750, 7
    %v4762 = vrot.slane %v4753, 7
    %v4763 = vsel %vm1174, %v4761, %v4762
    %v4768 = vsel %vm1174, 0.0, %v4758
    %v4769 = vsel %vm1174, 0.0, %v4761
    %v4770 = vadd.f32 %v4744, %v4768
    %v4771 = vadd.f32 %v4747, %v4760
    %v4772 = vadd.f32 %v4750, %v4769
    %v4773 = vadd.f32 %v4753, %v4763
    %v4778 = vrot.slane %v4770, 6
    %v4779 = vrot.slane %v4771, 6
    %v4780 = vsel %vm1195, %v4778, %v4779
    %v4781 = vrot.slane %v4772, 6
    %v4782 = vrot.slane %v4773, 6
    %v4783 = vsel %vm1195, %v4781, %v4782
    %v4788 = vsel %vm1195, 0.0, %v4778
    %v4789 = vsel %vm1195, 0.0, %v4781
    %v4790 = vadd.f32 %v4770, %v4788
    %v4791 = vadd.f32 %v4771, %v4780
    %v4792 = vadd.f32 %v4772, %v4789
    %v4793 = vadd.f32 %v4773, %v4783
    %v4798 = vrot.slane %v4790, 4
    %v4799 = vrot.slane %v4791, 4
    %v4800 = vsel %vm1216, %v4798, %v4799
    %v4801 = vrot.slane %v4792, 4
    %v4802 = vrot.slane %v4793, 4
    %v4803 = vsel %vm1216, %v4801, %v4802
    %v4808 = vsel %vm1216, 0.0, %v4798
    %v4809 = vsel %vm1216, 0.0, %v4801
    %v4810 = vadd.f32 %v4790, %v4808
    %v4811 = vadd.f32 %v4791, %v4800
    %v4812 = vadd.f32 %v4792, %v4809
    %v4813 = vadd.f32 %v4793, %v4803
    %v4814 = vadd.f32 %v4810, 0.0
    %v4815 = vadd.f32 %v4811, %v4810
    %v4816 = vadd.f32 %v4812, 0.0
    %v4817 = vadd.f32 %v4813, %v4812
    %v4818 = vmul.f32 %v4734, %v1317
    %v4819 = vmul.f32 %v4735, %v1319
    %v4820 = vmul.f32 %v4736, %v1317
    %v4821 = vmul.f32 %v4737, %v1319
    %v4822 = vmul.f32 %v4818, 2.0
    %v4823 = vmul.f32 %v4819, 2.0
    %v4824 = vmul.f32 %v4820, 2.0
    %v4825 = vmul.f32 %v4821, 2.0
    %v4826 = vmul.f32 %v4822, %v4734
    %v4827 = vmul.f32 %v4823, %v4735
    %v4828 = vmul.f32 %v4824, %v4736
    %v4829 = vmul.f32 %v4825, %v4737
    %v4830 = vsub.f32 %v4814, %v4826
    %v4831 = vsub.f32 %v4815, %v4827
    %v4832 = vsub.f32 %v4816, %v4828
    %v4833 = vsub.f32 %v4817, %v4829
    %v4834 = vmul.f32 %v4830, %v1317
    %v4835 = vmul.f32 %v4831, %v1319
    %v4836 = vmul.f32 %v4832, %v1317
    %v4837 = vmul.f32 %v4833, %v1319
    %v4838 = vmul.f32 %v4818, %v4818
    %v4839 = vmul.f32 %v4819, %v4819
    %v4840 = vmul.f32 %v4820, %v4820
    %v4841 = vmul.f32 %v4821, %v4821
    %v4842 = vadd.f32 %v4834, %v4838
    %v4843 = vadd.f32 %v4835, %v4839
    %v4844 = vadd.f32 %v4836, %v4840
    %v4845 = vadd.f32 %v4837, %v4841
    %v4846 = vadd.f32 %v4842, 1e-05
    %v4847 = vadd.f32 %v4843, 1e-05
    %v4848 = vadd.f32 %v4844, 1e-05
    %v4849 = vadd.f32 %v4845, 1e-05
    %v4850 = vrsqrt.pop %v4846
    %v4851 = vmul.f32 %v4846, %v4850
    %vm4852 = vcmp.eq.f32.partialorder %v4846, inf
    %v4853 = vsel %vm4852, %v4846, %v4851
    %vm4854 = vcmp.eq.f32.partialorder %v4846, 0.0
    %v4855 = vand.u32 %v4846, 2147483648
    %v4856 = vsel %vm4854, %v4855, %v4853
    %v4857 = vrsqrt.pop %v4847
    %v4858 = vmul.f32 %v4847, %v4857
    %vm4859 = vcmp.eq.f32.partialorder %v4847, inf
    %v4860 = vsel %vm4859, %v4847, %v4858
    %vm4861 = vcmp.eq.f32.partialorder %v4847, 0.0
    %v4862 = vand.u32 %v4847, 2147483648
    %v4863 = vsel %vm4861, %v4862, %v4860
    %v4864 = vrsqrt.pop %v4848
    %v4865 = vmul.f32 %v4848, %v4864
    %vm4866 = vcmp.eq.f32.partialorder %v4848, inf
    %v4867 = vsel %vm4866, %v4848, %v4865
    %vm4868 = vcmp.eq.f32.partialorder %v4848, 0.0
    %v4869 = vand.u32 %v4848, 2147483648
    %v4870 = vsel %vm4868, %v4869, %v4867
    %v4871 = vrsqrt.pop %v4849
    %v4872 = vmul.f32 %v4849, %v4871
    %vm4873 = vcmp.eq.f32.partialorder %v4849, inf
    %v4874 = vsel %vm4873, %v4849, %v4872
    %vm4875 = vcmp.eq.f32.partialorder %v4849, 0.0
    %v4876 = vand.u32 %v4849, 2147483648
    %v4877 = vsel %vm4875, %v4876, %v4874
    %4879 = vset.pattern.permute.xlu0 0
    %4880 = vperm.xlu0 %4879, %v4818
    %v4881 = vpop.permute.xlu0 %4880
    %4884 = vset.pattern.permute.xlu0 0
    %4885 = vperm.xlu0 %4884, %v4819
    %v4886 = vpop.permute.xlu0 %4885
    %4889 = vset.pattern.permute.xlu0 0
    %4890 = vperm.xlu0 %4889, %v4820
    %v4891 = vpop.permute.xlu0 %4890
    %4894 = vset.pattern.permute.xlu0 0
    %4895 = vperm.xlu0 %4894, %v4821
    %v4896 = vpop.permute.xlu0 %4895
    %v4898 = vsub.f32 %v4658, %v4881
    %v4899 = vsub.f32 %v4659, %v4886
    %v4900 = vsub.f32 %v4660, %v4891
    %v4901 = vsub.f32 %v4661, %v4896
    %4903 = vset.pattern.permute.xlu0 0
    %4904 = vperm.xlu0 %4903, %v4856
    %v4905 = vpop.permute.xlu0 %4904
    %4908 = vset.pattern.permute.xlu0 0
    %4909 = vperm.xlu0 %4908, %v4863
    %v4910 = vpop.permute.xlu0 %4909
    %4913 = vset.pattern.permute.xlu0 0
    %4914 = vperm.xlu0 %4913, %v4870
    %v4915 = vpop.permute.xlu0 %4914
    %4918 = vset.pattern.permute.xlu0 0
    %4919 = vperm.xlu0 %4918, %v4877
    %v4920 = vpop.permute.xlu0 %4919
    %v4922 = vrcp.pop %v4905
    %v4923 = vmul.f32 %v4898, %v4922
    %v4924 = vrcp.pop %v4910
    %v4925 = vmul.f32 %v4899, %v4924
    %v4926 = vrcp.pop %v4915
    %v4927 = vmul.f32 %v4900, %v4926
    %v4928 = vrcp.pop %v4920
    %v4929 = vmul.f32 %v4901, %v4928
    %v4930 = vlaneseq
    %v4931 = vshrl.u32 %v4930, 7
    %v4932 = vsub.s32 1, %v4931
    %v4933 = vrot.slane %v3615, %v4932
    %v4934 = vmul.f32 %v4923, %v4933
    %v4935 = vmul.f32 %v4925, %v4933
    %v4936 = vmul.f32 %v4927, %v4933
    %v4937 = vmul.f32 %v4929, %v4933
    %v4938 = vlaneseq
    %v4939 = vshrl.u32 %v4938, 7
    %v4940 = vsub.s32 2, %v4939
    %v4941 = vrot.slane %v3615, %v4940
    %v4942 = vadd.f32 %v4934, %v4941
    %v4943 = vadd.f32 %v4935, %v4941
    %v4944 = vadd.f32 %v4936, %v4941
    %v4945 = vadd.f32 %v4937, %v4941
    %v4950 = vrot.slane %v4942, 4
    %v4951 = vrot.slane %v4943, 4
    %v4952 = vsel %vm1216, %v4950, %v4951
    %v4953 = vrot.slane %v4944, 4
    %v4954 = vrot.slane %v4945, 4
    %v4955 = vsel %vm1216, %v4953, %v4954
    %v4960 = vsel %vm1216, 0.0, %v4950
    %v4961 = vsel %vm1216, 0.0, %v4953
    %v4962 = vrot.slane %v4942, 6
    %v4963 = vrot.slane %v4943, 6
    %v4964 = vsel %vm1195, %v4962, %v4963
    %v4965 = vrot.slane %v4944, 6
    %v4966 = vrot.slane %v4945, 6
    %v4967 = vsel %vm1195, %v4965, %v4966
    %v4970 = vsel %vm1195, 0.0, %v4962
    %v4971 = vsel %vm1195, 0.0, %v4965
    %4974 = vrot.lane.b32.xlu0 %v4970, 64
    %v4975 = vpop.permute.xlu0 %4974
    %4976 = vrot.lane.b32.xlu0 %v4964, 64
    %v4977 = vpop.permute.xlu0 %4976
    %4978 = vrot.lane.b32.xlu0 %v4971, 64
    %v4979 = vpop.permute.xlu0 %4978
    %4980 = vrot.lane.b32.xlu0 %v4967, 64
    %v4981 = vpop.permute.xlu0 %4980
    %v4986 = vsel %vm1157, %v4960, %v4975
    %v4987 = vsel %vm1157, %v4952, %v4977
    %v4988 = vsel %vm1157, %v4961, %v4979
    %v4989 = vsel %vm1157, %v4955, %v4981
    %v4990 = vsel %vm1157, %v4942, 0
    %v4992 = vsel %vm1157, %v4943, 0
    %v4994 = vsel %vm1157, %v4944, 0
    %v4996 = vsel %vm1157, %v4945, 0
    %4998 = vmatprep.subr.mxu0 0.0
    %v4999 = vand.u32 %v3573, 4294901760
    %5000 = vmatpush1.msra.mxu0 %v4999
    %5001 = vmatprep.subr.mxu0 0.0
    %v5002 = vand.u32 %v3574, 4294901760
    %5003 = vmatpush1.msra.mxu0 %v5002
    %5004 = vmatprep.subr.mxu0 0.0
    %v5005 = vand.u32 %v3575, 4294901760
    %5006 = vmatpush1.msra.mxu0 %v5005
    %5007 = vmatprep.subr.mxu0 0.0
    %v5008 = vand.u32 %v3576, 4294901760
    %5009 = vmatpush1.msra.mxu0 %v5008
    %5010 = vmatprep.subr.mxu0 0.0
    %v5011 = vand.u32 %v3577, 4294901760
    %5012 = vmatpush1.msra.mxu0 %v5011
    %5013 = vmatprep.subr.mxu0 0.0
    %v5014 = vand.u32 %v3578, 4294901760
    %5015 = vmatpush1.msra.mxu0 %v5014
    %5016 = vmatprep.subr.mxu0 0.0
    %v5017 = vand.u32 %v3579, 4294901760
    %5018 = vmatpush1.msra.mxu0 %v5017
    %5019 = vmatprep.subr.mxu0 0.0
    %v5020 = vand.u32 %v3580, 4294901760
    %5021 = vmatpush1.msra.mxu0 %v5020
    %5022 = vmatprep.subr.mxu0 0.0
    %v5023 = vand.u32 %v3581, 4294901760
    %5024 = vmatpush1.msra.mxu0 %v5023
    %5025 = vmatprep.subr.mxu0 0.0
    %v5026 = vand.u32 %v3582, 4294901760
    %5027 = vmatpush1.msra.mxu0 %v5026
    %5028 = vmatprep.subr.mxu0 0.0
    %v5029 = vand.u32 %v3583, 4294901760
    %5030 = vmatpush1.msra.mxu0 %v5029
    %5031 = vmatprep.subr.mxu0 0.0
    %v5032 = vand.u32 %v3584, 4294901760
    %5033 = vmatpush1.msra.mxu0 %v5032
    %5034 = vmatprep.subr.mxu0 0.0
    %v5035 = vand.u32 %v3585, 4294901760
    %5036 = vmatpush1.msra.mxu0 %v5035
    %5037 = vmatprep.subr.mxu0 0.0
    %v5038 = vand.u32 %v3586, 4294901760
    %5039 = vmatpush1.msra.mxu0 %v5038
    %5040 = vmatprep.subr.mxu0 0.0
    %v5041 = vand.u32 %v3587, 4294901760
    %5042 = vmatpush1.msra.mxu0 %v5041
    %5043 = vmatprep.subr.mxu0 0.0
    %v5044 = vand.u32 %v3588, 4294901760
    %5045 = vmatpush1.msra.mxu0 %v5044
    %5046 = vmatprep.subr.mxu0 0.0
    %v5047 = vand.u32 %v3589, 4294901760
    %5048 = vmatpush1.msra.mxu0 %v5047
    %5049 = vmatprep.subr.mxu0 0.0
    %v5050 = vand.u32 %v3590, 4294901760
    %5051 = vmatpush1.msra.mxu0 %v5050
    %5052 = vmatprep.subr.mxu0 0.0
    %v5053 = vand.u32 %v3591, 4294901760
    %5054 = vmatpush1.msra.mxu0 %v5053
    %5055 = vmatprep.subr.mxu0 0.0
    %v5056 = vand.u32 %v3592, 4294901760
    %5057 = vmatpush1.msra.mxu0 %v5056
    %5058 = vmatprep.subr.mxu0 0.0
    %v5059 = vand.u32 %v3593, 4294901760
    %5060 = vmatpush1.msra.mxu0 %v5059
    %5061 = vmatprep.subr.mxu0 0.0
    %v5062 = vand.u32 %v3594, 4294901760
    %5063 = vmatpush1.msra.mxu0 %v5062
    %5064 = vmatprep.subr.mxu0 0.0
    %v5065 = vand.u32 %v3595, 4294901760
    %5066 = vmatpush1.msra.mxu0 %v5065
    %5067 = vmatprep.subr.mxu0 0.0
    %v5068 = vand.u32 %v3596, 4294901760
    %5069 = vmatpush1.msra.mxu0 %v5068
    %5070 = vmatprep.subr.mxu0 0.0
    %5071 = vmatpush1.msra.mxu0 0.0
    %5072 = vmatprep.subr.mxu0 0.0
    %5073 = vmatpush1.msra.mxu0 0.0
    %5074 = vmatprep.subr.mxu0 0.0
    %5075 = vmatpush1.msra.mxu0 0.0
    %5076 = vmatprep.subr.mxu0 0.0
    %5077 = vmatpush1.msra.mxu0 0.0
    %5078 = vmatprep.subr.mxu0 0.0
    %5079 = vmatpush1.msra.mxu0 0.0
    %5080 = vmatprep.subr.mxu0 0.0
    %5081 = vmatpush1.msra.mxu0 0.0
    %5082 = vmatprep.subr.mxu0 0.0
    %5083 = vmatpush1.msra.mxu0 0.0
    %5084 = vmatprep.subr.mxu0 0.0
    %5085 = vmatpush1.msra.mxu0 0.0
    %v5086 = vand.u32 %v4990, 4294901760
    %v5087 = vsub.f32 %v4990, %v5086
    %v5088 = vand.u32 %v5087, 4294901760
    %v5089 = vsub.f32 %v5087, %v5088
    %v5090 = vand.u32 %v5089, 4294901760
    %5091 = vmatprep.mubr.f32.mxu0 %v5090
    %v5092 = vand.u32 %v4986, 4294901760
    %v5093 = vsub.f32 %v4986, %v5092
    %v5094 = vand.u32 %v5093, 4294901760
    %v5095 = vsub.f32 %v5093, %v5094
    %v5096 = vand.u32 %v5095, 4294901760
    %5097 = vmatmul.mubr.f32.gmra.mrb[0].mxu0 %v5096
    %v5098 = vpop.f32.mrb[0].mxu0
    %v5099 = vadd.f32 0.0, %v5098
    %v5100 = vpop.f32.mrb[0].mxu0
    %v5101 = vand.u32 %v4992, 4294901760
    %v5102 = vsub.f32 %v4992, %v5101
    %v5103 = vand.u32 %v5102, 4294901760
    %v5104 = vsub.f32 %v5102, %v5103
    %v5105 = vand.u32 %v5104, 4294901760
    %5106 = vmatprep.mubr.f32.mxu0 %v5105
    %v5107 = vand.u32 %v4987, 4294901760
    %v5108 = vsub.f32 %v4987, %v5107
    %v5109 = vand.u32 %v5108, 4294901760
    %v5110 = vsub.f32 %v5108, %v5109
    %v5111 = vand.u32 %v5110, 4294901760
    %5112 = vmatmul.mubr.f32.gmra.mrb[0].mxu0 %v5111
    %v5113 = vpop.f32.mrb[0].mxu0
    %v5114 = vadd.f32 0.0, %v5113
    %v5115 = vpop.f32.mrb[0].mxu0
    %v5116 = vand.u32 %v4994, 4294901760
    %v5117 = vsub.f32 %v4994, %v5116
    %v5118 = vand.u32 %v5117, 4294901760
    %v5119 = vsub.f32 %v5117, %v5118
    %v5120 = vand.u32 %v5119, 4294901760
    %5121 = vmatprep.mubr.f32.mxu0 %v5120
    %v5122 = vand.u32 %v4988, 4294901760
    %v5123 = vsub.f32 %v4988, %v5122
    %v5124 = vand.u32 %v5123, 4294901760
    %v5125 = vsub.f32 %v5123, %v5124
    %v5126 = vand.u32 %v5125, 4294901760
    %5127 = vmatmul.mubr.f32.gmra.mrb[0].mxu0 %v5126
    %v5128 = vpop.f32.mrb[0].mxu0
    %v5129 = vadd.f32 0.0, %v5128
    %v5130 = vpop.f32.mrb[0].mxu0
    %v5131 = vand.u32 %v4996, 4294901760
    %v5132 = vsub.f32 %v4996, %v5131
    %v5133 = vand.u32 %v5132, 4294901760
    %v5134 = vsub.f32 %v5132, %v5133
    %v5135 = vand.u32 %v5134, 4294901760
    %5136 = vmatprep.mubr.f32.mxu0 %v5135
    %v5137 = vand.u32 %v4989, 4294901760
    %v5138 = vsub.f32 %v4989, %v5137
    %v5139 = vand.u32 %v5138, 4294901760
    %v5140 = vsub.f32 %v5138, %v5139
    %v5141 = vand.u32 %v5140, 4294901760
    %5142 = vmatmul.mubr.f32.gmra.mrb[0].mxu0 %v5141
    %v5143 = vpop.f32.mrb[0].mxu0
    %v5144 = vadd.f32 0.0, %v5143
    %v5145 = vpop.f32.mrb[0].mxu0
    %5146 = vdwg.mxu0
    %5147 = vmatprep.subr.mxu0 0.0
    %v5148 = vand.u32 %v3573, 4294901760
    %v5149 = vsub.f32 %v3573, %v5148
    %v5150 = vand.u32 %v5149, 4294901760
    %v5151 = vsub.f32 %v5149, %v5150
    %v5152 = vand.u32 %v5151, 4294901760
    %5153 = vmatpush1.msra.mxu0 %v5152
    %5154 = vmatprep.subr.mxu0 0.0
    %v5155 = vand.u32 %v3574, 4294901760
    %v5156 = vsub.f32 %v3574, %v5155
    %v5157 = vand.u32 %v5156, 4294901760
    %v5158 = vsub.f32 %v5156, %v5157
    %v5159 = vand.u32 %v5158, 4294901760
    %5160 = vmatpush1.msra.mxu0 %v5159
    %5161 = vmatprep.subr.mxu0 0.0
    %v5162 = vand.u32 %v3575, 4294901760
    %v5163 = vsub.f32 %v3575, %v5162
    %v5164 = vand.u32 %v5163, 4294901760
    %v5165 = vsub.f32 %v5163, %v5164
    %v5166 = vand.u32 %v5165, 4294901760
    %5167 = vmatpush1.msra.mxu0 %v5166
    %5168 = vmatprep.subr.mxu0 0.0
    %v5169 = vand.u32 %v3576, 4294901760
    %v5170 = vsub.f32 %v3576, %v5169
    %v5171 = vand.u32 %v5170, 4294901760
    %v5172 = vsub.f32 %v5170, %v5171
    %v5173 = vand.u32 %v5172, 4294901760
    %5174 = vmatpush1.msra.mxu0 %v5173
    %5175 = vmatprep.subr.mxu0 0.0
    %v5176 = vand.u32 %v3577, 4294901760
    %v5177 = vsub.f32 %v3577, %v5176
    %v5178 = vand.u32 %v5177, 4294901760
    %v5179 = vsub.f32 %v5177, %v5178
    %v5180 = vand.u32 %v5179, 4294901760
    %5181 = vmatpush1.msra.mxu0 %v5180
    %5182 = vmatprep.subr.mxu0 0.0
    %v5183 = vand.u32 %v3578, 4294901760
    %v5184 = vsub.f32 %v3578, %v5183
    %v5185 = vand.u32 %v5184, 4294901760
    %v5186 = vsub.f32 %v5184, %v5185
    %v5187 = vand.u32 %v5186, 4294901760
    %5188 = vmatpush1.msra.mxu0 %v5187
    %5189 = vmatprep.subr.mxu0 0.0
    %v5190 = vand.u32 %v3579, 4294901760
    %v5191 = vsub.f32 %v3579, %v5190
    %v5192 = vand.u32 %v5191, 4294901760
    %v5193 = vsub.f32 %v5191, %v5192
    %v5194 = vand.u32 %v5193, 4294901760
    %5195 = vmatpush1.msra.mxu0 %v5194
    %5196 = vmatprep.subr.mxu0 0.0
    %v5197 = vand.u32 %v3580, 4294901760
    %v5198 = vsub.f32 %v3580, %v5197
    %v5199 = vand.u32 %v5198, 4294901760
    %v5200 = vsub.f32 %v5198, %v5199
    %v5201 = vand.u32 %v5200, 4294901760
    %5202 = vmatpush1.msra.mxu0 %v5201
    %5203 = vmatprep.subr.mxu0 0.0
    %v5204 = vand.u32 %v3581, 4294901760
    %v5205 = vsub.f32 %v3581, %v5204
    %v5206 = vand.u32 %v5205, 4294901760
    %v5207 = vsub.f32 %v5205, %v5206
    %v5208 = vand.u32 %v5207, 4294901760
    %5209 = vmatpush1.msra.mxu0 %v5208
    %5210 = vmatprep.subr.mxu0 0.0
    %v5211 = vand.u32 %v3582, 4294901760
    %v5212 = vsub.f32 %v3582, %v5211
    %v5213 = vand.u32 %v5212, 4294901760
    %v5214 = vsub.f32 %v5212, %v5213
    %v5215 = vand.u32 %v5214, 4294901760
    %5216 = vmatpush1.msra.mxu0 %v5215
    %5217 = vmatprep.subr.mxu0 0.0
    %v5218 = vand.u32 %v3583, 4294901760
    %v5219 = vsub.f32 %v3583, %v5218
    %v5220 = vand.u32 %v5219, 4294901760
    %v5221 = vsub.f32 %v5219, %v5220
    %v5222 = vand.u32 %v5221, 4294901760
    %5223 = vmatpush1.msra.mxu0 %v5222
    %5224 = vmatprep.subr.mxu0 0.0
    %v5225 = vand.u32 %v3584, 4294901760
    %v5226 = vsub.f32 %v3584, %v5225
    %v5227 = vand.u32 %v5226, 4294901760
    %v5228 = vsub.f32 %v5226, %v5227
    %v5229 = vand.u32 %v5228, 4294901760
    %5230 = vmatpush1.msra.mxu0 %v5229
    %5231 = vmatprep.subr.mxu0 0.0
    %v5232 = vand.u32 %v3585, 4294901760
    %v5233 = vsub.f32 %v3585, %v5232
    %v5234 = vand.u32 %v5233, 4294901760
    %v5235 = vsub.f32 %v5233, %v5234
    %v5236 = vand.u32 %v5235, 4294901760
    %5237 = vmatpush1.msra.mxu0 %v5236
    %5238 = vmatprep.subr.mxu0 0.0
    %v5239 = vand.u32 %v3586, 4294901760
    %v5240 = vsub.f32 %v3586, %v5239
    %v5241 = vand.u32 %v5240, 4294901760
    %v5242 = vsub.f32 %v5240, %v5241
    %v5243 = vand.u32 %v5242, 4294901760
    %5244 = vmatpush1.msra.mxu0 %v5243
    %5245 = vmatprep.subr.mxu0 0.0
    %v5246 = vand.u32 %v3587, 4294901760
    %v5247 = vsub.f32 %v3587, %v5246
    %v5248 = vand.u32 %v5247, 4294901760
    %v5249 = vsub.f32 %v5247, %v5248
    %v5250 = vand.u32 %v5249, 4294901760
    %5251 = vmatpush1.msra.mxu0 %v5250
    %5252 = vmatprep.subr.mxu0 0.0
    %v5253 = vand.u32 %v3588, 4294901760
    %v5254 = vsub.f32 %v3588, %v5253
    %v5255 = vand.u32 %v5254, 4294901760
    %v5256 = vsub.f32 %v5254, %v5255
    %v5257 = vand.u32 %v5256, 4294901760
    %5258 = vmatpush1.msra.mxu0 %v5257
    %5259 = vmatprep.subr.mxu0 0.0
    %v5260 = vand.u32 %v3589, 4294901760
    %v5261 = vsub.f32 %v3589, %v5260
    %v5262 = vand.u32 %v5261, 4294901760
    %v5263 = vsub.f32 %v5261, %v5262
    %v5264 = vand.u32 %v5263, 4294901760
    %5265 = vmatpush1.msra.mxu0 %v5264
    %5266 = vmatprep.subr.mxu0 0.0
    %v5267 = vand.u32 %v3590, 4294901760
    %v5268 = vsub.f32 %v3590, %v5267
    %v5269 = vand.u32 %v5268, 4294901760
    %v5270 = vsub.f32 %v5268, %v5269
    %v5271 = vand.u32 %v5270, 4294901760
    %5272 = vmatpush1.msra.mxu0 %v5271
    %5273 = vmatprep.subr.mxu0 0.0
    %v5274 = vand.u32 %v3591, 4294901760
    %v5275 = vsub.f32 %v3591, %v5274
    %v5276 = vand.u32 %v5275, 4294901760
    %v5277 = vsub.f32 %v5275, %v5276
    %v5278 = vand.u32 %v5277, 4294901760
    %5279 = vmatpush1.msra.mxu0 %v5278
    %5280 = vmatprep.subr.mxu0 0.0
    %v5281 = vand.u32 %v3592, 4294901760
    %v5282 = vsub.f32 %v3592, %v5281
    %v5283 = vand.u32 %v5282, 4294901760
    %v5284 = vsub.f32 %v5282, %v5283
    %v5285 = vand.u32 %v5284, 4294901760
    %5286 = vmatpush1.msra.mxu0 %v5285
    %5287 = vmatprep.subr.mxu0 0.0
    %v5288 = vand.u32 %v3593, 4294901760
    %v5289 = vsub.f32 %v3593, %v5288
    %v5290 = vand.u32 %v5289, 4294901760
    %v5291 = vsub.f32 %v5289, %v5290
    %v5292 = vand.u32 %v5291, 4294901760
    %5293 = vmatpush1.msra.mxu0 %v5292
    %5294 = vmatprep.subr.mxu0 0.0
    %v5295 = vand.u32 %v3594, 4294901760
    %v5296 = vsub.f32 %v3594, %v5295
    %v5297 = vand.u32 %v5296, 4294901760
    %v5298 = vsub.f32 %v5296, %v5297
    %v5299 = vand.u32 %v5298, 4294901760
    %5300 = vmatpush1.msra.mxu0 %v5299
    %5301 = vmatprep.subr.mxu0 0.0
    %v5302 = vand.u32 %v3595, 4294901760
    %v5303 = vsub.f32 %v3595, %v5302
    %v5304 = vand.u32 %v5303, 4294901760
    %v5305 = vsub.f32 %v5303, %v5304
    %v5306 = vand.u32 %v5305, 4294901760
    %5307 = vmatpush1.msra.mxu0 %v5306
    %5308 = vmatprep.subr.mxu0 0.0
    %v5309 = vand.u32 %v3596, 4294901760
    %v5310 = vsub.f32 %v3596, %v5309
    %v5311 = vand.u32 %v5310, 4294901760
    %v5312 = vsub.f32 %v5310, %v5311
    %v5313 = vand.u32 %v5312, 4294901760
    %5314 = vmatpush1.msra.mxu0 %v5313
    %5315 = vmatprep.subr.mxu0 0.0
    %5316 = vmatpush1.msra.mxu0 0.0
    %5317 = vmatprep.subr.mxu0 0.0
    %5318 = vmatpush1.msra.mxu0 0.0
    %5319 = vmatprep.subr.mxu0 0.0
    %5320 = vmatpush1.msra.mxu0 0.0
    %5321 = vmatprep.subr.mxu0 0.0
    %5322 = vmatpush1.msra.mxu0 0.0
    %5323 = vmatprep.subr.mxu0 0.0
    %5324 = vmatpush1.msra.mxu0 0.0
    %5325 = vmatprep.subr.mxu0 0.0
    %5326 = vmatpush1.msra.mxu0 0.0
    %5327 = vmatprep.subr.mxu0 0.0
    %5328 = vmatpush1.msra.mxu0 0.0
    %5329 = vmatprep.subr.mxu0 0.0
    %5330 = vmatpush1.msra.mxu0 0.0
    %v5331 = vand.u32 %v4990, 4294901760
    %5332 = vmatprep.mubr.f32.mxu0 %v5331
    %v5333 = vand.u32 %v4986, 4294901760
    %5334 = vmatmul.mubr.f32.gmra.mrb[0].mxu0 %v5333
    %v5335 = vpop.f32.mrb[0].mxu0
    %v5336 = vadd.f32 %v5099, %v5335
    %v5337 = vpop.f32.mrb[0].mxu0
    %v5338 = vand.u32 %v4992, 4294901760
    %5339 = vmatprep.mubr.f32.mxu0 %v5338
    %v5340 = vand.u32 %v4987, 4294901760
    %5341 = vmatmul.mubr.f32.gmra.mrb[0].mxu0 %v5340
    %v5342 = vpop.f32.mrb[0].mxu0
    %v5343 = vadd.f32 %v5114, %v5342
    %v5344 = vpop.f32.mrb[0].mxu0
    %v5345 = vand.u32 %v4994, 4294901760
    %5346 = vmatprep.mubr.f32.mxu0 %v5345
    %v5347 = vand.u32 %v4988, 4294901760
    %5348 = vmatmul.mubr.f32.gmra.mrb[0].mxu0 %v5347
    %v5349 = vpop.f32.mrb[0].mxu0
    %v5350 = vadd.f32 %v5129, %v5349
    %v5351 = vpop.f32.mrb[0].mxu0
    %v5352 = vand.u32 %v4996, 4294901760
    %5353 = vmatprep.mubr.f32.mxu0 %v5352
    %v5354 = vand.u32 %v4989, 4294901760
    %5355 = vmatmul.mubr.f32.gmra.mrb[0].mxu0 %v5354
    %v5356 = vpop.f32.mrb[0].mxu0
    %v5357 = vadd.f32 %v5144, %v5356
    %v5358 = vpop.f32.mrb[0].mxu0
    %5359 = vdwg.mxu0
    %5360 = vmatprep.subr.mxu0 0.0
    %v5361 = vand.u32 %v3573, 4294901760
    %v5362 = vsub.f32 %v3573, %v5361
    %5363 = vmatpush1.msra.mxu0 %v5362
    %5364 = vmatprep.subr.mxu0 0.0
    %v5365 = vand.u32 %v3574, 4294901760
    %v5366 = vsub.f32 %v3574, %v5365
    %5367 = vmatpush1.msra.mxu0 %v5366
    %5368 = vmatprep.subr.mxu0 0.0
    %v5369 = vand.u32 %v3575, 4294901760
    %v5370 = vsub.f32 %v3575, %v5369
    %5371 = vmatpush1.msra.mxu0 %v5370
    %5372 = vmatprep.subr.mxu0 0.0
    %v5373 = vand.u32 %v3576, 4294901760
    %v5374 = vsub.f32 %v3576, %v5373
    %5375 = vmatpush1.msra.mxu0 %v5374
    %5376 = vmatprep.subr.mxu0 0.0
    %v5377 = vand.u32 %v3577, 4294901760
    %v5378 = vsub.f32 %v3577, %v5377
    %5379 = vmatpush1.msra.mxu0 %v5378
    %5380 = vmatprep.subr.mxu0 0.0
    %v5381 = vand.u32 %v3578, 4294901760
    %v5382 = vsub.f32 %v3578, %v5381
    %5383 = vmatpush1.msra.mxu0 %v5382
    %5384 = vmatprep.subr.mxu0 0.0
    %v5385 = vand.u32 %v3579, 4294901760
    %v5386 = vsub.f32 %v3579, %v5385
    %5387 = vmatpush1.msra.mxu0 %v5386
    %5388 = vmatprep.subr.mxu0 0.0
    %v5389 = vand.u32 %v3580, 4294901760
    %v5390 = vsub.f32 %v3580, %v5389
    %5391 = vmatpush1.msra.mxu0 %v5390
    %5392 = vmatprep.subr.mxu0 0.0
    %v5393 = vand.u32 %v3581, 4294901760
    %v5394 = vsub.f32 %v3581, %v5393
    %5395 = vmatpush1.msra.mxu0 %v5394
    %5396 = vmatprep.subr.mxu0 0.0
    %v5397 = vand.u32 %v3582, 4294901760
    %v5398 = vsub.f32 %v3582, %v5397
    %5399 = vmatpush1.msra.mxu0 %v5398
    %5400 = vmatprep.subr.mxu0 0.0
    %v5401 = vand.u32 %v3583, 4294901760
    %v5402 = vsub.f32 %v3583, %v5401
    %5403 = vmatpush1.msra.mxu0 %v5402
    %5404 = vmatprep.subr.mxu0 0.0
    %v5405 = vand.u32 %v3584, 4294901760
    %v5406 = vsub.f32 %v3584, %v5405
    %5407 = vmatpush1.msra.mxu0 %v5406
    %5408 = vmatprep.subr.mxu0 0.0
    %v5409 = vand.u32 %v3585, 4294901760
    %v5410 = vsub.f32 %v3585, %v5409
    %5411 = vmatpush1.msra.mxu0 %v5410
    %5412 = vmatprep.subr.mxu0 0.0
    %v5413 = vand.u32 %v3586, 4294901760
    %v5414 = vsub.f32 %v3586, %v5413
    %5415 = vmatpush1.msra.mxu0 %v5414
    %5416 = vmatprep.subr.mxu0 0.0
    %v5417 = vand.u32 %v3587, 4294901760
    %v5418 = vsub.f32 %v3587, %v5417
    %5419 = vmatpush1.msra.mxu0 %v5418
    %5420 = vmatprep.subr.mxu0 0.0
    %v5421 = vand.u32 %v3588, 4294901760
    %v5422 = vsub.f32 %v3588, %v5421
    %5423 = vmatpush1.msra.mxu0 %v5422
    %5424 = vmatprep.subr.mxu0 0.0
    %v5425 = vand.u32 %v3589, 4294901760
    %v5426 = vsub.f32 %v3589, %v5425
    %5427 = vmatpush1.msra.mxu0 %v5426
    %5428 = vmatprep.subr.mxu0 0.0
    %v5429 = vand.u32 %v3590, 4294901760
    %v5430 = vsub.f32 %v3590, %v5429
    %5431 = vmatpush1.msra.mxu0 %v5430
    %5432 = vmatprep.subr.mxu0 0.0
    %v5433 = vand.u32 %v3591, 4294901760
    %v5434 = vsub.f32 %v3591, %v5433
    %5435 = vmatpush1.msra.mxu0 %v5434
    %5436 = vmatprep.subr.mxu0 0.0
    %v5437 = vand.u32 %v3592, 4294901760
    %v5438 = vsub.f32 %v3592, %v5437
    %5439 = vmatpush1.msra.mxu0 %v5438
    %5440 = vmatprep.subr.mxu0 0.0
    %v5441 = vand.u32 %v3593, 4294901760
    %v5442 = vsub.f32 %v3593, %v5441
    %5443 = vmatpush1.msra.mxu0 %v5442
    %5444 = vmatprep.subr.mxu0 0.0
    %v5445 = vand.u32 %v3594, 4294901760
    %v5446 = vsub.f32 %v3594, %v5445
    %5447 = vmatpush1.msra.mxu0 %v5446
    %5448 = vmatprep.subr.mxu0 0.0
    %v5449 = vand.u32 %v3595, 4294901760
    %v5450 = vsub.f32 %v3595, %v5449
    %5451 = vmatpush1.msra.mxu0 %v5450
    %5452 = vmatprep.subr.mxu0 0.0
    %v5453 = vand.u32 %v3596, 4294901760
    %v5454 = vsub.f32 %v3596, %v5453
    %5455 = vmatpush1.msra.mxu0 %v5454
    %5456 = vmatprep.subr.mxu0 0.0
    %5457 = vmatpush1.msra.mxu0 0.0
    %5458 = vmatprep.subr.mxu0 0.0
    %5459 = vmatpush1.msra.mxu0 0.0
    %5460 = vmatprep.subr.mxu0 0.0
    %5461 = vmatpush1.msra.mxu0 0.0
    %5462 = vmatprep.subr.mxu0 0.0
    %5463 = vmatpush1.msra.mxu0 0.0
    %5464 = vmatprep.subr.mxu0 0.0
    %5465 = vmatpush1.msra.mxu0 0.0
    %5466 = vmatprep.subr.mxu0 0.0
    %5467 = vmatpush1.msra.mxu0 0.0
    %5468 = vmatprep.subr.mxu0 0.0
    %5469 = vmatpush1.msra.mxu0 0.0
    %5470 = vmatprep.subr.mxu0 0.0
    %5471 = vmatpush1.msra.mxu0 0.0
    %v5472 = vand.u32 %v4990, 4294901760
    %v5473 = vsub.f32 %v4990, %v5472
    %5474 = vmatprep.mubr.f32.mxu0 %v5473
    %v5475 = vand.u32 %v4986, 4294901760
    %v5476 = vsub.f32 %v4986, %v5475
    %5477 = vmatmul.mubr.f32.gmra.mrb[0].mxu0 %v5476
    %v5478 = vpop.f32.mrb[0].mxu0
    %v5479 = vadd.f32 %v5336, %v5478
    %v5480 = vpop.f32.mrb[0].mxu0
    %v5481 = vand.u32 %v4992, 4294901760
    %v5482 = vsub.f32 %v4992, %v5481
    %5483 = vmatprep.mubr.f32.mxu0 %v5482
    %v5484 = vand.u32 %v4987, 4294901760
    %v5485 = vsub.f32 %v4987, %v5484
    %5486 = vmatmul.mubr.f32.gmra.mrb[0].mxu0 %v5485
    %v5487 = vpop.f32.mrb[0].mxu0
    %v5488 = vadd.f32 %v5343, %v5487
    %v5489 = vpop.f32.mrb[0].mxu0
    %v5490 = vand.u32 %v4994, 4294901760
    %v5491 = vsub.f32 %v4994, %v5490
    %5492 = vmatprep.mubr.f32.mxu0 %v5491
    %v5493 = vand.u32 %v4988, 4294901760
    %v5494 = vsub.f32 %v4988, %v5493
    %5495 = vmatmul.mubr.f32.gmra.mrb[0].mxu0 %v5494
    %v5496 = vpop.f32.mrb[0].mxu0
    %v5497 = vadd.f32 %v5350, %v5496
    %v5498 = vpop.f32.mrb[0].mxu0
    %v5499 = vand.u32 %v4996, 4294901760
    %v5500 = vsub.f32 %v4996, %v5499
    %5501 = vmatprep.mubr.f32.mxu0 %v5500
    %v5502 = vand.u32 %v4989, 4294901760
    %v5503 = vsub.f32 %v4989, %v5502
    %5504 = vmatmul.mubr.f32.gmra.mrb[0].mxu0 %v5503
    %v5505 = vpop.f32.mrb[0].mxu0
    %v5506 = vadd.f32 %v5357, %v5505
    %v5507 = vpop.f32.mrb[0].mxu0
    %5508 = vdwg.mxu0
    %5509 = vmatprep.subr.mxu0 0.0
    %v5510 = vand.u32 %v3573, 4294901760
    %5511 = vmatpush1.msra.mxu0 %v5510
    %5512 = vmatprep.subr.mxu0 0.0
    %v5513 = vand.u32 %v3574, 4294901760
    %5514 = vmatpush1.msra.mxu0 %v5513
    %5515 = vmatprep.subr.mxu0 0.0
    %v5516 = vand.u32 %v3575, 4294901760
    %5517 = vmatpush1.msra.mxu0 %v5516
    %5518 = vmatprep.subr.mxu0 0.0
    %v5519 = vand.u32 %v3576, 4294901760
    %5520 = vmatpush1.msra.mxu0 %v5519
    %5521 = vmatprep.subr.mxu0 0.0
    %v5522 = vand.u32 %v3577, 4294901760
    %5523 = vmatpush1.msra.mxu0 %v5522
    %5524 = vmatprep.subr.mxu0 0.0
    %v5525 = vand.u32 %v3578, 4294901760
    %5526 = vmatpush1.msra.mxu0 %v5525
    %5527 = vmatprep.subr.mxu0 0.0
    %v5528 = vand.u32 %v3579, 4294901760
    %5529 = vmatpush1.msra.mxu0 %v5528
    %5530 = vmatprep.subr.mxu0 0.0
    %v5531 = vand.u32 %v3580, 4294901760
    %5532 = vmatpush1.msra.mxu0 %v5531
    %5533 = vmatprep.subr.mxu0 0.0
    %v5534 = vand.u32 %v3581, 4294901760
    %5535 = vmatpush1.msra.mxu0 %v5534
    %5536 = vmatprep.subr.mxu0 0.0
    %v5537 = vand.u32 %v3582, 4294901760
    %5538 = vmatpush1.msra.mxu0 %v5537
    %5539 = vmatprep.subr.mxu0 0.0
    %v5540 = vand.u32 %v3583, 4294901760
    %5541 = vmatpush1.msra.mxu0 %v5540
    %5542 = vmatprep.subr.mxu0 0.0
    %v5543 = vand.u32 %v3584, 4294901760
    %5544 = vmatpush1.msra.mxu0 %v5543
    %5545 = vmatprep.subr.mxu0 0.0
    %v5546 = vand.u32 %v3585, 4294901760
    %5547 = vmatpush1.msra.mxu0 %v5546
    %5548 = vmatprep.subr.mxu0 0.0
    %v5549 = vand.u32 %v3586, 4294901760
    %5550 = vmatpush1.msra.mxu0 %v5549
    %5551 = vmatprep.subr.mxu0 0.0
    %v5552 = vand.u32 %v3587, 4294901760
    %5553 = vmatpush1.msra.mxu0 %v5552
    %5554 = vmatprep.subr.mxu0 0.0
    %v5555 = vand.u32 %v3588, 4294901760
    %5556 = vmatpush1.msra.mxu0 %v5555
    %5557 = vmatprep.subr.mxu0 0.0
    %v5558 = vand.u32 %v3589, 4294901760
    %5559 = vmatpush1.msra.mxu0 %v5558
    %5560 = vmatprep.subr.mxu0 0.0
    %v5561 = vand.u32 %v3590, 4294901760
    %5562 = vmatpush1.msra.mxu0 %v5561
    %5563 = vmatprep.subr.mxu0 0.0
    %v5564 = vand.u32 %v3591, 4294901760
    %5565 = vmatpush1.msra.mxu0 %v5564
    %5566 = vmatprep.subr.mxu0 0.0
    %v5567 = vand.u32 %v3592, 4294901760
    %5568 = vmatpush1.msra.mxu0 %v5567
    %5569 = vmatprep.subr.mxu0 0.0
    %v5570 = vand.u32 %v3593, 4294901760
    %5571 = vmatpush1.msra.mxu0 %v5570
    %5572 = vmatprep.subr.mxu0 0.0
    %v5573 = vand.u32 %v3594, 4294901760
    %5574 = vmatpush1.msra.mxu0 %v5573
    %5575 = vmatprep.subr.mxu0 0.0
    %v5576 = vand.u32 %v3595, 4294901760
    %5577 = vmatpush1.msra.mxu0 %v5576
    %5578 = vmatprep.subr.mxu0 0.0
    %v5579 = vand.u32 %v3596, 4294901760
    %5580 = vmatpush1.msra.mxu0 %v5579
    %5581 = vmatprep.subr.mxu0 0.0
    %5582 = vmatpush1.msra.mxu0 0.0
    %5583 = vmatprep.subr.mxu0 0.0
    %5584 = vmatpush1.msra.mxu0 0.0
    %5585 = vmatprep.subr.mxu0 0.0
    %5586 = vmatpush1.msra.mxu0 0.0
    %5587 = vmatprep.subr.mxu0 0.0
    %5588 = vmatpush1.msra.mxu0 0.0
    %5589 = vmatprep.subr.mxu0 0.0
    %5590 = vmatpush1.msra.mxu0 0.0
    %5591 = vmatprep.subr.mxu0 0.0
    %5592 = vmatpush1.msra.mxu0 0.0
    %5593 = vmatprep.subr.mxu0 0.0
    %5594 = vmatpush1.msra.mxu0 0.0
    %5595 = vmatprep.subr.mxu0 0.0
    %5596 = vmatpush1.msra.mxu0 0.0
    %v5597 = vand.u32 %v4990, 4294901760
    %v5598 = vsub.f32 %v4990, %v5597
    %v5599 = vand.u32 %v5598, 4294901760
    %5600 = vmatprep.mubr.f32.mxu0 %v5599
    %v5601 = vand.u32 %v4986, 4294901760
    %v5602 = vsub.f32 %v4986, %v5601
    %v5603 = vand.u32 %v5602, 4294901760
    %5604 = vmatmul.mubr.f32.gmra.mrb[0].mxu0 %v5603
    %v5605 = vpop.f32.mrb[0].mxu0
    %v5606 = vadd.f32 %v5479, %v5605
    %v5607 = vpop.f32.mrb[0].mxu0
    %v5608 = vand.u32 %v4992, 4294901760
    %v5609 = vsub.f32 %v4992, %v5608
    %v5610 = vand.u32 %v5609, 4294901760
    %5611 = vmatprep.mubr.f32.mxu0 %v5610
    %v5612 = vand.u32 %v4987, 4294901760
    %v5613 = vsub.f32 %v4987, %v5612
    %v5614 = vand.u32 %v5613, 4294901760
    %5615 = vmatmul.mubr.f32.gmra.mrb[0].mxu0 %v5614
    %v5616 = vpop.f32.mrb[0].mxu0
    %v5617 = vadd.f32 %v5488, %v5616
    %v5618 = vpop.f32.mrb[0].mxu0
    %v5619 = vand.u32 %v4994, 4294901760
    %v5620 = vsub.f32 %v4994, %v5619
    %v5621 = vand.u32 %v5620, 4294901760
    %5622 = vmatprep.mubr.f32.mxu0 %v5621
    %v5623 = vand.u32 %v4988, 4294901760
    %v5624 = vsub.f32 %v4988, %v5623
    %v5625 = vand.u32 %v5624, 4294901760
    %5626 = vmatmul.mubr.f32.gmra.mrb[0].mxu0 %v5625
    %v5627 = vpop.f32.mrb[0].mxu0
    %v5628 = vadd.f32 %v5497, %v5627
    %v5629 = vpop.f32.mrb[0].mxu0
    %v5630 = vand.u32 %v4996, 4294901760
    %v5631 = vsub.f32 %v4996, %v5630
    %v5632 = vand.u32 %v5631, 4294901760
    %5633 = vmatprep.mubr.f32.mxu0 %v5632
    %v5634 = vand.u32 %v4989, 4294901760
    %v5635 = vsub.f32 %v4989, %v5634
    %v5636 = vand.u32 %v5635, 4294901760
    %5637 = vmatmul.mubr.f32.gmra.mrb[0].mxu0 %v5636
    %v5638 = vpop.f32.mrb[0].mxu0
    %v5639 = vadd.f32 %v5506, %v5638
    %v5640 = vpop.f32.mrb[0].mxu0
    %5641 = vdwg.mxu0
    %5642 = vmatprep.subr.mxu0 0.0
    %v5643 = vand.u32 %v3573, 4294901760
    %v5644 = vsub.f32 %v3573, %v5643
    %v5645 = vand.u32 %v5644, 4294901760
    %5646 = vmatpush1.msra.mxu0 %v5645
    %5647 = vmatprep.subr.mxu0 0.0
    %v5648 = vand.u32 %v3574, 4294901760
    %v5649 = vsub.f32 %v3574, %v5648
    %v5650 = vand.u32 %v5649, 4294901760
    %5651 = vmatpush1.msra.mxu0 %v5650
    %5652 = vmatprep.subr.mxu0 0.0
    %v5653 = vand.u32 %v3575, 4294901760
    %v5654 = vsub.f32 %v3575, %v5653
    %v5655 = vand.u32 %v5654, 4294901760
    %5656 = vmatpush1.msra.mxu0 %v5655
    %5657 = vmatprep.subr.mxu0 0.0
    %v5658 = vand.u32 %v3576, 4294901760
    %v5659 = vsub.f32 %v3576, %v5658
    %v5660 = vand.u32 %v5659, 4294901760
    %5661 = vmatpush1.msra.mxu0 %v5660
    %5662 = vmatprep.subr.mxu0 0.0
    %v5663 = vand.u32 %v3577, 4294901760
    %v5664 = vsub.f32 %v3577, %v5663
    %v5665 = vand.u32 %v5664, 4294901760
    %5666 = vmatpush1.msra.mxu0 %v5665
    %5667 = vmatprep.subr.mxu0 0.0
    %v5668 = vand.u32 %v3578, 4294901760
    %v5669 = vsub.f32 %v3578, %v5668
    %v5670 = vand.u32 %v5669, 4294901760
    %5671 = vmatpush1.msra.mxu0 %v5670
    %5672 = vmatprep.subr.mxu0 0.0
    %v5673 = vand.u32 %v3579, 4294901760
    %v5674 = vsub.f32 %v3579, %v5673
    %v5675 = vand.u32 %v5674, 4294901760
    %5676 = vmatpush1.msra.mxu0 %v5675
    %5677 = vmatprep.subr.mxu0 0.0
    %v5678 = vand.u32 %v3580, 4294901760
    %v5679 = vsub.f32 %v3580, %v5678
    %v5680 = vand.u32 %v5679, 4294901760
    %5681 = vmatpush1.msra.mxu0 %v5680
    %5682 = vmatprep.subr.mxu0 0.0
    %v5683 = vand.u32 %v3581, 4294901760
    %v5684 = vsub.f32 %v3581, %v5683
    %v5685 = vand.u32 %v5684, 4294901760
    %5686 = vmatpush1.msra.mxu0 %v5685
    %5687 = vmatprep.subr.mxu0 0.0
    %v5688 = vand.u32 %v3582, 4294901760
    %v5689 = vsub.f32 %v3582, %v5688
    %v5690 = vand.u32 %v5689, 4294901760
    %5691 = vmatpush1.msra.mxu0 %v5690
    %5692 = vmatprep.subr.mxu0 0.0
    %v5693 = vand.u32 %v3583, 4294901760
    %v5694 = vsub.f32 %v3583, %v5693
    %v5695 = vand.u32 %v5694, 4294901760
    %5696 = vmatpush1.msra.mxu0 %v5695
    %5697 = vmatprep.subr.mxu0 0.0
    %v5698 = vand.u32 %v3584, 4294901760
    %v5699 = vsub.f32 %v3584, %v5698
    %v5700 = vand.u32 %v5699, 4294901760
    %5701 = vmatpush1.msra.mxu0 %v5700
    %5702 = vmatprep.subr.mxu0 0.0
    %v5703 = vand.u32 %v3585, 4294901760
    %v5704 = vsub.f32 %v3585, %v5703
    %v5705 = vand.u32 %v5704, 4294901760
    %5706 = vmatpush1.msra.mxu0 %v5705
    %5707 = vmatprep.subr.mxu0 0.0
    %v5708 = vand.u32 %v3586, 4294901760
    %v5709 = vsub.f32 %v3586, %v5708
    %v5710 = vand.u32 %v5709, 4294901760
    %5711 = vmatpush1.msra.mxu0 %v5710
    %5712 = vmatprep.subr.mxu0 0.0
    %v5713 = vand.u32 %v3587, 4294901760
    %v5714 = vsub.f32 %v3587, %v5713
    %v5715 = vand.u32 %v5714, 4294901760
    %5716 = vmatpush1.msra.mxu0 %v5715
    %5717 = vmatprep.subr.mxu0 0.0
    %v5718 = vand.u32 %v3588, 4294901760
    %v5719 = vsub.f32 %v3588, %v5718
    %v5720 = vand.u32 %v5719, 4294901760
    %5721 = vmatpush1.msra.mxu0 %v5720
    %5722 = vmatprep.subr.mxu0 0.0
    %v5723 = vand.u32 %v3589, 4294901760
    %v5724 = vsub.f32 %v3589, %v5723
    %v5725 = vand.u32 %v5724, 4294901760
    %5726 = vmatpush1.msra.mxu0 %v5725
    %5727 = vmatprep.subr.mxu0 0.0
    %v5728 = vand.u32 %v3590, 4294901760
    %v5729 = vsub.f32 %v3590, %v5728
    %v5730 = vand.u32 %v5729, 4294901760
    %5731 = vmatpush1.msra.mxu0 %v5730
    %5732 = vmatprep.subr.mxu0 0.0
    %v5733 = vand.u32 %v3591, 4294901760
    %v5734 = vsub.f32 %v3591, %v5733
    %v5735 = vand.u32 %v5734, 4294901760
    %5736 = vmatpush1.msra.mxu0 %v5735
    %5737 = vmatprep.subr.mxu0 0.0
    %v5738 = vand.u32 %v3592, 4294901760
    %v5739 = vsub.f32 %v3592, %v5738
    %v5740 = vand.u32 %v5739, 4294901760
    %5741 = vmatpush1.msra.mxu0 %v5740
    %5742 = vmatprep.subr.mxu0 0.0
    %v5743 = vand.u32 %v3593, 4294901760
    %v5744 = vsub.f32 %v3593, %v5743
    %v5745 = vand.u32 %v5744, 4294901760
    %5746 = vmatpush1.msra.mxu0 %v5745
    %5747 = vmatprep.subr.mxu0 0.0
    %v5748 = vand.u32 %v3594, 4294901760
    %v5749 = vsub.f32 %v3594, %v5748
    %v5750 = vand.u32 %v5749, 4294901760
    %5751 = vmatpush1.msra.mxu0 %v5750
    %5752 = vmatprep.subr.mxu0 0.0
    %v5753 = vand.u32 %v3595, 4294901760
    %v5754 = vsub.f32 %v3595, %v5753
    %v5755 = vand.u32 %v5754, 4294901760
    %5756 = vmatpush1.msra.mxu0 %v5755
    %5757 = vmatprep.subr.mxu0 0.0
    %v5758 = vand.u32 %v3596, 4294901760
    %v5759 = vsub.f32 %v3596, %v5758
    %v5760 = vand.u32 %v5759, 4294901760
    %5761 = vmatpush1.msra.mxu0 %v5760
    %5762 = vmatprep.subr.mxu0 0.0
    %5763 = vmatpush1.msra.mxu0 0.0
    %5764 = vmatprep.subr.mxu0 0.0
    %5765 = vmatpush1.msra.mxu0 0.0
    %5766 = vmatprep.subr.mxu0 0.0
    %5767 = vmatpush1.msra.mxu0 0.0
    %5768 = vmatprep.subr.mxu0 0.0
    %5769 = vmatpush1.msra.mxu0 0.0
    %5770 = vmatprep.subr.mxu0 0.0
    %5771 = vmatpush1.msra.mxu0 0.0
    %5772 = vmatprep.subr.mxu0 0.0
    %5773 = vmatpush1.msra.mxu0 0.0
    %5774 = vmatprep.subr.mxu0 0.0
    %5775 = vmatpush1.msra.mxu0 0.0
    %5776 = vmatprep.subr.mxu0 0.0
    %5777 = vmatpush1.msra.mxu0 0.0
    %v5778 = vand.u32 %v4990, 4294901760
    %5779 = vmatprep.mubr.f32.mxu0 %v5778
    %v5780 = vand.u32 %v4986, 4294901760
    %5781 = vmatmul.mubr.f32.gmra.mrb[0].mxu0 %v5780
    %v5782 = vpop.f32.mrb[0].mxu0
    %v5783 = vadd.f32 %v5606, %v5782
    %v5784 = vpop.f32.mrb[0].mxu0
    %v5785 = vand.u32 %v4992, 4294901760
    %5786 = vmatprep.mubr.f32.mxu0 %v5785
    %v5787 = vand.u32 %v4987, 4294901760
    %5788 = vmatmul.mubr.f32.gmra.mrb[0].mxu0 %v5787
    %v5789 = vpop.f32.mrb[0].mxu0
    %v5790 = vadd.f32 %v5617, %v5789
    %v5791 = vpop.f32.mrb[0].mxu0
    %v5792 = vand.u32 %v4994, 4294901760
    %5793 = vmatprep.mubr.f32.mxu0 %v5792
    %v5794 = vand.u32 %v4988, 4294901760
    %5795 = vmatmul.mubr.f32.gmra.mrb[0].mxu0 %v5794
    %v5796 = vpop.f32.mrb[0].mxu0
    %v5797 = vadd.f32 %v5628, %v5796
    %v5798 = vpop.f32.mrb[0].mxu0
    %v5799 = vand.u32 %v4996, 4294901760
    %5800 = vmatprep.mubr.f32.mxu0 %v5799
    %v5801 = vand.u32 %v4989, 4294901760
    %5802 = vmatmul.mubr.f32.gmra.mrb[0].mxu0 %v5801
    %v5803 = vpop.f32.mrb[0].mxu0
    %v5804 = vadd.f32 %v5639, %v5803
    %v5805 = vpop.f32.mrb[0].mxu0
    %5806 = vdwg.mxu0
    %5807 = vmatprep.subr.mxu0 0.0
    %v5808 = vand.u32 %v3573, 4294901760
    %5809 = vmatpush1.msra.mxu0 %v5808
    %5810 = vmatprep.subr.mxu0 0.0
    %v5811 = vand.u32 %v3574, 4294901760
    %5812 = vmatpush1.msra.mxu0 %v5811
    %5813 = vmatprep.subr.mxu0 0.0
    %v5814 = vand.u32 %v3575, 4294901760
    %5815 = vmatpush1.msra.mxu0 %v5814
    %5816 = vmatprep.subr.mxu0 0.0
    %v5817 = vand.u32 %v3576, 4294901760
    %5818 = vmatpush1.msra.mxu0 %v5817
    %5819 = vmatprep.subr.mxu0 0.0
    %v5820 = vand.u32 %v3577, 4294901760
    %5821 = vmatpush1.msra.mxu0 %v5820
    %5822 = vmatprep.subr.mxu0 0.0
    %v5823 = vand.u32 %v3578, 4294901760
    %5824 = vmatpush1.msra.mxu0 %v5823
    %5825 = vmatprep.subr.mxu0 0.0
    %v5826 = vand.u32 %v3579, 4294901760
    %5827 = vmatpush1.msra.mxu0 %v5826
    %5828 = vmatprep.subr.mxu0 0.0
    %v5829 = vand.u32 %v3580, 4294901760
    %5830 = vmatpush1.msra.mxu0 %v5829
    %5831 = vmatprep.subr.mxu0 0.0
    %v5832 = vand.u32 %v3581, 4294901760
    %5833 = vmatpush1.msra.mxu0 %v5832
    %5834 = vmatprep.subr.mxu0 0.0
    %v5835 = vand.u32 %v3582, 4294901760
    %5836 = vmatpush1.msra.mxu0 %v5835
    %5837 = vmatprep.subr.mxu0 0.0
    %v5838 = vand.u32 %v3583, 4294901760
    %5839 = vmatpush1.msra.mxu0 %v5838
    %5840 = vmatprep.subr.mxu0 0.0
    %v5841 = vand.u32 %v3584, 4294901760
    %5842 = vmatpush1.msra.mxu0 %v5841
    %5843 = vmatprep.subr.mxu0 0.0
    %v5844 = vand.u32 %v3585, 4294901760
    %5845 = vmatpush1.msra.mxu0 %v5844
    %5846 = vmatprep.subr.mxu0 0.0
    %v5847 = vand.u32 %v3586, 4294901760
    %5848 = vmatpush1.msra.mxu0 %v5847
    %5849 = vmatprep.subr.mxu0 0.0
    %v5850 = vand.u32 %v3587, 4294901760
    %5851 = vmatpush1.msra.mxu0 %v5850
    %5852 = vmatprep.subr.mxu0 0.0
    %v5853 = vand.u32 %v3588, 4294901760
    %5854 = vmatpush1.msra.mxu0 %v5853
    %5855 = vmatprep.subr.mxu0 0.0
    %v5856 = vand.u32 %v3589, 4294901760
    %5857 = vmatpush1.msra.mxu0 %v5856
    %5858 = vmatprep.subr.mxu0 0.0
    %v5859 = vand.u32 %v3590, 4294901760
    %5860 = vmatpush1.msra.mxu0 %v5859
    %5861 = vmatprep.subr.mxu0 0.0
    %v5862 = vand.u32 %v3591, 4294901760
    %5863 = vmatpush1.msra.mxu0 %v5862
    %5864 = vmatprep.subr.mxu0 0.0
    %v5865 = vand.u32 %v3592, 4294901760
    %5866 = vmatpush1.msra.mxu0 %v5865
    %5867 = vmatprep.subr.mxu0 0.0
    %v5868 = vand.u32 %v3593, 4294901760
    %5869 = vmatpush1.msra.mxu0 %v5868
    %5870 = vmatprep.subr.mxu0 0.0
    %v5871 = vand.u32 %v3594, 4294901760
    %5872 = vmatpush1.msra.mxu0 %v5871
    %5873 = vmatprep.subr.mxu0 0.0
    %v5874 = vand.u32 %v3595, 4294901760
    %5875 = vmatpush1.msra.mxu0 %v5874
    %5876 = vmatprep.subr.mxu0 0.0
    %v5877 = vand.u32 %v3596, 4294901760
    %5878 = vmatpush1.msra.mxu0 %v5877
    %5879 = vmatprep.subr.mxu0 0.0
    %5880 = vmatpush1.msra.mxu0 0.0
    %5881 = vmatprep.subr.mxu0 0.0
    %5882 = vmatpush1.msra.mxu0 0.0
    %5883 = vmatprep.subr.mxu0 0.0
    %5884 = vmatpush1.msra.mxu0 0.0
    %5885 = vmatprep.subr.mxu0 0.0
    %5886 = vmatpush1.msra.mxu0 0.0
    %5887 = vmatprep.subr.mxu0 0.0
    %5888 = vmatpush1.msra.mxu0 0.0
    %5889 = vmatprep.subr.mxu0 0.0
    %5890 = vmatpush1.msra.mxu0 0.0
    %5891 = vmatprep.subr.mxu0 0.0
    %5892 = vmatpush1.msra.mxu0 0.0
    %5893 = vmatprep.subr.mxu0 0.0
    %5894 = vmatpush1.msra.mxu0 0.0
    %v5895 = vand.u32 %v4990, 4294901760
    %5896 = vmatprep.mubr.f32.mxu0 %v5895
    %v5897 = vand.u32 %v4986, 4294901760
    %5898 = vmatmul.mubr.f32.gmra.mrb[0].mxu0 %v5897
    %v5899 = vpop.f32.mrb[0].mxu0
    %v5900 = vadd.f32 %v5783, %v5899
    %v5901 = vpop.f32.mrb[0].mxu0
    %v5902 = vand.u32 %v4992, 4294901760
    %5903 = vmatprep.mubr.f32.mxu0 %v5902
    %v5904 = vand.u32 %v4987, 4294901760
    %5905 = vmatmul.mubr.f32.gmra.mrb[0].mxu0 %v5904
    %v5906 = vpop.f32.mrb[0].mxu0
    %v5907 = vadd.f32 %v5790, %v5906
    %v5908 = vpop.f32.mrb[0].mxu0
    %v5909 = vand.u32 %v4994, 4294901760
    %5910 = vmatprep.mubr.f32.mxu0 %v5909
    %v5911 = vand.u32 %v4988, 4294901760
    %5912 = vmatmul.mubr.f32.gmra.mrb[0].mxu0 %v5911
    %v5913 = vpop.f32.mrb[0].mxu0
    %v5914 = vadd.f32 %v5797, %v5913
    %v5915 = vpop.f32.mrb[0].mxu0
    %v5916 = vand.u32 %v4996, 4294901760
    %5917 = vmatprep.mubr.f32.mxu0 %v5916
    %v5918 = vand.u32 %v4989, 4294901760
    %5919 = vmatmul.mubr.f32.gmra.mrb[0].mxu0 %v5918
    %v5920 = vpop.f32.mrb[0].mxu0
    %v5921 = vadd.f32 %v5804, %v5920
    %v5922 = vpop.f32.mrb[0].mxu0
    %5923 = vdwg.mxu0
    %vm5924 = vcmp.ge.f32.partialorder %v5900, 0.0
    %vm5925 = vcmp.ge.f32.partialorder %v5907, 0.0
    %vm5926 = vcmp.ge.f32.partialorder %v5914, 0.0
    %vm5927 = vcmp.ge.f32.partialorder %v5921, 0.0
    %v5928 = vlaneseq
    %v5929 = vshrl.u32 %v5928, 7
    %v5930 = vsub.s32 3, %v5929
    %v5931 = vrot.slane %v3615, %v5930
    %v5932 = vmul.f32 %v5931, %v5900
    %v5933 = vmul.f32 %v5931, %v5907
    %v5934 = vmul.f32 %v5931, %v5914
    %v5935 = vmul.f32 %v5931, %v5921
    %v5936 = vsel %vm5924, %v5900, %v5932
    %v5937 = vsel %vm5925, %v5907, %v5933
    %v5938 = vsel %vm5926, %v5914, %v5934
    %v5939 = vsel %vm5927, %v5921, %v5935
    %v5940 = vsel %vm1157, %v5936, 0.0
    %5941 = vadd.xlane.f32.xlu0 %v5940
    %v5942 = vpop.xlane.xlu0 %5941
    %v5943 = vsel %vm1157, %v5937, 0.0
    %5944 = vadd.xlane.f32.xlu0 %v5943
    %v5945 = vpop.xlane.xlu0 %5944
    %v5946 = vsel %vm1157, %v5938, 0.0
    %5947 = vadd.xlane.f32.xlu0 %v5946
    %v5948 = vpop.xlane.xlu0 %5947
    %v5949 = vsel %vm1157, %v5939, 0.0
    %5950 = vadd.xlane.f32.xlu0 %v5949
    %v5951 = vpop.xlane.xlu0 %5950
    %v5956 = vrot.slane %v5942, 7
    %v5957 = vrot.slane %v5945, 7
    %v5958 = vsel %vm1174, %v5956, %v5957
    %v5959 = vrot.slane %v5948, 7
    %v5960 = vrot.slane %v5951, 7
    %v5961 = vsel %vm1174, %v5959, %v5960
    %v5966 = vsel %vm1174, 0.0, %v5956
    %v5967 = vsel %vm1174, 0.0, %v5959
    %v5968 = vadd.f32 %v5942, %v5966
    %v5969 = vadd.f32 %v5945, %v5958
    %v5970 = vadd.f32 %v5948, %v5967
    %v5971 = vadd.f32 %v5951, %v5961
    %v5976 = vrot.slane %v5968, 6
    %v5977 = vrot.slane %v5969, 6
    %v5978 = vsel %vm1195, %v5976, %v5977
    %v5979 = vrot.slane %v5970, 6
    %v5980 = vrot.slane %v5971, 6
    %v5981 = vsel %vm1195, %v5979, %v5980
    %v5986 = vsel %vm1195, 0.0, %v5976
    %v5987 = vsel %vm1195, 0.0, %v5979
    %v5988 = vadd.f32 %v5968, %v5986
    %v5989 = vadd.f32 %v5969, %v5978
    %v5990 = vadd.f32 %v5970, %v5987
    %v5991 = vadd.f32 %v5971, %v5981
    %v5996 = vrot.slane %v5988, 4
    %v5997 = vrot.slane %v5989, 4
    %v5998 = vsel %vm1216, %v5996, %v5997
    %v5999 = vrot.slane %v5990, 4
    %v6000 = vrot.slane %v5991, 4
    %v6001 = vsel %vm1216, %v5999, %v6000
    %v6006 = vsel %vm1216, 0.0, %v5996
    %v6007 = vsel %vm1216, 0.0, %v5999
    %v6008 = vadd.f32 %v5988, %v6006
    %v6009 = vadd.f32 %v5989, %v5998
    %v6010 = vadd.f32 %v5990, %v6007
    %v6011 = vadd.f32 %v5991, %v6001
    %v6012 = vadd.f32 %v6008, 0.0
    %v6013 = vadd.f32 %v6009, %v6008
    %v6014 = vadd.f32 %v6010, 0.0
    %v6015 = vadd.f32 %v6011, %v6010
    %v6016 = vmul.f32 %v5936, %v5936
    %v6017 = vmul.f32 %v5937, %v5937
    %v6018 = vmul.f32 %v5938, %v5938
    %v6019 = vmul.f32 %v5939, %v5939
    %v6020 = vsel %vm1157, %v6016, 0.0
    %6021 = vadd.xlane.f32.xlu0 %v6020
    %v6022 = vpop.xlane.xlu0 %6021
    %v6023 = vsel %vm1157, %v6017, 0.0
    %6024 = vadd.xlane.f32.xlu0 %v6023
    %v6025 = vpop.xlane.xlu0 %6024
    %v6026 = vsel %vm1157, %v6018, 0.0
    %6027 = vadd.xlane.f32.xlu0 %v6026
    %v6028 = vpop.xlane.xlu0 %6027
    %v6029 = vsel %vm1157, %v6019, 0.0
    %6030 = vadd.xlane.f32.xlu0 %v6029
    %v6031 = vpop.xlane.xlu0 %6030
    %v6036 = vrot.slane %v6022, 7
    %v6037 = vrot.slane %v6025, 7
    %v6038 = vsel %vm1174, %v6036, %v6037
    %v6039 = vrot.slane %v6028, 7
    %v6040 = vrot.slane %v6031, 7
    %v6041 = vsel %vm1174, %v6039, %v6040
    %v6046 = vsel %vm1174, 0.0, %v6036
    %v6047 = vsel %vm1174, 0.0, %v6039
    %v6048 = vadd.f32 %v6022, %v6046
    %v6049 = vadd.f32 %v6025, %v6038
    %v6050 = vadd.f32 %v6028, %v6047
    %v6051 = vadd.f32 %v6031, %v6041
    %v6056 = vrot.slane %v6048, 6
    %v6057 = vrot.slane %v6049, 6
    %v6058 = vsel %vm1195, %v6056, %v6057
    %v6059 = vrot.slane %v6050, 6
    %v6060 = vrot.slane %v6051, 6
    %v6061 = vsel %vm1195, %v6059, %v6060
    %v6066 = vsel %vm1195, 0.0, %v6056
    %v6067 = vsel %vm1195, 0.0, %v6059
    %v6068 = vadd.f32 %v6048, %v6066
    %v6069 = vadd.f32 %v6049, %v6058
    %v6070 = vadd.f32 %v6050, %v6067
    %v6071 = vadd.f32 %v6051, %v6061
    %v6076 = vrot.slane %v6068, 4
    %v6077 = vrot.slane %v6069, 4
    %v6078 = vsel %vm1216, %v6076, %v6077
    %v6079 = vrot.slane %v6070, 4
    %v6080 = vrot.slane %v6071, 4
    %v6081 = vsel %vm1216, %v6079, %v6080
    %v6086 = vsel %vm1216, 0.0, %v6076
    %v6087 = vsel %vm1216, 0.0, %v6079
    %v6088 = vadd.f32 %v6068, %v6086
    %v6089 = vadd.f32 %v6069, %v6078
    %v6090 = vadd.f32 %v6070, %v6087
    %v6091 = vadd.f32 %v6071, %v6081
    %v6092 = vadd.f32 %v6088, 0.0
    %v6093 = vadd.f32 %v6089, %v6088
    %v6094 = vadd.f32 %v6090, 0.0
    %v6095 = vadd.f32 %v6091, %v6090
    %v6096 = vmul.f32 %v6012, %v1317
    %v6097 = vmul.f32 %v6013, %v1319
    %v6098 = vmul.f32 %v6014, %v1317
    %v6099 = vmul.f32 %v6015, %v1319
    %v6100 = vmul.f32 %v6096, 2.0
    %v6101 = vmul.f32 %v6097, 2.0
    %v6102 = vmul.f32 %v6098, 2.0
    %v6103 = vmul.f32 %v6099, 2.0
    %v6104 = vmul.f32 %v6100, %v6012
    %v6105 = vmul.f32 %v6101, %v6013
    %v6106 = vmul.f32 %v6102, %v6014
    %v6107 = vmul.f32 %v6103, %v6015
    %v6108 = vsub.f32 %v6092, %v6104
    %v6109 = vsub.f32 %v6093, %v6105
    %v6110 = vsub.f32 %v6094, %v6106
    %v6111 = vsub.f32 %v6095, %v6107
    %v6112 = vmul.f32 %v6108, %v1317
    %v6113 = vmul.f32 %v6109, %v1319
    %v6114 = vmul.f32 %v6110, %v1317
    %v6115 = vmul.f32 %v6111, %v1319
    %v6116 = vmul.f32 %v6096, %v6096
    %v6117 = vmul.f32 %v6097, %v6097
    %v6118 = vmul.f32 %v6098, %v6098
    %v6119 = vmul.f32 %v6099, %v6099
    %v6120 = vadd.f32 %v6112, %v6116
    %v6121 = vadd.f32 %v6113, %v6117
    %v6122 = vadd.f32 %v6114, %v6118
    %v6123 = vadd.f32 %v6115, %v6119
    %v6124 = vadd.f32 %v6120, 1e-05
    %v6125 = vadd.f32 %v6121, 1e-05
    %v6126 = vadd.f32 %v6122, 1e-05
    %v6127 = vadd.f32 %v6123, 1e-05
    %v6128 = vrsqrt.pop %v6124
    %v6129 = vmul.f32 %v6124, %v6128
    %vm6130 = vcmp.eq.f32.partialorder %v6124, inf
    %v6131 = vsel %vm6130, %v6124, %v6129
    %vm6132 = vcmp.eq.f32.partialorder %v6124, 0.0
    %v6133 = vand.u32 %v6124, 2147483648
    %v6134 = vsel %vm6132, %v6133, %v6131
    %v6135 = vrsqrt.pop %v6125
    %v6136 = vmul.f32 %v6125, %v6135
    %vm6137 = vcmp.eq.f32.partialorder %v6125, inf
    %v6138 = vsel %vm6137, %v6125, %v6136
    %vm6139 = vcmp.eq.f32.partialorder %v6125, 0.0
    %v6140 = vand.u32 %v6125, 2147483648
    %v6141 = vsel %vm6139, %v6140, %v6138
    %v6142 = vrsqrt.pop %v6126
    %v6143 = vmul.f32 %v6126, %v6142
    %vm6144 = vcmp.eq.f32.partialorder %v6126, inf
    %v6145 = vsel %vm6144, %v6126, %v6143
    %vm6146 = vcmp.eq.f32.partialorder %v6126, 0.0
    %v6147 = vand.u32 %v6126, 2147483648
    %v6148 = vsel %vm6146, %v6147, %v6145
    %v6149 = vrsqrt.pop %v6127
    %v6150 = vmul.f32 %v6127, %v6149
    %vm6151 = vcmp.eq.f32.partialorder %v6127, inf
    %v6152 = vsel %vm6151, %v6127, %v6150
    %vm6153 = vcmp.eq.f32.partialorder %v6127, 0.0
    %v6154 = vand.u32 %v6127, 2147483648
    %v6155 = vsel %vm6153, %v6154, %v6152
    %6157 = vset.pattern.permute.xlu0 0
    %6158 = vperm.xlu0 %6157, %v6096
    %v6159 = vpop.permute.xlu0 %6158
    %6162 = vset.pattern.permute.xlu0 0
    %6163 = vperm.xlu0 %6162, %v6097
    %v6164 = vpop.permute.xlu0 %6163
    %6167 = vset.pattern.permute.xlu0 0
    %6168 = vperm.xlu0 %6167, %v6098
    %v6169 = vpop.permute.xlu0 %6168
    %6172 = vset.pattern.permute.xlu0 0
    %6173 = vperm.xlu0 %6172, %v6099
    %v6174 = vpop.permute.xlu0 %6173
    %v6176 = vsub.f32 %v5936, %v6159
    %v6177 = vsub.f32 %v5937, %v6164
    %v6178 = vsub.f32 %v5938, %v6169
    %v6179 = vsub.f32 %v5939, %v6174
    %6181 = vset.pattern.permute.xlu0 0
    %6182 = vperm.xlu0 %6181, %v6134
    %v6183 = vpop.permute.xlu0 %6182
    %6186 = vset.pattern.permute.xlu0 0
    %6187 = vperm.xlu0 %6186, %v6141
    %v6188 = vpop.permute.xlu0 %6187
    %6191 = vset.pattern.permute.xlu0 0
    %6192 = vperm.xlu0 %6191, %v6148
    %v6193 = vpop.permute.xlu0 %6192
    %6196 = vset.pattern.permute.xlu0 0
    %6197 = vperm.xlu0 %6196, %v6155
    %v6198 = vpop.permute.xlu0 %6197
    %v6200 = vrcp.pop %v6183
    %v6201 = vmul.f32 %v6176, %v6200
    %v6202 = vrcp.pop %v6188
    %v6203 = vmul.f32 %v6177, %v6202
    %v6204 = vrcp.pop %v6193
    %v6205 = vmul.f32 %v6178, %v6204
    %v6206 = vrcp.pop %v6198
    %v6207 = vmul.f32 %v6179, %v6206
    %v6208 = vlaneseq
    %v6209 = vshrl.u32 %v6208, 7
    %v6210 = vsub.s32 4, %v6209
    %v6211 = vrot.slane %v3615, %v6210
    %v6212 = vmul.f32 %v6201, %v6211
    %v6213 = vmul.f32 %v6203, %v6211
    %v6214 = vmul.f32 %v6205, %v6211
    %v6215 = vmul.f32 %v6207, %v6211
    %v6216 = vlaneseq
    %v6217 = vshrl.u32 %v6216, 7
    %v6218 = vsub.s32 5, %v6217
    %v6219 = vrot.slane %v3615, %v6218
    %v6220 = vadd.f32 %v6212, %v6219
    %v6221 = vadd.f32 %v6213, %v6219
    %v6222 = vadd.f32 %v6214, %v6219
    %v6223 = vadd.f32 %v6215, %v6219
    %v6225 = vsel %vm1157, %v6220, 0
    %v6228 = vsel %vm1157, %v6221, 0
    %v6231 = vsel %vm1157, %v6222, 0
    %v6234 = vsel %vm1157, %v6223, 0
    %v6236 = vand.u32 %v3599, 4294901760
    %6237 = vmatprep.subr.mxu0 %v6236
    %v6238 = vand.u32 %v3598, 4294901760
    %6239 = vmatpush1.msra.mxu0 %v6238
    %v6240 = vand.u32 %v3601, 4294901760
    %6241 = vmatprep.subr.mxu0 %v6240
    %v6242 = vand.u32 %v3600, 4294901760
    %6243 = vmatpush1.msra.mxu0 %v6242
    %v6244 = vand.u32 %v3603, 4294901760
    %6245 = vmatprep.subr.mxu0 %v6244
    %v6246 = vand.u32 %v3602, 4294901760
    %6247 = vmatpush1.msra.mxu0 %v6246
    %v6248 = vand.u32 %v3605, 4294901760
    %6249 = vmatprep.subr.mxu0 %v6248
    %v6250 = vand.u32 %v3604, 4294901760
    %6251 = vmatpush1.msra.mxu0 %v6250
    %v6252 = vand.u32 %v3607, 4294901760
    %6253 = vmatprep.subr.mxu0 %v6252
    %v6254 = vand.u32 %v3606, 4294901760
    %6255 = vmatpush1.msra.mxu0 %v6254
    %v6256 = vand.u32 %v3609, 4294901760
    %6257 = vmatprep.subr.mxu0 %v6256
    %v6258 = vand.u32 %v3608, 4294901760
    %6259 = vmatpush1.msra.mxu0 %v6258
    %v6260 = vand.u32 %v3611, 4294901760
    %6261 = vmatprep.subr.mxu0 %v6260
    %v6262 = vand.u32 %v3610, 4294901760
    %6263 = vmatpush1.msra.mxu0 %v6262
    %v6264 = vand.u32 %v3613, 4294901760
    %6265 = vmatprep.subr.mxu0 %v6264
    %v6266 = vand.u32 %v3612, 4294901760
    %6267 = vmatpush1.msra.mxu0 %v6266
    %6268 = vmatprep.subr.mxu0 0.0
    %6269 = vmatpush1.msra.mxu0 0.0
    %6270 = vmatprep.subr.mxu0 0.0
    %6271 = vmatpush1.msra.mxu0 0.0
    %6272 = vmatprep.subr.mxu0 0.0
    %6273 = vmatpush1.msra.mxu0 0.0
    %6274 = vmatprep.subr.mxu0 0.0
    %6275 = vmatpush1.msra.mxu0 0.0
    %6276 = vmatprep.subr.mxu0 0.0
    %6277 = vmatpush1.msra.mxu0 0.0
    %6278 = vmatprep.subr.mxu0 0.0
    %6279 = vmatpush1.msra.mxu0 0.0
    %6280 = vmatprep.subr.mxu0 0.0
    %6281 = vmatpush1.msra.mxu0 0.0
    %6282 = vmatprep.subr.mxu0 0.0
    %6283 = vmatpush1.msra.mxu0 0.0
    %6284 = vmatprep.subr.mxu0 0.0
    %6285 = vmatpush1.msra.mxu0 0.0
    %6286 = vmatprep.subr.mxu0 0.0
    %6287 = vmatpush1.msra.mxu0 0.0
    %6288 = vmatprep.subr.mxu0 0.0
    %6289 = vmatpush1.msra.mxu0 0.0
    %6290 = vmatprep.subr.mxu0 0.0
    %6291 = vmatpush1.msra.mxu0 0.0
    %6292 = vmatprep.subr.mxu0 0.0
    %6293 = vmatpush1.msra.mxu0 0.0
    %6294 = vmatprep.subr.mxu0 0.0
    %6295 = vmatpush1.msra.mxu0 0.0
    %6296 = vmatprep.subr.mxu0 0.0
    %6297 = vmatpush1.msra.mxu0 0.0
    %6298 = vmatprep.subr.mxu0 0.0
    %6299 = vmatpush1.msra.mxu0 0.0
    %6300 = vmatprep.subr.mxu0 0.0
    %6301 = vmatpush1.msra.mxu0 0.0
    %6302 = vmatprep.subr.mxu0 0.0
    %6303 = vmatpush1.msra.mxu0 0.0
    %6304 = vmatprep.subr.mxu0 0.0
    %6305 = vmatpush1.msra.mxu0 0.0
    %6306 = vmatprep.subr.mxu0 0.0
    %6307 = vmatpush1.msra.mxu0 0.0
    %6308 = vmatprep.subr.mxu0 0.0
    %6309 = vmatpush1.msra.mxu0 0.0
    %6310 = vmatprep.subr.mxu0 0.0
    %6311 = vmatpush1.msra.mxu0 0.0
    %6312 = vmatprep.subr.mxu0 0.0
    %6313 = vmatpush1.msra.mxu0 0.0
    %6314 = vmatprep.subr.mxu0 0.0
    %6315 = vmatpush1.msra.mxu0 0.0
    %6316 = vmatprep.mubr.f32.mxu0 0.0
    %v6317 = vand.u32 %v6225, 4294901760
    %v6318 = vsub.f32 %v6225, %v6317
    %v6319 = vand.u32 %v6318, 4294901760
    %v6320 = vsub.f32 %v6318, %v6319
    %v6321 = vand.u32 %v6320, 4294901760
    %6322 = vmatmul.mubr.f32.gmra.mrb[0].mxu0 %v6321
    %v6323 = vpop.f32.mrb[0].mxu0
    %v6324 = vadd.f32 0.0, %v6323
    %v6325 = vpop.f32.mrb[0].mxu0
    %v6326 = vadd.f32 0.0, %v6325
    %6327 = vmatprep.mubr.f32.mxu0 0.0
    %v6328 = vand.u32 %v6228, 4294901760
    %v6329 = vsub.f32 %v6228, %v6328
    %v6330 = vand.u32 %v6329, 4294901760
    %v6331 = vsub.f32 %v6329, %v6330
    %v6332 = vand.u32 %v6331, 4294901760
    %6333 = vmatmul.mubr.f32.gmra.mrb[0].mxu0 %v6332
    %v6334 = vpop.f32.mrb[0].mxu0
    %v6335 = vadd.f32 0.0, %v6334
    %v6336 = vpop.f32.mrb[0].mxu0
    %v6337 = vadd.f32 0.0, %v6336
    %6338 = vmatprep.mubr.f32.mxu0 0.0
    %v6339 = vand.u32 %v6231, 4294901760
    %v6340 = vsub.f32 %v6231, %v6339
    %v6341 = vand.u32 %v6340, 4294901760
    %v6342 = vsub.f32 %v6340, %v6341
    %v6343 = vand.u32 %v6342, 4294901760
    %6344 = vmatmul.mubr.f32.gmra.mrb[0].mxu0 %v6343
    %v6345 = vpop.f32.mrb[0].mxu0
    %v6346 = vadd.f32 0.0, %v6345
    %v6347 = vpop.f32.mrb[0].mxu0
    %v6348 = vadd.f32 0.0, %v6347
    %6349 = vmatprep.mubr.f32.mxu0 0.0
    %v6350 = vand.u32 %v6234, 4294901760
    %v6351 = vsub.f32 %v6234, %v6350
    %v6352 = vand.u32 %v6351, 4294901760
    %v6353 = vsub.f32 %v6351, %v6352
    %v6354 = vand.u32 %v6353, 4294901760
    %6355 = vmatmul.mubr.f32.gmra.mrb[0].mxu0 %v6354
    %v6356 = vpop.f32.mrb[0].mxu0
    %v6357 = vadd.f32 0.0, %v6356
    %v6358 = vpop.f32.mrb[0].mxu0
    %v6359 = vadd.f32 0.0, %v6358
    %6360 = vdwg.mxu0
    %v6361 = vand.u32 %v3599, 4294901760
    %v6362 = vsub.f32 %v3599, %v6361
    %v6363 = vand.u32 %v6362, 4294901760
    %v6364 = vsub.f32 %v6362, %v6363
    %v6365 = vand.u32 %v6364, 4294901760
    %6366 = vmatprep.subr.mxu0 %v6365
    %v6367 = vand.u32 %v3598, 4294901760
    %v6368 = vsub.f32 %v3598, %v6367
    %v6369 = vand.u32 %v6368, 4294901760
    %v6370 = vsub.f32 %v6368, %v6369
    %v6371 = vand.u32 %v6370, 4294901760
    %6372 = vmatpush1.msra.mxu0 %v6371
    %v6373 = vand.u32 %v3601, 4294901760
    %v6374 = vsub.f32 %v3601, %v6373
    %v6375 = vand.u32 %v6374, 4294901760
    %v6376 = vsub.f32 %v6374, %v6375
    %v6377 = vand.u32 %v6376, 4294901760
    %6378 = vmatprep.subr.mxu0 %v6377
    %v6379 = vand.u32 %v3600, 4294901760
    %v6380 = vsub.f32 %v3600, %v6379
    %v6381 = vand.u32 %v6380, 4294901760
    %v6382 = vsub.f32 %v6380, %v6381
    %v6383 = vand.u32 %v6382, 4294901760
    %6384 = vmatpush1.msra.mxu0 %v6383
    %v6385 = vand.u32 %v3603, 4294901760
    %v6386 = vsub.f32 %v3603, %v6385
    %v6387 = vand.u32 %v6386, 4294901760
    %v6388 = vsub.f32 %v6386, %v6387
    %v6389 = vand.u32 %v6388, 4294901760
    %6390 = vmatprep.subr.mxu0 %v6389
    %v6391 = vand.u32 %v3602, 4294901760
    %v6392 = vsub.f32 %v3602, %v6391
    %v6393 = vand.u32 %v6392, 4294901760
    %v6394 = vsub.f32 %v6392, %v6393
    %v6395 = vand.u32 %v6394, 4294901760
    %6396 = vmatpush1.msra.mxu0 %v6395
    %v6397 = vand.u32 %v3605, 4294901760
    %v6398 = vsub.f32 %v3605, %v6397
    %v6399 = vand.u32 %v6398, 4294901760
    %v6400 = vsub.f32 %v6398, %v6399
    %v6401 = vand.u32 %v6400, 4294901760
    %6402 = vmatprep.subr.mxu0 %v6401
    %v6403 = vand.u32 %v3604, 4294901760
    %v6404 = vsub.f32 %v3604, %v6403
    %v6405 = vand.u32 %v6404, 4294901760
    %v6406 = vsub.f32 %v6404, %v6405
    %v6407 = vand.u32 %v6406, 4294901760
    %6408 = vmatpush1.msra.mxu0 %v6407
    %v6409 = vand.u32 %v3607, 4294901760
    %v6410 = vsub.f32 %v3607, %v6409
    %v6411 = vand.u32 %v6410, 4294901760
    %v6412 = vsub.f32 %v6410, %v6411
    %v6413 = vand.u32 %v6412, 4294901760
    %6414 = vmatprep.subr.mxu0 %v6413
    %v6415 = vand.u32 %v3606, 4294901760
    %v6416 = vsub.f32 %v3606, %v6415
    %v6417 = vand.u32 %v6416, 4294901760
    %v6418 = vsub.f32 %v6416, %v6417
    %v6419 = vand.u32 %v6418, 4294901760
    %6420 = vmatpush1.msra.mxu0 %v6419
    %v6421 = vand.u32 %v3609, 4294901760
    %v6422 = vsub.f32 %v3609, %v6421
    %v6423 = vand.u32 %v6422, 4294901760
    %v6424 = vsub.f32 %v6422, %v6423
    %v6425 = vand.u32 %v6424, 4294901760
    %6426 = vmatprep.subr.mxu0 %v6425
    %v6427 = vand.u32 %v3608, 4294901760
    %v6428 = vsub.f32 %v3608, %v6427
    %v6429 = vand.u32 %v6428, 4294901760
    %v6430 = vsub.f32 %v6428, %v6429
    %v6431 = vand.u32 %v6430, 4294901760
    %6432 = vmatpush1.msra.mxu0 %v6431
    %v6433 = vand.u32 %v3611, 4294901760
    %v6434 = vsub.f32 %v3611, %v6433
    %v6435 = vand.u32 %v6434, 4294901760
    %v6436 = vsub.f32 %v6434, %v6435
    %v6437 = vand.u32 %v6436, 4294901760
    %6438 = vmatprep.subr.mxu0 %v6437
    %v6439 = vand.u32 %v3610, 4294901760
    %v6440 = vsub.f32 %v3610, %v6439
    %v6441 = vand.u32 %v6440, 4294901760
    %v6442 = vsub.f32 %v6440, %v6441
    %v6443 = vand.u32 %v6442, 4294901760
    %6444 = vmatpush1.msra.mxu0 %v6443
    %v6445 = vand.u32 %v3613, 4294901760
    %v6446 = vsub.f32 %v3613, %v6445
    %v6447 = vand.u32 %v6446, 4294901760
    %v6448 = vsub.f32 %v6446, %v6447
    %v6449 = vand.u32 %v6448, 4294901760
    %6450 = vmatprep.subr.mxu0 %v6449
    %v6451 = vand.u32 %v3612, 4294901760
    %v6452 = vsub.f32 %v3612, %v6451
    %v6453 = vand.u32 %v6452, 4294901760
    %v6454 = vsub.f32 %v6452, %v6453
    %v6455 = vand.u32 %v6454, 4294901760
    %6456 = vmatpush1.msra.mxu0 %v6455
    %6457 = vmatprep.subr.mxu0 0.0
    %6458 = vmatpush1.msra.mxu0 0.0
    %6459 = vmatprep.subr.mxu0 0.0
    %6460 = vmatpush1.msra.mxu0 0.0
    %6461 = vmatprep.subr.mxu0 0.0
    %6462 = vmatpush1.msra.mxu0 0.0
    %6463 = vmatprep.subr.mxu0 0.0
    %6464 = vmatpush1.msra.mxu0 0.0
    %6465 = vmatprep.subr.mxu0 0.0
    %6466 = vmatpush1.msra.mxu0 0.0
    %6467 = vmatprep.subr.mxu0 0.0
    %6468 = vmatpush1.msra.mxu0 0.0
    %6469 = vmatprep.subr.mxu0 0.0
    %6470 = vmatpush1.msra.mxu0 0.0
    %6471 = vmatprep.subr.mxu0 0.0
    %6472 = vmatpush1.msra.mxu0 0.0
    %6473 = vmatprep.subr.mxu0 0.0
    %6474 = vmatpush1.msra.mxu0 0.0
    %6475 = vmatprep.subr.mxu0 0.0
    %6476 = vmatpush1.msra.mxu0 0.0
    %6477 = vmatprep.subr.mxu0 0.0
    %6478 = vmatpush1.msra.mxu0 0.0
    %6479 = vmatprep.subr.mxu0 0.0
    %6480 = vmatpush1.msra.mxu0 0.0
    %6481 = vmatprep.subr.mxu0 0.0
    %6482 = vmatpush1.msra.mxu0 0.0
    %6483 = vmatprep.subr.mxu0 0.0
    %6484 = vmatpush1.msra.mxu0 0.0
    %6485 = vmatprep.subr.mxu0 0.0
    %6486 = vmatpush1.msra.mxu0 0.0
    %6487 = vmatprep.subr.mxu0 0.0
    %6488 = vmatpush1.msra.mxu0 0.0
    %6489 = vmatprep.subr.mxu0 0.0
    %6490 = vmatpush1.msra.mxu0 0.0
    %6491 = vmatprep.subr.mxu0 0.0
    %6492 = vmatpush1.msra.mxu0 0.0
    %6493 = vmatprep.subr.mxu0 0.0
    %6494 = vmatpush1.msra.mxu0 0.0
    %6495 = vmatprep.subr.mxu0 0.0
    %6496 = vmatpush1.msra.mxu0 0.0
    %6497 = vmatprep.subr.mxu0 0.0
    %6498 = vmatpush1.msra.mxu0 0.0
    %6499 = vmatprep.subr.mxu0 0.0
    %6500 = vmatpush1.msra.mxu0 0.0
    %6501 = vmatprep.subr.mxu0 0.0
    %6502 = vmatpush1.msra.mxu0 0.0
    %6503 = vmatprep.subr.mxu0 0.0
    %6504 = vmatpush1.msra.mxu0 0.0
    %6505 = vmatprep.mubr.f32.mxu0 0.0
    %v6506 = vand.u32 %v6225, 4294901760
    %6507 = vmatmul.mubr.f32.gmra.mrb[0].mxu0 %v6506
    %v6508 = vpop.f32.mrb[0].mxu0
    %v6509 = vadd.f32 %v6324, %v6508
    %v6510 = vpop.f32.mrb[0].mxu0
    %v6511 = vadd.f32 %v6326, %v6510
    %6512 = vmatprep.mubr.f32.mxu0 0.0
    %v6513 = vand.u32 %v6228, 4294901760
    %6514 = vmatmul.mubr.f32.gmra.mrb[0].mxu0 %v6513
    %v6515 = vpop.f32.mrb[0].mxu0
    %v6516 = vadd.f32 %v6335, %v6515
    %v6517 = vpop.f32.mrb[0].mxu0
    %v6518 = vadd.f32 %v6337, %v6517
    %6519 = vmatprep.mubr.f32.mxu0 0.0
    %v6520 = vand.u32 %v6231, 4294901760
    %6521 = vmatmul.mubr.f32.gmra.mrb[0].mxu0 %v6520
    %v6522 = vpop.f32.mrb[0].mxu0
    %v6523 = vadd.f32 %v6346, %v6522
    %v6524 = vpop.f32.mrb[0].mxu0
    %v6525 = vadd.f32 %v6348, %v6524
    %6526 = vmatprep.mubr.f32.mxu0 0.0
    %v6527 = vand.u32 %v6234, 4294901760
    %6528 = vmatmul.mubr.f32.gmra.mrb[0].mxu0 %v6527
    %v6529 = vpop.f32.mrb[0].mxu0
    %v6530 = vadd.f32 %v6357, %v6529
    %v6531 = vpop.f32.mrb[0].mxu0
    %v6532 = vadd.f32 %v6359, %v6531
    %6533 = vdwg.mxu0
    %v6534 = vand.u32 %v3599, 4294901760
    %v6535 = vsub.f32 %v3599, %v6534
    %6536 = vmatprep.subr.mxu0 %v6535
    %v6537 = vand.u32 %v3598, 4294901760
    %v6538 = vsub.f32 %v3598, %v6537
    %6539 = vmatpush1.msra.mxu0 %v6538
    %v6540 = vand.u32 %v3601, 4294901760
    %v6541 = vsub.f32 %v3601, %v6540
    %6542 = vmatprep.subr.mxu0 %v6541
    %v6543 = vand.u32 %v3600, 4294901760
    %v6544 = vsub.f32 %v3600, %v6543
    %6545 = vmatpush1.msra.mxu0 %v6544
    %v6546 = vand.u32 %v3603, 4294901760
    %v6547 = vsub.f32 %v3603, %v6546
    %6548 = vmatprep.subr.mxu0 %v6547
    %v6549 = vand.u32 %v3602, 4294901760
    %v6550 = vsub.f32 %v3602, %v6549
    %6551 = vmatpush1.msra.mxu0 %v6550
    %v6552 = vand.u32 %v3605, 4294901760
    %v6553 = vsub.f32 %v3605, %v6552
    %6554 = vmatprep.subr.mxu0 %v6553
    %v6555 = vand.u32 %v3604, 4294901760
    %v6556 = vsub.f32 %v3604, %v6555
    %6557 = vmatpush1.msra.mxu0 %v6556
    %v6558 = vand.u32 %v3607, 4294901760
    %v6559 = vsub.f32 %v3607, %v6558
    %6560 = vmatprep.subr.mxu0 %v6559
    %v6561 = vand.u32 %v3606, 4294901760
    %v6562 = vsub.f32 %v3606, %v6561
    %6563 = vmatpush1.msra.mxu0 %v6562
    %v6564 = vand.u32 %v3609, 4294901760
    %v6565 = vsub.f32 %v3609, %v6564
    %6566 = vmatprep.subr.mxu0 %v6565
    %v6567 = vand.u32 %v3608, 4294901760
    %v6568 = vsub.f32 %v3608, %v6567
    %6569 = vmatpush1.msra.mxu0 %v6568
    %v6570 = vand.u32 %v3611, 4294901760
    %v6571 = vsub.f32 %v3611, %v6570
    %6572 = vmatprep.subr.mxu0 %v6571
    %v6573 = vand.u32 %v3610, 4294901760
    %v6574 = vsub.f32 %v3610, %v6573
    %6575 = vmatpush1.msra.mxu0 %v6574
    %v6576 = vand.u32 %v3613, 4294901760
    %v6577 = vsub.f32 %v3613, %v6576
    %6578 = vmatprep.subr.mxu0 %v6577
    %v6579 = vand.u32 %v3612, 4294901760
    %v6580 = vsub.f32 %v3612, %v6579
    %6581 = vmatpush1.msra.mxu0 %v6580
    %6582 = vmatprep.subr.mxu0 0.0
    %6583 = vmatpush1.msra.mxu0 0.0
    %6584 = vmatprep.subr.mxu0 0.0
    %6585 = vmatpush1.msra.mxu0 0.0
    %6586 = vmatprep.subr.mxu0 0.0
    %6587 = vmatpush1.msra.mxu0 0.0
    %6588 = vmatprep.subr.mxu0 0.0
    %6589 = vmatpush1.msra.mxu0 0.0
    %6590 = vmatprep.subr.mxu0 0.0
    %6591 = vmatpush1.msra.mxu0 0.0
    %6592 = vmatprep.subr.mxu0 0.0
    %6593 = vmatpush1.msra.mxu0 0.0
    %6594 = vmatprep.subr.mxu0 0.0
    %6595 = vmatpush1.msra.mxu0 0.0
    %6596 = vmatprep.subr.mxu0 0.0
    %6597 = vmatpush1.msra.mxu0 0.0
    %6598 = vmatprep.subr.mxu0 0.0
    %6599 = vmatpush1.msra.mxu0 0.0
    %6600 = vmatprep.subr.mxu0 0.0
    %6601 = vmatpush1.msra.mxu0 0.0
    %6602 = vmatprep.subr.mxu0 0.0
    %6603 = vmatpush1.msra.mxu0 0.0
    %6604 = vmatprep.subr.mxu0 0.0
    %6605 = vmatpush1.msra.mxu0 0.0
    %6606 = vmatprep.subr.mxu0 0.0
    %6607 = vmatpush1.msra.mxu0 0.0
    %6608 = vmatprep.subr.mxu0 0.0
    %6609 = vmatpush1.msra.mxu0 0.0
    %6610 = vmatprep.subr.mxu0 0.0
    %6611 = vmatpush1.msra.mxu0 0.0
    %6612 = vmatprep.subr.mxu0 0.0
    %6613 = vmatpush1.msra.mxu0 0.0
    %6614 = vmatprep.subr.mxu0 0.0
    %6615 = vmatpush1.msra.mxu0 0.0
    %6616 = vmatprep.subr.mxu0 0.0
    %6617 = vmatpush1.msra.mxu0 0.0
    %6618 = vmatprep.subr.mxu0 0.0
    %6619 = vmatpush1.msra.mxu0 0.0
    %6620 = vmatprep.subr.mxu0 0.0
    %6621 = vmatpush1.msra.mxu0 0.0
    %6622 = vmatprep.subr.mxu0 0.0
    %6623 = vmatpush1.msra.mxu0 0.0
    %6624 = vmatprep.subr.mxu0 0.0
    %6625 = vmatpush1.msra.mxu0 0.0
    %6626 = vmatprep.subr.mxu0 0.0
    %6627 = vmatpush1.msra.mxu0 0.0
    %6628 = vmatprep.subr.mxu0 0.0
    %6629 = vmatpush1.msra.mxu0 0.0
    %6630 = vmatprep.mubr.f32.mxu0 0.0
    %v6631 = vand.u32 %v6225, 4294901760
    %v6632 = vsub.f32 %v6225, %v6631
    %6633 = vmatmul.mubr.f32.gmra.mrb[0].mxu0 %v6632
    %v6634 = vpop.f32.mrb[0].mxu0
    %v6635 = vadd.f32 %v6509, %v6634
    %v6636 = vpop.f32.mrb[0].mxu0
    %v6637 = vadd.f32 %v6511, %v6636
    %6638 = vmatprep.mubr.f32.mxu0 0.0
    %v6639 = vand.u32 %v6228, 4294901760
    %v6640 = vsub.f32 %v6228, %v6639
    %6641 = vmatmul.mubr.f32.gmra.mrb[0].mxu0 %v6640
    %v6642 = vpop.f32.mrb[0].mxu0
    %v6643 = vadd.f32 %v6516, %v6642
    %v6644 = vpop.f32.mrb[0].mxu0
    %v6645 = vadd.f32 %v6518, %v6644
    %6646 = vmatprep.mubr.f32.mxu0 0.0
    %v6647 = vand.u32 %v6231, 4294901760
    %v6648 = vsub.f32 %v6231, %v6647
    %6649 = vmatmul.mubr.f32.gmra.mrb[0].mxu0 %v6648
    %v6650 = vpop.f32.mrb[0].mxu0
    %v6651 = vadd.f32 %v6523, %v6650
    %v6652 = vpop.f32.mrb[0].mxu0
    %v6653 = vadd.f32 %v6525, %v6652
    %6654 = vmatprep.mubr.f32.mxu0 0.0
    %v6655 = vand.u32 %v6234, 4294901760
    %v6656 = vsub.f32 %v6234, %v6655
    %6657 = vmatmul.mubr.f32.gmra.mrb[0].mxu0 %v6656
    %v6658 = vpop.f32.mrb[0].mxu0
    %v6659 = vadd.f32 %v6530, %v6658
    %v6660 = vpop.f32.mrb[0].mxu0
    %v6661 = vadd.f32 %v6532, %v6660
    %6662 = vdwg.mxu0
    %v6663 = vand.u32 %v3599, 4294901760
    %6664 = vmatprep.subr.mxu0 %v6663
    %v6665 = vand.u32 %v3598, 4294901760
    %6666 = vmatpush1.msra.mxu0 %v6665
    %v6667 = vand.u32 %v3601, 4294901760
    %6668 = vmatprep.subr.mxu0 %v6667
    %v6669 = vand.u32 %v3600, 4294901760
    %6670 = vmatpush1.msra.mxu0 %v6669
    %v6671 = vand.u32 %v3603, 4294901760
    %6672 = vmatprep.subr.mxu0 %v6671
    %v6673 = vand.u32 %v3602, 4294901760
    %6674 = vmatpush1.msra.mxu0 %v6673
    %v6675 = vand.u32 %v3605, 4294901760
    %6676 = vmatprep.subr.mxu0 %v6675
    %v6677 = vand.u32 %v3604, 4294901760
    %6678 = vmatpush1.msra.mxu0 %v6677
    %v6679 = vand.u32 %v3607, 4294901760
    %6680 = vmatprep.subr.mxu0 %v6679
    %v6681 = vand.u32 %v3606, 4294901760
    %6682 = vmatpush1.msra.mxu0 %v6681
    %v6683 = vand.u32 %v3609, 4294901760
    %6684 = vmatprep.subr.mxu0 %v6683
    %v6685 = vand.u32 %v3608, 4294901760
    %6686 = vmatpush1.msra.mxu0 %v6685
    %v6687 = vand.u32 %v3611, 4294901760
    %6688 = vmatprep.subr.mxu0 %v6687
    %v6689 = vand.u32 %v3610, 4294901760
    %6690 = vmatpush1.msra.mxu0 %v6689
    %v6691 = vand.u32 %v3613, 4294901760
    %6692 = vmatprep.subr.mxu0 %v6691
    %v6693 = vand.u32 %v3612, 4294901760
    %6694 = vmatpush1.msra.mxu0 %v6693
    %6695 = vmatprep.subr.mxu0 0.0
    %6696 = vmatpush1.msra.mxu0 0.0
    %6697 = vmatprep.subr.mxu0 0.0
    %6698 = vmatpush1.msra.mxu0 0.0
    %6699 = vmatprep.subr.mxu0 0.0
    %6700 = vmatpush1.msra.mxu0 0.0
    %6701 = vmatprep.subr.mxu0 0.0
    %6702 = vmatpush1.msra.mxu0 0.0
    %6703 = vmatprep.subr.mxu0 0.0
    %6704 = vmatpush1.msra.mxu0 0.0
    %6705 = vmatprep.subr.mxu0 0.0
    %6706 = vmatpush1.msra.mxu0 0.0
    %6707 = vmatprep.subr.mxu0 0.0
    %6708 = vmatpush1.msra.mxu0 0.0
    %6709 = vmatprep.subr.mxu0 0.0
    %6710 = vmatpush1.msra.mxu0 0.0
    %6711 = vmatprep.subr.mxu0 0.0
    %6712 = vmatpush1.msra.mxu0 0.0
    %6713 = vmatprep.subr.mxu0 0.0
    %6714 = vmatpush1.msra.mxu0 0.0
    %6715 = vmatprep.subr.mxu0 0.0
    %6716 = vmatpush1.msra.mxu0 0.0
    %6717 = vmatprep.subr.mxu0 0.0
    %6718 = vmatpush1.msra.mxu0 0.0
    %6719 = vmatprep.subr.mxu0 0.0
    %6720 = vmatpush1.msra.mxu0 0.0
    %6721 = vmatprep.subr.mxu0 0.0
    %6722 = vmatpush1.msra.mxu0 0.0
    %6723 = vmatprep.subr.mxu0 0.0
    %6724 = vmatpush1.msra.mxu0 0.0
    %6725 = vmatprep.subr.mxu0 0.0
    %6726 = vmatpush1.msra.mxu0 0.0
    %6727 = vmatprep.subr.mxu0 0.0
    %6728 = vmatpush1.msra.mxu0 0.0
    %6729 = vmatprep.subr.mxu0 0.0
    %6730 = vmatpush1.msra.mxu0 0.0
    %6731 = vmatprep.subr.mxu0 0.0
    %6732 = vmatpush1.msra.mxu0 0.0
    %6733 = vmatprep.subr.mxu0 0.0
    %6734 = vmatpush1.msra.mxu0 0.0
    %6735 = vmatprep.subr.mxu0 0.0
    %6736 = vmatpush1.msra.mxu0 0.0
    %6737 = vmatprep.subr.mxu0 0.0
    %6738 = vmatpush1.msra.mxu0 0.0
    %6739 = vmatprep.subr.mxu0 0.0
    %6740 = vmatpush1.msra.mxu0 0.0
    %6741 = vmatprep.subr.mxu0 0.0
    %6742 = vmatpush1.msra.mxu0 0.0
    %6743 = vmatprep.mubr.f32.mxu0 0.0
    %v6744 = vand.u32 %v6225, 4294901760
    %v6745 = vsub.f32 %v6225, %v6744
    %v6746 = vand.u32 %v6745, 4294901760
    %6747 = vmatmul.mubr.f32.gmra.mrb[0].mxu0 %v6746
    %v6748 = vpop.f32.mrb[0].mxu0
    %v6749 = vadd.f32 %v6635, %v6748
    %v6750 = vpop.f32.mrb[0].mxu0
    %v6751 = vadd.f32 %v6637, %v6750
    %6752 = vmatprep.mubr.f32.mxu0 0.0
    %v6753 = vand.u32 %v6228, 4294901760
    %v6754 = vsub.f32 %v6228, %v6753
    %v6755 = vand.u32 %v6754, 4294901760
    %6756 = vmatmul.mubr.f32.gmra.mrb[0].mxu0 %v6755
    %v6757 = vpop.f32.mrb[0].mxu0
    %v6758 = vadd.f32 %v6643, %v6757
    %v6759 = vpop.f32.mrb[0].mxu0
    %v6760 = vadd.f32 %v6645, %v6759
    %6761 = vmatprep.mubr.f32.mxu0 0.0
    %v6762 = vand.u32 %v6231, 4294901760
    %v6763 = vsub.f32 %v6231, %v6762
    %v6764 = vand.u32 %v6763, 4294901760
    %6765 = vmatmul.mubr.f32.gmra.mrb[0].mxu0 %v6764
    %v6766 = vpop.f32.mrb[0].mxu0
    %v6767 = vadd.f32 %v6651, %v6766
    %v6768 = vpop.f32.mrb[0].mxu0
    %v6769 = vadd.f32 %v6653, %v6768
    %6770 = vmatprep.mubr.f32.mxu0 0.0
    %v6771 = vand.u32 %v6234, 4294901760
    %v6772 = vsub.f32 %v6234, %v6771
    %v6773 = vand.u32 %v6772, 4294901760
    %6774 = vmatmul.mubr.f32.gmra.mrb[0].mxu0 %v6773
    %v6775 = vpop.f32.mrb[0].mxu0
    %v6776 = vadd.f32 %v6659, %v6775
    %v6777 = vpop.f32.mrb[0].mxu0
    %v6778 = vadd.f32 %v6661, %v6777
    %6779 = vdwg.mxu0
    %v6780 = vand.u32 %v3599, 4294901760
    %v6781 = vsub.f32 %v3599, %v6780
    %v6782 = vand.u32 %v6781, 4294901760
    %6783 = vmatprep.subr.mxu0 %v6782
    %v6784 = vand.u32 %v3598, 4294901760
    %v6785 = vsub.f32 %v3598, %v6784
    %v6786 = vand.u32 %v6785, 4294901760
    %6787 = vmatpush1.msra.mxu0 %v6786
    %v6788 = vand.u32 %v3601, 4294901760
    %v6789 = vsub.f32 %v3601, %v6788
    %v6790 = vand.u32 %v6789, 4294901760
    %6791 = vmatprep.subr.mxu0 %v6790
    %v6792 = vand.u32 %v3600, 4294901760
    %v6793 = vsub.f32 %v3600, %v6792
    %v6794 = vand.u32 %v6793, 4294901760
    %6795 = vmatpush1.msra.mxu0 %v6794
    %v6796 = vand.u32 %v3603, 4294901760
    %v6797 = vsub.f32 %v3603, %v6796
    %v6798 = vand.u32 %v6797, 4294901760
    %6799 = vmatprep.subr.mxu0 %v6798
    %v6800 = vand.u32 %v3602, 4294901760
    %v6801 = vsub.f32 %v3602, %v6800
    %v6802 = vand.u32 %v6801, 4294901760
    %6803 = vmatpush1.msra.mxu0 %v6802
    %v6804 = vand.u32 %v3605, 4294901760
    %v6805 = vsub.f32 %v3605, %v6804
    %v6806 = vand.u32 %v6805, 4294901760
    %6807 = vmatprep.subr.mxu0 %v6806
    %v6808 = vand.u32 %v3604, 4294901760
    %v6809 = vsub.f32 %v3604, %v6808
    %v6810 = vand.u32 %v6809, 4294901760
    %6811 = vmatpush1.msra.mxu0 %v6810
    %v6812 = vand.u32 %v3607, 4294901760
    %v6813 = vsub.f32 %v3607, %v6812
    %v6814 = vand.u32 %v6813, 4294901760
    %6815 = vmatprep.subr.mxu0 %v6814
    %v6816 = vand.u32 %v3606, 4294901760
    %v6817 = vsub.f32 %v3606, %v6816
    %v6818 = vand.u32 %v6817, 4294901760
    %6819 = vmatpush1.msra.mxu0 %v6818
    %v6820 = vand.u32 %v3609, 4294901760
    %v6821 = vsub.f32 %v3609, %v6820
    %v6822 = vand.u32 %v6821, 4294901760
    %6823 = vmatprep.subr.mxu0 %v6822
    %v6824 = vand.u32 %v3608, 4294901760
    %v6825 = vsub.f32 %v3608, %v6824
    %v6826 = vand.u32 %v6825, 4294901760
    %6827 = vmatpush1.msra.mxu0 %v6826
    %v6828 = vand.u32 %v3611, 4294901760
    %v6829 = vsub.f32 %v3611, %v6828
    %v6830 = vand.u32 %v6829, 4294901760
    %6831 = vmatprep.subr.mxu0 %v6830
    %v6832 = vand.u32 %v3610, 4294901760
    %v6833 = vsub.f32 %v3610, %v6832
    %v6834 = vand.u32 %v6833, 4294901760
    %6835 = vmatpush1.msra.mxu0 %v6834
    %v6836 = vand.u32 %v3613, 4294901760
    %v6837 = vsub.f32 %v3613, %v6836
    %v6838 = vand.u32 %v6837, 4294901760
    %6839 = vmatprep.subr.mxu0 %v6838
    %v6840 = vand.u32 %v3612, 4294901760
    %v6841 = vsub.f32 %v3612, %v6840
    %v6842 = vand.u32 %v6841, 4294901760
    %6843 = vmatpush1.msra.mxu0 %v6842
    %6844 = vmatprep.subr.mxu0 0.0
    %6845 = vmatpush1.msra.mxu0 0.0
    %6846 = vmatprep.subr.mxu0 0.0
    %6847 = vmatpush1.msra.mxu0 0.0
    %6848 = vmatprep.subr.mxu0 0.0
    %6849 = vmatpush1.msra.mxu0 0.0
    %6850 = vmatprep.subr.mxu0 0.0
    %6851 = vmatpush1.msra.mxu0 0.0
    %6852 = vmatprep.subr.mxu0 0.0
    %6853 = vmatpush1.msra.mxu0 0.0
    %6854 = vmatprep.subr.mxu0 0.0
    %6855 = vmatpush1.msra.mxu0 0.0
    %6856 = vmatprep.subr.mxu0 0.0
    %6857 = vmatpush1.msra.mxu0 0.0
    %6858 = vmatprep.subr.mxu0 0.0
    %6859 = vmatpush1.msra.mxu0 0.0
    %6860 = vmatprep.subr.mxu0 0.0
    %6861 = vmatpush1.msra.mxu0 0.0
    %6862 = vmatprep.subr.mxu0 0.0
    %6863 = vmatpush1.msra.mxu0 0.0
    %6864 = vmatprep.subr.mxu0 0.0
    %6865 = vmatpush1.msra.mxu0 0.0
    %6866 = vmatprep.subr.mxu0 0.0
    %6867 = vmatpush1.msra.mxu0 0.0
    %6868 = vmatprep.subr.mxu0 0.0
    %6869 = vmatpush1.msra.mxu0 0.0
    %6870 = vmatprep.subr.mxu0 0.0
    %6871 = vmatpush1.msra.mxu0 0.0
    %6872 = vmatprep.subr.mxu0 0.0
    %6873 = vmatpush1.msra.mxu0 0.0
    %6874 = vmatprep.subr.mxu0 0.0
    %6875 = vmatpush1.msra.mxu0 0.0
    %6876 = vmatprep.subr.mxu0 0.0
    %6877 = vmatpush1.msra.mxu0 0.0
    %6878 = vmatprep.subr.mxu0 0.0
    %6879 = vmatpush1.msra.mxu0 0.0
    %6880 = vmatprep.subr.mxu0 0.0
    %6881 = vmatpush1.msra.mxu0 0.0
    %6882 = vmatprep.subr.mxu0 0.0
    %6883 = vmatpush1.msra.mxu0 0.0
    %6884 = vmatprep.subr.mxu0 0.0
    %6885 = vmatpush1.msra.mxu0 0.0
    %6886 = vmatprep.subr.mxu0 0.0
    %6887 = vmatpush1.msra.mxu0 0.0
    %6888 = vmatprep.subr.mxu0 0.0
    %6889 = vmatpush1.msra.mxu0 0.0
    %6890 = vmatprep.subr.mxu0 0.0
    %6891 = vmatpush1.msra.mxu0 0.0
    %6892 = vmatprep.mubr.f32.mxu0 0.0
    %v6893 = vand.u32 %v6225, 4294901760
    %6894 = vmatmul.mubr.f32.gmra.mrb[0].mxu0 %v6893
    %v6895 = vpop.f32.mrb[0].mxu0
    %v6896 = vadd.f32 %v6749, %v6895
    %v6897 = vpop.f32.mrb[0].mxu0
    %v6898 = vadd.f32 %v6751, %v6897
    %6899 = vmatprep.mubr.f32.mxu0 0.0
    %v6900 = vand.u32 %v6228, 4294901760
    %6901 = vmatmul.mubr.f32.gmra.mrb[0].mxu0 %v6900
    %v6902 = vpop.f32.mrb[0].mxu0
    %v6903 = vadd.f32 %v6758, %v6902
    %v6904 = vpop.f32.mrb[0].mxu0
    %v6905 = vadd.f32 %v6760, %v6904
    %6906 = vmatprep.mubr.f32.mxu0 0.0
    %v6907 = vand.u32 %v6231, 4294901760
    %6908 = vmatmul.mubr.f32.gmra.mrb[0].mxu0 %v6907
    %v6909 = vpop.f32.mrb[0].mxu0
    %v6910 = vadd.f32 %v6767, %v6909
    %v6911 = vpop.f32.mrb[0].mxu0
    %v6912 = vadd.f32 %v6769, %v6911
    %6913 = vmatprep.mubr.f32.mxu0 0.0
    %v6914 = vand.u32 %v6234, 4294901760
    %6915 = vmatmul.mubr.f32.gmra.mrb[0].mxu0 %v6914
    %v6916 = vpop.f32.mrb[0].mxu0
    %v6917 = vadd.f32 %v6776, %v6916
    %v6918 = vpop.f32.mrb[0].mxu0
    %v6919 = vadd.f32 %v6778, %v6918
    %6920 = vdwg.mxu0
    %v6921 = vand.u32 %v3599, 4294901760
    %6922 = vmatprep.subr.mxu0 %v6921
    %v6923 = vand.u32 %v3598, 4294901760
    %6924 = vmatpush1.msra.mxu0 %v6923
    %v6925 = vand.u32 %v3601, 4294901760
    %6926 = vmatprep.subr.mxu0 %v6925
    %v6927 = vand.u32 %v3600, 4294901760
    %6928 = vmatpush1.msra.mxu0 %v6927
    %v6929 = vand.u32 %v3603, 4294901760
    %6930 = vmatprep.subr.mxu0 %v6929
    %v6931 = vand.u32 %v3602, 4294901760
    %6932 = vmatpush1.msra.mxu0 %v6931
    %v6933 = vand.u32 %v3605, 4294901760
    %6934 = vmatprep.subr.mxu0 %v6933
    %v6935 = vand.u32 %v3604, 4294901760
    %6936 = vmatpush1.msra.mxu0 %v6935
    %v6937 = vand.u32 %v3607, 4294901760
    %6938 = vmatprep.subr.mxu0 %v6937
    %v6939 = vand.u32 %v3606, 4294901760
    %6940 = vmatpush1.msra.mxu0 %v6939
    %v6941 = vand.u32 %v3609, 4294901760
    %6942 = vmatprep.subr.mxu0 %v6941
    %v6943 = vand.u32 %v3608, 4294901760
    %6944 = vmatpush1.msra.mxu0 %v6943
    %v6945 = vand.u32 %v3611, 4294901760
    %6946 = vmatprep.subr.mxu0 %v6945
    %v6947 = vand.u32 %v3610, 4294901760
    %6948 = vmatpush1.msra.mxu0 %v6947
    %v6949 = vand.u32 %v3613, 4294901760
    %6950 = vmatprep.subr.mxu0 %v6949
    %v6951 = vand.u32 %v3612, 4294901760
    %6952 = vmatpush1.msra.mxu0 %v6951
    %6953 = vmatprep.subr.mxu0 0.0
    %6954 = vmatpush1.msra.mxu0 0.0
    %6955 = vmatprep.subr.mxu0 0.0
    %6956 = vmatpush1.msra.mxu0 0.0
    %6957 = vmatprep.subr.mxu0 0.0
    %6958 = vmatpush1.msra.mxu0 0.0
    %6959 = vmatprep.subr.mxu0 0.0
    %6960 = vmatpush1.msra.mxu0 0.0
    %6961 = vmatprep.subr.mxu0 0.0
    %6962 = vmatpush1.msra.mxu0 0.0
    %6963 = vmatprep.subr.mxu0 0.0
    %6964 = vmatpush1.msra.mxu0 0.0
    %6965 = vmatprep.subr.mxu0 0.0
    %6966 = vmatpush1.msra.mxu0 0.0
    %6967 = vmatprep.subr.mxu0 0.0
    %6968 = vmatpush1.msra.mxu0 0.0
    %6969 = vmatprep.subr.mxu0 0.0
    %6970 = vmatpush1.msra.mxu0 0.0
    %6971 = vmatprep.subr.mxu0 0.0
    %6972 = vmatpush1.msra.mxu0 0.0
    %6973 = vmatprep.subr.mxu0 0.0
    %6974 = vmatpush1.msra.mxu0 0.0
    %6975 = vmatprep.subr.mxu0 0.0
    %6976 = vmatpush1.msra.mxu0 0.0
    %6977 = vmatprep.subr.mxu0 0.0
    %6978 = vmatpush1.msra.mxu0 0.0
    %6979 = vmatprep.subr.mxu0 0.0
    %6980 = vmatpush1.msra.mxu0 0.0
    %6981 = vmatprep.subr.mxu0 0.0
    %6982 = vmatpush1.msra.mxu0 0.0
    %6983 = vmatprep.subr.mxu0 0.0
    %6984 = vmatpush1.msra.mxu0 0.0
    %6985 = vmatprep.subr.mxu0 0.0
    %6986 = vmatpush1.msra.mxu0 0.0
    %6987 = vmatprep.subr.mxu0 0.0
    %6988 = vmatpush1.msra.mxu0 0.0
    %6989 = vmatprep.subr.mxu0 0.0
    %6990 = vmatpush1.msra.mxu0 0.0
    %6991 = vmatprep.subr.mxu0 0.0
    %6992 = vmatpush1.msra.mxu0 0.0
    %6993 = vmatprep.subr.mxu0 0.0
    %6994 = vmatpush1.msra.mxu0 0.0
    %6995 = vmatprep.subr.mxu0 0.0
    %6996 = vmatpush1.msra.mxu0 0.0
    %6997 = vmatprep.subr.mxu0 0.0
    %6998 = vmatpush1.msra.mxu0 0.0
    %6999 = vmatprep.subr.mxu0 0.0
    %7000 = vmatpush1.msra.mxu0 0.0
    %7001 = vmatprep.mubr.f32.mxu0 0.0
    %v7002 = vand.u32 %v6225, 4294901760
    %7003 = vmatmul.mubr.f32.gmra.mrb[0].mxu0 %v7002
    %v7004 = vpop.f32.mrb[0].mxu0
    %v7005 = vadd.f32 %v6896, %v7004
    %v7006 = vpop.f32.mrb[0].mxu0
    %v7007 = vadd.f32 %v6898, %v7006
    %7008 = vmatprep.mubr.f32.mxu0 0.0
    %v7009 = vand.u32 %v6228, 4294901760
    %7010 = vmatmul.mubr.f32.gmra.mrb[0].mxu0 %v7009
    %v7011 = vpop.f32.mrb[0].mxu0
    %v7012 = vadd.f32 %v6903, %v7011
    %v7013 = vpop.f32.mrb[0].mxu0
    %v7014 = vadd.f32 %v6905, %v7013
    %7015 = vmatprep.mubr.f32.mxu0 0.0
    %v7016 = vand.u32 %v6231, 4294901760
    %7017 = vmatmul.mubr.f32.gmra.mrb[0].mxu0 %v7016
    %v7018 = vpop.f32.mrb[0].mxu0
    %v7019 = vadd.f32 %v6910, %v7018
    %v7020 = vpop.f32.mrb[0].mxu0
    %v7021 = vadd.f32 %v6912, %v7020
    %7022 = vmatprep.mubr.f32.mxu0 0.0
    %v7023 = vand.u32 %v6234, 4294901760
    %7024 = vmatmul.mubr.f32.gmra.mrb[0].mxu0 %v7023
    %v7025 = vpop.f32.mrb[0].mxu0
    %v7026 = vadd.f32 %v6917, %v7025
    %v7027 = vpop.f32.mrb[0].mxu0
    %v7028 = vadd.f32 %v6919, %v7027
    %7029 = vdwg.mxu0
    %v7030 = vadd.f32 %v3531, %v7005
    %v7031 = vadd.f32 %v3532, %v7007
    %v7032 = vadd.f32 %v3533, %v7012
    %v7033 = vadd.f32 %v3534, %v7014
    %v7034 = vadd.f32 %v3535, %v7019
    %v7035 = vadd.f32 %v3536, %v7021
    %v7036 = vadd.f32 %v3537, %v7026
    %v7037 = vadd.f32 %v3538, %v7028
    %7038 = vst [vmem:[#allocation2] sm:$0xff] %v7030
    %7039 = vst [vmem:[#allocation2 + $0x8] sm:$0xff] %v7031
    %7040 = vst [vmem:[#allocation2 + $0x10] sm:$0xff] %v7032
    %7041 = vst [vmem:[#allocation2 + $0x18] sm:$0xff] %v7033
    %7042 = vst [vmem:[#allocation2 + $0x20] sm:$0xff] %v7034
    %7043 = vst [vmem:[#allocation2 + $0x28] sm:$0xff] %v7035
    %7044 = vst [vmem:[#allocation2 + $0x30] sm:$0xff] %v7036
    %7045 = vst [vmem:[#allocation2 + $0x38] sm:$0xff] %v7037
    // Predicated region
    $region22: #{tpu_custom_call.1} parent=1 // pred_check
      _
    $region23: #{tpu_custom_call.1} parent=1 // pred_check_branch
      %7047 = sbr.rel (0) target = $region25
    $region24: #{tpu_custom_call.1} parent=1 // pred_region
      %s7049 = ssub.s32 1024, 1024
      %7050 = vsyncadd [#allocation3], %s7049
      %s7051 = sshll.u32 [#allocation2], 4
      %s7052 = int_to_ptr.vmem [resolvable:$true] %s7051
      %7057 = dma.vmem_to_hbm [thread:$0]  %s7052, 1024, %s5, [#allocation3], 256, 256, 16
    $region25: #{tpu_custom_call.1} parent=1 // pred_fallthru
      _
    // Predicated region
    $region26: #{tpu_custom_call.1} parent=1 // pred_check
      _
    $region27: #{tpu_custom_call.1} parent=1 // pred_check_branch
      %7059 = sbr.rel (0) target = $region29
    $region28: #{tpu_custom_call.1} parent=1 // pred_region
      %7060 = dma.done [#allocation3], 1024
    $region29: #{tpu_custom_call.1} parent=1 // pred_fallthru
      _
    %7061 = vsyncpa [#allocation3], 1

</llo_original>
